<compile_context>
chip_gen: v7x
topology: tpu7x:2x2x1
jax: 0.10.0
libtpu: 0.0.40
codegen_flags: <defaults>
</compile_context>

<pallas_src>
import functools

import jax
import jax.numpy as jnp
from jax.experimental import pallas as pl
from jax.experimental.pallas import tpu as pltpu


def _round_up(x, m):
    return (x + m - 1) // m * m


def _fused_block_kernel(*refs, block_depth, H, W, Cin, Cout, Cp, Wp):
    """Fused (conv3x3 + folded-BN bias + LeakyReLU) x block_depth, one batch element.

    refs layout:
      refs[0]                  x_ref   (1, H, W, Cin)     unpadded input block
      refs[1 + 2*d]            w_ref_d (9, Cd, Cp)        folded weights (Cd=Cin for d=0 else Cp)
      refs[2 + 2*d]            b_ref_d (1, Cp)  f32       folded bias
      refs[1 + 2*block_depth]  o_ref   (1, H, W, Cout)    unpadded output block
      refs[2 + 2*block_depth]  xp0     (H+2, Wp, Cin) f32 layer-0 halo buffer (real channels)
      refs[3 + 2*block_depth]  xp      (H+2, Wp, Cp)  f32 wide halo buffer for layers >= 1
    """
    x_ref = refs[0]
    o_ref = refs[1 + 2 * block_depth]
    xp0 = refs[2 + 2 * block_depth]
    xp = refs[3 + 2 * block_depth]

    # Layer-0 halo buffer: tiny (Cin lanes), so a full memset is cheap.  The
    # 1-pixel border realizes padding=1 without any HBM-side jnp.pad.
    xp0[...] = jnp.zeros((H + 2, Wp, Cin), xp0.dtype)
    xp0[1:H + 1, 1:W + 1, :] = x_ref[0].astype(xp0.dtype)

    if block_depth > 1:
        # Zero ONLY the halo border strips of the wide buffer; its interior is
        # fully overwritten by every layer's writeback.  (Re-done every grid
        # step: with a "parallel" grid each core owns its own scratch.)
        zrow = jnp.zeros((1, Wp, Cp), xp.dtype)
        zcol = jnp.zeros((H + 2, 1, Cp), xp.dtype)
        xp[0:1, :, :] = zrow                 # top halo row
        xp[H + 1:H + 2, :, :] = zrow         # bottom halo row
        xp[:, 0:1, :] = zcol                 # left halo column
        xp[:, W + 1:W + 2, :] = zcol         # right halo column

    src = xp0
    src_c = Cin
    for d in range(block_depth):
        w_ref = refs[1 + 2 * d]
        b_ref = refs[2 + 2 * d]

        # 3x3 conv as 9 accumulating MXU matmuls (no im2col scratch buffer).
        # NOTE: the dx-shifted slab loads still repack through vld/vst; a
        # pltpu.roll-based tap construction could move that shift to the XLU.
        acc = None
        for dy in range(3):
            for dx in range(3):
                tap = dy * 3 + dx
                slab = src[dy:dy + H, dx:dx + W, :].reshape(H * W, src_c)
                part = jnp.dot(slab.astype(w_ref.dtype), w_ref[tap],
                               preferred_element_type=jnp.float32)
                acc = part if acc is None else acc + part

        # Folded-BN epilogue (scale already folded into w) + LeakyReLU(0.2).
        y = acc + b_ref[...]
        y = jnp.where(y >= 0, y, 0.2 * y)
        y = y.reshape(H, W, Cp)

        if d + 1 < block_depth:
            xp[1:H + 1, 1:W + 1, :] = y.astype(xp.dtype)   # stays in VMEM
            src = xp
            src_c = Cp
        else:
            o_ref[0] = y[:, :, :Cout].astype(o_ref.dtype)  # store only real channels


def _fused_block_call(x_nhwc, folded, *, Cout, Cp, Wp):
    """x_nhwc: (N, H, W, Cin) f32 (unpadded). Returns (N, H, W, Cout) f32."""
    N, H, W, Cin = x_nhwc.shape
    D = len(folded)

    kernel = functools.partial(_fused_block_kernel, block_depth=D, H=H, W=W,
                               Cin=Cin, Cout=Cout, Cp=Cp, Wp=Wp)

    in_specs = [pl.BlockSpec((1, H, W, Cin), lambda n: (n, 0, 0, 0))]
    args = [x_nhwc]
    for w3, b2 in folded:
        in_specs.append(pl.BlockSpec(w3.shape, lambda n: (0, 0, 0)))
        in_specs.append(pl.BlockSpec(b2.shape, lambda n: (0, 0)))
        args.append(w3)
        args.append(b2)

    # Advisory cost estimate (padded MXU work actually performed).
    flops = 2 * N * H * W * 9 * (Cin * Cp + (D - 1) * Cp * Cp)
    weight_bytes = sum(w.size * w.dtype.itemsize + b.size * b.dtype.itemsize
                       for w, b in folded)
    bytes_accessed = 4 * N * H * W * (Cin + Cout) + weight_bytes

    # Footprint-derived scoped-VMEM limit (v5e/v6e defaults are 16/32 MiB).
    scratch_bytes = 4 * (H + 2) * Wp * (Cin + Cp)            # xp0 + xp (f32)
    io_bytes = 2 * 4 * H * W * (Cin + Cout)                  # double-buffered blocks
    temp_bytes = 4 * H * W * Cp * 4                          # acc + matmul temporaries
    footprint = scratch_bytes + io_bytes + 2 * weight_bytes + temp_bytes
    vmem_limit = int(min(100 * 2**20, max(32 * 2**20, 2 * footprint)))

    return pl.pallas_call(
        kernel,
        out_shape=jax.ShapeDtypeStruct((N, H, W, Cout), jnp.float32),
        grid_spec=pltpu.PrefetchScalarGridSpec(
            num_scalar_prefetch=0,
            grid=(N,),
            in_specs=in_specs,
            out_specs=pl.BlockSpec((1, H, W, Cout), lambda n: (n, 0, 0, 0)),
            scratch_shapes=[
                pltpu.VMEM((H + 2, Wp, Cin), jnp.float32),   # layer-0 halo buffer
                pltpu.VMEM((H + 2, Wp, Cp), jnp.float32),    # wide halo buffer (layers >= 1)
            ],
        ),
        compiler_params=pltpu.CompilerParams(
            dimension_semantics=("parallel",),
            vmem_limit_bytes=vmem_limit,
        ),
        cost_estimate=pl.CostEstimate(
            flops=int(flops), transcendentals=0, bytes_accessed=int(bytes_accessed)),
    )(*args)


def init_basic_block_params(key, block_depth, in_channels, out_channels, eps=1e-5):
    """Deterministic synthetic parameters for `block_depth` conv+BN layers.

    Returns a list of (w_hwio, scale, bias) where eval-mode BN + conv bias have
    already been collapsed to a per-output-channel scale/bias.
    """
    params = []
    cin = in_channels
    for _ in range(block_depth):
        key, kw, kb, kg, kbeta, km, kv = jax.random.split(key, 7)
        w = jax.random.normal(kw, (3, 3, cin, out_channels), jnp.float32) * 0.1
        conv_b = jax.random.normal(kb, (out_channels,), jnp.float32) * 0.1
        gamma = 1.0 + 0.1 * jax.random.normal(kg, (out_channels,), jnp.float32)
        beta = 0.1 * jax.random.normal(kbeta, (out_channels,), jnp.float32)
        run_mean = 0.1 * jax.random.normal(km, (out_channels,), jnp.float32)
        run_var = jnp.abs(1.0 + 0.1 * jax.random.normal(kv, (out_channels,), jnp.float32))
        scale = gamma / jnp.sqrt(run_var + eps)           # BN eval-mode scale
        bias = (conv_b - run_mean) * scale + beta         # BN eval-mode bias (+conv bias)
        params.append((w, scale, bias))
        cin = out_channels
    return params


def _fold_and_pack_params(params, cp, w0_dtype):
    """Fold BN scale into the conv weights and pack for the kernel.

    Layer 0 -> (9, Cin, cp) in `w0_dtype`; layers >= 1 -> (9, cp, cp) in bf16
    (zero-padded channels).  Biases -> (1, cp) f32.
    """
    folded = []
    for d, (w, scale, bias) in enumerate(params):
        kh, kw, cin, cout = w.shape
        wf = (w * scale[None, None, None, :]).reshape(kh * kw, cin, cout)
        in_pad = cin if d == 0 else cp
        wdt = w0_dtype if d == 0 else jnp.bfloat16
        wp = jnp.zeros((kh * kw, in_pad, cp), jnp.float32).at[:, :cin, :cout].set(wf)
        b2 = jnp.zeros((1, cp), jnp.float32).at[0, :cout].set(bias)
        folded.append((wp.astype(wdt), b2))
    return folded


def basic_block_forward(x_nchw, params):
    """PyTorch-style NCHW input; returns NCHW output. Eval-mode BatchNorm."""
    x = jnp.transpose(x_nchw, (0, 2, 3, 1))               # NCHW -> NHWC (channels on lanes)
    N, H, W, cin = x.shape
    cout = params[-1][0].shape[-1]
    cp = _round_up(cout, 128)                             # lane width of intermediates
    wp = _round_up(W + 2, 8)                              # halo width, sublane-aligned
    w0_dtype = jnp.bfloat16 if cin >= 128 else jnp.float32

    folded = _fold_and_pack_params(params, cp, w0_dtype)
    out = _fused_block_call(x, folded, Cout=cout, Cp=cp, Wp=wp)   # (N, H, W, cout)
    return jnp.transpose(out, (0, 3, 1, 2))               # NHWC -> NCHW


def _reference_forward(x_nchw, params):
    """Pure-JAX reference (XLA conv, f32) with identical folded-BN semantics."""
    x = x_nchw
    for w, scale, bias in params:
        y = jax.lax.conv_general_dilated(
            x, w, window_strides=(1, 1), padding=((1, 1), (1, 1)),
            dimension_numbers=("NCHW", "HWIO", "NCHW"))
        y = y * scale[None, :, None, None] + bias[None, :, None, None]
        x = jnp.where(y >= 0, y, 0.2 * y)
    return x


if __name__ == "__main__":
    key = jax.random.PRNGKey(0)
    kx, kp = jax.random.split(key)

    N, Cin, H, W = 2, 4, 16, 16
    Cout = 8
    block_depth = 2

    x = jax.random.normal(kx, (N, Cin, H, W), jnp.float32)
    params = init_basic_block_params(kp, block_depth, Cin, Cout)

    out = jax.block_until_ready(basic_block_forward(x, params))
    assert out.shape == (N, Cout, H, W), out.shape
    assert bool(jnp.all(jnp.isfinite(out)))

    ref = jax.block_until_ready(_reference_forward(x, params))
    max_err = float(jnp.max(jnp.abs(out - ref)))
    # bf16 matmul operands for layers >= 1 -> slightly looser tolerance than pure f32.
    assert max_err < 3e-2, f"max abs error vs reference: {max_err}"

    print("KERNEL_OK")
</pallas_src>

<mosaic_0001>
module attributes {stable_mosaic.version = 11 : i64} {
  func.func @_fused_block_kernel(%arg0: i32, %arg1: memref<1x16x16x4xf32, #tpu.memory_space<vmem>>, %arg2: memref<9x4x128xf32, #tpu.memory_space<vmem>>, %arg3: memref<1x128xf32, #tpu.memory_space<vmem>>, %arg4: memref<9x128x128xbf16, #tpu.memory_space<vmem>>, %arg5: memref<1x128xf32, #tpu.memory_space<vmem>>, %arg6: memref<1x16x16x8xf32, #tpu.memory_space<vmem>>, %arg7: memref<18x24x4xf32, #tpu.memory_space<vmem>>, %arg8: memref<18x24x128xf32, #tpu.memory_space<vmem>>) attributes {dimension_semantics = [#tpu.dimension_semantics<parallel>], iteration_bounds = array<i64: 2>, scalar_prefetch = 0 : i64, scratch_operands = 2 : i64, tpu.core_type = #tpu.core_type<tc>, window_params = [{transform_indices = @transform_0, window_bounds = array<i64: 1, 16, 16, 4>}, {pipeline_mode = #tpu.pipeline_mode<synchronous>, transform_indices = @transform_1, window_bounds = array<i64: 9, 4, 128>}, {pipeline_mode = #tpu.pipeline_mode<synchronous>, transform_indices = @transform_2, window_bounds = array<i64: 1, 128>}, {pipeline_mode = #tpu.pipeline_mode<synchronous>, transform_indices = @transform_3, window_bounds = array<i64: 9, 128, 128>}, {pipeline_mode = #tpu.pipeline_mode<synchronous>, transform_indices = @transform_4, window_bounds = array<i64: 1, 128>}, {transform_indices = @transform_5, window_bounds = array<i64: 1, 16, 16, 8>}]} {
    %cst = arith.constant 0.000000e+00 : f32
    %0 = vector.broadcast %cst : f32 to vector<18x24x4xf32>
    %c0 = arith.constant 0 : index
    %c0_0 = arith.constant 0 : index
    %c0_1 = arith.constant 0 : index
    %1 = vector.load %arg7[%c0, %c0_0, %c0_1] : memref<18x24x4xf32, #tpu.memory_space<vmem>>, vector<18x24x4xf32>
    tpu.vector_store %arg7[%c0, %c0_0, %c0_1], %0 {strides = array<i32>} : memref<18x24x4xf32, #tpu.memory_space<vmem>>, vector<18x24x4xf32>,
    %c0_2 = arith.constant 0 : index
    %c0_3 = arith.constant 0 : index
    %c0_4 = arith.constant 0 : index
    %c0_5 = arith.constant 0 : index
    %2 = vector.load %arg1[%c0_2, %c0_3, %c0_4, %c0_5] : memref<1x16x16x4xf32, #tpu.memory_space<vmem>>, vector<1x16x16x4xf32>
    %3 = vector.shape_cast %2 : vector<1x16x16x4xf32> to vector<16x16x4xf32>
    %c1 = arith.constant 1 : index
    %c1_6 = arith.constant 1 : index
    %c0_7 = arith.constant 0 : index
    %4 = vector.load %arg7[%c1, %c1_6, %c0_7] : memref<18x24x4xf32, #tpu.memory_space<vmem>>, vector<16x16x4xf32>
    tpu.vector_store %arg7[%c1, %c1_6, %c0_7], %3 {strides = array<i32>} : memref<18x24x4xf32, #tpu.memory_space<vmem>>, vector<16x16x4xf32>,
    %cst_8 = arith.constant 0.000000e+00 : f32
    %5 = vector.broadcast %cst_8 : f32 to vector<1x24x128xf32>
    %cst_9 = arith.constant 0.000000e+00 : f32
    %6 = vector.broadcast %cst_9 : f32 to vector<18x1x128xf32>
    %c0_10 = arith.constant 0 : index
    %c0_11 = arith.constant 0 : index
    %c0_12 = arith.constant 0 : index
    %7 = vector.load %arg8[%c0_10, %c0_11, %c0_12] : memref<18x24x128xf32, #tpu.memory_space<vmem>>, vector<1x24x128xf32>
    tpu.vector_store %arg8[%c0_10, %c0_11, %c0_12], %5 {strides = array<i32>} : memref<18x24x128xf32, #tpu.memory_space<vmem>>, vector<1x24x128xf32>,
    %c17 = arith.constant 17 : index
    %c0_13 = arith.constant 0 : index
    %c0_14 = arith.constant 0 : index
    %8 = vector.load %arg8[%c17, %c0_13, %c0_14] : memref<18x24x128xf32, #tpu.memory_space<vmem>>, vector<1x24x128xf32>
    tpu.vector_store %arg8[%c17, %c0_13, %c0_14], %5 {strides = array<i32>} : memref<18x24x128xf32, #tpu.memory_space<vmem>>, vector<1x24x128xf32>,
    %c0_15 = arith.constant 0 : index
    %c0_16 = arith.constant 0 : index
    %c0_17 = arith.constant 0 : index
    %9 = vector.load %arg8[%c0_15, %c0_16, %c0_17] : memref<18x24x128xf32, #tpu.memory_space<vmem>>, vector<18x1x128xf32>
    tpu.vector_store %arg8[%c0_15, %c0_16, %c0_17], %6 {strides = array<i32>} : memref<18x24x128xf32, #tpu.memory_space<vmem>>, vector<18x1x128xf32>,
    %c0_18 = arith.constant 0 : index
    %c17_19 = arith.constant 17 : index
    %c0_20 = arith.constant 0 : index
    %10 = vector.load %arg8[%c0_18, %c17_19, %c0_20] : memref<18x24x128xf32, #tpu.memory_space<vmem>>, vector<18x1x128xf32>
    tpu.vector_store %arg8[%c0_18, %c17_19, %c0_20], %6 {strides = array<i32>} : memref<18x24x128xf32, #tpu.memory_space<vmem>>, vector<18x1x128xf32>,
    %c0_21 = arith.constant 0 : index
    %c0_22 = arith.constant 0 : index
    %c0_23 = arith.constant 0 : index
    %11 = vector.load %arg7[%c0_21, %c0_22, %c0_23] : memref<18x24x4xf32, #tpu.memory_space<vmem>>, vector<16x16x4xf32>
    %12 = vector.shape_cast %11 : vector<16x16x4xf32> to vector<256x4xf32>
    %c0_24 = arith.constant 0 : index
    %c0_25 = arith.constant 0 : index
    %c0_26 = arith.constant 0 : index
    %13 = vector.load %arg2[%c0_24, %c0_25, %c0_26] : memref<9x4x128xf32, #tpu.memory_space<vmem>>, vector<1x4x128xf32>
    %14 = vector.shape_cast %13 : vector<1x4x128xf32> to vector<4x128xf32>
    %cst_27 = arith.constant dense<0.000000e+00> : vector<256x128xf32>
    %15 = tpu.matmul %12, %14, %cst_27 {dimension_numbers = #tpu.dot_dimension_numbers<[1], [0], [0], [1], [0, 0, 1, 1], [], []>} : vector<256x4xf32>, vector<4x128xf32>, vector<256x128xf32> -> vector<256x128xf32>
    %c0_28 = arith.constant 0 : index
    %c1_29 = arith.constant 1 : index
    %c0_30 = arith.constant 0 : index
    %16 = vector.load %arg7[%c0_28, %c1_29, %c0_30] : memref<18x24x4xf32, #tpu.memory_space<vmem>>, vector<16x16x4xf32>
    %17 = vector.shape_cast %16 : vector<16x16x4xf32> to vector<256x4xf32>
    %c1_31 = arith.constant 1 : index
    %c0_32 = arith.constant 0 : index
    %c0_33 = arith.constant 0 : index
    %18 = vector.load %arg2[%c1_31, %c0_32, %c0_33] : memref<9x4x128xf32, #tpu.memory_space<vmem>>, vector<1x4x128xf32>
    %19 = vector.shape_cast %18 : vector<1x4x128xf32> to vector<4x128xf32>
    %cst_34 = arith.constant dense<0.000000e+00> : vector<256x128xf32>
    %20 = tpu.matmul %17, %19, %cst_34 {dimension_numbers = #tpu.dot_dimension_numbers<[1], [0], [0], [1], [0, 0, 1, 1], [], []>} : vector<256x4xf32>, vector<4x128xf32>, vector<256x128xf32> -> vector<256x128xf32>
    %21 = arith.addf %15, %20 : vector<256x128xf32>
    %c0_35 = arith.constant 0 : index
    %c2 = arith.constant 2 : index
    %c0_36 = arith.constant 0 : index
    %22 = vector.load %arg7[%c0_35, %c2, %c0_36] : memref<18x24x4xf32, #tpu.memory_space<vmem>>, vector<16x16x4xf32>
    %23 = vector.shape_cast %22 : vector<16x16x4xf32> to vector<256x4xf32>
    %c2_37 = arith.constant 2 : index
    %c0_38 = arith.constant 0 : index
    %c0_39 = arith.constant 0 : index
    %24 = vector.load %arg2[%c2_37, %c0_38, %c0_39] : memref<9x4x128xf32, #tpu.memory_space<vmem>>, vector<1x4x128xf32>
    %25 = vector.shape_cast %24 : vector<1x4x128xf32> to vector<4x128xf32>
    %cst_40 = arith.constant dense<0.000000e+00> : vector<256x128xf32>
    %26 = tpu.matmul %23, %25, %cst_40 {dimension_numbers = #tpu.dot_dimension_numbers<[1], [0], [0], [1], [0, 0, 1, 1], [], []>} : vector<256x4xf32>, vector<4x128xf32>, vector<256x128xf32> -> vector<256x128xf32>
    %27 = arith.addf %21, %26 : vector<256x128xf32>
    %c1_41 = arith.constant 1 : index
    %c0_42 = arith.constant 0 : index
    %c0_43 = arith.constant 0 : index
    %28 = vector.load %arg7[%c1_41, %c0_42, %c0_43] : memref<18x24x4xf32, #tpu.memory_space<vmem>>, vector<16x16x4xf32>
    %29 = vector.shape_cast %28 : vector<16x16x4xf32> to vector<256x4xf32>
    %c3 = arith.constant 3 : index
    %c0_44 = arith.constant 0 : index
    %c0_45 = arith.constant 0 : index
    %30 = vector.load %arg2[%c3, %c0_44, %c0_45] : memref<9x4x128xf32, #tpu.memory_space<vmem>>, vector<1x4x128xf32>
    %31 = vector.shape_cast %30 : vector<1x4x128xf32> to vector<4x128xf32>
    %cst_46 = arith.constant dense<0.000000e+00> : vector<256x128xf32>
    %32 = tpu.matmul %29, %31, %cst_46 {dimension_numbers = #tpu.dot_dimension_numbers<[1], [0], [0], [1], [0, 0, 1, 1], [], []>} : vector<256x4xf32>, vector<4x128xf32>, vector<256x128xf32> -> vector<256x128xf32>
    %33 = arith.addf %27, %32 : vector<256x128xf32>
    %c1_47 = arith.constant 1 : index
    %c1_48 = arith.constant 1 : index
    %c0_49 = arith.constant 0 : index
    %34 = vector.load %arg7[%c1_47, %c1_48, %c0_49] : memref<18x24x4xf32, #tpu.memory_space<vmem>>, vector<16x16x4xf32>
    %35 = vector.shape_cast %34 : vector<16x16x4xf32> to vector<256x4xf32>
    %c4 = arith.constant 4 : index
    %c0_50 = arith.constant 0 : index
    %c0_51 = arith.constant 0 : index
    %36 = vector.load %arg2[%c4, %c0_50, %c0_51] : memref<9x4x128xf32, #tpu.memory_space<vmem>>, vector<1x4x128xf32>
    %37 = vector.shape_cast %36 : vector<1x4x128xf32> to vector<4x128xf32>
    %cst_52 = arith.constant dense<0.000000e+00> : vector<256x128xf32>
    %38 = tpu.matmul %35, %37, %cst_52 {dimension_numbers = #tpu.dot_dimension_numbers<[1], [0], [0], [1], [0, 0, 1, 1], [], []>} : vector<256x4xf32>, vector<4x128xf32>, vector<256x128xf32> -> vector<256x128xf32>
    %39 = arith.addf %33, %38 : vector<256x128xf32>
    %c1_53 = arith.constant 1 : index
    %c2_54 = arith.constant 2 : index
    %c0_55 = arith.constant 0 : index
    %40 = vector.load %arg7[%c1_53, %c2_54, %c0_55] : memref<18x24x4xf32, #tpu.memory_space<vmem>>, vector<16x16x4xf32>
    %41 = vector.shape_cast %40 : vector<16x16x4xf32> to vector<256x4xf32>
    %c5 = arith.constant 5 : index
    %c0_56 = arith.constant 0 : index
    %c0_57 = arith.constant 0 : index
    %42 = vector.load %arg2[%c5, %c0_56, %c0_57] : memref<9x4x128xf32, #tpu.memory_space<vmem>>, vector<1x4x128xf32>
    %43 = vector.shape_cast %42 : vector<1x4x128xf32> to vector<4x128xf32>
    %cst_58 = arith.constant dense<0.000000e+00> : vector<256x128xf32>
    %44 = tpu.matmul %41, %43, %cst_58 {dimension_numbers = #tpu.dot_dimension_numbers<[1], [0], [0], [1], [0, 0, 1, 1], [], []>} : vector<256x4xf32>, vector<4x128xf32>, vector<256x128xf32> -> vector<256x128xf32>
    %45 = arith.addf %39, %44 : vector<256x128xf32>
    %c2_59 = arith.constant 2 : index
    %c0_60 = arith.constant 0 : index
    %c0_61 = arith.constant 0 : index
    %46 = vector.load %arg7[%c2_59, %c0_60, %c0_61] : memref<18x24x4xf32, #tpu.memory_space<vmem>>, vector<16x16x4xf32>
    %47 = vector.shape_cast %46 : vector<16x16x4xf32> to vector<256x4xf32>
    %c6 = arith.constant 6 : index
    %c0_62 = arith.constant 0 : index
    %c0_63 = arith.constant 0 : index
    %48 = vector.load %arg2[%c6, %c0_62, %c0_63] : memref<9x4x128xf32, #tpu.memory_space<vmem>>, vector<1x4x128xf32>
    %49 = vector.shape_cast %48 : vector<1x4x128xf32> to vector<4x128xf32>
    %cst_64 = arith.constant dense<0.000000e+00> : vector<256x128xf32>
    %50 = tpu.matmul %47, %49, %cst_64 {dimension_numbers = #tpu.dot_dimension_numbers<[1], [0], [0], [1], [0, 0, 1, 1], [], []>} : vector<256x4xf32>, vector<4x128xf32>, vector<256x128xf32> -> vector<256x128xf32>
    %51 = arith.addf %45, %50 : vector<256x128xf32>
    %c2_65 = arith.constant 2 : index
    %c1_66 = arith.constant 1 : index
    %c0_67 = arith.constant 0 : index
    %52 = vector.load %arg7[%c2_65, %c1_66, %c0_67] : memref<18x24x4xf32, #tpu.memory_space<vmem>>, vector<16x16x4xf32>
    %53 = vector.shape_cast %52 : vector<16x16x4xf32> to vector<256x4xf32>
    %c7 = arith.constant 7 : index
    %c0_68 = arith.constant 0 : index
    %c0_69 = arith.constant 0 : index
    %54 = vector.load %arg2[%c7, %c0_68, %c0_69] : memref<9x4x128xf32, #tpu.memory_space<vmem>>, vector<1x4x128xf32>
    %55 = vector.shape_cast %54 : vector<1x4x128xf32> to vector<4x128xf32>
    %cst_70 = arith.constant dense<0.000000e+00> : vector<256x128xf32>
    %56 = tpu.matmul %53, %55, %cst_70 {dimension_numbers = #tpu.dot_dimension_numbers<[1], [0], [0], [1], [0, 0, 1, 1], [], []>} : vector<256x4xf32>, vector<4x128xf32>, vector<256x128xf32> -> vector<256x128xf32>
    %57 = arith.addf %51, %56 : vector<256x128xf32>
    %c2_71 = arith.constant 2 : index
    %c2_72 = arith.constant 2 : index
    %c0_73 = arith.constant 0 : index
    %58 = vector.load %arg7[%c2_71, %c2_72, %c0_73] : memref<18x24x4xf32, #tpu.memory_space<vmem>>, vector<16x16x4xf32>
    %59 = vector.shape_cast %58 : vector<16x16x4xf32> to vector<256x4xf32>
    %c8 = arith.constant 8 : index
    %c0_74 = arith.constant 0 : index
    %c0_75 = arith.constant 0 : index
    %60 = vector.load %arg2[%c8, %c0_74, %c0_75] : memref<9x4x128xf32, #tpu.memory_space<vmem>>, vector<1x4x128xf32>
    %61 = vector.shape_cast %60 : vector<1x4x128xf32> to vector<4x128xf32>
    %cst_76 = arith.constant dense<0.000000e+00> : vector<256x128xf32>
    %62 = tpu.matmul %59, %61, %cst_76 {dimension_numbers = #tpu.dot_dimension_numbers<[1], [0], [0], [1], [0, 0, 1, 1], [], []>} : vector<256x4xf32>, vector<4x128xf32>, vector<256x128xf32> -> vector<256x128xf32>
    %63 = arith.addf %57, %62 : vector<256x128xf32>
    %c0_77 = arith.constant 0 : index
    %c0_78 = arith.constant 0 : index
    %64 = vector.load %arg3[%c0_77, %c0_78] : memref<1x128xf32, #tpu.memory_space<vmem>>, vector<1x128xf32>
    %65 = vector.broadcast %64 : vector<1x128xf32> to vector<256x128xf32>
    %66 = arith.addf %63, %65 : vector<256x128xf32>
    %cst_79 = arith.constant 0.000000e+00 : f32
    %67 = vector.broadcast %cst_79 : f32 to vector<256x128xf32>
    %68 = arith.cmpf oge, %66, %67 : vector<256x128xf32>
    %cst_80 = arith.constant 2.000000e-01 : f32
    %69 = vector.broadcast %cst_80 : f32 to vector<256x128xf32>
    %70 = arith.mulf %69, %66 : vector<256x128xf32>
    %71 = arith.select %68, %66, %70 : vector<256x128xi1>, vector<256x128xf32>
    %72 = vector.shape_cast %71 : vector<256x128xf32> to vector<16x16x128xf32>
    %c1_81 = arith.constant 1 : index
    %c1_82 = arith.constant 1 : index
    %c0_83 = arith.constant 0 : index
    %73 = vector.load %arg8[%c1_81, %c1_82, %c0_83] : memref<18x24x128xf32, #tpu.memory_space<vmem>>, vector<16x16x128xf32>
    tpu.vector_store %arg8[%c1_81, %c1_82, %c0_83], %72 {strides = array<i32>} : memref<18x24x128xf32, #tpu.memory_space<vmem>>, vector<16x16x128xf32>,
    %c0_84 = arith.constant 0 : index
    %c0_85 = arith.constant 0 : index
    %c0_86 = arith.constant 0 : index
    %74 = vector.load %arg8[%c0_84, %c0_85, %c0_86] : memref<18x24x128xf32, #tpu.memory_space<vmem>>, vector<16x16x128xf32>
    %75 = vector.shape_cast %74 : vector<16x16x128xf32> to vector<256x128xf32>
    %76 = arith.truncf %75 : vector<256x128xf32> to vector<256x128xbf16>
    %c0_87 = arith.constant 0 : index
    %c0_88 = arith.constant 0 : index
    %c0_89 = arith.constant 0 : index
    %77 = vector.load %arg4[%c0_87, %c0_88, %c0_89] : memref<9x128x128xbf16, #tpu.memory_space<vmem>>, vector<1x128x128xbf16>
    %78 = vector.shape_cast %77 : vector<1x128x128xbf16> to vector<128x128xbf16>
    %cst_90 = arith.constant dense<0.000000e+00> : vector<256x128xf32>
    %79 = tpu.matmul %76, %78, %cst_90 {dimension_numbers = #tpu.dot_dimension_numbers<[1], [0], [0], [1], [0, 0, 1, 1], [], []>} : vector<256x128xbf16>, vector<128x128xbf16>, vector<256x128xf32> -> vector<256x128xf32>
    %c0_91 = arith.constant 0 : index
    %c1_92 = arith.constant 1 : index
    %c0_93 = arith.constant 0 : index
    %80 = vector.load %arg8[%c0_91, %c1_92, %c0_93] : memref<18x24x128xf32, #tpu.memory_space<vmem>>, vector<16x16x128xf32>
    %81 = vector.shape_cast %80 : vector<16x16x128xf32> to vector<256x128xf32>
    %82 = arith.truncf %81 : vector<256x128xf32> to vector<256x128xbf16>
    %c1_94 = arith.constant 1 : index
    %c0_95 = arith.constant 0 : index
    %c0_96 = arith.constant 0 : index
    %83 = vector.load %arg4[%c1_94, %c0_95, %c0_96] : memref<9x128x128xbf16, #tpu.memory_space<vmem>>, vector<1x128x128xbf16>
    %84 = vector.shape_cast %83 : vector<1x128x128xbf16> to vector<128x128xbf16>
    %cst_97 = arith.constant dense<0.000000e+00> : vector<256x128xf32>
    %85 = tpu.matmul %82, %84, %cst_97 {dimension_numbers = #tpu.dot_dimension_numbers<[1], [0], [0], [1], [0, 0, 1, 1], [], []>} : vector<256x128xbf16>, vector<128x128xbf16>, vector<256x128xf32> -> vector<256x128xf32>
    %86 = arith.addf %79, %85 : vector<256x128xf32>
    %c0_98 = arith.constant 0 : index
    %c2_99 = arith.constant 2 : index
    %c0_100 = arith.constant 0 : index
    %87 = vector.load %arg8[%c0_98, %c2_99, %c0_100] : memref<18x24x128xf32, #tpu.memory_space<vmem>>, vector<16x16x128xf32>
    %88 = vector.shape_cast %87 : vector<16x16x128xf32> to vector<256x128xf32>
    %89 = arith.truncf %88 : vector<256x128xf32> to vector<256x128xbf16>
    %c2_101 = arith.constant 2 : index
    %c0_102 = arith.constant 0 : index
    %c0_103 = arith.constant 0 : index
    %90 = vector.load %arg4[%c2_101, %c0_102, %c0_103] : memref<9x128x128xbf16, #tpu.memory_space<vmem>>, vector<1x128x128xbf16>
    %91 = vector.shape_cast %90 : vector<1x128x128xbf16> to vector<128x128xbf16>
    %cst_104 = arith.constant dense<0.000000e+00> : vector<256x128xf32>
    %92 = tpu.matmul %89, %91, %cst_104 {dimension_numbers = #tpu.dot_dimension_numbers<[1], [0], [0], [1], [0, 0, 1, 1], [], []>} : vector<256x128xbf16>, vector<128x128xbf16>, vector<256x128xf32> -> vector<256x128xf32>
    %93 = arith.addf %86, %92 : vector<256x128xf32>
    %c1_105 = arith.constant 1 : index
    %c0_106 = arith.constant 0 : index
    %c0_107 = arith.constant 0 : index
    %94 = vector.load %arg8[%c1_105, %c0_106, %c0_107] : memref<18x24x128xf32, #tpu.memory_space<vmem>>, vector<16x16x128xf32>
    %95 = vector.shape_cast %94 : vector<16x16x128xf32> to vector<256x128xf32>
    %96 = arith.truncf %95 : vector<256x128xf32> to vector<256x128xbf16>
    %c3_108 = arith.constant 3 : index
    %c0_109 = arith.constant 0 : index
    %c0_110 = arith.constant 0 : index
    %97 = vector.load %arg4[%c3_108, %c0_109, %c0_110] : memref<9x128x128xbf16, #tpu.memory_space<vmem>>, vector<1x128x128xbf16>
    %98 = vector.shape_cast %97 : vector<1x128x128xbf16> to vector<128x128xbf16>
    %cst_111 = arith.constant dense<0.000000e+00> : vector<256x128xf32>
    %99 = tpu.matmul %96, %98, %cst_111 {dimension_numbers = #tpu.dot_dimension_numbers<[1], [0], [0], [1], [0, 0, 1, 1], [], []>} : vector<256x128xbf16>, vector<128x128xbf16>, vector<256x128xf32> -> vector<256x128xf32>
    %100 = arith.addf %93, %99 : vector<256x128xf32>
    %c1_112 = arith.constant 1 : index
    %c1_113 = arith.constant 1 : index
    %c0_114 = arith.constant 0 : index
    %101 = vector.load %arg8[%c1_112, %c1_113, %c0_114] : memref<18x24x128xf32, #tpu.memory_space<vmem>>, vector<16x16x128xf32>
    %102 = vector.shape_cast %101 : vector<16x16x128xf32> to vector<256x128xf32>
    %103 = arith.truncf %102 : vector<256x128xf32> to vector<256x128xbf16>
    %c4_115 = arith.constant 4 : index
    %c0_116 = arith.constant 0 : index
    %c0_117 = arith.constant 0 : index
    %104 = vector.load %arg4[%c4_115, %c0_116, %c0_117] : memref<9x128x128xbf16, #tpu.memory_space<vmem>>, vector<1x128x128xbf16>
    %105 = vector.shape_cast %104 : vector<1x128x128xbf16> to vector<128x128xbf16>
    %cst_118 = arith.constant dense<0.000000e+00> : vector<256x128xf32>
    %106 = tpu.matmul %103, %105, %cst_118 {dimension_numbers = #tpu.dot_dimension_numbers<[1], [0], [0], [1], [0, 0, 1, 1], [], []>} : vector<256x128xbf16>, vector<128x128xbf16>, vector<256x128xf32> -> vector<256x128xf32>
    %107 = arith.addf %100, %106 : vector<256x128xf32>
    %c1_119 = arith.constant 1 : index
    %c2_120 = arith.constant 2 : index
    %c0_121 = arith.constant 0 : index
    %108 = vector.load %arg8[%c1_119, %c2_120, %c0_121] : memref<18x24x128xf32, #tpu.memory_space<vmem>>, vector<16x16x128xf32>
    %109 = vector.shape_cast %108 : vector<16x16x128xf32> to vector<256x128xf32>
    %110 = arith.truncf %109 : vector<256x128xf32> to vector<256x128xbf16>
    %c5_122 = arith.constant 5 : index
    %c0_123 = arith.constant 0 : index
    %c0_124 = arith.constant 0 : index
    %111 = vector.load %arg4[%c5_122, %c0_123, %c0_124] : memref<9x128x128xbf16, #tpu.memory_space<vmem>>, vector<1x128x128xbf16>
    %112 = vector.shape_cast %111 : vector<1x128x128xbf16> to vector<128x128xbf16>
    %cst_125 = arith.constant dense<0.000000e+00> : vector<256x128xf32>
    %113 = tpu.matmul %110, %112, %cst_125 {dimension_numbers = #tpu.dot_dimension_numbers<[1], [0], [0], [1], [0, 0, 1, 1], [], []>} : vector<256x128xbf16>, vector<128x128xbf16>, vector<256x128xf32> -> vector<256x128xf32>
    %114 = arith.addf %107, %113 : vector<256x128xf32>
    %c2_126 = arith.constant 2 : index
    %c0_127 = arith.constant 0 : index
    %c0_128 = arith.constant 0 : index
    %115 = vector.load %arg8[%c2_126, %c0_127, %c0_128] : memref<18x24x128xf32, #tpu.memory_space<vmem>>, vector<16x16x128xf32>
    %116 = vector.shape_cast %115 : vector<16x16x128xf32> to vector<256x128xf32>
    %117 = arith.truncf %116 : vector<256x128xf32> to vector<256x128xbf16>
    %c6_129 = arith.constant 6 : index
    %c0_130 = arith.constant 0 : index
    %c0_131 = arith.constant 0 : index
    %118 = vector.load %arg4[%c6_129, %c0_130, %c0_131] : memref<9x128x128xbf16, #tpu.memory_space<vmem>>, vector<1x128x128xbf16>
    %119 = vector.shape_cast %118 : vector<1x128x128xbf16> to vector<128x128xbf16>
    %cst_132 = arith.constant dense<0.000000e+00> : vector<256x128xf32>
    %120 = tpu.matmul %117, %119, %cst_132 {dimension_numbers = #tpu.dot_dimension_numbers<[1], [0], [0], [1], [0, 0, 1, 1], [], []>} : vector<256x128xbf16>, vector<128x128xbf16>, vector<256x128xf32> -> vector<256x128xf32>
    %121 = arith.addf %114, %120 : vector<256x128xf32>
    %c2_133 = arith.constant 2 : index
    %c1_134 = arith.constant 1 : index
    %c0_135 = arith.constant 0 : index
    %122 = vector.load %arg8[%c2_133, %c1_134, %c0_135] : memref<18x24x128xf32, #tpu.memory_space<vmem>>, vector<16x16x128xf32>
    %123 = vector.shape_cast %122 : vector<16x16x128xf32> to vector<256x128xf32>
    %124 = arith.truncf %123 : vector<256x128xf32> to vector<256x128xbf16>
    %c7_136 = arith.constant 7 : index
    %c0_137 = arith.constant 0 : index
    %c0_138 = arith.constant 0 : index
    %125 = vector.load %arg4[%c7_136, %c0_137, %c0_138] : memref<9x128x128xbf16, #tpu.memory_space<vmem>>, vector<1x128x128xbf16>
    %126 = vector.shape_cast %125 : vector<1x128x128xbf16> to vector<128x128xbf16>
    %cst_139 = arith.constant dense<0.000000e+00> : vector<256x128xf32>
    %127 = tpu.matmul %124, %126, %cst_139 {dimension_numbers = #tpu.dot_dimension_numbers<[1], [0], [0], [1], [0, 0, 1, 1], [], []>} : vector<256x128xbf16>, vector<128x128xbf16>, vector<256x128xf32> -> vector<256x128xf32>
    %128 = arith.addf %121, %127 : vector<256x128xf32>
    %c2_140 = arith.constant 2 : index
    %c2_141 = arith.constant 2 : index
    %c0_142 = arith.constant 0 : index
    %129 = vector.load %arg8[%c2_140, %c2_141, %c0_142] : memref<18x24x128xf32, #tpu.memory_space<vmem>>, vector<16x16x128xf32>
    %130 = vector.shape_cast %129 : vector<16x16x128xf32> to vector<256x128xf32>
    %131 = arith.truncf %130 : vector<256x128xf32> to vector<256x128xbf16>
    %c8_143 = arith.constant 8 : index
    %c0_144 = arith.constant 0 : index
    %c0_145 = arith.constant 0 : index
    %132 = vector.load %arg4[%c8_143, %c0_144, %c0_145] : memref<9x128x128xbf16, #tpu.memory_space<vmem>>, vector<1x128x128xbf16>
    %133 = vector.shape_cast %132 : vector<1x128x128xbf16> to vector<128x128xbf16>
    %cst_146 = arith.constant dense<0.000000e+00> : vector<256x128xf32>
    %134 = tpu.matmul %131, %133, %cst_146 {dimension_numbers = #tpu.dot_dimension_numbers<[1], [0], [0], [1], [0, 0, 1, 1], [], []>} : vector<256x128xbf16>, vector<128x128xbf16>, vector<256x128xf32> -> vector<256x128xf32>
    %135 = arith.addf %128, %134 : vector<256x128xf32>
    %c0_147 = arith.constant 0 : index
    %c0_148 = arith.constant 0 : index
    %136 = vector.load %arg5[%c0_147, %c0_148] : memref<1x128xf32, #tpu.memory_space<vmem>>, vector<1x128xf32>
    %137 = vector.broadcast %136 : vector<1x128xf32> to vector<256x128xf32>
    %138 = arith.addf %135, %137 : vector<256x128xf32>
    %cst_149 = arith.constant 0.000000e+00 : f32
    %139 = vector.broadcast %cst_149 : f32 to vector<256x128xf32>
    %140 = arith.cmpf oge, %138, %139 : vector<256x128xf32>
    %cst_150 = arith.constant 2.000000e-01 : f32
    %141 = vector.broadcast %cst_150 : f32 to vector<256x128xf32>
    %142 = arith.mulf %141, %138 : vector<256x128xf32>
    %143 = arith.select %140, %138, %142 : vector<256x128xi1>, vector<256x128xf32>
    %144 = vector.shape_cast %143 : vector<256x128xf32> to vector<16x16x128xf32>
    %145 = vector.extract_strided_slice %144 {offsets = [0, 0, 0], sizes = [16, 16, 8], strides = [1, 1, 1]} : vector<16x16x128xf32> to vector<16x16x8xf32>
    %c0_151 = arith.constant 0 : index
    %c0_152 = arith.constant 0 : index
    %c0_153 = arith.constant 0 : index
    %c0_154 = arith.constant 0 : index
    %146 = vector.load %arg6[%c0_151, %c0_152, %c0_153, %c0_154] : memref<1x16x16x8xf32, #tpu.memory_space<vmem>>, vector<1x16x16x8xf32>
    %147 = vector.shape_cast %146 : vector<1x16x16x8xf32> to vector<16x16x8xf32>
    %148 = vector.shape_cast %145 : vector<16x16x8xf32> to vector<1x16x16x8xf32>
    tpu.vector_store %arg6[%c0_151, %c0_152, %c0_153, %c0_154], %148 {strides = array<i32>} : memref<1x16x16x8xf32, #tpu.memory_space<vmem>>, vector<1x16x16x8xf32>,
    return
  }
  func.func @transform_0(%arg0: i32) -> (i32, i32, i32, i32) {
    %c0_i32 = arith.constant 0 : i32
    %c0_i32_0 = arith.constant 0 : i32
    %c0_i32_1 = arith.constant 0 : i32
    %c0_i32_2 = arith.constant 0 : i32
    return %arg0, %c0_i32, %c0_i32_0, %c0_i32_1 : i32, i32, i32, i32
  }
  func.func @transform_1(%arg0: i32) -> (i32, i32, i32) {
    %c0_i32 = arith.constant 0 : i32
    %c0_i32_0 = arith.constant 0 : i32
    %c0_i32_1 = arith.constant 0 : i32
    %c0_i32_2 = arith.constant 0 : i32
    return %c0_i32, %c0_i32_0, %c0_i32_1 : i32, i32, i32
  }
  func.func @transform_2(%arg0: i32) -> (i32, i32) {
    %c0_i32 = arith.constant 0 : i32
    %c0_i32_0 = arith.constant 0 : i32
    %c0_i32_1 = arith.constant 0 : i32
    return %c0_i32, %c0_i32_0 : i32, i32
  }
  func.func @transform_3(%arg0: i32) -> (i32, i32, i32) {
    %c0_i32 = arith.constant 0 : i32
    %c0_i32_0 = arith.constant 0 : i32
    %c0_i32_1 = arith.constant 0 : i32
    %c0_i32_2 = arith.constant 0 : i32
    return %c0_i32, %c0_i32_0, %c0_i32_1 : i32, i32, i32
  }
  func.func @transform_4(%arg0: i32) -> (i32, i32) {
    %c0_i32 = arith.constant 0 : i32
    %c0_i32_0 = arith.constant 0 : i32
    %c0_i32_1 = arith.constant 0 : i32
    return %c0_i32, %c0_i32_0 : i32, i32
  }
  func.func @transform_5(%arg0: i32) -> (i32, i32, i32, i32) {
    %c0_i32 = arith.constant 0 : i32
    %c0_i32_0 = arith.constant 0 : i32
    %c0_i32_1 = arith.constant 0 : i32
    %c0_i32_2 = arith.constant 0 : i32
    return %arg0, %c0_i32, %c0_i32_0, %c0_i32_1 : i32, i32, i32, i32
  }
}

</mosaic_0001>

<llo_original>
// kernel: tpu_custom_call.1
$region0: #{tpu_custom_call.1}
  #allocation0 [shape = 'u32[]', space=smem, size = 0x4, offset = 0x4, fixed_abs, tag = 'smem constant byte address 0x4 - core index']
  #allocation1 [shape = 'u32[144,128]{1,0:T(1,128)}', space=vmem, size = 0x12000, scoped, tag = 'internal scratch']
  #allocation2 [shape = 'f32[18,24,4]{2,1,0:T(8,128)}', space=vmem, size = 0x36000, scoped, tag = 'scratch operand']
  #allocation3 [shape = 'f32[18,24,128]{2,1,0:T(8,128)}', space=vmem, size = 0x36000, scoped, tag = 'scratch operand']
  %s0 = inlined_call_operand.vmem [shape: f32[2,16,16,4], index: 0, kind: input, shape index: {}]
  %s1 = inlined_call_operand.vmem [shape: f32[9,4,128], index: 1, kind: input, shape index: {}]
  %s2 = inlined_call_operand.vmem [shape: f32[1,128], index: 2, kind: input, shape index: {}]
  %s3 = inlined_call_operand.vmem [shape: bf16[9,128,128], index: 3, kind: input, shape index: {}]
  %s4 = inlined_call_operand.vmem [shape: f32[1,128], index: 4, kind: input, shape index: {}]
  %s5 = inlined_call_operand.vmem [shape: f32[2,16,16,8], index: 5, kind: output, shape index: {}]
  %s6 = sld [smem:[#allocation0]]
  $region53: #{tpu_custom_call.1} parent=0
    _
  %s8 = ssub.s32 1, %s6
  %s9 = scalar_select 0, %s8, %s6
  loop: start=0, step=1, limit=4
  $region2: #{tpu_custom_call.1} parent=0 // loop_pre_header
    _
  $region3: #{tpu_custom_call.1} parent=0 // loop_header
    %s11 = sphi 0, %s15
    %p12 = scmp.ge.s32.totalorder %s11, 4
    %s21 = sphi 0, %s23
    %s24 = sphi 0, %s21
    %s25 = sphi 0, %s24
    %s41 = sphi 0, %s25
    %s45 = sphi 0, %s45
    %s47 = sphi 0, %s45
    %s48 = sphi 0, %s47
    %s62 = sphi 0, %s48
    %s66 = sphi 0, %s66
    %s68 = sphi 0, %s66
    %s69 = sphi 0, %s68
    %s83 = sphi 0, %s69
    %s87 = sphi 0, %s87
    %s89 = sphi 0, %s87
    %s90 = sphi 0, %s89
    %s104 = sphi 0, %s90
    %s108 = sphi 0, %s108
    %s110 = sphi 0, %s108
    %s111 = sphi 0, %s110
    %s125 = sphi 0, %s111
    %s131 = sphi 0, %s133
    %s134 = sphi 0, %s131
    %s135 = sphi 0, %s134
    %s151 = sphi 0, %s135
  $region4: #{tpu_custom_call.1} parent=0 // loop_header_branch
    %14 = sbr.rel (%p12) target = $region8
  $region5: #{tpu_custom_call.1} parent=0 // loop_body
    %s16 = ssub.s32 %s11, 1
    %s17 = ssub.s32 %s11, 2
    %s18 = sadd.s32 %s11, 1
    %s19 = ssub.s32 %s11, %s18
    %p20 = scmp.eq.s32.totalorder %s19, 0
    %s22 = sadd.s32 %s21, 1
    %s23 = scalar_select %p20, %s21, %s22
    %p26 = pneg %p20
    %p27 = scmp.eq.s32.totalorder %s11, 1
    %p28 = por %p26, %p27
    %p29 = scmp.ne.s32.totalorder %s21, %s24
    %p30 = scmp.eq.s32.totalorder %s11, 0
    %p31 = por %p29, %p30
    %p32 = scmp.ne.s32.totalorder %s21, %s24
    %p33 = scmp.eq.s32.totalorder %s16, 1
    %p34 = por %p32, %p33
    %p35 = scmp.ne.s32.totalorder %s24, %s25
    %p36 = scmp.eq.s32.totalorder %s16, 0
    %p37 = por %p35, %p36
    %p38 = scmp.ne.s32.totalorder %s24, %s25
    %p39 = scmp.eq.s32.totalorder %s17, 1
    %p40 = por %p38, %p39
    %p42 = scmp.ne.s32.totalorder %s25, %s41
    %p43 = scmp.eq.s32.totalorder %s17, 0
    %p44 = por %p42, %p43
    %s46 = sadd.s32 %s45, 1
    %p49 = scmp.eq.s32.totalorder %s11, 1
    %p50 = scmp.ne.s32.totalorder %s45, %s47
    %p51 = scmp.eq.s32.totalorder %s11, 0
    %p52 = por %p50, %p51
    %p53 = scmp.ne.s32.totalorder %s45, %s47
    %p54 = scmp.eq.s32.totalorder %s16, 1
    %p55 = por %p53, %p54
    %p56 = scmp.ne.s32.totalorder %s47, %s48
    %p57 = scmp.eq.s32.totalorder %s16, 0
    %p58 = por %p56, %p57
    %p59 = scmp.ne.s32.totalorder %s47, %s48
    %p60 = scmp.eq.s32.totalorder %s17, 1
    %p61 = por %p59, %p60
    %p63 = scmp.ne.s32.totalorder %s48, %s62
    %p64 = scmp.eq.s32.totalorder %s17, 0
    %p65 = por %p63, %p64
    %s67 = sadd.s32 %s66, 1
    %p70 = scmp.eq.s32.totalorder %s11, 1
    %p71 = scmp.ne.s32.totalorder %s66, %s68
    %p72 = scmp.eq.s32.totalorder %s11, 0
    %p73 = por %p71, %p72
    %p74 = scmp.ne.s32.totalorder %s66, %s68
    %p75 = scmp.eq.s32.totalorder %s16, 1
    %p76 = por %p74, %p75
    %p77 = scmp.ne.s32.totalorder %s68, %s69
    %p78 = scmp.eq.s32.totalorder %s16, 0
    %p79 = por %p77, %p78
    %p80 = scmp.ne.s32.totalorder %s68, %s69
    %p81 = scmp.eq.s32.totalorder %s17, 1
    %p82 = por %p80, %p81
    %p84 = scmp.ne.s32.totalorder %s69, %s83
    %p85 = scmp.eq.s32.totalorder %s17, 0
    %p86 = por %p84, %p85
    %s88 = sadd.s32 %s87, 1
    %p91 = scmp.eq.s32.totalorder %s11, 1
    %p92 = scmp.ne.s32.totalorder %s87, %s89
    %p93 = scmp.eq.s32.totalorder %s11, 0
    %p94 = por %p92, %p93
    %p95 = scmp.ne.s32.totalorder %s87, %s89
    %p96 = scmp.eq.s32.totalorder %s16, 1
    %p97 = por %p95, %p96
    %p98 = scmp.ne.s32.totalorder %s89, %s90
    %p99 = scmp.eq.s32.totalorder %s16, 0
    %p100 = por %p98, %p99
    %p101 = scmp.ne.s32.totalorder %s89, %s90
    %p102 = scmp.eq.s32.totalorder %s17, 1
    %p103 = por %p101, %p102
    %p105 = scmp.ne.s32.totalorder %s90, %s104
    %p106 = scmp.eq.s32.totalorder %s17, 0
    %p107 = por %p105, %p106
    %s109 = sadd.s32 %s108, 1
    %p112 = scmp.eq.s32.totalorder %s11, 1
    %p113 = scmp.ne.s32.totalorder %s108, %s110
    %p114 = scmp.eq.s32.totalorder %s11, 0
    %p115 = por %p113, %p114
    %p116 = scmp.ne.s32.totalorder %s108, %s110
    %p117 = scmp.eq.s32.totalorder %s16, 1
    %p118 = por %p116, %p117
    %p119 = scmp.ne.s32.totalorder %s110, %s111
    %p120 = scmp.eq.s32.totalorder %s16, 0
    %p121 = por %p119, %p120
    %p122 = scmp.ne.s32.totalorder %s110, %s111
    %p123 = scmp.eq.s32.totalorder %s17, 1
    %p124 = por %p122, %p123
    %p126 = scmp.ne.s32.totalorder %s111, %s125
    %p127 = scmp.eq.s32.totalorder %s17, 0
    %p128 = por %p126, %p127
    %s129 = ssub.s32 %s11, %s18
    %p130 = scmp.eq.s32.totalorder %s129, 0
    %s132 = sadd.s32 %s131, 1
    %s133 = scalar_select %p130, %s131, %s132
    %p136 = pneg %p130
    %p137 = scmp.eq.s32.totalorder %s11, 1
    %p138 = por %p136, %p137
    %p139 = scmp.ne.s32.totalorder %s131, %s134
    %p140 = scmp.eq.s32.totalorder %s11, 0
    %p141 = por %p139, %p140
    %p142 = scmp.ne.s32.totalorder %s131, %s134
    %p143 = scmp.eq.s32.totalorder %s16, 1
    %p144 = por %p142, %p143
    %p145 = scmp.ne.s32.totalorder %s134, %s135
    %p146 = scmp.eq.s32.totalorder %s16, 0
    %p147 = por %p145, %p146
    %p148 = scmp.ne.s32.totalorder %s134, %s135
    %p149 = scmp.eq.s32.totalorder %s17, 1
    %p150 = por %p148, %p149
    %p152 = scmp.ne.s32.totalorder %s135, %s151
    %p153 = scmp.eq.s32.totalorder %s17, 0
    %p154 = por %p152, %p153
    %p155 = scmp.le.s32.totalorder 1, %s11
    %p156 = scmp.lt.s32.totalorder %s11, 3
    %p157 = pnand %p155, %p156
    %p158 = pneg %p157
    // Predicated region
    $region9: #{tpu_custom_call.1} parent=5 // pred_check
      _
    $region10: #{tpu_custom_call.1} parent=5 // pred_check_branch
      %160 = sbr.rel (%p157) target = $region12
    $region11: #{tpu_custom_call.1} parent=5 // pred_region
      %s161 = ssub.s32 %s11, 1
      // Predicated region
      $region13: #{tpu_custom_call.1} parent=11 // pred_check
        %p162 = pneg %p58
      $region14: #{tpu_custom_call.1} parent=11 // pred_check_branch
        %164 = sbr.rel (%p162) target = $region16
      $region15: #{tpu_custom_call.1} parent=11 // pred_region
        _
      $region16: #{tpu_custom_call.1} parent=11 // pred_fallthru
        _
      // Predicated region
      $region17: #{tpu_custom_call.1} parent=11 // pred_check
        %p165 = pneg %p79
      $region18: #{tpu_custom_call.1} parent=11 // pred_check_branch
        %167 = sbr.rel (%p165) target = $region20
      $region19: #{tpu_custom_call.1} parent=11 // pred_region
        _
      $region20: #{tpu_custom_call.1} parent=11 // pred_fallthru
        _
      // Predicated region
      $region21: #{tpu_custom_call.1} parent=11 // pred_check
        %p168 = pneg %p100
      $region22: #{tpu_custom_call.1} parent=11 // pred_check_branch
        %170 = sbr.rel (%p168) target = $region24
      $region23: #{tpu_custom_call.1} parent=11 // pred_region
        _
      $region24: #{tpu_custom_call.1} parent=11 // pred_fallthru
        _
      // Predicated region
      $region25: #{tpu_custom_call.1} parent=11 // pred_check
        %p171 = pneg %p121
      $region26: #{tpu_custom_call.1} parent=11 // pred_check_branch
        %173 = sbr.rel (%p171) target = $region28
      $region27: #{tpu_custom_call.1} parent=11 // pred_region
        _
      $region28: #{tpu_custom_call.1} parent=11 // pred_fallthru
        _
    $region12: #{tpu_custom_call.1} parent=5 // pred_fallthru
      _
    %p174 = scmp.lt.s32.totalorder %s11, 2
    // Predicated region
    $region29: #{tpu_custom_call.1} parent=5 // pred_check
      %p175 = pneg %p174
    $region30: #{tpu_custom_call.1} parent=5 // pred_check_branch
      %177 = sbr.rel (%p175) target = $region32
    $region31: #{tpu_custom_call.1} parent=5 // pred_region
      // Predicated region
      $region33: #{tpu_custom_call.1} parent=31 // pred_check
        %p178 = pneg %p31
      $region34: #{tpu_custom_call.1} parent=31 // pred_check_branch
        %180 = sbr.rel (%p178) target = $region36
      $region35: #{tpu_custom_call.1} parent=31 // pred_region
        %p181 = scmp.lt.s32.totalorder %s11, 1
        %s182 = scalar_select %p181, %s11, 1
        %s183 = smul.addr %s182, 32
        %s184 = smul.addr %s183, 8
        %s185 = scalar_lea.vmem %s0, %s184
      $region36: #{tpu_custom_call.1} parent=31 // pred_fallthru
        _
    $region32: #{tpu_custom_call.1} parent=5 // pred_fallthru
      _
    %p186 = scmp.le.s32.totalorder 1, %s11
    %p187 = scmp.lt.s32.totalorder %s11, 3
    %p188 = pnand %p186, %p187
    %p189 = pneg %p188
    // Predicated region
    $region37: #{tpu_custom_call.1} parent=5 // pred_check
      _
    $region38: #{tpu_custom_call.1} parent=5 // pred_check_branch
      %191 = sbr.rel (%p188) target = $region40
    $region39: #{tpu_custom_call.1} parent=5 // pred_region
      %s192 = ssub.s32 %s11, 1
      %p193 = scmp.lt.s32.totalorder %s16, 1
      %s194 = scalar_select %p193, %s16, 1
      %s195 = smul.addr %s194, 32
      %s196 = smul.addr %s195, 8
      %s197 = scalar_lea.vmem %s0, %s196
      %p198 = pneg %p37
      %p199 = pneg %p34
      %p200 = pneg %p58
      %p201 = pneg %p55
      %p202 = pneg %p79
      %p203 = pneg %p76
      %p204 = pneg %p100
      %p205 = pneg %p97
      %p206 = pneg %p121
      %p207 = pneg %p118
      %p208 = pneg %p147
      %p209 = pneg %p144
      %p210 = scmp.lt.s32.totalorder %s16, 1
      %s211 = scalar_select %p210, %s16, 1
      %s212 = smul.addr %s211, 32
      %s213 = smul.addr %s212, 8
      %s214 = scalar_lea.vmem %s5, %s213
      %p215 = scmp.lt.s32.totalorder %s16, 1
      %s216 = scalar_select %p215, %s16, 1
      %s217 = smul.addr %s216, 32
      %s218 = smul.addr %s217, 8
      %s219 = scalar_lea.vmem %s0, %s218
      %p220 = scmp.lt.s32.totalorder %s16, 1
      %s221 = scalar_select %p220, %s16, 1
      %s222 = smul.addr %s221, 32
      %s223 = smul.addr %s222, 8
      %s224 = scalar_lea.vmem %s5, %s223
      %vm226 = vcmask 31744
      %227 = vst.msk [vmem:[#allocation2] sm:$0xff] %vm226, 0.0
      %228 = vst.msk [vmem:[#allocation2 + $0x8] sm:$0xff] %vm226, 0.0
      %229 = vst.msk [vmem:[#allocation2 + $0x10] sm:$0xff] %vm226, 0.0
      %230 = vst.msk [vmem:[#allocation2 + $0x18] sm:$0xff] %vm226, 0.0
      %231 = vst.msk [vmem:[#allocation2 + $0x20] sm:$0xff] %vm226, 0.0
      %232 = vst.msk [vmem:[#allocation2 + $0x28] sm:$0xff] %vm226, 0.0
      %233 = vst.msk [vmem:[#allocation2 + $0x30] sm:$0xff] %vm226, 0.0
      %234 = vst.msk [vmem:[#allocation2 + $0x38] sm:$0xff] %vm226, 0.0
      %235 = vst.msk [vmem:[#allocation2 + $0x40] sm:$0xff] %vm226, 0.0
      %236 = vst.msk [vmem:[#allocation2 + $0x48] sm:$0xff] %vm226, 0.0
      %237 = vst.msk [vmem:[#allocation2 + $0x50] sm:$0xff] %vm226, 0.0
      %238 = vst.msk [vmem:[#allocation2 + $0x58] sm:$0xff] %vm226, 0.0
      %239 = vst.msk [vmem:[#allocation2 + $0x60] sm:$0xff] %vm226, 0.0
      %240 = vst.msk [vmem:[#allocation2 + $0x68] sm:$0xff] %vm226, 0.0
      %241 = vst.msk [vmem:[#allocation2 + $0x70] sm:$0xff] %vm226, 0.0
      %242 = vst.msk [vmem:[#allocation2 + $0x78] sm:$0xff] %vm226, 0.0
      %243 = vst.msk [vmem:[#allocation2 + $0x80] sm:$0xff] %vm226, 0.0
      %244 = vst.msk [vmem:[#allocation2 + $0x88] sm:$0xff] %vm226, 0.0
      %245 = vst.msk [vmem:[#allocation2 + $0x90] sm:$0xff] %vm226, 0.0
      %246 = vst.msk [vmem:[#allocation2 + $0x98] sm:$0xff] %vm226, 0.0
      %247 = vst.msk [vmem:[#allocation2 + $0xa0] sm:$0xff] %vm226, 0.0
      %248 = vst.msk [vmem:[#allocation2 + $0xa8] sm:$0xff] %vm226, 0.0
      %249 = vst.msk [vmem:[#allocation2 + $0xb0] sm:$0xff] %vm226, 0.0
      %250 = vst.msk [vmem:[#allocation2 + $0xb8] sm:$0xff] %vm226, 0.0
      %251 = vst.msk [vmem:[#allocation2 + $0xc0] sm:$0xff] %vm226, 0.0
      %252 = vst.msk [vmem:[#allocation2 + $0xc8] sm:$0xff] %vm226, 0.0
      %253 = vst.msk [vmem:[#allocation2 + $0xd0] sm:$0xff] %vm226, 0.0
      %254 = vst.msk [vmem:[#allocation2 + $0xd8] sm:$0xff] %vm226, 0.0
      %255 = vst.msk [vmem:[#allocation2 + $0xe0] sm:$0xff] %vm226, 0.0
      %256 = vst.msk [vmem:[#allocation2 + $0xe8] sm:$0xff] %vm226, 0.0
      %257 = vst.msk [vmem:[#allocation2 + $0xf0] sm:$0xff] %vm226, 0.0
      %258 = vst.msk [vmem:[#allocation2 + $0xf8] sm:$0xff] %vm226, 0.0
      %259 = vst.msk [vmem:[#allocation2 + $0x100] sm:$0xff] %vm226, 0.0
      %260 = vst.msk [vmem:[#allocation2 + $0x108] sm:$0xff] %vm226, 0.0
      %261 = vst.msk [vmem:[#allocation2 + $0x110] sm:$0xff] %vm226, 0.0
      %262 = vst.msk [vmem:[#allocation2 + $0x118] sm:$0xff] %vm226, 0.0
      %263 = vst.msk [vmem:[#allocation2 + $0x120] sm:$0xff] %vm226, 0.0
      %264 = vst.msk [vmem:[#allocation2 + $0x128] sm:$0xff] %vm226, 0.0
      %265 = vst.msk [vmem:[#allocation2 + $0x130] sm:$0xff] %vm226, 0.0
      %266 = vst.msk [vmem:[#allocation2 + $0x138] sm:$0xff] %vm226, 0.0
      %267 = vst.msk [vmem:[#allocation2 + $0x140] sm:$0xff] %vm226, 0.0
      %268 = vst.msk [vmem:[#allocation2 + $0x148] sm:$0xff] %vm226, 0.0
      %269 = vst.msk [vmem:[#allocation2 + $0x150] sm:$0xff] %vm226, 0.0
      %270 = vst.msk [vmem:[#allocation2 + $0x158] sm:$0xff] %vm226, 0.0
      %271 = vst.msk [vmem:[#allocation2 + $0x160] sm:$0xff] %vm226, 0.0
      %272 = vst.msk [vmem:[#allocation2 + $0x168] sm:$0xff] %vm226, 0.0
      %273 = vst.msk [vmem:[#allocation2 + $0x170] sm:$0xff] %vm226, 0.0
      %274 = vst.msk [vmem:[#allocation2 + $0x178] sm:$0xff] %vm226, 0.0
      %275 = vst.msk [vmem:[#allocation2 + $0x180] sm:$0xff] %vm226, 0.0
      %276 = vst.msk [vmem:[#allocation2 + $0x188] sm:$0xff] %vm226, 0.0
      %277 = vst.msk [vmem:[#allocation2 + $0x190] sm:$0xff] %vm226, 0.0
      %278 = vst.msk [vmem:[#allocation2 + $0x198] sm:$0xff] %vm226, 0.0
      %279 = vst.msk [vmem:[#allocation2 + $0x1a0] sm:$0xff] %vm226, 0.0
      %280 = vst.msk [vmem:[#allocation2 + $0x1a8] sm:$0xff] %vm226, 0.0
      %v281 = vld [vmem:[%s219] sm:$0xff]
      %v282 = vld [vmem:[%s219 + $0x8] sm:$0xff]
      %v283 = vld [vmem:[%s219 + $0x10] sm:$0xff]
      %v284 = vld [vmem:[%s219 + $0x18] sm:$0xff]
      %v285 = vld [vmem:[%s219 + $0x20] sm:$0xff]
      %v286 = vld [vmem:[%s219 + $0x28] sm:$0xff]
      %v287 = vld [vmem:[%s219 + $0x30] sm:$0xff]
      %v288 = vld [vmem:[%s219 + $0x38] sm:$0xff]
      %v289 = vld [vmem:[%s219 + $0x40] sm:$0xff]
      %v290 = vld [vmem:[%s219 + $0x48] sm:$0xff]
      %v291 = vld [vmem:[%s219 + $0x50] sm:$0xff]
      %v292 = vld [vmem:[%s219 + $0x58] sm:$0xff]
      %v293 = vld [vmem:[%s219 + $0x60] sm:$0xff]
      %v294 = vld [vmem:[%s219 + $0x68] sm:$0xff]
      %v295 = vld [vmem:[%s219 + $0x70] sm:$0xff]
      %v296 = vld [vmem:[%s219 + $0x78] sm:$0xff]
      %v297 = vld [vmem:[%s219 + $0x80] sm:$0xff]
      %v298 = vld [vmem:[%s219 + $0x88] sm:$0xff]
      %v299 = vld [vmem:[%s219 + $0x90] sm:$0xff]
      %v300 = vld [vmem:[%s219 + $0x98] sm:$0xff]
      %v301 = vld [vmem:[%s219 + $0xa0] sm:$0xff]
      %v302 = vld [vmem:[%s219 + $0xa8] sm:$0xff]
      %v303 = vld [vmem:[%s219 + $0xb0] sm:$0xff]
      %v304 = vld [vmem:[%s219 + $0xb8] sm:$0xff]
      %v305 = vld [vmem:[%s219 + $0xc0] sm:$0xff]
      %v306 = vld [vmem:[%s219 + $0xc8] sm:$0xff]
      %v307 = vld [vmem:[%s219 + $0xd0] sm:$0xff]
      %v308 = vld [vmem:[%s219 + $0xd8] sm:$0xff]
      %v309 = vld [vmem:[%s219 + $0xe0] sm:$0xff]
      %v310 = vld [vmem:[%s219 + $0xe8] sm:$0xff]
      %v311 = vld [vmem:[%s219 + $0xf0] sm:$0xff]
      %v312 = vld [vmem:[%s219 + $0xf8] sm:$0xff]
      %s313 = scalar_lea.vmem [#allocation2], 24
      %314 = vst.msk [vmem:[%s313 + $0x1] sm:$0xff] %vm226, %v281
      %315 = vst.msk [vmem:[%s313 + $0x9] sm:$0xff] %vm226, %v282
      %316 = vst.msk [vmem:[%s313 + $0x19] sm:$0xff] %vm226, %v283
      %317 = vst.msk [vmem:[%s313 + $0x21] sm:$0xff] %vm226, %v284
      %318 = vst.msk [vmem:[%s313 + $0x31] sm:$0xff] %vm226, %v285
      %319 = vst.msk [vmem:[%s313 + $0x39] sm:$0xff] %vm226, %v286
      %320 = vst.msk [vmem:[%s313 + $0x49] sm:$0xff] %vm226, %v287
      %321 = vst.msk [vmem:[%s313 + $0x51] sm:$0xff] %vm226, %v288
      %322 = vst.msk [vmem:[%s313 + $0x61] sm:$0xff] %vm226, %v289
      %323 = vst.msk [vmem:[%s313 + $0x69] sm:$0xff] %vm226, %v290
      %324 = vst.msk [vmem:[%s313 + $0x79] sm:$0xff] %vm226, %v291
      %325 = vst.msk [vmem:[%s313 + $0x81] sm:$0xff] %vm226, %v292
      %326 = vst.msk [vmem:[%s313 + $0x91] sm:$0xff] %vm226, %v293
      %327 = vst.msk [vmem:[%s313 + $0x99] sm:$0xff] %vm226, %v294
      %328 = vst.msk [vmem:[%s313 + $0xa9] sm:$0xff] %vm226, %v295
      %329 = vst.msk [vmem:[%s313 + $0xb1] sm:$0xff] %vm226, %v296
      %330 = vst.msk [vmem:[%s313 + $0xc1] sm:$0xff] %vm226, %v297
      %331 = vst.msk [vmem:[%s313 + $0xc9] sm:$0xff] %vm226, %v298
      %332 = vst.msk [vmem:[%s313 + $0xd9] sm:$0xff] %vm226, %v299
      %333 = vst.msk [vmem:[%s313 + $0xe1] sm:$0xff] %vm226, %v300
      %334 = vst.msk [vmem:[%s313 + $0xf1] sm:$0xff] %vm226, %v301
      %335 = vst.msk [vmem:[%s313 + $0xf9] sm:$0xff] %vm226, %v302
      %336 = vst.msk [vmem:[%s313 + $0x109] sm:$0xff] %vm226, %v303
      %337 = vst.msk [vmem:[%s313 + $0x111] sm:$0xff] %vm226, %v304
      %338 = vst.msk [vmem:[%s313 + $0x121] sm:$0xff] %vm226, %v305
      %339 = vst.msk [vmem:[%s313 + $0x129] sm:$0xff] %vm226, %v306
      %340 = vst.msk [vmem:[%s313 + $0x139] sm:$0xff] %vm226, %v307
      %341 = vst.msk [vmem:[%s313 + $0x141] sm:$0xff] %vm226, %v308
      %342 = vst.msk [vmem:[%s313 + $0x151] sm:$0xff] %vm226, %v309
      %343 = vst.msk [vmem:[%s313 + $0x159] sm:$0xff] %vm226, %v310
      %344 = vst.msk [vmem:[%s313 + $0x169] sm:$0xff] %vm226, %v311
      %345 = vst.msk [vmem:[%s313 + $0x171] sm:$0xff] %vm226, %v312
      %346 = vst [vmem:[#allocation3] sm:$0xff] 0.0
      %347 = vst [vmem:[#allocation3 + $0x8] sm:$0xff] 0.0
      %348 = vst [vmem:[#allocation3 + $0x10] sm:$0xff] 0.0
      %s349 = scalar_lea.vmem [#allocation3], 408
      %350 = vst [vmem:[%s349] sm:$0xff] 0.0
      %351 = vst [vmem:[%s349 + $0x8] sm:$0xff] 0.0
      %352 = vst [vmem:[%s349 + $0x10] sm:$0xff] 0.0
      %353 = vst [vmem:[#allocation3] sm:$0x1] 0.0
      %354 = vst [vmem:[#allocation3 + $0x18] sm:$0x1] 0.0
      %355 = vst [vmem:[#allocation3 + $0x30] sm:$0x1] 0.0
      %356 = vst [vmem:[#allocation3 + $0x48] sm:$0x1] 0.0
      %357 = vst [vmem:[#allocation3 + $0x60] sm:$0x1] 0.0
      %358 = vst [vmem:[#allocation3 + $0x78] sm:$0x1] 0.0
      %359 = vst [vmem:[#allocation3 + $0x90] sm:$0x1] 0.0
      %360 = vst [vmem:[#allocation3 + $0xa8] sm:$0x1] 0.0
      %361 = vst [vmem:[#allocation3 + $0xc0] sm:$0x1] 0.0
      %362 = vst [vmem:[#allocation3 + $0xd8] sm:$0x1] 0.0
      %363 = vst [vmem:[#allocation3 + $0xf0] sm:$0x1] 0.0
      %364 = vst [vmem:[#allocation3 + $0x108] sm:$0x1] 0.0
      %365 = vst [vmem:[#allocation3 + $0x120] sm:$0x1] 0.0
      %366 = vst [vmem:[#allocation3 + $0x138] sm:$0x1] 0.0
      %367 = vst [vmem:[#allocation3 + $0x150] sm:$0x1] 0.0
      %368 = vst [vmem:[#allocation3 + $0x168] sm:$0x1] 0.0
      %369 = vst [vmem:[#allocation3 + $0x180] sm:$0x1] 0.0
      %370 = vst [vmem:[#allocation3 + $0x198] sm:$0x1] 0.0
      %371 = vst [vmem:[#allocation3 + $0x11] sm:$0x1] 0.0
      %372 = vst [vmem:[#allocation3 + $0x29] sm:$0x1] 0.0
      %373 = vst [vmem:[#allocation3 + $0x41] sm:$0x1] 0.0
      %374 = vst [vmem:[#allocation3 + $0x59] sm:$0x1] 0.0
      %375 = vst [vmem:[#allocation3 + $0x71] sm:$0x1] 0.0
      %376 = vst [vmem:[#allocation3 + $0x89] sm:$0x1] 0.0
      %377 = vst [vmem:[#allocation3 + $0xa1] sm:$0x1] 0.0
      %378 = vst [vmem:[#allocation3 + $0xb9] sm:$0x1] 0.0
      %379 = vst [vmem:[#allocation3 + $0xd1] sm:$0x1] 0.0
      %380 = vst [vmem:[#allocation3 + $0xe9] sm:$0x1] 0.0
      %381 = vst [vmem:[#allocation3 + $0x101] sm:$0x1] 0.0
      %382 = vst [vmem:[#allocation3 + $0x119] sm:$0x1] 0.0
      %383 = vst [vmem:[#allocation3 + $0x131] sm:$0x1] 0.0
      %384 = vst [vmem:[#allocation3 + $0x149] sm:$0x1] 0.0
      %385 = vst [vmem:[#allocation3 + $0x161] sm:$0x1] 0.0
      %386 = vst [vmem:[#allocation3 + $0x179] sm:$0x1] 0.0
      %387 = vst [vmem:[#allocation3 + $0x191] sm:$0x1] 0.0
      %388 = vst [vmem:[#allocation3 + $0x1a9] sm:$0x1] 0.0
      %v389 = vld [vmem:[#allocation2] sm:$0xff]
      %v390 = vld [vmem:[#allocation2 + $0x8] sm:$0xff]
      %v391 = vld [vmem:[#allocation2 + $0x18] sm:$0xff]
      %v392 = vld [vmem:[#allocation2 + $0x20] sm:$0xff]
      %v393 = vld [vmem:[#allocation2 + $0x30] sm:$0xff]
      %v394 = vld [vmem:[#allocation2 + $0x38] sm:$0xff]
      %v395 = vld [vmem:[#allocation2 + $0x48] sm:$0xff]
      %v396 = vld [vmem:[#allocation2 + $0x50] sm:$0xff]
      %v397 = vld [vmem:[#allocation2 + $0x60] sm:$0xff]
      %v398 = vld [vmem:[#allocation2 + $0x68] sm:$0xff]
      %v399 = vld [vmem:[#allocation2 + $0x78] sm:$0xff]
      %v400 = vld [vmem:[#allocation2 + $0x80] sm:$0xff]
      %v401 = vld [vmem:[#allocation2 + $0x90] sm:$0xff]
      %v402 = vld [vmem:[#allocation2 + $0x98] sm:$0xff]
      %v403 = vld [vmem:[#allocation2 + $0xa8] sm:$0xff]
      %v404 = vld [vmem:[#allocation2 + $0xb0] sm:$0xff]
      %v405 = vld [vmem:[#allocation2 + $0xc0] sm:$0xff]
      %v406 = vld [vmem:[#allocation2 + $0xc8] sm:$0xff]
      %v407 = vld [vmem:[#allocation2 + $0xd8] sm:$0xff]
      %v408 = vld [vmem:[#allocation2 + $0xe0] sm:$0xff]
      %v409 = vld [vmem:[#allocation2 + $0xf0] sm:$0xff]
      %v410 = vld [vmem:[#allocation2 + $0xf8] sm:$0xff]
      %v411 = vld [vmem:[#allocation2 + $0x108] sm:$0xff]
      %v412 = vld [vmem:[#allocation2 + $0x110] sm:$0xff]
      %v413 = vld [vmem:[#allocation2 + $0x120] sm:$0xff]
      %v414 = vld [vmem:[#allocation2 + $0x128] sm:$0xff]
      %v415 = vld [vmem:[#allocation2 + $0x138] sm:$0xff]
      %v416 = vld [vmem:[#allocation2 + $0x140] sm:$0xff]
      %v417 = vld [vmem:[#allocation2 + $0x150] sm:$0xff]
      %v418 = vld [vmem:[#allocation2 + $0x158] sm:$0xff]
      %v419 = vld [vmem:[#allocation2 + $0x168] sm:$0xff]
      %v420 = vld [vmem:[#allocation2 + $0x170] sm:$0xff]
      %v421 = vld [vmem:[%s1] sm:$0xf]
      %v422 = vld [vmem:[#allocation2 + $0x1] sm:$0xff]
      %v423 = vld [vmem:[#allocation2 + $0x9] sm:$0xff]
      %v424 = vld [vmem:[#allocation2 + $0x19] sm:$0xff]
      %v425 = vld [vmem:[#allocation2 + $0x21] sm:$0xff]
      %v426 = vld [vmem:[#allocation2 + $0x31] sm:$0xff]
      %v427 = vld [vmem:[#allocation2 + $0x39] sm:$0xff]
      %v428 = vld [vmem:[#allocation2 + $0x49] sm:$0xff]
      %v429 = vld [vmem:[#allocation2 + $0x51] sm:$0xff]
      %v430 = vld [vmem:[#allocation2 + $0x61] sm:$0xff]
      %v431 = vld [vmem:[#allocation2 + $0x69] sm:$0xff]
      %v432 = vld [vmem:[#allocation2 + $0x79] sm:$0xff]
      %v433 = vld [vmem:[#allocation2 + $0x81] sm:$0xff]
      %v434 = vld [vmem:[#allocation2 + $0x91] sm:$0xff]
      %v435 = vld [vmem:[#allocation2 + $0x99] sm:$0xff]
      %v436 = vld [vmem:[#allocation2 + $0xa9] sm:$0xff]
      %v437 = vld [vmem:[#allocation2 + $0xb1] sm:$0xff]
      %v438 = vld [vmem:[#allocation2 + $0xc1] sm:$0xff]
      %v439 = vld [vmem:[#allocation2 + $0xc9] sm:$0xff]
      %v440 = vld [vmem:[#allocation2 + $0xd9] sm:$0xff]
      %v441 = vld [vmem:[#allocation2 + $0xe1] sm:$0xff]
      %v442 = vld [vmem:[#allocation2 + $0xf1] sm:$0xff]
      %v443 = vld [vmem:[#allocation2 + $0xf9] sm:$0xff]
      %v444 = vld [vmem:[#allocation2 + $0x109] sm:$0xff]
      %v445 = vld [vmem:[#allocation2 + $0x111] sm:$0xff]
      %v446 = vld [vmem:[#allocation2 + $0x121] sm:$0xff]
      %v447 = vld [vmem:[#allocation2 + $0x129] sm:$0xff]
      %v448 = vld [vmem:[#allocation2 + $0x139] sm:$0xff]
      %v449 = vld [vmem:[#allocation2 + $0x141] sm:$0xff]
      %v450 = vld [vmem:[#allocation2 + $0x151] sm:$0xff]
      %v451 = vld [vmem:[#allocation2 + $0x159] sm:$0xff]
      %v452 = vld [vmem:[#allocation2 + $0x169] sm:$0xff]
      %v453 = vld [vmem:[#allocation2 + $0x171] sm:$0xff]
      %s454 = scalar_lea.vmem %s1, 4
      %v455 = vld [vmem:[%s454] sm:$0xf]
      %v457 = vsel %vm226, %v422, 0
      %v460 = vsel %vm226, %v423, 0
      %v463 = vsel %vm226, %v424, 0
      %v466 = vsel %vm226, %v425, 0
      %v469 = vsel %vm226, %v426, 0
      %v472 = vsel %vm226, %v427, 0
      %v475 = vsel %vm226, %v428, 0
      %v478 = vsel %vm226, %v429, 0
      %v481 = vsel %vm226, %v430, 0
      %v484 = vsel %vm226, %v431, 0
      %v487 = vsel %vm226, %v432, 0
      %v490 = vsel %vm226, %v433, 0
      %v493 = vsel %vm226, %v434, 0
      %v496 = vsel %vm226, %v435, 0
      %v499 = vsel %vm226, %v436, 0
      %v502 = vsel %vm226, %v437, 0
      %v505 = vsel %vm226, %v438, 0
      %v508 = vsel %vm226, %v439, 0
      %v511 = vsel %vm226, %v440, 0
      %v514 = vsel %vm226, %v441, 0
      %v517 = vsel %vm226, %v442, 0
      %v520 = vsel %vm226, %v443, 0
      %v523 = vsel %vm226, %v444, 0
      %v526 = vsel %vm226, %v445, 0
      %v529 = vsel %vm226, %v446, 0
      %v532 = vsel %vm226, %v447, 0
      %v535 = vsel %vm226, %v448, 0
      %v538 = vsel %vm226, %v449, 0
      %v541 = vsel %vm226, %v450, 0
      %v544 = vsel %vm226, %v451, 0
      %v547 = vsel %vm226, %v452, 0
      %v550 = vsel %vm226, %v453, 0
      %vm552 = vcmask 1043456
      %v554 = vsel %vm552, %v455, 0
      %556 = vmatprep.subr.mxu0 0.0
      %557 = vmatpush1.msra.mxu0 %v554
      %558 = vmatprep.subr.mxu0 0.0
      %559 = vmatpush1.msra.mxu0 0.0
      %560 = vmatprep.subr.mxu0 0.0
      %561 = vmatpush1.msra.mxu0 0.0
      %562 = vmatprep.subr.mxu0 0.0
      %563 = vmatpush1.msra.mxu0 0.0
      %564 = vmatprep.subr.mxu0 0.0
      %565 = vmatpush1.msra.mxu0 0.0
      %566 = vmatprep.subr.mxu0 0.0
      %567 = vmatpush1.msra.mxu0 0.0
      %568 = vmatprep.subr.mxu0 0.0
      %569 = vmatpush1.msra.mxu0 0.0
      %570 = vmatprep.subr.mxu0 0.0
      %571 = vmatpush1.msra.mxu0 0.0
      %572 = vmatprep.subr.mxu0 0.0
      %573 = vmatpush1.msra.mxu0 0.0
      %574 = vmatprep.subr.mxu0 0.0
      %575 = vmatpush1.msra.mxu0 0.0
      %576 = vmatprep.subr.mxu0 0.0
      %577 = vmatpush1.msra.mxu0 0.0
      %578 = vmatprep.subr.mxu0 0.0
      %579 = vmatpush1.msra.mxu0 0.0
      %580 = vmatprep.subr.mxu0 0.0
      %581 = vmatpush1.msra.mxu0 0.0
      %582 = vmatprep.subr.mxu0 0.0
      %583 = vmatpush1.msra.mxu0 0.0
      %584 = vmatprep.subr.mxu0 0.0
      %585 = vmatpush1.msra.mxu0 0.0
      %586 = vmatprep.subr.mxu0 0.0
      %587 = vmatpush1.msra.mxu0 0.0
      %588 = vmatprep.subr.mxu0 0.0
      %589 = vmatpush1.msra.mxu0 0.0
      %590 = vmatprep.subr.mxu0 0.0
      %591 = vmatpush1.msra.mxu0 0.0
      %592 = vmatprep.subr.mxu0 0.0
      %593 = vmatpush1.msra.mxu0 0.0
      %594 = vmatprep.subr.mxu0 0.0
      %595 = vmatpush1.msra.mxu0 0.0
      %596 = vmatprep.subr.mxu0 0.0
      %597 = vmatpush1.msra.mxu0 0.0
      %598 = vmatprep.subr.mxu0 0.0
      %599 = vmatpush1.msra.mxu0 0.0
      %600 = vmatprep.subr.mxu0 0.0
      %601 = vmatpush1.msra.mxu0 0.0
      %602 = vmatprep.subr.mxu0 0.0
      %603 = vmatpush1.msra.mxu0 0.0
      %604 = vmatprep.subr.mxu0 0.0
      %605 = vmatpush1.msra.mxu0 0.0
      %606 = vmatprep.subr.mxu0 0.0
      %607 = vmatpush1.msra.mxu0 0.0
      %608 = vmatprep.subr.mxu0 0.0
      %609 = vmatpush1.msra.mxu0 0.0
      %610 = vmatprep.subr.mxu0 0.0
      %611 = vmatpush1.msra.mxu0 0.0
      %612 = vmatprep.subr.mxu0 0.0
      %613 = vmatpush1.msra.mxu0 0.0
      %614 = vmatprep.subr.mxu0 0.0
      %615 = vmatpush1.msra.mxu0 0.0
      %616 = vmatprep.subr.mxu0 0.0
      %617 = vmatpush1.msra.mxu0 0.0
      %618 = vmatprep.subr.mxu0 0.0
      %619 = vmatpush1.msra.mxu0 0.0
      %620 = vmatprep.mubr.f32.mxu0 0.0
      %621 = vmatmul.mubr.f32.gmra.mrb[0].mxu0 %v457
      %v622 = vpop.f32.mrb[0].mxu0
      %v623 = vadd.f32 0.0, %v622
      %v624 = vpop.f32.mrb[0].mxu0
      %625 = vmatprep.mubr.f32.mxu0 0.0
      %626 = vmatmul.mubr.f32.gmra.mrb[0].mxu0 %v460
      %v627 = vpop.f32.mrb[0].mxu0
      %v628 = vadd.f32 0.0, %v627
      %v629 = vpop.f32.mrb[0].mxu0
      %630 = vmatprep.mubr.f32.mxu0 0.0
      %631 = vmatmul.mubr.f32.gmra.mrb[0].mxu0 %v463
      %v632 = vpop.f32.mrb[0].mxu0
      %v633 = vadd.f32 0.0, %v632
      %v634 = vpop.f32.mrb[0].mxu0
      %635 = vmatprep.mubr.f32.mxu0 0.0
      %636 = vmatmul.mubr.f32.gmra.mrb[0].mxu0 %v466
      %v637 = vpop.f32.mrb[0].mxu0
      %v638 = vadd.f32 0.0, %v637
      %v639 = vpop.f32.mrb[0].mxu0
      %640 = vmatprep.mubr.f32.mxu0 0.0
      %641 = vmatmul.mubr.f32.gmra.mrb[0].mxu0 %v469
      %v642 = vpop.f32.mrb[0].mxu0
      %v643 = vadd.f32 0.0, %v642
      %v644 = vpop.f32.mrb[0].mxu0
      %645 = vmatprep.mubr.f32.mxu0 0.0
      %646 = vmatmul.mubr.f32.gmra.mrb[0].mxu0 %v472
      %v647 = vpop.f32.mrb[0].mxu0
      %v648 = vadd.f32 0.0, %v647
      %v649 = vpop.f32.mrb[0].mxu0
      %650 = vmatprep.mubr.f32.mxu0 0.0
      %651 = vmatmul.mubr.f32.gmra.mrb[0].mxu0 %v475
      %v652 = vpop.f32.mrb[0].mxu0
      %v653 = vadd.f32 0.0, %v652
      %v654 = vpop.f32.mrb[0].mxu0
      %655 = vmatprep.mubr.f32.mxu0 0.0
      %656 = vmatmul.mubr.f32.gmra.mrb[0].mxu0 %v478
      %v657 = vpop.f32.mrb[0].mxu0
      %v658 = vadd.f32 0.0, %v657
      %v659 = vpop.f32.mrb[0].mxu0
      %660 = vmatprep.mubr.f32.mxu0 0.0
      %661 = vmatmul.mubr.f32.gmra.mrb[0].mxu0 %v481
      %v662 = vpop.f32.mrb[0].mxu0
      %v663 = vadd.f32 0.0, %v662
      %v664 = vpop.f32.mrb[0].mxu0
      %665 = vmatprep.mubr.f32.mxu0 0.0
      %666 = vmatmul.mubr.f32.gmra.mrb[0].mxu0 %v484
      %v667 = vpop.f32.mrb[0].mxu0
      %v668 = vadd.f32 0.0, %v667
      %v669 = vpop.f32.mrb[0].mxu0
      %670 = vmatprep.mubr.f32.mxu0 0.0
      %671 = vmatmul.mubr.f32.gmra.mrb[0].mxu0 %v487
      %v672 = vpop.f32.mrb[0].mxu0
      %v673 = vadd.f32 0.0, %v672
      %v674 = vpop.f32.mrb[0].mxu0
      %675 = vmatprep.mubr.f32.mxu0 0.0
      %676 = vmatmul.mubr.f32.gmra.mrb[0].mxu0 %v490
      %v677 = vpop.f32.mrb[0].mxu0
      %v678 = vadd.f32 0.0, %v677
      %v679 = vpop.f32.mrb[0].mxu0
      %680 = vmatprep.mubr.f32.mxu0 0.0
      %681 = vmatmul.mubr.f32.gmra.mrb[0].mxu0 %v493
      %v682 = vpop.f32.mrb[0].mxu0
      %v683 = vadd.f32 0.0, %v682
      %v684 = vpop.f32.mrb[0].mxu0
      %685 = vmatprep.mubr.f32.mxu0 0.0
      %686 = vmatmul.mubr.f32.gmra.mrb[0].mxu0 %v496
      %v687 = vpop.f32.mrb[0].mxu0
      %v688 = vadd.f32 0.0, %v687
      %v689 = vpop.f32.mrb[0].mxu0
      %690 = vmatprep.mubr.f32.mxu0 0.0
      %691 = vmatmul.mubr.f32.gmra.mrb[0].mxu0 %v499
      %v692 = vpop.f32.mrb[0].mxu0
      %v693 = vadd.f32 0.0, %v692
      %v694 = vpop.f32.mrb[0].mxu0
      %695 = vmatprep.mubr.f32.mxu0 0.0
      %696 = vmatmul.mubr.f32.gmra.mrb[0].mxu0 %v502
      %v697 = vpop.f32.mrb[0].mxu0
      %v698 = vadd.f32 0.0, %v697
      %v699 = vpop.f32.mrb[0].mxu0
      %700 = vmatprep.mubr.f32.mxu0 0.0
      %701 = vmatmul.mubr.f32.gmra.mrb[0].mxu0 %v505
      %v702 = vpop.f32.mrb[0].mxu0
      %v703 = vadd.f32 0.0, %v702
      %v704 = vpop.f32.mrb[0].mxu0
      %705 = vmatprep.mubr.f32.mxu0 0.0
      %706 = vmatmul.mubr.f32.gmra.mrb[0].mxu0 %v508
      %v707 = vpop.f32.mrb[0].mxu0
      %v708 = vadd.f32 0.0, %v707
      %v709 = vpop.f32.mrb[0].mxu0
      %710 = vmatprep.mubr.f32.mxu0 0.0
      %711 = vmatmul.mubr.f32.gmra.mrb[0].mxu0 %v511
      %v712 = vpop.f32.mrb[0].mxu0
      %v713 = vadd.f32 0.0, %v712
      %v714 = vpop.f32.mrb[0].mxu0
      %715 = vmatprep.mubr.f32.mxu0 0.0
      %716 = vmatmul.mubr.f32.gmra.mrb[0].mxu0 %v514
      %v717 = vpop.f32.mrb[0].mxu0
      %v718 = vadd.f32 0.0, %v717
      %v719 = vpop.f32.mrb[0].mxu0
      %720 = vmatprep.mubr.f32.mxu0 0.0
      %721 = vmatmul.mubr.f32.gmra.mrb[0].mxu0 %v517
      %v722 = vpop.f32.mrb[0].mxu0
      %v723 = vadd.f32 0.0, %v722
      %v724 = vpop.f32.mrb[0].mxu0
      %725 = vmatprep.mubr.f32.mxu0 0.0
      %726 = vmatmul.mubr.f32.gmra.mrb[0].mxu0 %v520
      %v727 = vpop.f32.mrb[0].mxu0
      %v728 = vadd.f32 0.0, %v727
      %v729 = vpop.f32.mrb[0].mxu0
      %730 = vmatprep.mubr.f32.mxu0 0.0
      %731 = vmatmul.mubr.f32.gmra.mrb[0].mxu0 %v523
      %v732 = vpop.f32.mrb[0].mxu0
      %v733 = vadd.f32 0.0, %v732
      %v734 = vpop.f32.mrb[0].mxu0
      %735 = vmatprep.mubr.f32.mxu0 0.0
      %736 = vmatmul.mubr.f32.gmra.mrb[0].mxu0 %v526
      %v737 = vpop.f32.mrb[0].mxu0
      %v738 = vadd.f32 0.0, %v737
      %v739 = vpop.f32.mrb[0].mxu0
      %740 = vmatprep.mubr.f32.mxu0 0.0
      %741 = vmatmul.mubr.f32.gmra.mrb[0].mxu0 %v529
      %v742 = vpop.f32.mrb[0].mxu0
      %v743 = vadd.f32 0.0, %v742
      %v744 = vpop.f32.mrb[0].mxu0
      %745 = vmatprep.mubr.f32.mxu0 0.0
      %746 = vmatmul.mubr.f32.gmra.mrb[0].mxu0 %v532
      %v747 = vpop.f32.mrb[0].mxu0
      %v748 = vadd.f32 0.0, %v747
      %v749 = vpop.f32.mrb[0].mxu0
      %750 = vmatprep.mubr.f32.mxu0 0.0
      %751 = vmatmul.mubr.f32.gmra.mrb[0].mxu0 %v535
      %v752 = vpop.f32.mrb[0].mxu0
      %v753 = vadd.f32 0.0, %v752
      %v754 = vpop.f32.mrb[0].mxu0
      %755 = vmatprep.mubr.f32.mxu0 0.0
      %756 = vmatmul.mubr.f32.gmra.mrb[0].mxu0 %v538
      %v757 = vpop.f32.mrb[0].mxu0
      %v758 = vadd.f32 0.0, %v757
      %v759 = vpop.f32.mrb[0].mxu0
      %760 = vmatprep.mubr.f32.mxu0 0.0
      %761 = vmatmul.mubr.f32.gmra.mrb[0].mxu0 %v541
      %v762 = vpop.f32.mrb[0].mxu0
      %v763 = vadd.f32 0.0, %v762
      %v764 = vpop.f32.mrb[0].mxu0
      %765 = vmatprep.mubr.f32.mxu0 0.0
      %766 = vmatmul.mubr.f32.gmra.mrb[0].mxu0 %v544
      %v767 = vpop.f32.mrb[0].mxu0
      %v768 = vadd.f32 0.0, %v767
      %v769 = vpop.f32.mrb[0].mxu0
      %770 = vmatprep.mubr.f32.mxu0 0.0
      %771 = vmatmul.mubr.f32.gmra.mrb[0].mxu0 %v547
      %v772 = vpop.f32.mrb[0].mxu0
      %v773 = vadd.f32 0.0, %v772
      %v774 = vpop.f32.mrb[0].mxu0
      %775 = vmatprep.mubr.f32.mxu0 0.0
      %776 = vmatmul.mubr.f32.gmra.mrb[0].mxu0 %v550
      %v777 = vpop.f32.mrb[0].mxu0
      %v778 = vadd.f32 0.0, %v777
      %v779 = vpop.f32.mrb[0].mxu0
      %780 = vdwg.mxu0
      %v782 = vsel %vm226, %v389, 0
      %v785 = vsel %vm226, %v390, 0
      %v788 = vsel %vm226, %v391, 0
      %v791 = vsel %vm226, %v392, 0
      %v794 = vsel %vm226, %v393, 0
      %v797 = vsel %vm226, %v394, 0
      %v800 = vsel %vm226, %v395, 0
      %v803 = vsel %vm226, %v396, 0
      %v806 = vsel %vm226, %v397, 0
      %v809 = vsel %vm226, %v398, 0
      %v812 = vsel %vm226, %v399, 0
      %v815 = vsel %vm226, %v400, 0
      %v818 = vsel %vm226, %v401, 0
      %v821 = vsel %vm226, %v402, 0
      %v824 = vsel %vm226, %v403, 0
      %v827 = vsel %vm226, %v404, 0
      %v830 = vsel %vm226, %v405, 0
      %v833 = vsel %vm226, %v406, 0
      %v836 = vsel %vm226, %v407, 0
      %v839 = vsel %vm226, %v408, 0
      %v842 = vsel %vm226, %v409, 0
      %v845 = vsel %vm226, %v410, 0
      %v848 = vsel %vm226, %v411, 0
      %v851 = vsel %vm226, %v412, 0
      %v854 = vsel %vm226, %v413, 0
      %v857 = vsel %vm226, %v414, 0
      %v860 = vsel %vm226, %v415, 0
      %v863 = vsel %vm226, %v416, 0
      %v866 = vsel %vm226, %v417, 0
      %v869 = vsel %vm226, %v418, 0
      %v872 = vsel %vm226, %v419, 0
      %v875 = vsel %vm226, %v420, 0
      %v878 = vsel %vm552, %v421, 0
      %880 = vmatprep.subr.mxu0 0.0
      %881 = vmatpush1.msra.mxu0 %v878
      %882 = vmatprep.subr.mxu0 0.0
      %883 = vmatpush1.msra.mxu0 0.0
      %884 = vmatprep.subr.mxu0 0.0
      %885 = vmatpush1.msra.mxu0 0.0
      %886 = vmatprep.subr.mxu0 0.0
      %887 = vmatpush1.msra.mxu0 0.0
      %888 = vmatprep.subr.mxu0 0.0
      %889 = vmatpush1.msra.mxu0 0.0
      %890 = vmatprep.subr.mxu0 0.0
      %891 = vmatpush1.msra.mxu0 0.0
      %892 = vmatprep.subr.mxu0 0.0
      %893 = vmatpush1.msra.mxu0 0.0
      %894 = vmatprep.subr.mxu0 0.0
      %895 = vmatpush1.msra.mxu0 0.0
      %896 = vmatprep.subr.mxu0 0.0
      %897 = vmatpush1.msra.mxu0 0.0
      %898 = vmatprep.subr.mxu0 0.0
      %899 = vmatpush1.msra.mxu0 0.0
      %900 = vmatprep.subr.mxu0 0.0
      %901 = vmatpush1.msra.mxu0 0.0
      %902 = vmatprep.subr.mxu0 0.0
      %903 = vmatpush1.msra.mxu0 0.0
      %904 = vmatprep.subr.mxu0 0.0
      %905 = vmatpush1.msra.mxu0 0.0
      %906 = vmatprep.subr.mxu0 0.0
      %907 = vmatpush1.msra.mxu0 0.0
      %908 = vmatprep.subr.mxu0 0.0
      %909 = vmatpush1.msra.mxu0 0.0
      %910 = vmatprep.subr.mxu0 0.0
      %911 = vmatpush1.msra.mxu0 0.0
      %912 = vmatprep.subr.mxu0 0.0
      %913 = vmatpush1.msra.mxu0 0.0
      %914 = vmatprep.subr.mxu0 0.0
      %915 = vmatpush1.msra.mxu0 0.0
      %916 = vmatprep.subr.mxu0 0.0
      %917 = vmatpush1.msra.mxu0 0.0
      %918 = vmatprep.subr.mxu0 0.0
      %919 = vmatpush1.msra.mxu0 0.0
      %920 = vmatprep.subr.mxu0 0.0
      %921 = vmatpush1.msra.mxu0 0.0
      %922 = vmatprep.subr.mxu0 0.0
      %923 = vmatpush1.msra.mxu0 0.0
      %924 = vmatprep.subr.mxu0 0.0
      %925 = vmatpush1.msra.mxu0 0.0
      %926 = vmatprep.subr.mxu0 0.0
      %927 = vmatpush1.msra.mxu0 0.0
      %928 = vmatprep.subr.mxu0 0.0
      %929 = vmatpush1.msra.mxu0 0.0
      %930 = vmatprep.subr.mxu0 0.0
      %931 = vmatpush1.msra.mxu0 0.0
      %932 = vmatprep.subr.mxu0 0.0
      %933 = vmatpush1.msra.mxu0 0.0
      %934 = vmatprep.subr.mxu0 0.0
      %935 = vmatpush1.msra.mxu0 0.0
      %936 = vmatprep.subr.mxu0 0.0
      %937 = vmatpush1.msra.mxu0 0.0
      %938 = vmatprep.subr.mxu0 0.0
      %939 = vmatpush1.msra.mxu0 0.0
      %940 = vmatprep.subr.mxu0 0.0
      %941 = vmatpush1.msra.mxu0 0.0
      %942 = vmatprep.subr.mxu0 0.0
      %943 = vmatpush1.msra.mxu0 0.0
      %944 = vmatprep.mubr.f32.mxu0 0.0
      %945 = vmatmul.mubr.f32.gmra.mrb[0].mxu0 %v782
      %v946 = vpop.f32.mrb[0].mxu0
      %v947 = vadd.f32 %v623, %v946
      %v948 = vpop.f32.mrb[0].mxu0
      %949 = vmatprep.mubr.f32.mxu0 0.0
      %950 = vmatmul.mubr.f32.gmra.mrb[0].mxu0 %v785
      %v951 = vpop.f32.mrb[0].mxu0
      %v952 = vadd.f32 %v628, %v951
      %v953 = vpop.f32.mrb[0].mxu0
      %954 = vmatprep.mubr.f32.mxu0 0.0
      %955 = vmatmul.mubr.f32.gmra.mrb[0].mxu0 %v788
      %v956 = vpop.f32.mrb[0].mxu0
      %v957 = vadd.f32 %v633, %v956
      %v958 = vpop.f32.mrb[0].mxu0
      %959 = vmatprep.mubr.f32.mxu0 0.0
      %960 = vmatmul.mubr.f32.gmra.mrb[0].mxu0 %v791
      %v961 = vpop.f32.mrb[0].mxu0
      %v962 = vadd.f32 %v638, %v961
      %v963 = vpop.f32.mrb[0].mxu0
      %964 = vmatprep.mubr.f32.mxu0 0.0
      %965 = vmatmul.mubr.f32.gmra.mrb[0].mxu0 %v794
      %v966 = vpop.f32.mrb[0].mxu0
      %v967 = vadd.f32 %v643, %v966
      %v968 = vpop.f32.mrb[0].mxu0
      %969 = vmatprep.mubr.f32.mxu0 0.0
      %970 = vmatmul.mubr.f32.gmra.mrb[0].mxu0 %v797
      %v971 = vpop.f32.mrb[0].mxu0
      %v972 = vadd.f32 %v648, %v971
      %v973 = vpop.f32.mrb[0].mxu0
      %974 = vmatprep.mubr.f32.mxu0 0.0
      %975 = vmatmul.mubr.f32.gmra.mrb[0].mxu0 %v800
      %v976 = vpop.f32.mrb[0].mxu0
      %v977 = vadd.f32 %v653, %v976
      %v978 = vpop.f32.mrb[0].mxu0
      %979 = vmatprep.mubr.f32.mxu0 0.0
      %980 = vmatmul.mubr.f32.gmra.mrb[0].mxu0 %v803
      %v981 = vpop.f32.mrb[0].mxu0
      %v982 = vadd.f32 %v658, %v981
      %v983 = vpop.f32.mrb[0].mxu0
      %984 = vmatprep.mubr.f32.mxu0 0.0
      %985 = vmatmul.mubr.f32.gmra.mrb[0].mxu0 %v806
      %v986 = vpop.f32.mrb[0].mxu0
      %v987 = vadd.f32 %v663, %v986
      %v988 = vpop.f32.mrb[0].mxu0
      %989 = vmatprep.mubr.f32.mxu0 0.0
      %990 = vmatmul.mubr.f32.gmra.mrb[0].mxu0 %v809
      %v991 = vpop.f32.mrb[0].mxu0
      %v992 = vadd.f32 %v668, %v991
      %v993 = vpop.f32.mrb[0].mxu0
      %994 = vmatprep.mubr.f32.mxu0 0.0
      %995 = vmatmul.mubr.f32.gmra.mrb[0].mxu0 %v812
      %v996 = vpop.f32.mrb[0].mxu0
      %v997 = vadd.f32 %v673, %v996
      %v998 = vpop.f32.mrb[0].mxu0
      %999 = vmatprep.mubr.f32.mxu0 0.0
      %1000 = vmatmul.mubr.f32.gmra.mrb[0].mxu0 %v815
      %v1001 = vpop.f32.mrb[0].mxu0
      %v1002 = vadd.f32 %v678, %v1001
      %v1003 = vpop.f32.mrb[0].mxu0
      %1004 = vmatprep.mubr.f32.mxu0 0.0
      %1005 = vmatmul.mubr.f32.gmra.mrb[0].mxu0 %v818
      %v1006 = vpop.f32.mrb[0].mxu0
      %v1007 = vadd.f32 %v683, %v1006
      %v1008 = vpop.f32.mrb[0].mxu0
      %1009 = vmatprep.mubr.f32.mxu0 0.0
      %1010 = vmatmul.mubr.f32.gmra.mrb[0].mxu0 %v821
      %v1011 = vpop.f32.mrb[0].mxu0
      %v1012 = vadd.f32 %v688, %v1011
      %v1013 = vpop.f32.mrb[0].mxu0
      %1014 = vmatprep.mubr.f32.mxu0 0.0
      %1015 = vmatmul.mubr.f32.gmra.mrb[0].mxu0 %v824
      %v1016 = vpop.f32.mrb[0].mxu0
      %v1017 = vadd.f32 %v693, %v1016
      %v1018 = vpop.f32.mrb[0].mxu0
      %1019 = vmatprep.mubr.f32.mxu0 0.0
      %1020 = vmatmul.mubr.f32.gmra.mrb[0].mxu0 %v827
      %v1021 = vpop.f32.mrb[0].mxu0
      %v1022 = vadd.f32 %v698, %v1021
      %v1023 = vpop.f32.mrb[0].mxu0
      %1024 = vmatprep.mubr.f32.mxu0 0.0
      %1025 = vmatmul.mubr.f32.gmra.mrb[0].mxu0 %v830
      %v1026 = vpop.f32.mrb[0].mxu0
      %v1027 = vadd.f32 %v703, %v1026
      %v1028 = vpop.f32.mrb[0].mxu0
      %1029 = vmatprep.mubr.f32.mxu0 0.0
      %1030 = vmatmul.mubr.f32.gmra.mrb[0].mxu0 %v833
      %v1031 = vpop.f32.mrb[0].mxu0
      %v1032 = vadd.f32 %v708, %v1031
      %v1033 = vpop.f32.mrb[0].mxu0
      %1034 = vmatprep.mubr.f32.mxu0 0.0
      %1035 = vmatmul.mubr.f32.gmra.mrb[0].mxu0 %v836
      %v1036 = vpop.f32.mrb[0].mxu0
      %v1037 = vadd.f32 %v713, %v1036
      %v1038 = vpop.f32.mrb[0].mxu0
      %1039 = vmatprep.mubr.f32.mxu0 0.0
      %1040 = vmatmul.mubr.f32.gmra.mrb[0].mxu0 %v839
      %v1041 = vpop.f32.mrb[0].mxu0
      %v1042 = vadd.f32 %v718, %v1041
      %v1043 = vpop.f32.mrb[0].mxu0
      %1044 = vmatprep.mubr.f32.mxu0 0.0
      %1045 = vmatmul.mubr.f32.gmra.mrb[0].mxu0 %v842
      %v1046 = vpop.f32.mrb[0].mxu0
      %v1047 = vadd.f32 %v723, %v1046
      %v1048 = vpop.f32.mrb[0].mxu0
      %1049 = vmatprep.mubr.f32.mxu0 0.0
      %1050 = vmatmul.mubr.f32.gmra.mrb[0].mxu0 %v845
      %v1051 = vpop.f32.mrb[0].mxu0
      %v1052 = vadd.f32 %v728, %v1051
      %v1053 = vpop.f32.mrb[0].mxu0
      %1054 = vmatprep.mubr.f32.mxu0 0.0
      %1055 = vmatmul.mubr.f32.gmra.mrb[0].mxu0 %v848
      %v1056 = vpop.f32.mrb[0].mxu0
      %v1057 = vadd.f32 %v733, %v1056
      %v1058 = vpop.f32.mrb[0].mxu0
      %1059 = vmatprep.mubr.f32.mxu0 0.0
      %1060 = vmatmul.mubr.f32.gmra.mrb[0].mxu0 %v851
      %v1061 = vpop.f32.mrb[0].mxu0
      %v1062 = vadd.f32 %v738, %v1061
      %v1063 = vpop.f32.mrb[0].mxu0
      %1064 = vmatprep.mubr.f32.mxu0 0.0
      %1065 = vmatmul.mubr.f32.gmra.mrb[0].mxu0 %v854
      %v1066 = vpop.f32.mrb[0].mxu0
      %v1067 = vadd.f32 %v743, %v1066
      %v1068 = vpop.f32.mrb[0].mxu0
      %1069 = vmatprep.mubr.f32.mxu0 0.0
      %1070 = vmatmul.mubr.f32.gmra.mrb[0].mxu0 %v857
      %v1071 = vpop.f32.mrb[0].mxu0
      %v1072 = vadd.f32 %v748, %v1071
      %v1073 = vpop.f32.mrb[0].mxu0
      %1074 = vmatprep.mubr.f32.mxu0 0.0
      %1075 = vmatmul.mubr.f32.gmra.mrb[0].mxu0 %v860
      %v1076 = vpop.f32.mrb[0].mxu0
      %v1077 = vadd.f32 %v753, %v1076
      %v1078 = vpop.f32.mrb[0].mxu0
      %1079 = vmatprep.mubr.f32.mxu0 0.0
      %1080 = vmatmul.mubr.f32.gmra.mrb[0].mxu0 %v863
      %v1081 = vpop.f32.mrb[0].mxu0
      %v1082 = vadd.f32 %v758, %v1081
      %v1083 = vpop.f32.mrb[0].mxu0
      %1084 = vmatprep.mubr.f32.mxu0 0.0
      %1085 = vmatmul.mubr.f32.gmra.mrb[0].mxu0 %v866
      %v1086 = vpop.f32.mrb[0].mxu0
      %v1087 = vadd.f32 %v763, %v1086
      %v1088 = vpop.f32.mrb[0].mxu0
      %1089 = vmatprep.mubr.f32.mxu0 0.0
      %1090 = vmatmul.mubr.f32.gmra.mrb[0].mxu0 %v869
      %v1091 = vpop.f32.mrb[0].mxu0
      %v1092 = vadd.f32 %v768, %v1091
      %v1093 = vpop.f32.mrb[0].mxu0
      %1094 = vmatprep.mubr.f32.mxu0 0.0
      %1095 = vmatmul.mubr.f32.gmra.mrb[0].mxu0 %v872
      %v1096 = vpop.f32.mrb[0].mxu0
      %v1097 = vadd.f32 %v773, %v1096
      %v1098 = vpop.f32.mrb[0].mxu0
      %1099 = vmatprep.mubr.f32.mxu0 0.0
      %1100 = vmatmul.mubr.f32.gmra.mrb[0].mxu0 %v875
      %v1101 = vpop.f32.mrb[0].mxu0
      %v1102 = vadd.f32 %v778, %v1101
      %v1103 = vpop.f32.mrb[0].mxu0
      %1104 = vdwg.mxu0
      %v1105 = vld [vmem:[#allocation2 + $0x2] sm:$0xff]
      %v1106 = vld [vmem:[#allocation2 + $0xa] sm:$0xff]
      %v1107 = vld [vmem:[#allocation2 + $0x1a] sm:$0xff]
      %v1108 = vld [vmem:[#allocation2 + $0x22] sm:$0xff]
      %v1109 = vld [vmem:[#allocation2 + $0x32] sm:$0xff]
      %v1110 = vld [vmem:[#allocation2 + $0x3a] sm:$0xff]
      %v1111 = vld [vmem:[#allocation2 + $0x4a] sm:$0xff]
      %v1112 = vld [vmem:[#allocation2 + $0x52] sm:$0xff]
      %v1113 = vld [vmem:[#allocation2 + $0x62] sm:$0xff]
      %v1114 = vld [vmem:[#allocation2 + $0x6a] sm:$0xff]
      %v1115 = vld [vmem:[#allocation2 + $0x7a] sm:$0xff]
      %v1116 = vld [vmem:[#allocation2 + $0x82] sm:$0xff]
      %v1117 = vld [vmem:[#allocation2 + $0x92] sm:$0xff]
      %v1118 = vld [vmem:[#allocation2 + $0x9a] sm:$0xff]
      %v1119 = vld [vmem:[#allocation2 + $0xaa] sm:$0xff]
      %v1120 = vld [vmem:[#allocation2 + $0xb2] sm:$0xff]
      %v1121 = vld [vmem:[#allocation2 + $0xc2] sm:$0xff]
      %v1122 = vld [vmem:[#allocation2 + $0xca] sm:$0xff]
      %v1123 = vld [vmem:[#allocation2 + $0xda] sm:$0xff]
      %v1124 = vld [vmem:[#allocation2 + $0xe2] sm:$0xff]
      %v1125 = vld [vmem:[#allocation2 + $0xf2] sm:$0xff]
      %v1126 = vld [vmem:[#allocation2 + $0xfa] sm:$0xff]
      %v1127 = vld [vmem:[#allocation2 + $0x10a] sm:$0xff]
      %v1128 = vld [vmem:[#allocation2 + $0x112] sm:$0xff]
      %v1129 = vld [vmem:[#allocation2 + $0x122] sm:$0xff]
      %v1130 = vld [vmem:[#allocation2 + $0x12a] sm:$0xff]
      %v1131 = vld [vmem:[#allocation2 + $0x13a] sm:$0xff]
      %v1132 = vld [vmem:[#allocation2 + $0x142] sm:$0xff]
      %v1133 = vld [vmem:[#allocation2 + $0x152] sm:$0xff]
      %v1134 = vld [vmem:[#allocation2 + $0x15a] sm:$0xff]
      %v1135 = vld [vmem:[#allocation2 + $0x16a] sm:$0xff]
      %v1136 = vld [vmem:[#allocation2 + $0x172] sm:$0xff]
      %s1137 = scalar_lea.vmem %s1, 8
      %v1138 = vld [vmem:[%s1137] sm:$0xf]
      %v1140 = vsel %vm226, %v1105, 0
      %v1143 = vsel %vm226, %v1106, 0
      %v1146 = vsel %vm226, %v1107, 0
      %v1149 = vsel %vm226, %v1108, 0
      %v1152 = vsel %vm226, %v1109, 0
      %v1155 = vsel %vm226, %v1110, 0
      %v1158 = vsel %vm226, %v1111, 0
      %v1161 = vsel %vm226, %v1112, 0
      %v1164 = vsel %vm226, %v1113, 0
      %v1167 = vsel %vm226, %v1114, 0
      %v1170 = vsel %vm226, %v1115, 0
      %v1173 = vsel %vm226, %v1116, 0
      %v1176 = vsel %vm226, %v1117, 0
      %v1179 = vsel %vm226, %v1118, 0
      %v1182 = vsel %vm226, %v1119, 0
      %v1185 = vsel %vm226, %v1120, 0
      %v1188 = vsel %vm226, %v1121, 0
      %v1191 = vsel %vm226, %v1122, 0
      %v1194 = vsel %vm226, %v1123, 0
      %v1197 = vsel %vm226, %v1124, 0
      %v1200 = vsel %vm226, %v1125, 0
      %v1203 = vsel %vm226, %v1126, 0
      %v1206 = vsel %vm226, %v1127, 0
      %v1209 = vsel %vm226, %v1128, 0
      %v1212 = vsel %vm226, %v1129, 0
      %v1215 = vsel %vm226, %v1130, 0
      %v1218 = vsel %vm226, %v1131, 0
      %v1221 = vsel %vm226, %v1132, 0
      %v1224 = vsel %vm226, %v1133, 0
      %v1227 = vsel %vm226, %v1134, 0
      %v1230 = vsel %vm226, %v1135, 0
      %v1233 = vsel %vm226, %v1136, 0
      %v1236 = vsel %vm552, %v1138, 0
      %1238 = vmatprep.subr.mxu0 0.0
      %1239 = vmatpush1.msra.mxu0 %v1236
      %1240 = vmatprep.subr.mxu0 0.0
      %1241 = vmatpush1.msra.mxu0 0.0
      %1242 = vmatprep.subr.mxu0 0.0
      %1243 = vmatpush1.msra.mxu0 0.0
      %1244 = vmatprep.subr.mxu0 0.0
      %1245 = vmatpush1.msra.mxu0 0.0
      %1246 = vmatprep.subr.mxu0 0.0
      %1247 = vmatpush1.msra.mxu0 0.0
      %1248 = vmatprep.subr.mxu0 0.0
      %1249 = vmatpush1.msra.mxu0 0.0
      %1250 = vmatprep.subr.mxu0 0.0
      %1251 = vmatpush1.msra.mxu0 0.0
      %1252 = vmatprep.subr.mxu0 0.0
      %1253 = vmatpush1.msra.mxu0 0.0
      %1254 = vmatprep.subr.mxu0 0.0
      %1255 = vmatpush1.msra.mxu0 0.0
      %1256 = vmatprep.subr.mxu0 0.0
      %1257 = vmatpush1.msra.mxu0 0.0
      %1258 = vmatprep.subr.mxu0 0.0
      %1259 = vmatpush1.msra.mxu0 0.0
      %1260 = vmatprep.subr.mxu0 0.0
      %1261 = vmatpush1.msra.mxu0 0.0
      %1262 = vmatprep.subr.mxu0 0.0
      %1263 = vmatpush1.msra.mxu0 0.0
      %1264 = vmatprep.subr.mxu0 0.0
      %1265 = vmatpush1.msra.mxu0 0.0
      %1266 = vmatprep.subr.mxu0 0.0
      %1267 = vmatpush1.msra.mxu0 0.0
      %1268 = vmatprep.subr.mxu0 0.0
      %1269 = vmatpush1.msra.mxu0 0.0
      %1270 = vmatprep.subr.mxu0 0.0
      %1271 = vmatpush1.msra.mxu0 0.0
      %1272 = vmatprep.subr.mxu0 0.0
      %1273 = vmatpush1.msra.mxu0 0.0
      %1274 = vmatprep.subr.mxu0 0.0
      %1275 = vmatpush1.msra.mxu0 0.0
      %1276 = vmatprep.subr.mxu0 0.0
      %1277 = vmatpush1.msra.mxu0 0.0
      %1278 = vmatprep.subr.mxu0 0.0
      %1279 = vmatpush1.msra.mxu0 0.0
      %1280 = vmatprep.subr.mxu0 0.0
      %1281 = vmatpush1.msra.mxu0 0.0
      %1282 = vmatprep.subr.mxu0 0.0
      %1283 = vmatpush1.msra.mxu0 0.0
      %1284 = vmatprep.subr.mxu0 0.0
      %1285 = vmatpush1.msra.mxu0 0.0
      %1286 = vmatprep.subr.mxu0 0.0
      %1287 = vmatpush1.msra.mxu0 0.0
      %1288 = vmatprep.subr.mxu0 0.0
      %1289 = vmatpush1.msra.mxu0 0.0
      %1290 = vmatprep.subr.mxu0 0.0
      %1291 = vmatpush1.msra.mxu0 0.0
      %1292 = vmatprep.subr.mxu0 0.0
      %1293 = vmatpush1.msra.mxu0 0.0
      %1294 = vmatprep.subr.mxu0 0.0
      %1295 = vmatpush1.msra.mxu0 0.0
      %1296 = vmatprep.subr.mxu0 0.0
      %1297 = vmatpush1.msra.mxu0 0.0
      %1298 = vmatprep.subr.mxu0 0.0
      %1299 = vmatpush1.msra.mxu0 0.0
      %1300 = vmatprep.subr.mxu0 0.0
      %1301 = vmatpush1.msra.mxu0 0.0
      %1302 = vmatprep.mubr.f32.mxu0 0.0
      %1303 = vmatmul.mubr.f32.gmra.mrb[0].mxu0 %v1140
      %v1304 = vpop.f32.mrb[0].mxu0
      %v1305 = vadd.f32 0.0, %v1304
      %v1306 = vpop.f32.mrb[0].mxu0
      %1307 = vmatprep.mubr.f32.mxu0 0.0
      %1308 = vmatmul.mubr.f32.gmra.mrb[0].mxu0 %v1143
      %v1309 = vpop.f32.mrb[0].mxu0
      %v1310 = vadd.f32 0.0, %v1309
      %v1311 = vpop.f32.mrb[0].mxu0
      %1312 = vmatprep.mubr.f32.mxu0 0.0
      %1313 = vmatmul.mubr.f32.gmra.mrb[0].mxu0 %v1146
      %v1314 = vpop.f32.mrb[0].mxu0
      %v1315 = vadd.f32 0.0, %v1314
      %v1316 = vpop.f32.mrb[0].mxu0
      %1317 = vmatprep.mubr.f32.mxu0 0.0
      %1318 = vmatmul.mubr.f32.gmra.mrb[0].mxu0 %v1149
      %v1319 = vpop.f32.mrb[0].mxu0
      %v1320 = vadd.f32 0.0, %v1319
      %v1321 = vpop.f32.mrb[0].mxu0
      %1322 = vmatprep.mubr.f32.mxu0 0.0
      %1323 = vmatmul.mubr.f32.gmra.mrb[0].mxu0 %v1152
      %v1324 = vpop.f32.mrb[0].mxu0
      %v1325 = vadd.f32 0.0, %v1324
      %v1326 = vpop.f32.mrb[0].mxu0
      %1327 = vmatprep.mubr.f32.mxu0 0.0
      %1328 = vmatmul.mubr.f32.gmra.mrb[0].mxu0 %v1155
      %v1329 = vpop.f32.mrb[0].mxu0
      %v1330 = vadd.f32 0.0, %v1329
      %v1331 = vpop.f32.mrb[0].mxu0
      %1332 = vmatprep.mubr.f32.mxu0 0.0
      %1333 = vmatmul.mubr.f32.gmra.mrb[0].mxu0 %v1158
      %v1334 = vpop.f32.mrb[0].mxu0
      %v1335 = vadd.f32 0.0, %v1334
      %v1336 = vpop.f32.mrb[0].mxu0
      %1337 = vmatprep.mubr.f32.mxu0 0.0
      %1338 = vmatmul.mubr.f32.gmra.mrb[0].mxu0 %v1161
      %v1339 = vpop.f32.mrb[0].mxu0
      %v1340 = vadd.f32 0.0, %v1339
      %v1341 = vpop.f32.mrb[0].mxu0
      %1342 = vmatprep.mubr.f32.mxu0 0.0
      %1343 = vmatmul.mubr.f32.gmra.mrb[0].mxu0 %v1164
      %v1344 = vpop.f32.mrb[0].mxu0
      %v1345 = vadd.f32 0.0, %v1344
      %v1346 = vpop.f32.mrb[0].mxu0
      %1347 = vmatprep.mubr.f32.mxu0 0.0
      %1348 = vmatmul.mubr.f32.gmra.mrb[0].mxu0 %v1167
      %v1349 = vpop.f32.mrb[0].mxu0
      %v1350 = vadd.f32 0.0, %v1349
      %v1351 = vpop.f32.mrb[0].mxu0
      %1352 = vmatprep.mubr.f32.mxu0 0.0
      %1353 = vmatmul.mubr.f32.gmra.mrb[0].mxu0 %v1170
      %v1354 = vpop.f32.mrb[0].mxu0
      %v1355 = vadd.f32 0.0, %v1354
      %v1356 = vpop.f32.mrb[0].mxu0
      %1357 = vmatprep.mubr.f32.mxu0 0.0
      %1358 = vmatmul.mubr.f32.gmra.mrb[0].mxu0 %v1173
      %v1359 = vpop.f32.mrb[0].mxu0
      %v1360 = vadd.f32 0.0, %v1359
      %v1361 = vpop.f32.mrb[0].mxu0
      %1362 = vmatprep.mubr.f32.mxu0 0.0
      %1363 = vmatmul.mubr.f32.gmra.mrb[0].mxu0 %v1176
      %v1364 = vpop.f32.mrb[0].mxu0
      %v1365 = vadd.f32 0.0, %v1364
      %v1366 = vpop.f32.mrb[0].mxu0
      %1367 = vmatprep.mubr.f32.mxu0 0.0
      %1368 = vmatmul.mubr.f32.gmra.mrb[0].mxu0 %v1179
      %v1369 = vpop.f32.mrb[0].mxu0
      %v1370 = vadd.f32 0.0, %v1369
      %v1371 = vpop.f32.mrb[0].mxu0
      %1372 = vmatprep.mubr.f32.mxu0 0.0
      %1373 = vmatmul.mubr.f32.gmra.mrb[0].mxu0 %v1182
      %v1374 = vpop.f32.mrb[0].mxu0
      %v1375 = vadd.f32 0.0, %v1374
      %v1376 = vpop.f32.mrb[0].mxu0
      %1377 = vmatprep.mubr.f32.mxu0 0.0
      %1378 = vmatmul.mubr.f32.gmra.mrb[0].mxu0 %v1185
      %v1379 = vpop.f32.mrb[0].mxu0
      %v1380 = vadd.f32 0.0, %v1379
      %v1381 = vpop.f32.mrb[0].mxu0
      %1382 = vmatprep.mubr.f32.mxu0 0.0
      %1383 = vmatmul.mubr.f32.gmra.mrb[0].mxu0 %v1188
      %v1384 = vpop.f32.mrb[0].mxu0
      %v1385 = vadd.f32 0.0, %v1384
      %v1386 = vpop.f32.mrb[0].mxu0
      %1387 = vmatprep.mubr.f32.mxu0 0.0
      %1388 = vmatmul.mubr.f32.gmra.mrb[0].mxu0 %v1191
      %v1389 = vpop.f32.mrb[0].mxu0
      %v1390 = vadd.f32 0.0, %v1389
      %v1391 = vpop.f32.mrb[0].mxu0
      %1392 = vmatprep.mubr.f32.mxu0 0.0
      %1393 = vmatmul.mubr.f32.gmra.mrb[0].mxu0 %v1194
      %v1394 = vpop.f32.mrb[0].mxu0
      %v1395 = vadd.f32 0.0, %v1394
      %v1396 = vpop.f32.mrb[0].mxu0
      %1397 = vmatprep.mubr.f32.mxu0 0.0
      %1398 = vmatmul.mubr.f32.gmra.mrb[0].mxu0 %v1197
      %v1399 = vpop.f32.mrb[0].mxu0
      %v1400 = vadd.f32 0.0, %v1399
      %v1401 = vpop.f32.mrb[0].mxu0
      %1402 = vmatprep.mubr.f32.mxu0 0.0
      %1403 = vmatmul.mubr.f32.gmra.mrb[0].mxu0 %v1200
      %v1404 = vpop.f32.mrb[0].mxu0
      %v1405 = vadd.f32 0.0, %v1404
      %v1406 = vpop.f32.mrb[0].mxu0
      %1407 = vmatprep.mubr.f32.mxu0 0.0
      %1408 = vmatmul.mubr.f32.gmra.mrb[0].mxu0 %v1203
      %v1409 = vpop.f32.mrb[0].mxu0
      %v1410 = vadd.f32 0.0, %v1409
      %v1411 = vpop.f32.mrb[0].mxu0
      %1412 = vmatprep.mubr.f32.mxu0 0.0
      %1413 = vmatmul.mubr.f32.gmra.mrb[0].mxu0 %v1206
      %v1414 = vpop.f32.mrb[0].mxu0
      %v1415 = vadd.f32 0.0, %v1414
      %v1416 = vpop.f32.mrb[0].mxu0
      %1417 = vmatprep.mubr.f32.mxu0 0.0
      %1418 = vmatmul.mubr.f32.gmra.mrb[0].mxu0 %v1209
      %v1419 = vpop.f32.mrb[0].mxu0
      %v1420 = vadd.f32 0.0, %v1419
      %v1421 = vpop.f32.mrb[0].mxu0
      %1422 = vmatprep.mubr.f32.mxu0 0.0
      %1423 = vmatmul.mubr.f32.gmra.mrb[0].mxu0 %v1212
      %v1424 = vpop.f32.mrb[0].mxu0
      %v1425 = vadd.f32 0.0, %v1424
      %v1426 = vpop.f32.mrb[0].mxu0
      %1427 = vmatprep.mubr.f32.mxu0 0.0
      %1428 = vmatmul.mubr.f32.gmra.mrb[0].mxu0 %v1215
      %v1429 = vpop.f32.mrb[0].mxu0
      %v1430 = vadd.f32 0.0, %v1429
      %v1431 = vpop.f32.mrb[0].mxu0
      %1432 = vmatprep.mubr.f32.mxu0 0.0
      %1433 = vmatmul.mubr.f32.gmra.mrb[0].mxu0 %v1218
      %v1434 = vpop.f32.mrb[0].mxu0
      %v1435 = vadd.f32 0.0, %v1434
      %v1436 = vpop.f32.mrb[0].mxu0
      %1437 = vmatprep.mubr.f32.mxu0 0.0
      %1438 = vmatmul.mubr.f32.gmra.mrb[0].mxu0 %v1221
      %v1439 = vpop.f32.mrb[0].mxu0
      %v1440 = vadd.f32 0.0, %v1439
      %v1441 = vpop.f32.mrb[0].mxu0
      %1442 = vmatprep.mubr.f32.mxu0 0.0
      %1443 = vmatmul.mubr.f32.gmra.mrb[0].mxu0 %v1224
      %v1444 = vpop.f32.mrb[0].mxu0
      %v1445 = vadd.f32 0.0, %v1444
      %v1446 = vpop.f32.mrb[0].mxu0
      %1447 = vmatprep.mubr.f32.mxu0 0.0
      %1448 = vmatmul.mubr.f32.gmra.mrb[0].mxu0 %v1227
      %v1449 = vpop.f32.mrb[0].mxu0
      %v1450 = vadd.f32 0.0, %v1449
      %v1451 = vpop.f32.mrb[0].mxu0
      %1452 = vmatprep.mubr.f32.mxu0 0.0
      %1453 = vmatmul.mubr.f32.gmra.mrb[0].mxu0 %v1230
      %v1454 = vpop.f32.mrb[0].mxu0
      %v1455 = vadd.f32 0.0, %v1454
      %v1456 = vpop.f32.mrb[0].mxu0
      %1457 = vmatprep.mubr.f32.mxu0 0.0
      %1458 = vmatmul.mubr.f32.gmra.mrb[0].mxu0 %v1233
      %v1459 = vpop.f32.mrb[0].mxu0
      %v1460 = vadd.f32 0.0, %v1459
      %v1461 = vpop.f32.mrb[0].mxu0
      %1462 = vdwg.mxu0
      %v1463 = vadd.f32 %v947, %v1305
      %v1464 = vadd.f32 %v952, %v1310
      %v1465 = vadd.f32 %v957, %v1315
      %v1466 = vadd.f32 %v962, %v1320
      %v1467 = vadd.f32 %v967, %v1325
      %v1468 = vadd.f32 %v972, %v1330
      %v1469 = vadd.f32 %v977, %v1335
      %v1470 = vadd.f32 %v982, %v1340
      %v1471 = vadd.f32 %v987, %v1345
      %v1472 = vadd.f32 %v992, %v1350
      %v1473 = vadd.f32 %v997, %v1355
      %v1474 = vadd.f32 %v1002, %v1360
      %v1475 = vadd.f32 %v1007, %v1365
      %v1476 = vadd.f32 %v1012, %v1370
      %v1477 = vadd.f32 %v1017, %v1375
      %v1478 = vadd.f32 %v1022, %v1380
      %v1479 = vadd.f32 %v1027, %v1385
      %v1480 = vadd.f32 %v1032, %v1390
      %v1481 = vadd.f32 %v1037, %v1395
      %v1482 = vadd.f32 %v1042, %v1400
      %v1483 = vadd.f32 %v1047, %v1405
      %v1484 = vadd.f32 %v1052, %v1410
      %v1485 = vadd.f32 %v1057, %v1415
      %v1486 = vadd.f32 %v1062, %v1420
      %v1487 = vadd.f32 %v1067, %v1425
      %v1488 = vadd.f32 %v1072, %v1430
      %v1489 = vadd.f32 %v1077, %v1435
      %v1490 = vadd.f32 %v1082, %v1440
      %v1491 = vadd.f32 %v1087, %v1445
      %v1492 = vadd.f32 %v1092, %v1450
      %v1493 = vadd.f32 %v1097, %v1455
      %v1494 = vadd.f32 %v1102, %v1460
      %v1495 = vld [vmem:[%s313] sm:$0xff]
      %v1496 = vld [vmem:[%s313 + $0x8] sm:$0xff]
      %v1497 = vld [vmem:[%s313 + $0x18] sm:$0xff]
      %v1498 = vld [vmem:[%s313 + $0x20] sm:$0xff]
      %v1499 = vld [vmem:[%s313 + $0x30] sm:$0xff]
      %v1500 = vld [vmem:[%s313 + $0x38] sm:$0xff]
      %v1501 = vld [vmem:[%s313 + $0x48] sm:$0xff]
      %v1502 = vld [vmem:[%s313 + $0x50] sm:$0xff]
      %v1503 = vld [vmem:[%s313 + $0x60] sm:$0xff]
      %v1504 = vld [vmem:[%s313 + $0x68] sm:$0xff]
      %v1505 = vld [vmem:[%s313 + $0x78] sm:$0xff]
      %v1506 = vld [vmem:[%s313 + $0x80] sm:$0xff]
      %v1507 = vld [vmem:[%s313 + $0x90] sm:$0xff]
      %v1508 = vld [vmem:[%s313 + $0x98] sm:$0xff]
      %v1509 = vld [vmem:[%s313 + $0xa8] sm:$0xff]
      %v1510 = vld [vmem:[%s313 + $0xb0] sm:$0xff]
      %v1511 = vld [vmem:[%s313 + $0xc0] sm:$0xff]
      %v1512 = vld [vmem:[%s313 + $0xc8] sm:$0xff]
      %v1513 = vld [vmem:[%s313 + $0xd8] sm:$0xff]
      %v1514 = vld [vmem:[%s313 + $0xe0] sm:$0xff]
      %v1515 = vld [vmem:[%s313 + $0xf0] sm:$0xff]
      %v1516 = vld [vmem:[%s313 + $0xf8] sm:$0xff]
      %v1517 = vld [vmem:[%s313 + $0x108] sm:$0xff]
      %v1518 = vld [vmem:[%s313 + $0x110] sm:$0xff]
      %v1519 = vld [vmem:[%s313 + $0x120] sm:$0xff]
      %v1520 = vld [vmem:[%s313 + $0x128] sm:$0xff]
      %v1521 = vld [vmem:[%s313 + $0x138] sm:$0xff]
      %v1522 = vld [vmem:[%s313 + $0x140] sm:$0xff]
      %v1523 = vld [vmem:[%s313 + $0x150] sm:$0xff]
      %v1524 = vld [vmem:[%s313 + $0x158] sm:$0xff]
      %v1525 = vld [vmem:[%s313 + $0x168] sm:$0xff]
      %v1526 = vld [vmem:[%s313 + $0x170] sm:$0xff]
      %s1527 = scalar_lea.vmem %s1, 12
      %v1528 = vld [vmem:[%s1527] sm:$0xf]
      %v1530 = vsel %vm226, %v1495, 0
      %v1533 = vsel %vm226, %v1496, 0
      %v1536 = vsel %vm226, %v1497, 0
      %v1539 = vsel %vm226, %v1498, 0
      %v1542 = vsel %vm226, %v1499, 0
      %v1545 = vsel %vm226, %v1500, 0
      %v1548 = vsel %vm226, %v1501, 0
      %v1551 = vsel %vm226, %v1502, 0
      %v1554 = vsel %vm226, %v1503, 0
      %v1557 = vsel %vm226, %v1504, 0
      %v1560 = vsel %vm226, %v1505, 0
      %v1563 = vsel %vm226, %v1506, 0
      %v1566 = vsel %vm226, %v1507, 0
      %v1569 = vsel %vm226, %v1508, 0
      %v1572 = vsel %vm226, %v1509, 0
      %v1575 = vsel %vm226, %v1510, 0
      %v1578 = vsel %vm226, %v1511, 0
      %v1581 = vsel %vm226, %v1512, 0
      %v1584 = vsel %vm226, %v1513, 0
      %v1587 = vsel %vm226, %v1514, 0
      %v1590 = vsel %vm226, %v1515, 0
      %v1593 = vsel %vm226, %v1516, 0
      %v1596 = vsel %vm226, %v1517, 0
      %v1599 = vsel %vm226, %v1518, 0
      %v1602 = vsel %vm226, %v1519, 0
      %v1605 = vsel %vm226, %v1520, 0
      %v1608 = vsel %vm226, %v1521, 0
      %v1611 = vsel %vm226, %v1522, 0
      %v1614 = vsel %vm226, %v1523, 0
      %v1617 = vsel %vm226, %v1524, 0
      %v1620 = vsel %vm226, %v1525, 0
      %v1623 = vsel %vm226, %v1526, 0
      %v1626 = vsel %vm552, %v1528, 0
      %1628 = vmatprep.subr.mxu0 0.0
      %1629 = vmatpush1.msra.mxu0 %v1626
      %1630 = vmatprep.subr.mxu0 0.0
      %1631 = vmatpush1.msra.mxu0 0.0
      %1632 = vmatprep.subr.mxu0 0.0
      %1633 = vmatpush1.msra.mxu0 0.0
      %1634 = vmatprep.subr.mxu0 0.0
      %1635 = vmatpush1.msra.mxu0 0.0
      %1636 = vmatprep.subr.mxu0 0.0
      %1637 = vmatpush1.msra.mxu0 0.0
      %1638 = vmatprep.subr.mxu0 0.0
      %1639 = vmatpush1.msra.mxu0 0.0
      %1640 = vmatprep.subr.mxu0 0.0
      %1641 = vmatpush1.msra.mxu0 0.0
      %1642 = vmatprep.subr.mxu0 0.0
      %1643 = vmatpush1.msra.mxu0 0.0
      %1644 = vmatprep.subr.mxu0 0.0
      %1645 = vmatpush1.msra.mxu0 0.0
      %1646 = vmatprep.subr.mxu0 0.0
      %1647 = vmatpush1.msra.mxu0 0.0
      %1648 = vmatprep.subr.mxu0 0.0
      %1649 = vmatpush1.msra.mxu0 0.0
      %1650 = vmatprep.subr.mxu0 0.0
      %1651 = vmatpush1.msra.mxu0 0.0
      %1652 = vmatprep.subr.mxu0 0.0
      %1653 = vmatpush1.msra.mxu0 0.0
      %1654 = vmatprep.subr.mxu0 0.0
      %1655 = vmatpush1.msra.mxu0 0.0
      %1656 = vmatprep.subr.mxu0 0.0
      %1657 = vmatpush1.msra.mxu0 0.0
      %1658 = vmatprep.subr.mxu0 0.0
      %1659 = vmatpush1.msra.mxu0 0.0
      %1660 = vmatprep.subr.mxu0 0.0
      %1661 = vmatpush1.msra.mxu0 0.0
      %1662 = vmatprep.subr.mxu0 0.0
      %1663 = vmatpush1.msra.mxu0 0.0
      %1664 = vmatprep.subr.mxu0 0.0
      %1665 = vmatpush1.msra.mxu0 0.0
      %1666 = vmatprep.subr.mxu0 0.0
      %1667 = vmatpush1.msra.mxu0 0.0
      %1668 = vmatprep.subr.mxu0 0.0
      %1669 = vmatpush1.msra.mxu0 0.0
      %1670 = vmatprep.subr.mxu0 0.0
      %1671 = vmatpush1.msra.mxu0 0.0
      %1672 = vmatprep.subr.mxu0 0.0
      %1673 = vmatpush1.msra.mxu0 0.0
      %1674 = vmatprep.subr.mxu0 0.0
      %1675 = vmatpush1.msra.mxu0 0.0
      %1676 = vmatprep.subr.mxu0 0.0
      %1677 = vmatpush1.msra.mxu0 0.0
      %1678 = vmatprep.subr.mxu0 0.0
      %1679 = vmatpush1.msra.mxu0 0.0
      %1680 = vmatprep.subr.mxu0 0.0
      %1681 = vmatpush1.msra.mxu0 0.0
      %1682 = vmatprep.subr.mxu0 0.0
      %1683 = vmatpush1.msra.mxu0 0.0
      %1684 = vmatprep.subr.mxu0 0.0
      %1685 = vmatpush1.msra.mxu0 0.0
      %1686 = vmatprep.subr.mxu0 0.0
      %1687 = vmatpush1.msra.mxu0 0.0
      %1688 = vmatprep.subr.mxu0 0.0
      %1689 = vmatpush1.msra.mxu0 0.0
      %1690 = vmatprep.subr.mxu0 0.0
      %1691 = vmatpush1.msra.mxu0 0.0
      %1692 = vmatprep.mubr.f32.mxu0 0.0
      %1693 = vmatmul.mubr.f32.gmra.mrb[0].mxu0 %v1530
      %v1694 = vpop.f32.mrb[0].mxu0
      %v1695 = vadd.f32 0.0, %v1694
      %v1696 = vpop.f32.mrb[0].mxu0
      %1697 = vmatprep.mubr.f32.mxu0 0.0
      %1698 = vmatmul.mubr.f32.gmra.mrb[0].mxu0 %v1533
      %v1699 = vpop.f32.mrb[0].mxu0
      %v1700 = vadd.f32 0.0, %v1699
      %v1701 = vpop.f32.mrb[0].mxu0
      %1702 = vmatprep.mubr.f32.mxu0 0.0
      %1703 = vmatmul.mubr.f32.gmra.mrb[0].mxu0 %v1536
      %v1704 = vpop.f32.mrb[0].mxu0
      %v1705 = vadd.f32 0.0, %v1704
      %v1706 = vpop.f32.mrb[0].mxu0
      %1707 = vmatprep.mubr.f32.mxu0 0.0
      %1708 = vmatmul.mubr.f32.gmra.mrb[0].mxu0 %v1539
      %v1709 = vpop.f32.mrb[0].mxu0
      %v1710 = vadd.f32 0.0, %v1709
      %v1711 = vpop.f32.mrb[0].mxu0
      %1712 = vmatprep.mubr.f32.mxu0 0.0
      %1713 = vmatmul.mubr.f32.gmra.mrb[0].mxu0 %v1542
      %v1714 = vpop.f32.mrb[0].mxu0
      %v1715 = vadd.f32 0.0, %v1714
      %v1716 = vpop.f32.mrb[0].mxu0
      %1717 = vmatprep.mubr.f32.mxu0 0.0
      %1718 = vmatmul.mubr.f32.gmra.mrb[0].mxu0 %v1545
      %v1719 = vpop.f32.mrb[0].mxu0
      %v1720 = vadd.f32 0.0, %v1719
      %v1721 = vpop.f32.mrb[0].mxu0
      %1722 = vmatprep.mubr.f32.mxu0 0.0
      %1723 = vmatmul.mubr.f32.gmra.mrb[0].mxu0 %v1548
      %v1724 = vpop.f32.mrb[0].mxu0
      %v1725 = vadd.f32 0.0, %v1724
      %v1726 = vpop.f32.mrb[0].mxu0
      %1727 = vmatprep.mubr.f32.mxu0 0.0
      %1728 = vmatmul.mubr.f32.gmra.mrb[0].mxu0 %v1551
      %v1729 = vpop.f32.mrb[0].mxu0
      %v1730 = vadd.f32 0.0, %v1729
      %v1731 = vpop.f32.mrb[0].mxu0
      %1732 = vmatprep.mubr.f32.mxu0 0.0
      %1733 = vmatmul.mubr.f32.gmra.mrb[0].mxu0 %v1554
      %v1734 = vpop.f32.mrb[0].mxu0
      %v1735 = vadd.f32 0.0, %v1734
      %v1736 = vpop.f32.mrb[0].mxu0
      %1737 = vmatprep.mubr.f32.mxu0 0.0
      %1738 = vmatmul.mubr.f32.gmra.mrb[0].mxu0 %v1557
      %v1739 = vpop.f32.mrb[0].mxu0
      %v1740 = vadd.f32 0.0, %v1739
      %v1741 = vpop.f32.mrb[0].mxu0
      %1742 = vmatprep.mubr.f32.mxu0 0.0
      %1743 = vmatmul.mubr.f32.gmra.mrb[0].mxu0 %v1560
      %v1744 = vpop.f32.mrb[0].mxu0
      %v1745 = vadd.f32 0.0, %v1744
      %v1746 = vpop.f32.mrb[0].mxu0
      %1747 = vmatprep.mubr.f32.mxu0 0.0
      %1748 = vmatmul.mubr.f32.gmra.mrb[0].mxu0 %v1563
      %v1749 = vpop.f32.mrb[0].mxu0
      %v1750 = vadd.f32 0.0, %v1749
      %v1751 = vpop.f32.mrb[0].mxu0
      %1752 = vmatprep.mubr.f32.mxu0 0.0
      %1753 = vmatmul.mubr.f32.gmra.mrb[0].mxu0 %v1566
      %v1754 = vpop.f32.mrb[0].mxu0
      %v1755 = vadd.f32 0.0, %v1754
      %v1756 = vpop.f32.mrb[0].mxu0
      %1757 = vmatprep.mubr.f32.mxu0 0.0
      %1758 = vmatmul.mubr.f32.gmra.mrb[0].mxu0 %v1569
      %v1759 = vpop.f32.mrb[0].mxu0
      %v1760 = vadd.f32 0.0, %v1759
      %v1761 = vpop.f32.mrb[0].mxu0
      %1762 = vmatprep.mubr.f32.mxu0 0.0
      %1763 = vmatmul.mubr.f32.gmra.mrb[0].mxu0 %v1572
      %v1764 = vpop.f32.mrb[0].mxu0
      %v1765 = vadd.f32 0.0, %v1764
      %v1766 = vpop.f32.mrb[0].mxu0
      %1767 = vmatprep.mubr.f32.mxu0 0.0
      %1768 = vmatmul.mubr.f32.gmra.mrb[0].mxu0 %v1575
      %v1769 = vpop.f32.mrb[0].mxu0
      %v1770 = vadd.f32 0.0, %v1769
      %v1771 = vpop.f32.mrb[0].mxu0
      %1772 = vmatprep.mubr.f32.mxu0 0.0
      %1773 = vmatmul.mubr.f32.gmra.mrb[0].mxu0 %v1578
      %v1774 = vpop.f32.mrb[0].mxu0
      %v1775 = vadd.f32 0.0, %v1774
      %v1776 = vpop.f32.mrb[0].mxu0
      %1777 = vmatprep.mubr.f32.mxu0 0.0
      %1778 = vmatmul.mubr.f32.gmra.mrb[0].mxu0 %v1581
      %v1779 = vpop.f32.mrb[0].mxu0
      %v1780 = vadd.f32 0.0, %v1779
      %v1781 = vpop.f32.mrb[0].mxu0
      %1782 = vmatprep.mubr.f32.mxu0 0.0
      %1783 = vmatmul.mubr.f32.gmra.mrb[0].mxu0 %v1584
      %v1784 = vpop.f32.mrb[0].mxu0
      %v1785 = vadd.f32 0.0, %v1784
      %v1786 = vpop.f32.mrb[0].mxu0
      %1787 = vmatprep.mubr.f32.mxu0 0.0
      %1788 = vmatmul.mubr.f32.gmra.mrb[0].mxu0 %v1587
      %v1789 = vpop.f32.mrb[0].mxu0
      %v1790 = vadd.f32 0.0, %v1789
      %v1791 = vpop.f32.mrb[0].mxu0
      %1792 = vmatprep.mubr.f32.mxu0 0.0
      %1793 = vmatmul.mubr.f32.gmra.mrb[0].mxu0 %v1590
      %v1794 = vpop.f32.mrb[0].mxu0
      %v1795 = vadd.f32 0.0, %v1794
      %v1796 = vpop.f32.mrb[0].mxu0
      %1797 = vmatprep.mubr.f32.mxu0 0.0
      %1798 = vmatmul.mubr.f32.gmra.mrb[0].mxu0 %v1593
      %v1799 = vpop.f32.mrb[0].mxu0
      %v1800 = vadd.f32 0.0, %v1799
      %v1801 = vpop.f32.mrb[0].mxu0
      %1802 = vmatprep.mubr.f32.mxu0 0.0
      %1803 = vmatmul.mubr.f32.gmra.mrb[0].mxu0 %v1596
      %v1804 = vpop.f32.mrb[0].mxu0
      %v1805 = vadd.f32 0.0, %v1804
      %v1806 = vpop.f32.mrb[0].mxu0
      %1807 = vmatprep.mubr.f32.mxu0 0.0
      %1808 = vmatmul.mubr.f32.gmra.mrb[0].mxu0 %v1599
      %v1809 = vpop.f32.mrb[0].mxu0
      %v1810 = vadd.f32 0.0, %v1809
      %v1811 = vpop.f32.mrb[0].mxu0
      %1812 = vmatprep.mubr.f32.mxu0 0.0
      %1813 = vmatmul.mubr.f32.gmra.mrb[0].mxu0 %v1602
      %v1814 = vpop.f32.mrb[0].mxu0
      %v1815 = vadd.f32 0.0, %v1814
      %v1816 = vpop.f32.mrb[0].mxu0
      %1817 = vmatprep.mubr.f32.mxu0 0.0
      %1818 = vmatmul.mubr.f32.gmra.mrb[0].mxu0 %v1605
      %v1819 = vpop.f32.mrb[0].mxu0
      %v1820 = vadd.f32 0.0, %v1819
      %v1821 = vpop.f32.mrb[0].mxu0
      %1822 = vmatprep.mubr.f32.mxu0 0.0
      %1823 = vmatmul.mubr.f32.gmra.mrb[0].mxu0 %v1608
      %v1824 = vpop.f32.mrb[0].mxu0
      %v1825 = vadd.f32 0.0, %v1824
      %v1826 = vpop.f32.mrb[0].mxu0
      %1827 = vmatprep.mubr.f32.mxu0 0.0
      %1828 = vmatmul.mubr.f32.gmra.mrb[0].mxu0 %v1611
      %v1829 = vpop.f32.mrb[0].mxu0
      %v1830 = vadd.f32 0.0, %v1829
      %v1831 = vpop.f32.mrb[0].mxu0
      %1832 = vmatprep.mubr.f32.mxu0 0.0
      %1833 = vmatmul.mubr.f32.gmra.mrb[0].mxu0 %v1614
      %v1834 = vpop.f32.mrb[0].mxu0
      %v1835 = vadd.f32 0.0, %v1834
      %v1836 = vpop.f32.mrb[0].mxu0
      %1837 = vmatprep.mubr.f32.mxu0 0.0
      %1838 = vmatmul.mubr.f32.gmra.mrb[0].mxu0 %v1617
      %v1839 = vpop.f32.mrb[0].mxu0
      %v1840 = vadd.f32 0.0, %v1839
      %v1841 = vpop.f32.mrb[0].mxu0
      %1842 = vmatprep.mubr.f32.mxu0 0.0
      %1843 = vmatmul.mubr.f32.gmra.mrb[0].mxu0 %v1620
      %v1844 = vpop.f32.mrb[0].mxu0
      %v1845 = vadd.f32 0.0, %v1844
      %v1846 = vpop.f32.mrb[0].mxu0
      %1847 = vmatprep.mubr.f32.mxu0 0.0
      %1848 = vmatmul.mubr.f32.gmra.mrb[0].mxu0 %v1623
      %v1849 = vpop.f32.mrb[0].mxu0
      %v1850 = vadd.f32 0.0, %v1849
      %v1851 = vpop.f32.mrb[0].mxu0
      %1852 = vdwg.mxu0
      %v1853 = vadd.f32 %v1463, %v1695
      %v1854 = vadd.f32 %v1464, %v1700
      %v1855 = vadd.f32 %v1465, %v1705
      %v1856 = vadd.f32 %v1466, %v1710
      %v1857 = vadd.f32 %v1467, %v1715
      %v1858 = vadd.f32 %v1468, %v1720
      %v1859 = vadd.f32 %v1469, %v1725
      %v1860 = vadd.f32 %v1470, %v1730
      %v1861 = vadd.f32 %v1471, %v1735
      %v1862 = vadd.f32 %v1472, %v1740
      %v1863 = vadd.f32 %v1473, %v1745
      %v1864 = vadd.f32 %v1474, %v1750
      %v1865 = vadd.f32 %v1475, %v1755
      %v1866 = vadd.f32 %v1476, %v1760
      %v1867 = vadd.f32 %v1477, %v1765
      %v1868 = vadd.f32 %v1478, %v1770
      %v1869 = vadd.f32 %v1479, %v1775
      %v1870 = vadd.f32 %v1480, %v1780
      %v1871 = vadd.f32 %v1481, %v1785
      %v1872 = vadd.f32 %v1482, %v1790
      %v1873 = vadd.f32 %v1483, %v1795
      %v1874 = vadd.f32 %v1484, %v1800
      %v1875 = vadd.f32 %v1485, %v1805
      %v1876 = vadd.f32 %v1486, %v1810
      %v1877 = vadd.f32 %v1487, %v1815
      %v1878 = vadd.f32 %v1488, %v1820
      %v1879 = vadd.f32 %v1489, %v1825
      %v1880 = vadd.f32 %v1490, %v1830
      %v1881 = vadd.f32 %v1491, %v1835
      %v1882 = vadd.f32 %v1492, %v1840
      %v1883 = vadd.f32 %v1493, %v1845
      %v1884 = vadd.f32 %v1494, %v1850
      %v1885 = vld [vmem:[%s313 + $0x1] sm:$0xff]
      %v1886 = vld [vmem:[%s313 + $0x9] sm:$0xff]
      %v1887 = vld [vmem:[%s313 + $0x19] sm:$0xff]
      %v1888 = vld [vmem:[%s313 + $0x21] sm:$0xff]
      %v1889 = vld [vmem:[%s313 + $0x31] sm:$0xff]
      %v1890 = vld [vmem:[%s313 + $0x39] sm:$0xff]
      %v1891 = vld [vmem:[%s313 + $0x49] sm:$0xff]
      %v1892 = vld [vmem:[%s313 + $0x51] sm:$0xff]
      %v1893 = vld [vmem:[%s313 + $0x61] sm:$0xff]
      %v1894 = vld [vmem:[%s313 + $0x69] sm:$0xff]
      %v1895 = vld [vmem:[%s313 + $0x79] sm:$0xff]
      %v1896 = vld [vmem:[%s313 + $0x81] sm:$0xff]
      %v1897 = vld [vmem:[%s313 + $0x91] sm:$0xff]
      %v1898 = vld [vmem:[%s313 + $0x99] sm:$0xff]
      %v1899 = vld [vmem:[%s313 + $0xa9] sm:$0xff]
      %v1900 = vld [vmem:[%s313 + $0xb1] sm:$0xff]
      %v1901 = vld [vmem:[%s313 + $0xc1] sm:$0xff]
      %v1902 = vld [vmem:[%s313 + $0xc9] sm:$0xff]
      %v1903 = vld [vmem:[%s313 + $0xd9] sm:$0xff]
      %v1904 = vld [vmem:[%s313 + $0xe1] sm:$0xff]
      %v1905 = vld [vmem:[%s313 + $0xf1] sm:$0xff]
      %v1906 = vld [vmem:[%s313 + $0xf9] sm:$0xff]
      %v1907 = vld [vmem:[%s313 + $0x109] sm:$0xff]
      %v1908 = vld [vmem:[%s313 + $0x111] sm:$0xff]
      %v1909 = vld [vmem:[%s313 + $0x121] sm:$0xff]
      %v1910 = vld [vmem:[%s313 + $0x129] sm:$0xff]
      %v1911 = vld [vmem:[%s313 + $0x139] sm:$0xff]
      %v1912 = vld [vmem:[%s313 + $0x141] sm:$0xff]
      %v1913 = vld [vmem:[%s313 + $0x151] sm:$0xff]
      %v1914 = vld [vmem:[%s313 + $0x159] sm:$0xff]
      %v1915 = vld [vmem:[%s313 + $0x169] sm:$0xff]
      %v1916 = vld [vmem:[%s313 + $0x171] sm:$0xff]
      %s1917 = scalar_lea.vmem %s1, 16
      %v1918 = vld [vmem:[%s1917] sm:$0xf]
      %v1920 = vsel %vm226, %v1885, 0
      %v1923 = vsel %vm226, %v1886, 0
      %v1926 = vsel %vm226, %v1887, 0
      %v1929 = vsel %vm226, %v1888, 0
      %v1932 = vsel %vm226, %v1889, 0
      %v1935 = vsel %vm226, %v1890, 0
      %v1938 = vsel %vm226, %v1891, 0
      %v1941 = vsel %vm226, %v1892, 0
      %v1944 = vsel %vm226, %v1893, 0
      %v1947 = vsel %vm226, %v1894, 0
      %v1950 = vsel %vm226, %v1895, 0
      %v1953 = vsel %vm226, %v1896, 0
      %v1956 = vsel %vm226, %v1897, 0
      %v1959 = vsel %vm226, %v1898, 0
      %v1962 = vsel %vm226, %v1899, 0
      %v1965 = vsel %vm226, %v1900, 0
      %v1968 = vsel %vm226, %v1901, 0
      %v1971 = vsel %vm226, %v1902, 0
      %v1974 = vsel %vm226, %v1903, 0
      %v1977 = vsel %vm226, %v1904, 0
      %v1980 = vsel %vm226, %v1905, 0
      %v1983 = vsel %vm226, %v1906, 0
      %v1986 = vsel %vm226, %v1907, 0
      %v1989 = vsel %vm226, %v1908, 0
      %v1992 = vsel %vm226, %v1909, 0
      %v1995 = vsel %vm226, %v1910, 0
      %v1998 = vsel %vm226, %v1911, 0
      %v2001 = vsel %vm226, %v1912, 0
      %v2004 = vsel %vm226, %v1913, 0
      %v2007 = vsel %vm226, %v1914, 0
      %v2010 = vsel %vm226, %v1915, 0
      %v2013 = vsel %vm226, %v1916, 0
      %v2016 = vsel %vm552, %v1918, 0
      %2018 = vmatprep.subr.mxu0 0.0
      %2019 = vmatpush1.msra.mxu0 %v2016
      %2020 = vmatprep.subr.mxu0 0.0
      %2021 = vmatpush1.msra.mxu0 0.0
      %2022 = vmatprep.subr.mxu0 0.0
      %2023 = vmatpush1.msra.mxu0 0.0
      %2024 = vmatprep.subr.mxu0 0.0
      %2025 = vmatpush1.msra.mxu0 0.0
      %2026 = vmatprep.subr.mxu0 0.0
      %2027 = vmatpush1.msra.mxu0 0.0
      %2028 = vmatprep.subr.mxu0 0.0
      %2029 = vmatpush1.msra.mxu0 0.0
      %2030 = vmatprep.subr.mxu0 0.0
      %2031 = vmatpush1.msra.mxu0 0.0
      %2032 = vmatprep.subr.mxu0 0.0
      %2033 = vmatpush1.msra.mxu0 0.0
      %2034 = vmatprep.subr.mxu0 0.0
      %2035 = vmatpush1.msra.mxu0 0.0
      %2036 = vmatprep.subr.mxu0 0.0
      %2037 = vmatpush1.msra.mxu0 0.0
      %2038 = vmatprep.subr.mxu0 0.0
      %2039 = vmatpush1.msra.mxu0 0.0
      %2040 = vmatprep.subr.mxu0 0.0
      %2041 = vmatpush1.msra.mxu0 0.0
      %2042 = vmatprep.subr.mxu0 0.0
      %2043 = vmatpush1.msra.mxu0 0.0
      %2044 = vmatprep.subr.mxu0 0.0
      %2045 = vmatpush1.msra.mxu0 0.0
      %2046 = vmatprep.subr.mxu0 0.0
      %2047 = vmatpush1.msra.mxu0 0.0
      %2048 = vmatprep.subr.mxu0 0.0
      %2049 = vmatpush1.msra.mxu0 0.0
      %2050 = vmatprep.subr.mxu0 0.0
      %2051 = vmatpush1.msra.mxu0 0.0
      %2052 = vmatprep.subr.mxu0 0.0
      %2053 = vmatpush1.msra.mxu0 0.0
      %2054 = vmatprep.subr.mxu0 0.0
      %2055 = vmatpush1.msra.mxu0 0.0
      %2056 = vmatprep.subr.mxu0 0.0
      %2057 = vmatpush1.msra.mxu0 0.0
      %2058 = vmatprep.subr.mxu0 0.0
      %2059 = vmatpush1.msra.mxu0 0.0
      %2060 = vmatprep.subr.mxu0 0.0
      %2061 = vmatpush1.msra.mxu0 0.0
      %2062 = vmatprep.subr.mxu0 0.0
      %2063 = vmatpush1.msra.mxu0 0.0
      %2064 = vmatprep.subr.mxu0 0.0
      %2065 = vmatpush1.msra.mxu0 0.0
      %2066 = vmatprep.subr.mxu0 0.0
      %2067 = vmatpush1.msra.mxu0 0.0
      %2068 = vmatprep.subr.mxu0 0.0
      %2069 = vmatpush1.msra.mxu0 0.0
      %2070 = vmatprep.subr.mxu0 0.0
      %2071 = vmatpush1.msra.mxu0 0.0
      %2072 = vmatprep.subr.mxu0 0.0
      %2073 = vmatpush1.msra.mxu0 0.0
      %2074 = vmatprep.subr.mxu0 0.0
      %2075 = vmatpush1.msra.mxu0 0.0
      %2076 = vmatprep.subr.mxu0 0.0
      %2077 = vmatpush1.msra.mxu0 0.0
      %2078 = vmatprep.subr.mxu0 0.0
      %2079 = vmatpush1.msra.mxu0 0.0
      %2080 = vmatprep.subr.mxu0 0.0
      %2081 = vmatpush1.msra.mxu0 0.0
      %2082 = vmatprep.mubr.f32.mxu0 0.0
      %2083 = vmatmul.mubr.f32.gmra.mrb[0].mxu0 %v1920
      %v2084 = vpop.f32.mrb[0].mxu0
      %v2085 = vadd.f32 0.0, %v2084
      %v2086 = vpop.f32.mrb[0].mxu0
      %2087 = vmatprep.mubr.f32.mxu0 0.0
      %2088 = vmatmul.mubr.f32.gmra.mrb[0].mxu0 %v1923
      %v2089 = vpop.f32.mrb[0].mxu0
      %v2090 = vadd.f32 0.0, %v2089
      %v2091 = vpop.f32.mrb[0].mxu0
      %2092 = vmatprep.mubr.f32.mxu0 0.0
      %2093 = vmatmul.mubr.f32.gmra.mrb[0].mxu0 %v1926
      %v2094 = vpop.f32.mrb[0].mxu0
      %v2095 = vadd.f32 0.0, %v2094
      %v2096 = vpop.f32.mrb[0].mxu0
      %2097 = vmatprep.mubr.f32.mxu0 0.0
      %2098 = vmatmul.mubr.f32.gmra.mrb[0].mxu0 %v1929
      %v2099 = vpop.f32.mrb[0].mxu0
      %v2100 = vadd.f32 0.0, %v2099
      %v2101 = vpop.f32.mrb[0].mxu0
      %2102 = vmatprep.mubr.f32.mxu0 0.0
      %2103 = vmatmul.mubr.f32.gmra.mrb[0].mxu0 %v1932
      %v2104 = vpop.f32.mrb[0].mxu0
      %v2105 = vadd.f32 0.0, %v2104
      %v2106 = vpop.f32.mrb[0].mxu0
      %2107 = vmatprep.mubr.f32.mxu0 0.0
      %2108 = vmatmul.mubr.f32.gmra.mrb[0].mxu0 %v1935
      %v2109 = vpop.f32.mrb[0].mxu0
      %v2110 = vadd.f32 0.0, %v2109
      %v2111 = vpop.f32.mrb[0].mxu0
      %2112 = vmatprep.mubr.f32.mxu0 0.0
      %2113 = vmatmul.mubr.f32.gmra.mrb[0].mxu0 %v1938
      %v2114 = vpop.f32.mrb[0].mxu0
      %v2115 = vadd.f32 0.0, %v2114
      %v2116 = vpop.f32.mrb[0].mxu0
      %2117 = vmatprep.mubr.f32.mxu0 0.0
      %2118 = vmatmul.mubr.f32.gmra.mrb[0].mxu0 %v1941
      %v2119 = vpop.f32.mrb[0].mxu0
      %v2120 = vadd.f32 0.0, %v2119
      %v2121 = vpop.f32.mrb[0].mxu0
      %2122 = vmatprep.mubr.f32.mxu0 0.0
      %2123 = vmatmul.mubr.f32.gmra.mrb[0].mxu0 %v1944
      %v2124 = vpop.f32.mrb[0].mxu0
      %v2125 = vadd.f32 0.0, %v2124
      %v2126 = vpop.f32.mrb[0].mxu0
      %2127 = vmatprep.mubr.f32.mxu0 0.0
      %2128 = vmatmul.mubr.f32.gmra.mrb[0].mxu0 %v1947
      %v2129 = vpop.f32.mrb[0].mxu0
      %v2130 = vadd.f32 0.0, %v2129
      %v2131 = vpop.f32.mrb[0].mxu0
      %2132 = vmatprep.mubr.f32.mxu0 0.0
      %2133 = vmatmul.mubr.f32.gmra.mrb[0].mxu0 %v1950
      %v2134 = vpop.f32.mrb[0].mxu0
      %v2135 = vadd.f32 0.0, %v2134
      %v2136 = vpop.f32.mrb[0].mxu0
      %2137 = vmatprep.mubr.f32.mxu0 0.0
      %2138 = vmatmul.mubr.f32.gmra.mrb[0].mxu0 %v1953
      %v2139 = vpop.f32.mrb[0].mxu0
      %v2140 = vadd.f32 0.0, %v2139
      %v2141 = vpop.f32.mrb[0].mxu0
      %2142 = vmatprep.mubr.f32.mxu0 0.0
      %2143 = vmatmul.mubr.f32.gmra.mrb[0].mxu0 %v1956
      %v2144 = vpop.f32.mrb[0].mxu0
      %v2145 = vadd.f32 0.0, %v2144
      %v2146 = vpop.f32.mrb[0].mxu0
      %2147 = vmatprep.mubr.f32.mxu0 0.0
      %2148 = vmatmul.mubr.f32.gmra.mrb[0].mxu0 %v1959
      %v2149 = vpop.f32.mrb[0].mxu0
      %v2150 = vadd.f32 0.0, %v2149
      %v2151 = vpop.f32.mrb[0].mxu0
      %2152 = vmatprep.mubr.f32.mxu0 0.0
      %2153 = vmatmul.mubr.f32.gmra.mrb[0].mxu0 %v1962
      %v2154 = vpop.f32.mrb[0].mxu0
      %v2155 = vadd.f32 0.0, %v2154
      %v2156 = vpop.f32.mrb[0].mxu0
      %2157 = vmatprep.mubr.f32.mxu0 0.0
      %2158 = vmatmul.mubr.f32.gmra.mrb[0].mxu0 %v1965
      %v2159 = vpop.f32.mrb[0].mxu0
      %v2160 = vadd.f32 0.0, %v2159
      %v2161 = vpop.f32.mrb[0].mxu0
      %2162 = vmatprep.mubr.f32.mxu0 0.0
      %2163 = vmatmul.mubr.f32.gmra.mrb[0].mxu0 %v1968
      %v2164 = vpop.f32.mrb[0].mxu0
      %v2165 = vadd.f32 0.0, %v2164
      %v2166 = vpop.f32.mrb[0].mxu0
      %2167 = vmatprep.mubr.f32.mxu0 0.0
      %2168 = vmatmul.mubr.f32.gmra.mrb[0].mxu0 %v1971
      %v2169 = vpop.f32.mrb[0].mxu0
      %v2170 = vadd.f32 0.0, %v2169
      %v2171 = vpop.f32.mrb[0].mxu0
      %2172 = vmatprep.mubr.f32.mxu0 0.0
      %2173 = vmatmul.mubr.f32.gmra.mrb[0].mxu0 %v1974
      %v2174 = vpop.f32.mrb[0].mxu0
      %v2175 = vadd.f32 0.0, %v2174
      %v2176 = vpop.f32.mrb[0].mxu0
      %2177 = vmatprep.mubr.f32.mxu0 0.0
      %2178 = vmatmul.mubr.f32.gmra.mrb[0].mxu0 %v1977
      %v2179 = vpop.f32.mrb[0].mxu0
      %v2180 = vadd.f32 0.0, %v2179
      %v2181 = vpop.f32.mrb[0].mxu0
      %2182 = vmatprep.mubr.f32.mxu0 0.0
      %2183 = vmatmul.mubr.f32.gmra.mrb[0].mxu0 %v1980
      %v2184 = vpop.f32.mrb[0].mxu0
      %v2185 = vadd.f32 0.0, %v2184
      %v2186 = vpop.f32.mrb[0].mxu0
      %2187 = vmatprep.mubr.f32.mxu0 0.0
      %2188 = vmatmul.mubr.f32.gmra.mrb[0].mxu0 %v1983
      %v2189 = vpop.f32.mrb[0].mxu0
      %v2190 = vadd.f32 0.0, %v2189
      %v2191 = vpop.f32.mrb[0].mxu0
      %2192 = vmatprep.mubr.f32.mxu0 0.0
      %2193 = vmatmul.mubr.f32.gmra.mrb[0].mxu0 %v1986
      %v2194 = vpop.f32.mrb[0].mxu0
      %v2195 = vadd.f32 0.0, %v2194
      %v2196 = vpop.f32.mrb[0].mxu0
      %2197 = vmatprep.mubr.f32.mxu0 0.0
      %2198 = vmatmul.mubr.f32.gmra.mrb[0].mxu0 %v1989
      %v2199 = vpop.f32.mrb[0].mxu0
      %v2200 = vadd.f32 0.0, %v2199
      %v2201 = vpop.f32.mrb[0].mxu0
      %2202 = vmatprep.mubr.f32.mxu0 0.0
      %2203 = vmatmul.mubr.f32.gmra.mrb[0].mxu0 %v1992
      %v2204 = vpop.f32.mrb[0].mxu0
      %v2205 = vadd.f32 0.0, %v2204
      %v2206 = vpop.f32.mrb[0].mxu0
      %2207 = vmatprep.mubr.f32.mxu0 0.0
      %2208 = vmatmul.mubr.f32.gmra.mrb[0].mxu0 %v1995
      %v2209 = vpop.f32.mrb[0].mxu0
      %v2210 = vadd.f32 0.0, %v2209
      %v2211 = vpop.f32.mrb[0].mxu0
      %2212 = vmatprep.mubr.f32.mxu0 0.0
      %2213 = vmatmul.mubr.f32.gmra.mrb[0].mxu0 %v1998
      %v2214 = vpop.f32.mrb[0].mxu0
      %v2215 = vadd.f32 0.0, %v2214
      %v2216 = vpop.f32.mrb[0].mxu0
      %2217 = vmatprep.mubr.f32.mxu0 0.0
      %2218 = vmatmul.mubr.f32.gmra.mrb[0].mxu0 %v2001
      %v2219 = vpop.f32.mrb[0].mxu0
      %v2220 = vadd.f32 0.0, %v2219
      %v2221 = vpop.f32.mrb[0].mxu0
      %2222 = vmatprep.mubr.f32.mxu0 0.0
      %2223 = vmatmul.mubr.f32.gmra.mrb[0].mxu0 %v2004
      %v2224 = vpop.f32.mrb[0].mxu0
      %v2225 = vadd.f32 0.0, %v2224
      %v2226 = vpop.f32.mrb[0].mxu0
      %2227 = vmatprep.mubr.f32.mxu0 0.0
      %2228 = vmatmul.mubr.f32.gmra.mrb[0].mxu0 %v2007
      %v2229 = vpop.f32.mrb[0].mxu0
      %v2230 = vadd.f32 0.0, %v2229
      %v2231 = vpop.f32.mrb[0].mxu0
      %2232 = vmatprep.mubr.f32.mxu0 0.0
      %2233 = vmatmul.mubr.f32.gmra.mrb[0].mxu0 %v2010
      %v2234 = vpop.f32.mrb[0].mxu0
      %v2235 = vadd.f32 0.0, %v2234
      %v2236 = vpop.f32.mrb[0].mxu0
      %2237 = vmatprep.mubr.f32.mxu0 0.0
      %2238 = vmatmul.mubr.f32.gmra.mrb[0].mxu0 %v2013
      %v2239 = vpop.f32.mrb[0].mxu0
      %v2240 = vadd.f32 0.0, %v2239
      %v2241 = vpop.f32.mrb[0].mxu0
      %2242 = vdwg.mxu0
      %v2243 = vadd.f32 %v1853, %v2085
      %v2244 = vadd.f32 %v1854, %v2090
      %v2245 = vadd.f32 %v1855, %v2095
      %v2246 = vadd.f32 %v1856, %v2100
      %v2247 = vadd.f32 %v1857, %v2105
      %v2248 = vadd.f32 %v1858, %v2110
      %v2249 = vadd.f32 %v1859, %v2115
      %v2250 = vadd.f32 %v1860, %v2120
      %v2251 = vadd.f32 %v1861, %v2125
      %v2252 = vadd.f32 %v1862, %v2130
      %v2253 = vadd.f32 %v1863, %v2135
      %v2254 = vadd.f32 %v1864, %v2140
      %v2255 = vadd.f32 %v1865, %v2145
      %v2256 = vadd.f32 %v1866, %v2150
      %v2257 = vadd.f32 %v1867, %v2155
      %v2258 = vadd.f32 %v1868, %v2160
      %v2259 = vadd.f32 %v1869, %v2165
      %v2260 = vadd.f32 %v1870, %v2170
      %v2261 = vadd.f32 %v1871, %v2175
      %v2262 = vadd.f32 %v1872, %v2180
      %v2263 = vadd.f32 %v1873, %v2185
      %v2264 = vadd.f32 %v1874, %v2190
      %v2265 = vadd.f32 %v1875, %v2195
      %v2266 = vadd.f32 %v1876, %v2200
      %v2267 = vadd.f32 %v1877, %v2205
      %v2268 = vadd.f32 %v1878, %v2210
      %v2269 = vadd.f32 %v1879, %v2215
      %v2270 = vadd.f32 %v1880, %v2220
      %v2271 = vadd.f32 %v1881, %v2225
      %v2272 = vadd.f32 %v1882, %v2230
      %v2273 = vadd.f32 %v1883, %v2235
      %v2274 = vadd.f32 %v1884, %v2240
      %v2275 = vld [vmem:[%s313 + $0x2] sm:$0xff]
      %v2276 = vld [vmem:[%s313 + $0xa] sm:$0xff]
      %v2277 = vld [vmem:[%s313 + $0x1a] sm:$0xff]
      %v2278 = vld [vmem:[%s313 + $0x22] sm:$0xff]
      %v2279 = vld [vmem:[%s313 + $0x32] sm:$0xff]
      %v2280 = vld [vmem:[%s313 + $0x3a] sm:$0xff]
      %v2281 = vld [vmem:[%s313 + $0x4a] sm:$0xff]
      %v2282 = vld [vmem:[%s313 + $0x52] sm:$0xff]
      %v2283 = vld [vmem:[%s313 + $0x62] sm:$0xff]
      %v2284 = vld [vmem:[%s313 + $0x6a] sm:$0xff]
      %v2285 = vld [vmem:[%s313 + $0x7a] sm:$0xff]
      %v2286 = vld [vmem:[%s313 + $0x82] sm:$0xff]
      %v2287 = vld [vmem:[%s313 + $0x92] sm:$0xff]
      %v2288 = vld [vmem:[%s313 + $0x9a] sm:$0xff]
      %v2289 = vld [vmem:[%s313 + $0xaa] sm:$0xff]
      %v2290 = vld [vmem:[%s313 + $0xb2] sm:$0xff]
      %v2291 = vld [vmem:[%s313 + $0xc2] sm:$0xff]
      %v2292 = vld [vmem:[%s313 + $0xca] sm:$0xff]
      %v2293 = vld [vmem:[%s313 + $0xda] sm:$0xff]
      %v2294 = vld [vmem:[%s313 + $0xe2] sm:$0xff]
      %v2295 = vld [vmem:[%s313 + $0xf2] sm:$0xff]
      %v2296 = vld [vmem:[%s313 + $0xfa] sm:$0xff]
      %v2297 = vld [vmem:[%s313 + $0x10a] sm:$0xff]
      %v2298 = vld [vmem:[%s313 + $0x112] sm:$0xff]
      %v2299 = vld [vmem:[%s313 + $0x122] sm:$0xff]
      %v2300 = vld [vmem:[%s313 + $0x12a] sm:$0xff]
      %v2301 = vld [vmem:[%s313 + $0x13a] sm:$0xff]
      %v2302 = vld [vmem:[%s313 + $0x142] sm:$0xff]
      %v2303 = vld [vmem:[%s313 + $0x152] sm:$0xff]
      %v2304 = vld [vmem:[%s313 + $0x15a] sm:$0xff]
      %v2305 = vld [vmem:[%s313 + $0x16a] sm:$0xff]
      %v2306 = vld [vmem:[%s313 + $0x172] sm:$0xff]
      %s2307 = scalar_lea.vmem %s1, 20
      %v2308 = vld [vmem:[%s2307] sm:$0xf]
      %v2310 = vsel %vm226, %v2275, 0
      %v2313 = vsel %vm226, %v2276, 0
      %v2316 = vsel %vm226, %v2277, 0
      %v2319 = vsel %vm226, %v2278, 0
      %v2322 = vsel %vm226, %v2279, 0
      %v2325 = vsel %vm226, %v2280, 0
      %v2328 = vsel %vm226, %v2281, 0
      %v2331 = vsel %vm226, %v2282, 0
      %v2334 = vsel %vm226, %v2283, 0
      %v2337 = vsel %vm226, %v2284, 0
      %v2340 = vsel %vm226, %v2285, 0
      %v2343 = vsel %vm226, %v2286, 0
      %v2346 = vsel %vm226, %v2287, 0
      %v2349 = vsel %vm226, %v2288, 0
      %v2352 = vsel %vm226, %v2289, 0
      %v2355 = vsel %vm226, %v2290, 0
      %v2358 = vsel %vm226, %v2291, 0
      %v2361 = vsel %vm226, %v2292, 0
      %v2364 = vsel %vm226, %v2293, 0
      %v2367 = vsel %vm226, %v2294, 0
      %v2370 = vsel %vm226, %v2295, 0
      %v2373 = vsel %vm226, %v2296, 0
      %v2376 = vsel %vm226, %v2297, 0
      %v2379 = vsel %vm226, %v2298, 0
      %v2382 = vsel %vm226, %v2299, 0
      %v2385 = vsel %vm226, %v2300, 0
      %v2388 = vsel %vm226, %v2301, 0
      %v2391 = vsel %vm226, %v2302, 0
      %v2394 = vsel %vm226, %v2303, 0
      %v2397 = vsel %vm226, %v2304, 0
      %v2400 = vsel %vm226, %v2305, 0
      %v2403 = vsel %vm226, %v2306, 0
      %v2406 = vsel %vm552, %v2308, 0
      %2408 = vmatprep.subr.mxu0 0.0
      %2409 = vmatpush1.msra.mxu0 %v2406
      %2410 = vmatprep.subr.mxu0 0.0
      %2411 = vmatpush1.msra.mxu0 0.0
      %2412 = vmatprep.subr.mxu0 0.0
      %2413 = vmatpush1.msra.mxu0 0.0
      %2414 = vmatprep.subr.mxu0 0.0
      %2415 = vmatpush1.msra.mxu0 0.0
      %2416 = vmatprep.subr.mxu0 0.0
      %2417 = vmatpush1.msra.mxu0 0.0
      %2418 = vmatprep.subr.mxu0 0.0
      %2419 = vmatpush1.msra.mxu0 0.0
      %2420 = vmatprep.subr.mxu0 0.0
      %2421 = vmatpush1.msra.mxu0 0.0
      %2422 = vmatprep.subr.mxu0 0.0
      %2423 = vmatpush1.msra.mxu0 0.0
      %2424 = vmatprep.subr.mxu0 0.0
      %2425 = vmatpush1.msra.mxu0 0.0
      %2426 = vmatprep.subr.mxu0 0.0
      %2427 = vmatpush1.msra.mxu0 0.0
      %2428 = vmatprep.subr.mxu0 0.0
      %2429 = vmatpush1.msra.mxu0 0.0
      %2430 = vmatprep.subr.mxu0 0.0
      %2431 = vmatpush1.msra.mxu0 0.0
      %2432 = vmatprep.subr.mxu0 0.0
      %2433 = vmatpush1.msra.mxu0 0.0
      %2434 = vmatprep.subr.mxu0 0.0
      %2435 = vmatpush1.msra.mxu0 0.0
      %2436 = vmatprep.subr.mxu0 0.0
      %2437 = vmatpush1.msra.mxu0 0.0
      %2438 = vmatprep.subr.mxu0 0.0
      %2439 = vmatpush1.msra.mxu0 0.0
      %2440 = vmatprep.subr.mxu0 0.0
      %2441 = vmatpush1.msra.mxu0 0.0
      %2442 = vmatprep.subr.mxu0 0.0
      %2443 = vmatpush1.msra.mxu0 0.0
      %2444 = vmatprep.subr.mxu0 0.0
      %2445 = vmatpush1.msra.mxu0 0.0
      %2446 = vmatprep.subr.mxu0 0.0
      %2447 = vmatpush1.msra.mxu0 0.0
      %2448 = vmatprep.subr.mxu0 0.0
      %2449 = vmatpush1.msra.mxu0 0.0
      %2450 = vmatprep.subr.mxu0 0.0
      %2451 = vmatpush1.msra.mxu0 0.0
      %2452 = vmatprep.subr.mxu0 0.0
      %2453 = vmatpush1.msra.mxu0 0.0
      %2454 = vmatprep.subr.mxu0 0.0
      %2455 = vmatpush1.msra.mxu0 0.0
      %2456 = vmatprep.subr.mxu0 0.0
      %2457 = vmatpush1.msra.mxu0 0.0
      %2458 = vmatprep.subr.mxu0 0.0
      %2459 = vmatpush1.msra.mxu0 0.0
      %2460 = vmatprep.subr.mxu0 0.0
      %2461 = vmatpush1.msra.mxu0 0.0
      %2462 = vmatprep.subr.mxu0 0.0
      %2463 = vmatpush1.msra.mxu0 0.0
      %2464 = vmatprep.subr.mxu0 0.0
      %2465 = vmatpush1.msra.mxu0 0.0
      %2466 = vmatprep.subr.mxu0 0.0
      %2467 = vmatpush1.msra.mxu0 0.0
      %2468 = vmatprep.subr.mxu0 0.0
      %2469 = vmatpush1.msra.mxu0 0.0
      %2470 = vmatprep.subr.mxu0 0.0
      %2471 = vmatpush1.msra.mxu0 0.0
      %2472 = vmatprep.mubr.f32.mxu0 0.0
      %2473 = vmatmul.mubr.f32.gmra.mrb[0].mxu0 %v2310
      %v2474 = vpop.f32.mrb[0].mxu0
      %v2475 = vadd.f32 0.0, %v2474
      %v2476 = vpop.f32.mrb[0].mxu0
      %2477 = vmatprep.mubr.f32.mxu0 0.0
      %2478 = vmatmul.mubr.f32.gmra.mrb[0].mxu0 %v2313
      %v2479 = vpop.f32.mrb[0].mxu0
      %v2480 = vadd.f32 0.0, %v2479
      %v2481 = vpop.f32.mrb[0].mxu0
      %2482 = vmatprep.mubr.f32.mxu0 0.0
      %2483 = vmatmul.mubr.f32.gmra.mrb[0].mxu0 %v2316
      %v2484 = vpop.f32.mrb[0].mxu0
      %v2485 = vadd.f32 0.0, %v2484
      %v2486 = vpop.f32.mrb[0].mxu0
      %2487 = vmatprep.mubr.f32.mxu0 0.0
      %2488 = vmatmul.mubr.f32.gmra.mrb[0].mxu0 %v2319
      %v2489 = vpop.f32.mrb[0].mxu0
      %v2490 = vadd.f32 0.0, %v2489
      %v2491 = vpop.f32.mrb[0].mxu0
      %2492 = vmatprep.mubr.f32.mxu0 0.0
      %2493 = vmatmul.mubr.f32.gmra.mrb[0].mxu0 %v2322
      %v2494 = vpop.f32.mrb[0].mxu0
      %v2495 = vadd.f32 0.0, %v2494
      %v2496 = vpop.f32.mrb[0].mxu0
      %2497 = vmatprep.mubr.f32.mxu0 0.0
      %2498 = vmatmul.mubr.f32.gmra.mrb[0].mxu0 %v2325
      %v2499 = vpop.f32.mrb[0].mxu0
      %v2500 = vadd.f32 0.0, %v2499
      %v2501 = vpop.f32.mrb[0].mxu0
      %2502 = vmatprep.mubr.f32.mxu0 0.0
      %2503 = vmatmul.mubr.f32.gmra.mrb[0].mxu0 %v2328
      %v2504 = vpop.f32.mrb[0].mxu0
      %v2505 = vadd.f32 0.0, %v2504
      %v2506 = vpop.f32.mrb[0].mxu0
      %2507 = vmatprep.mubr.f32.mxu0 0.0
      %2508 = vmatmul.mubr.f32.gmra.mrb[0].mxu0 %v2331
      %v2509 = vpop.f32.mrb[0].mxu0
      %v2510 = vadd.f32 0.0, %v2509
      %v2511 = vpop.f32.mrb[0].mxu0
      %2512 = vmatprep.mubr.f32.mxu0 0.0
      %2513 = vmatmul.mubr.f32.gmra.mrb[0].mxu0 %v2334
      %v2514 = vpop.f32.mrb[0].mxu0
      %v2515 = vadd.f32 0.0, %v2514
      %v2516 = vpop.f32.mrb[0].mxu0
      %2517 = vmatprep.mubr.f32.mxu0 0.0
      %2518 = vmatmul.mubr.f32.gmra.mrb[0].mxu0 %v2337
      %v2519 = vpop.f32.mrb[0].mxu0
      %v2520 = vadd.f32 0.0, %v2519
      %v2521 = vpop.f32.mrb[0].mxu0
      %2522 = vmatprep.mubr.f32.mxu0 0.0
      %2523 = vmatmul.mubr.f32.gmra.mrb[0].mxu0 %v2340
      %v2524 = vpop.f32.mrb[0].mxu0
      %v2525 = vadd.f32 0.0, %v2524
      %v2526 = vpop.f32.mrb[0].mxu0
      %2527 = vmatprep.mubr.f32.mxu0 0.0
      %2528 = vmatmul.mubr.f32.gmra.mrb[0].mxu0 %v2343
      %v2529 = vpop.f32.mrb[0].mxu0
      %v2530 = vadd.f32 0.0, %v2529
      %v2531 = vpop.f32.mrb[0].mxu0
      %2532 = vmatprep.mubr.f32.mxu0 0.0
      %2533 = vmatmul.mubr.f32.gmra.mrb[0].mxu0 %v2346
      %v2534 = vpop.f32.mrb[0].mxu0
      %v2535 = vadd.f32 0.0, %v2534
      %v2536 = vpop.f32.mrb[0].mxu0
      %2537 = vmatprep.mubr.f32.mxu0 0.0
      %2538 = vmatmul.mubr.f32.gmra.mrb[0].mxu0 %v2349
      %v2539 = vpop.f32.mrb[0].mxu0
      %v2540 = vadd.f32 0.0, %v2539
      %v2541 = vpop.f32.mrb[0].mxu0
      %2542 = vmatprep.mubr.f32.mxu0 0.0
      %2543 = vmatmul.mubr.f32.gmra.mrb[0].mxu0 %v2352
      %v2544 = vpop.f32.mrb[0].mxu0
      %v2545 = vadd.f32 0.0, %v2544
      %v2546 = vpop.f32.mrb[0].mxu0
      %2547 = vmatprep.mubr.f32.mxu0 0.0
      %2548 = vmatmul.mubr.f32.gmra.mrb[0].mxu0 %v2355
      %v2549 = vpop.f32.mrb[0].mxu0
      %v2550 = vadd.f32 0.0, %v2549
      %v2551 = vpop.f32.mrb[0].mxu0
      %2552 = vmatprep.mubr.f32.mxu0 0.0
      %2553 = vmatmul.mubr.f32.gmra.mrb[0].mxu0 %v2358
      %v2554 = vpop.f32.mrb[0].mxu0
      %v2555 = vadd.f32 0.0, %v2554
      %v2556 = vpop.f32.mrb[0].mxu0
      %2557 = vmatprep.mubr.f32.mxu0 0.0
      %2558 = vmatmul.mubr.f32.gmra.mrb[0].mxu0 %v2361
      %v2559 = vpop.f32.mrb[0].mxu0
      %v2560 = vadd.f32 0.0, %v2559
      %v2561 = vpop.f32.mrb[0].mxu0
      %2562 = vmatprep.mubr.f32.mxu0 0.0
      %2563 = vmatmul.mubr.f32.gmra.mrb[0].mxu0 %v2364
      %v2564 = vpop.f32.mrb[0].mxu0
      %v2565 = vadd.f32 0.0, %v2564
      %v2566 = vpop.f32.mrb[0].mxu0
      %2567 = vmatprep.mubr.f32.mxu0 0.0
      %2568 = vmatmul.mubr.f32.gmra.mrb[0].mxu0 %v2367
      %v2569 = vpop.f32.mrb[0].mxu0
      %v2570 = vadd.f32 0.0, %v2569
      %v2571 = vpop.f32.mrb[0].mxu0
      %2572 = vmatprep.mubr.f32.mxu0 0.0
      %2573 = vmatmul.mubr.f32.gmra.mrb[0].mxu0 %v2370
      %v2574 = vpop.f32.mrb[0].mxu0
      %v2575 = vadd.f32 0.0, %v2574
      %v2576 = vpop.f32.mrb[0].mxu0
      %2577 = vmatprep.mubr.f32.mxu0 0.0
      %2578 = vmatmul.mubr.f32.gmra.mrb[0].mxu0 %v2373
      %v2579 = vpop.f32.mrb[0].mxu0
      %v2580 = vadd.f32 0.0, %v2579
      %v2581 = vpop.f32.mrb[0].mxu0
      %2582 = vmatprep.mubr.f32.mxu0 0.0
      %2583 = vmatmul.mubr.f32.gmra.mrb[0].mxu0 %v2376
      %v2584 = vpop.f32.mrb[0].mxu0
      %v2585 = vadd.f32 0.0, %v2584
      %v2586 = vpop.f32.mrb[0].mxu0
      %2587 = vmatprep.mubr.f32.mxu0 0.0
      %2588 = vmatmul.mubr.f32.gmra.mrb[0].mxu0 %v2379
      %v2589 = vpop.f32.mrb[0].mxu0
      %v2590 = vadd.f32 0.0, %v2589
      %v2591 = vpop.f32.mrb[0].mxu0
      %2592 = vmatprep.mubr.f32.mxu0 0.0
      %2593 = vmatmul.mubr.f32.gmra.mrb[0].mxu0 %v2382
      %v2594 = vpop.f32.mrb[0].mxu0
      %v2595 = vadd.f32 0.0, %v2594
      %v2596 = vpop.f32.mrb[0].mxu0
      %2597 = vmatprep.mubr.f32.mxu0 0.0
      %2598 = vmatmul.mubr.f32.gmra.mrb[0].mxu0 %v2385
      %v2599 = vpop.f32.mrb[0].mxu0
      %v2600 = vadd.f32 0.0, %v2599
      %v2601 = vpop.f32.mrb[0].mxu0
      %2602 = vmatprep.mubr.f32.mxu0 0.0
      %2603 = vmatmul.mubr.f32.gmra.mrb[0].mxu0 %v2388
      %v2604 = vpop.f32.mrb[0].mxu0
      %v2605 = vadd.f32 0.0, %v2604
      %v2606 = vpop.f32.mrb[0].mxu0
      %2607 = vmatprep.mubr.f32.mxu0 0.0
      %2608 = vmatmul.mubr.f32.gmra.mrb[0].mxu0 %v2391
      %v2609 = vpop.f32.mrb[0].mxu0
      %v2610 = vadd.f32 0.0, %v2609
      %v2611 = vpop.f32.mrb[0].mxu0
      %2612 = vmatprep.mubr.f32.mxu0 0.0
      %2613 = vmatmul.mubr.f32.gmra.mrb[0].mxu0 %v2394
      %v2614 = vpop.f32.mrb[0].mxu0
      %v2615 = vadd.f32 0.0, %v2614
      %v2616 = vpop.f32.mrb[0].mxu0
      %2617 = vmatprep.mubr.f32.mxu0 0.0
      %2618 = vmatmul.mubr.f32.gmra.mrb[0].mxu0 %v2397
      %v2619 = vpop.f32.mrb[0].mxu0
      %v2620 = vadd.f32 0.0, %v2619
      %v2621 = vpop.f32.mrb[0].mxu0
      %2622 = vmatprep.mubr.f32.mxu0 0.0
      %2623 = vmatmul.mubr.f32.gmra.mrb[0].mxu0 %v2400
      %v2624 = vpop.f32.mrb[0].mxu0
      %v2625 = vadd.f32 0.0, %v2624
      %v2626 = vpop.f32.mrb[0].mxu0
      %2627 = vmatprep.mubr.f32.mxu0 0.0
      %2628 = vmatmul.mubr.f32.gmra.mrb[0].mxu0 %v2403
      %v2629 = vpop.f32.mrb[0].mxu0
      %v2630 = vadd.f32 0.0, %v2629
      %v2631 = vpop.f32.mrb[0].mxu0
      %2632 = vdwg.mxu0
      %v2633 = vadd.f32 %v2243, %v2475
      %v2634 = vadd.f32 %v2244, %v2480
      %v2635 = vadd.f32 %v2245, %v2485
      %v2636 = vadd.f32 %v2246, %v2490
      %v2637 = vadd.f32 %v2247, %v2495
      %v2638 = vadd.f32 %v2248, %v2500
      %v2639 = vadd.f32 %v2249, %v2505
      %v2640 = vadd.f32 %v2250, %v2510
      %v2641 = vadd.f32 %v2251, %v2515
      %v2642 = vadd.f32 %v2252, %v2520
      %v2643 = vadd.f32 %v2253, %v2525
      %v2644 = vadd.f32 %v2254, %v2530
      %v2645 = vadd.f32 %v2255, %v2535
      %v2646 = vadd.f32 %v2256, %v2540
      %v2647 = vadd.f32 %v2257, %v2545
      %v2648 = vadd.f32 %v2258, %v2550
      %v2649 = vadd.f32 %v2259, %v2555
      %v2650 = vadd.f32 %v2260, %v2560
      %v2651 = vadd.f32 %v2261, %v2565
      %v2652 = vadd.f32 %v2262, %v2570
      %v2653 = vadd.f32 %v2263, %v2575
      %v2654 = vadd.f32 %v2264, %v2580
      %v2655 = vadd.f32 %v2265, %v2585
      %v2656 = vadd.f32 %v2266, %v2590
      %v2657 = vadd.f32 %v2267, %v2595
      %v2658 = vadd.f32 %v2268, %v2600
      %v2659 = vadd.f32 %v2269, %v2605
      %v2660 = vadd.f32 %v2270, %v2610
      %v2661 = vadd.f32 %v2271, %v2615
      %v2662 = vadd.f32 %v2272, %v2620
      %v2663 = vadd.f32 %v2273, %v2625
      %v2664 = vadd.f32 %v2274, %v2630
      %s2665 = scalar_lea.vmem [#allocation2], 48
      %v2666 = vld [vmem:[%s2665] sm:$0xff]
      %v2667 = vld [vmem:[%s2665 + $0x8] sm:$0xff]
      %v2668 = vld [vmem:[%s2665 + $0x18] sm:$0xff]
      %v2669 = vld [vmem:[%s2665 + $0x20] sm:$0xff]
      %v2670 = vld [vmem:[%s2665 + $0x30] sm:$0xff]
      %v2671 = vld [vmem:[%s2665 + $0x38] sm:$0xff]
      %v2672 = vld [vmem:[%s2665 + $0x48] sm:$0xff]
      %v2673 = vld [vmem:[%s2665 + $0x50] sm:$0xff]
      %v2674 = vld [vmem:[%s2665 + $0x60] sm:$0xff]
      %v2675 = vld [vmem:[%s2665 + $0x68] sm:$0xff]
      %v2676 = vld [vmem:[%s2665 + $0x78] sm:$0xff]
      %v2677 = vld [vmem:[%s2665 + $0x80] sm:$0xff]
      %v2678 = vld [vmem:[%s2665 + $0x90] sm:$0xff]
      %v2679 = vld [vmem:[%s2665 + $0x98] sm:$0xff]
      %v2680 = vld [vmem:[%s2665 + $0xa8] sm:$0xff]
      %v2681 = vld [vmem:[%s2665 + $0xb0] sm:$0xff]
      %v2682 = vld [vmem:[%s2665 + $0xc0] sm:$0xff]
      %v2683 = vld [vmem:[%s2665 + $0xc8] sm:$0xff]
      %v2684 = vld [vmem:[%s2665 + $0xd8] sm:$0xff]
      %v2685 = vld [vmem:[%s2665 + $0xe0] sm:$0xff]
      %v2686 = vld [vmem:[%s2665 + $0xf0] sm:$0xff]
      %v2687 = vld [vmem:[%s2665 + $0xf8] sm:$0xff]
      %v2688 = vld [vmem:[%s2665 + $0x108] sm:$0xff]
      %v2689 = vld [vmem:[%s2665 + $0x110] sm:$0xff]
      %v2690 = vld [vmem:[%s2665 + $0x120] sm:$0xff]
      %v2691 = vld [vmem:[%s2665 + $0x128] sm:$0xff]
      %v2692 = vld [vmem:[%s2665 + $0x138] sm:$0xff]
      %v2693 = vld [vmem:[%s2665 + $0x140] sm:$0xff]
      %v2694 = vld [vmem:[%s2665 + $0x150] sm:$0xff]
      %v2695 = vld [vmem:[%s2665 + $0x158] sm:$0xff]
      %v2696 = vld [vmem:[%s2665 + $0x168] sm:$0xff]
      %v2697 = vld [vmem:[%s2665 + $0x170] sm:$0xff]
      %s2698 = scalar_lea.vmem %s1, 24
      %v2699 = vld [vmem:[%s2698] sm:$0xf]
      %v2701 = vsel %vm226, %v2666, 0
      %v2704 = vsel %vm226, %v2667, 0
      %v2707 = vsel %vm226, %v2668, 0
      %v2710 = vsel %vm226, %v2669, 0
      %v2713 = vsel %vm226, %v2670, 0
      %v2716 = vsel %vm226, %v2671, 0
      %v2719 = vsel %vm226, %v2672, 0
      %v2722 = vsel %vm226, %v2673, 0
      %v2725 = vsel %vm226, %v2674, 0
      %v2728 = vsel %vm226, %v2675, 0
      %v2731 = vsel %vm226, %v2676, 0
      %v2734 = vsel %vm226, %v2677, 0
      %v2737 = vsel %vm226, %v2678, 0
      %v2740 = vsel %vm226, %v2679, 0
      %v2743 = vsel %vm226, %v2680, 0
      %v2746 = vsel %vm226, %v2681, 0
      %v2749 = vsel %vm226, %v2682, 0
      %v2752 = vsel %vm226, %v2683, 0
      %v2755 = vsel %vm226, %v2684, 0
      %v2758 = vsel %vm226, %v2685, 0
      %v2761 = vsel %vm226, %v2686, 0
      %v2764 = vsel %vm226, %v2687, 0
      %v2767 = vsel %vm226, %v2688, 0
      %v2770 = vsel %vm226, %v2689, 0
      %v2773 = vsel %vm226, %v2690, 0
      %v2776 = vsel %vm226, %v2691, 0
      %v2779 = vsel %vm226, %v2692, 0
      %v2782 = vsel %vm226, %v2693, 0
      %v2785 = vsel %vm226, %v2694, 0
      %v2788 = vsel %vm226, %v2695, 0
      %v2791 = vsel %vm226, %v2696, 0
      %v2794 = vsel %vm226, %v2697, 0
      %v2797 = vsel %vm552, %v2699, 0
      %2799 = vmatprep.subr.mxu0 0.0
      %2800 = vmatpush1.msra.mxu0 %v2797
      %2801 = vmatprep.subr.mxu0 0.0
      %2802 = vmatpush1.msra.mxu0 0.0
      %2803 = vmatprep.subr.mxu0 0.0
      %2804 = vmatpush1.msra.mxu0 0.0
      %2805 = vmatprep.subr.mxu0 0.0
      %2806 = vmatpush1.msra.mxu0 0.0
      %2807 = vmatprep.subr.mxu0 0.0
      %2808 = vmatpush1.msra.mxu0 0.0
      %2809 = vmatprep.subr.mxu0 0.0
      %2810 = vmatpush1.msra.mxu0 0.0
      %2811 = vmatprep.subr.mxu0 0.0
      %2812 = vmatpush1.msra.mxu0 0.0
      %2813 = vmatprep.subr.mxu0 0.0
      %2814 = vmatpush1.msra.mxu0 0.0
      %2815 = vmatprep.subr.mxu0 0.0
      %2816 = vmatpush1.msra.mxu0 0.0
      %2817 = vmatprep.subr.mxu0 0.0
      %2818 = vmatpush1.msra.mxu0 0.0
      %2819 = vmatprep.subr.mxu0 0.0
      %2820 = vmatpush1.msra.mxu0 0.0
      %2821 = vmatprep.subr.mxu0 0.0
      %2822 = vmatpush1.msra.mxu0 0.0
      %2823 = vmatprep.subr.mxu0 0.0
      %2824 = vmatpush1.msra.mxu0 0.0
      %2825 = vmatprep.subr.mxu0 0.0
      %2826 = vmatpush1.msra.mxu0 0.0
      %2827 = vmatprep.subr.mxu0 0.0
      %2828 = vmatpush1.msra.mxu0 0.0
      %2829 = vmatprep.subr.mxu0 0.0
      %2830 = vmatpush1.msra.mxu0 0.0
      %2831 = vmatprep.subr.mxu0 0.0
      %2832 = vmatpush1.msra.mxu0 0.0
      %2833 = vmatprep.subr.mxu0 0.0
      %2834 = vmatpush1.msra.mxu0 0.0
      %2835 = vmatprep.subr.mxu0 0.0
      %2836 = vmatpush1.msra.mxu0 0.0
      %2837 = vmatprep.subr.mxu0 0.0
      %2838 = vmatpush1.msra.mxu0 0.0
      %2839 = vmatprep.subr.mxu0 0.0
      %2840 = vmatpush1.msra.mxu0 0.0
      %2841 = vmatprep.subr.mxu0 0.0
      %2842 = vmatpush1.msra.mxu0 0.0
      %2843 = vmatprep.subr.mxu0 0.0
      %2844 = vmatpush1.msra.mxu0 0.0
      %2845 = vmatprep.subr.mxu0 0.0
      %2846 = vmatpush1.msra.mxu0 0.0
      %2847 = vmatprep.subr.mxu0 0.0
      %2848 = vmatpush1.msra.mxu0 0.0
      %2849 = vmatprep.subr.mxu0 0.0
      %2850 = vmatpush1.msra.mxu0 0.0
      %2851 = vmatprep.subr.mxu0 0.0
      %2852 = vmatpush1.msra.mxu0 0.0
      %2853 = vmatprep.subr.mxu0 0.0
      %2854 = vmatpush1.msra.mxu0 0.0
      %2855 = vmatprep.subr.mxu0 0.0
      %2856 = vmatpush1.msra.mxu0 0.0
      %2857 = vmatprep.subr.mxu0 0.0
      %2858 = vmatpush1.msra.mxu0 0.0
      %2859 = vmatprep.subr.mxu0 0.0
      %2860 = vmatpush1.msra.mxu0 0.0
      %2861 = vmatprep.subr.mxu0 0.0
      %2862 = vmatpush1.msra.mxu0 0.0
      %2863 = vmatprep.mubr.f32.mxu0 0.0
      %2864 = vmatmul.mubr.f32.gmra.mrb[0].mxu0 %v2701
      %v2865 = vpop.f32.mrb[0].mxu0
      %v2866 = vadd.f32 0.0, %v2865
      %v2867 = vpop.f32.mrb[0].mxu0
      %2868 = vmatprep.mubr.f32.mxu0 0.0
      %2869 = vmatmul.mubr.f32.gmra.mrb[0].mxu0 %v2704
      %v2870 = vpop.f32.mrb[0].mxu0
      %v2871 = vadd.f32 0.0, %v2870
      %v2872 = vpop.f32.mrb[0].mxu0
      %2873 = vmatprep.mubr.f32.mxu0 0.0
      %2874 = vmatmul.mubr.f32.gmra.mrb[0].mxu0 %v2707
      %v2875 = vpop.f32.mrb[0].mxu0
      %v2876 = vadd.f32 0.0, %v2875
      %v2877 = vpop.f32.mrb[0].mxu0
      %2878 = vmatprep.mubr.f32.mxu0 0.0
      %2879 = vmatmul.mubr.f32.gmra.mrb[0].mxu0 %v2710
      %v2880 = vpop.f32.mrb[0].mxu0
      %v2881 = vadd.f32 0.0, %v2880
      %v2882 = vpop.f32.mrb[0].mxu0
      %2883 = vmatprep.mubr.f32.mxu0 0.0
      %2884 = vmatmul.mubr.f32.gmra.mrb[0].mxu0 %v2713
      %v2885 = vpop.f32.mrb[0].mxu0
      %v2886 = vadd.f32 0.0, %v2885
      %v2887 = vpop.f32.mrb[0].mxu0
      %2888 = vmatprep.mubr.f32.mxu0 0.0
      %2889 = vmatmul.mubr.f32.gmra.mrb[0].mxu0 %v2716
      %v2890 = vpop.f32.mrb[0].mxu0
      %v2891 = vadd.f32 0.0, %v2890
      %v2892 = vpop.f32.mrb[0].mxu0
      %2893 = vmatprep.mubr.f32.mxu0 0.0
      %2894 = vmatmul.mubr.f32.gmra.mrb[0].mxu0 %v2719
      %v2895 = vpop.f32.mrb[0].mxu0
      %v2896 = vadd.f32 0.0, %v2895
      %v2897 = vpop.f32.mrb[0].mxu0
      %2898 = vmatprep.mubr.f32.mxu0 0.0
      %2899 = vmatmul.mubr.f32.gmra.mrb[0].mxu0 %v2722
      %v2900 = vpop.f32.mrb[0].mxu0
      %v2901 = vadd.f32 0.0, %v2900
      %v2902 = vpop.f32.mrb[0].mxu0
      %2903 = vmatprep.mubr.f32.mxu0 0.0
      %2904 = vmatmul.mubr.f32.gmra.mrb[0].mxu0 %v2725
      %v2905 = vpop.f32.mrb[0].mxu0
      %v2906 = vadd.f32 0.0, %v2905
      %v2907 = vpop.f32.mrb[0].mxu0
      %2908 = vmatprep.mubr.f32.mxu0 0.0
      %2909 = vmatmul.mubr.f32.gmra.mrb[0].mxu0 %v2728
      %v2910 = vpop.f32.mrb[0].mxu0
      %v2911 = vadd.f32 0.0, %v2910
      %v2912 = vpop.f32.mrb[0].mxu0
      %2913 = vmatprep.mubr.f32.mxu0 0.0
      %2914 = vmatmul.mubr.f32.gmra.mrb[0].mxu0 %v2731
      %v2915 = vpop.f32.mrb[0].mxu0
      %v2916 = vadd.f32 0.0, %v2915
      %v2917 = vpop.f32.mrb[0].mxu0
      %2918 = vmatprep.mubr.f32.mxu0 0.0
      %2919 = vmatmul.mubr.f32.gmra.mrb[0].mxu0 %v2734
      %v2920 = vpop.f32.mrb[0].mxu0
      %v2921 = vadd.f32 0.0, %v2920
      %v2922 = vpop.f32.mrb[0].mxu0
      %2923 = vmatprep.mubr.f32.mxu0 0.0
      %2924 = vmatmul.mubr.f32.gmra.mrb[0].mxu0 %v2737
      %v2925 = vpop.f32.mrb[0].mxu0
      %v2926 = vadd.f32 0.0, %v2925
      %v2927 = vpop.f32.mrb[0].mxu0
      %2928 = vmatprep.mubr.f32.mxu0 0.0
      %2929 = vmatmul.mubr.f32.gmra.mrb[0].mxu0 %v2740
      %v2930 = vpop.f32.mrb[0].mxu0
      %v2931 = vadd.f32 0.0, %v2930
      %v2932 = vpop.f32.mrb[0].mxu0
      %2933 = vmatprep.mubr.f32.mxu0 0.0
      %2934 = vmatmul.mubr.f32.gmra.mrb[0].mxu0 %v2743
      %v2935 = vpop.f32.mrb[0].mxu0
      %v2936 = vadd.f32 0.0, %v2935
      %v2937 = vpop.f32.mrb[0].mxu0
      %2938 = vmatprep.mubr.f32.mxu0 0.0
      %2939 = vmatmul.mubr.f32.gmra.mrb[0].mxu0 %v2746
      %v2940 = vpop.f32.mrb[0].mxu0
      %v2941 = vadd.f32 0.0, %v2940
      %v2942 = vpop.f32.mrb[0].mxu0
      %2943 = vmatprep.mubr.f32.mxu0 0.0
      %2944 = vmatmul.mubr.f32.gmra.mrb[0].mxu0 %v2749
      %v2945 = vpop.f32.mrb[0].mxu0
      %v2946 = vadd.f32 0.0, %v2945
      %v2947 = vpop.f32.mrb[0].mxu0
      %2948 = vmatprep.mubr.f32.mxu0 0.0
      %2949 = vmatmul.mubr.f32.gmra.mrb[0].mxu0 %v2752
      %v2950 = vpop.f32.mrb[0].mxu0
      %v2951 = vadd.f32 0.0, %v2950
      %v2952 = vpop.f32.mrb[0].mxu0
      %2953 = vmatprep.mubr.f32.mxu0 0.0
      %2954 = vmatmul.mubr.f32.gmra.mrb[0].mxu0 %v2755
      %v2955 = vpop.f32.mrb[0].mxu0
      %v2956 = vadd.f32 0.0, %v2955
      %v2957 = vpop.f32.mrb[0].mxu0
      %2958 = vmatprep.mubr.f32.mxu0 0.0
      %2959 = vmatmul.mubr.f32.gmra.mrb[0].mxu0 %v2758
      %v2960 = vpop.f32.mrb[0].mxu0
      %v2961 = vadd.f32 0.0, %v2960
      %v2962 = vpop.f32.mrb[0].mxu0
      %2963 = vmatprep.mubr.f32.mxu0 0.0
      %2964 = vmatmul.mubr.f32.gmra.mrb[0].mxu0 %v2761
      %v2965 = vpop.f32.mrb[0].mxu0
      %v2966 = vadd.f32 0.0, %v2965
      %v2967 = vpop.f32.mrb[0].mxu0
      %2968 = vmatprep.mubr.f32.mxu0 0.0
      %2969 = vmatmul.mubr.f32.gmra.mrb[0].mxu0 %v2764
      %v2970 = vpop.f32.mrb[0].mxu0
      %v2971 = vadd.f32 0.0, %v2970
      %v2972 = vpop.f32.mrb[0].mxu0
      %2973 = vmatprep.mubr.f32.mxu0 0.0
      %2974 = vmatmul.mubr.f32.gmra.mrb[0].mxu0 %v2767
      %v2975 = vpop.f32.mrb[0].mxu0
      %v2976 = vadd.f32 0.0, %v2975
      %v2977 = vpop.f32.mrb[0].mxu0
      %2978 = vmatprep.mubr.f32.mxu0 0.0
      %2979 = vmatmul.mubr.f32.gmra.mrb[0].mxu0 %v2770
      %v2980 = vpop.f32.mrb[0].mxu0
      %v2981 = vadd.f32 0.0, %v2980
      %v2982 = vpop.f32.mrb[0].mxu0
      %2983 = vmatprep.mubr.f32.mxu0 0.0
      %2984 = vmatmul.mubr.f32.gmra.mrb[0].mxu0 %v2773
      %v2985 = vpop.f32.mrb[0].mxu0
      %v2986 = vadd.f32 0.0, %v2985
      %v2987 = vpop.f32.mrb[0].mxu0
      %2988 = vmatprep.mubr.f32.mxu0 0.0
      %2989 = vmatmul.mubr.f32.gmra.mrb[0].mxu0 %v2776
      %v2990 = vpop.f32.mrb[0].mxu0
      %v2991 = vadd.f32 0.0, %v2990
      %v2992 = vpop.f32.mrb[0].mxu0
      %2993 = vmatprep.mubr.f32.mxu0 0.0
      %2994 = vmatmul.mubr.f32.gmra.mrb[0].mxu0 %v2779
      %v2995 = vpop.f32.mrb[0].mxu0
      %v2996 = vadd.f32 0.0, %v2995
      %v2997 = vpop.f32.mrb[0].mxu0
      %2998 = vmatprep.mubr.f32.mxu0 0.0
      %2999 = vmatmul.mubr.f32.gmra.mrb[0].mxu0 %v2782
      %v3000 = vpop.f32.mrb[0].mxu0
      %v3001 = vadd.f32 0.0, %v3000
      %v3002 = vpop.f32.mrb[0].mxu0
      %3003 = vmatprep.mubr.f32.mxu0 0.0
      %3004 = vmatmul.mubr.f32.gmra.mrb[0].mxu0 %v2785
      %v3005 = vpop.f32.mrb[0].mxu0
      %v3006 = vadd.f32 0.0, %v3005
      %v3007 = vpop.f32.mrb[0].mxu0
      %3008 = vmatprep.mubr.f32.mxu0 0.0
      %3009 = vmatmul.mubr.f32.gmra.mrb[0].mxu0 %v2788
      %v3010 = vpop.f32.mrb[0].mxu0
      %v3011 = vadd.f32 0.0, %v3010
      %v3012 = vpop.f32.mrb[0].mxu0
      %3013 = vmatprep.mubr.f32.mxu0 0.0
      %3014 = vmatmul.mubr.f32.gmra.mrb[0].mxu0 %v2791
      %v3015 = vpop.f32.mrb[0].mxu0
      %v3016 = vadd.f32 0.0, %v3015
      %v3017 = vpop.f32.mrb[0].mxu0
      %3018 = vmatprep.mubr.f32.mxu0 0.0
      %3019 = vmatmul.mubr.f32.gmra.mrb[0].mxu0 %v2794
      %v3020 = vpop.f32.mrb[0].mxu0
      %v3021 = vadd.f32 0.0, %v3020
      %v3022 = vpop.f32.mrb[0].mxu0
      %3023 = vdwg.mxu0
      %v3024 = vadd.f32 %v2633, %v2866
      %v3025 = vadd.f32 %v2634, %v2871
      %v3026 = vadd.f32 %v2635, %v2876
      %v3027 = vadd.f32 %v2636, %v2881
      %v3028 = vadd.f32 %v2637, %v2886
      %v3029 = vadd.f32 %v2638, %v2891
      %v3030 = vadd.f32 %v2639, %v2896
      %v3031 = vadd.f32 %v2640, %v2901
      %v3032 = vadd.f32 %v2641, %v2906
      %v3033 = vadd.f32 %v2642, %v2911
      %v3034 = vadd.f32 %v2643, %v2916
      %v3035 = vadd.f32 %v2644, %v2921
      %v3036 = vadd.f32 %v2645, %v2926
      %v3037 = vadd.f32 %v2646, %v2931
      %v3038 = vadd.f32 %v2647, %v2936
      %v3039 = vadd.f32 %v2648, %v2941
      %v3040 = vadd.f32 %v2649, %v2946
      %v3041 = vadd.f32 %v2650, %v2951
      %v3042 = vadd.f32 %v2651, %v2956
      %v3043 = vadd.f32 %v2652, %v2961
      %v3044 = vadd.f32 %v2653, %v2966
      %v3045 = vadd.f32 %v2654, %v2971
      %v3046 = vadd.f32 %v2655, %v2976
      %v3047 = vadd.f32 %v2656, %v2981
      %v3048 = vadd.f32 %v2657, %v2986
      %v3049 = vadd.f32 %v2658, %v2991
      %v3050 = vadd.f32 %v2659, %v2996
      %v3051 = vadd.f32 %v2660, %v3001
      %v3052 = vadd.f32 %v2661, %v3006
      %v3053 = vadd.f32 %v2662, %v3011
      %v3054 = vadd.f32 %v2663, %v3016
      %v3055 = vadd.f32 %v2664, %v3021
      %v3056 = vld [vmem:[%s2665 + $0x1] sm:$0xff]
      %v3057 = vld [vmem:[%s2665 + $0x9] sm:$0xff]
      %v3058 = vld [vmem:[%s2665 + $0x19] sm:$0xff]
      %v3059 = vld [vmem:[%s2665 + $0x21] sm:$0xff]
      %v3060 = vld [vmem:[%s2665 + $0x31] sm:$0xff]
      %v3061 = vld [vmem:[%s2665 + $0x39] sm:$0xff]
      %v3062 = vld [vmem:[%s2665 + $0x49] sm:$0xff]
      %v3063 = vld [vmem:[%s2665 + $0x51] sm:$0xff]
      %v3064 = vld [vmem:[%s2665 + $0x61] sm:$0xff]
      %v3065 = vld [vmem:[%s2665 + $0x69] sm:$0xff]
      %v3066 = vld [vmem:[%s2665 + $0x79] sm:$0xff]
      %v3067 = vld [vmem:[%s2665 + $0x81] sm:$0xff]
      %v3068 = vld [vmem:[%s2665 + $0x91] sm:$0xff]
      %v3069 = vld [vmem:[%s2665 + $0x99] sm:$0xff]
      %v3070 = vld [vmem:[%s2665 + $0xa9] sm:$0xff]
      %v3071 = vld [vmem:[%s2665 + $0xb1] sm:$0xff]
      %v3072 = vld [vmem:[%s2665 + $0xc1] sm:$0xff]
      %v3073 = vld [vmem:[%s2665 + $0xc9] sm:$0xff]
      %v3074 = vld [vmem:[%s2665 + $0xd9] sm:$0xff]
      %v3075 = vld [vmem:[%s2665 + $0xe1] sm:$0xff]
      %v3076 = vld [vmem:[%s2665 + $0xf1] sm:$0xff]
      %v3077 = vld [vmem:[%s2665 + $0xf9] sm:$0xff]
      %v3078 = vld [vmem:[%s2665 + $0x109] sm:$0xff]
      %v3079 = vld [vmem:[%s2665 + $0x111] sm:$0xff]
      %v3080 = vld [vmem:[%s2665 + $0x121] sm:$0xff]
      %v3081 = vld [vmem:[%s2665 + $0x129] sm:$0xff]
      %v3082 = vld [vmem:[%s2665 + $0x139] sm:$0xff]
      %v3083 = vld [vmem:[%s2665 + $0x141] sm:$0xff]
      %v3084 = vld [vmem:[%s2665 + $0x151] sm:$0xff]
      %v3085 = vld [vmem:[%s2665 + $0x159] sm:$0xff]
      %v3086 = vld [vmem:[%s2665 + $0x169] sm:$0xff]
      %v3087 = vld [vmem:[%s2665 + $0x171] sm:$0xff]
      %s3088 = scalar_lea.vmem %s1, 28
      %v3089 = vld [vmem:[%s3088] sm:$0xf]
      %v3091 = vsel %vm226, %v3056, 0
      %v3094 = vsel %vm226, %v3057, 0
      %v3097 = vsel %vm226, %v3058, 0
      %v3100 = vsel %vm226, %v3059, 0
      %v3103 = vsel %vm226, %v3060, 0
      %v3106 = vsel %vm226, %v3061, 0
      %v3109 = vsel %vm226, %v3062, 0
      %v3112 = vsel %vm226, %v3063, 0
      %v3115 = vsel %vm226, %v3064, 0
      %v3118 = vsel %vm226, %v3065, 0
      %v3121 = vsel %vm226, %v3066, 0
      %v3124 = vsel %vm226, %v3067, 0
      %v3127 = vsel %vm226, %v3068, 0
      %v3130 = vsel %vm226, %v3069, 0
      %v3133 = vsel %vm226, %v3070, 0
      %v3136 = vsel %vm226, %v3071, 0
      %v3139 = vsel %vm226, %v3072, 0
      %v3142 = vsel %vm226, %v3073, 0
      %v3145 = vsel %vm226, %v3074, 0
      %v3148 = vsel %vm226, %v3075, 0
      %v3151 = vsel %vm226, %v3076, 0
      %v3154 = vsel %vm226, %v3077, 0
      %v3157 = vsel %vm226, %v3078, 0
      %v3160 = vsel %vm226, %v3079, 0
      %v3163 = vsel %vm226, %v3080, 0
      %v3166 = vsel %vm226, %v3081, 0
      %v3169 = vsel %vm226, %v3082, 0
      %v3172 = vsel %vm226, %v3083, 0
      %v3175 = vsel %vm226, %v3084, 0
      %v3178 = vsel %vm226, %v3085, 0
      %v3181 = vsel %vm226, %v3086, 0
      %v3184 = vsel %vm226, %v3087, 0
      %v3187 = vsel %vm552, %v3089, 0
      %3189 = vmatprep.subr.mxu0 0.0
      %3190 = vmatpush1.msra.mxu0 %v3187
      %3191 = vmatprep.subr.mxu0 0.0
      %3192 = vmatpush1.msra.mxu0 0.0
      %3193 = vmatprep.subr.mxu0 0.0
      %3194 = vmatpush1.msra.mxu0 0.0
      %3195 = vmatprep.subr.mxu0 0.0
      %3196 = vmatpush1.msra.mxu0 0.0
      %3197 = vmatprep.subr.mxu0 0.0
      %3198 = vmatpush1.msra.mxu0 0.0
      %3199 = vmatprep.subr.mxu0 0.0
      %3200 = vmatpush1.msra.mxu0 0.0
      %3201 = vmatprep.subr.mxu0 0.0
      %3202 = vmatpush1.msra.mxu0 0.0
      %3203 = vmatprep.subr.mxu0 0.0
      %3204 = vmatpush1.msra.mxu0 0.0
      %3205 = vmatprep.subr.mxu0 0.0
      %3206 = vmatpush1.msra.mxu0 0.0
      %3207 = vmatprep.subr.mxu0 0.0
      %3208 = vmatpush1.msra.mxu0 0.0
      %3209 = vmatprep.subr.mxu0 0.0
      %3210 = vmatpush1.msra.mxu0 0.0
      %3211 = vmatprep.subr.mxu0 0.0
      %3212 = vmatpush1.msra.mxu0 0.0
      %3213 = vmatprep.subr.mxu0 0.0
      %3214 = vmatpush1.msra.mxu0 0.0
      %3215 = vmatprep.subr.mxu0 0.0
      %3216 = vmatpush1.msra.mxu0 0.0
      %3217 = vmatprep.subr.mxu0 0.0
      %3218 = vmatpush1.msra.mxu0 0.0
      %3219 = vmatprep.subr.mxu0 0.0
      %3220 = vmatpush1.msra.mxu0 0.0
      %3221 = vmatprep.subr.mxu0 0.0
      %3222 = vmatpush1.msra.mxu0 0.0
      %3223 = vmatprep.subr.mxu0 0.0
      %3224 = vmatpush1.msra.mxu0 0.0
      %3225 = vmatprep.subr.mxu0 0.0
      %3226 = vmatpush1.msra.mxu0 0.0
      %3227 = vmatprep.subr.mxu0 0.0
      %3228 = vmatpush1.msra.mxu0 0.0
      %3229 = vmatprep.subr.mxu0 0.0
      %3230 = vmatpush1.msra.mxu0 0.0
      %3231 = vmatprep.subr.mxu0 0.0
      %3232 = vmatpush1.msra.mxu0 0.0
      %3233 = vmatprep.subr.mxu0 0.0
      %3234 = vmatpush1.msra.mxu0 0.0
      %3235 = vmatprep.subr.mxu0 0.0
      %3236 = vmatpush1.msra.mxu0 0.0
      %3237 = vmatprep.subr.mxu0 0.0
      %3238 = vmatpush1.msra.mxu0 0.0
      %3239 = vmatprep.subr.mxu0 0.0
      %3240 = vmatpush1.msra.mxu0 0.0
      %3241 = vmatprep.subr.mxu0 0.0
      %3242 = vmatpush1.msra.mxu0 0.0
      %3243 = vmatprep.subr.mxu0 0.0
      %3244 = vmatpush1.msra.mxu0 0.0
      %3245 = vmatprep.subr.mxu0 0.0
      %3246 = vmatpush1.msra.mxu0 0.0
      %3247 = vmatprep.subr.mxu0 0.0
      %3248 = vmatpush1.msra.mxu0 0.0
      %3249 = vmatprep.subr.mxu0 0.0
      %3250 = vmatpush1.msra.mxu0 0.0
      %3251 = vmatprep.subr.mxu0 0.0
      %3252 = vmatpush1.msra.mxu0 0.0
      %3253 = vmatprep.mubr.f32.mxu0 0.0
      %3254 = vmatmul.mubr.f32.gmra.mrb[0].mxu0 %v3091
      %v3255 = vpop.f32.mrb[0].mxu0
      %v3256 = vadd.f32 0.0, %v3255
      %v3257 = vpop.f32.mrb[0].mxu0
      %3258 = vmatprep.mubr.f32.mxu0 0.0
      %3259 = vmatmul.mubr.f32.gmra.mrb[0].mxu0 %v3094
      %v3260 = vpop.f32.mrb[0].mxu0
      %v3261 = vadd.f32 0.0, %v3260
      %v3262 = vpop.f32.mrb[0].mxu0
      %3263 = vmatprep.mubr.f32.mxu0 0.0
      %3264 = vmatmul.mubr.f32.gmra.mrb[0].mxu0 %v3097
      %v3265 = vpop.f32.mrb[0].mxu0
      %v3266 = vadd.f32 0.0, %v3265
      %v3267 = vpop.f32.mrb[0].mxu0
      %3268 = vmatprep.mubr.f32.mxu0 0.0
      %3269 = vmatmul.mubr.f32.gmra.mrb[0].mxu0 %v3100
      %v3270 = vpop.f32.mrb[0].mxu0
      %v3271 = vadd.f32 0.0, %v3270
      %v3272 = vpop.f32.mrb[0].mxu0
      %3273 = vmatprep.mubr.f32.mxu0 0.0
      %3274 = vmatmul.mubr.f32.gmra.mrb[0].mxu0 %v3103
      %v3275 = vpop.f32.mrb[0].mxu0
      %v3276 = vadd.f32 0.0, %v3275
      %v3277 = vpop.f32.mrb[0].mxu0
      %3278 = vmatprep.mubr.f32.mxu0 0.0
      %3279 = vmatmul.mubr.f32.gmra.mrb[0].mxu0 %v3106
      %v3280 = vpop.f32.mrb[0].mxu0
      %v3281 = vadd.f32 0.0, %v3280
      %v3282 = vpop.f32.mrb[0].mxu0
      %3283 = vmatprep.mubr.f32.mxu0 0.0
      %3284 = vmatmul.mubr.f32.gmra.mrb[0].mxu0 %v3109
      %v3285 = vpop.f32.mrb[0].mxu0
      %v3286 = vadd.f32 0.0, %v3285
      %v3287 = vpop.f32.mrb[0].mxu0
      %3288 = vmatprep.mubr.f32.mxu0 0.0
      %3289 = vmatmul.mubr.f32.gmra.mrb[0].mxu0 %v3112
      %v3290 = vpop.f32.mrb[0].mxu0
      %v3291 = vadd.f32 0.0, %v3290
      %v3292 = vpop.f32.mrb[0].mxu0
      %3293 = vmatprep.mubr.f32.mxu0 0.0
      %3294 = vmatmul.mubr.f32.gmra.mrb[0].mxu0 %v3115
      %v3295 = vpop.f32.mrb[0].mxu0
      %v3296 = vadd.f32 0.0, %v3295
      %v3297 = vpop.f32.mrb[0].mxu0
      %3298 = vmatprep.mubr.f32.mxu0 0.0
      %3299 = vmatmul.mubr.f32.gmra.mrb[0].mxu0 %v3118
      %v3300 = vpop.f32.mrb[0].mxu0
      %v3301 = vadd.f32 0.0, %v3300
      %v3302 = vpop.f32.mrb[0].mxu0
      %3303 = vmatprep.mubr.f32.mxu0 0.0
      %3304 = vmatmul.mubr.f32.gmra.mrb[0].mxu0 %v3121
      %v3305 = vpop.f32.mrb[0].mxu0
      %v3306 = vadd.f32 0.0, %v3305
      %v3307 = vpop.f32.mrb[0].mxu0
      %3308 = vmatprep.mubr.f32.mxu0 0.0
      %3309 = vmatmul.mubr.f32.gmra.mrb[0].mxu0 %v3124
      %v3310 = vpop.f32.mrb[0].mxu0
      %v3311 = vadd.f32 0.0, %v3310
      %v3312 = vpop.f32.mrb[0].mxu0
      %3313 = vmatprep.mubr.f32.mxu0 0.0
      %3314 = vmatmul.mubr.f32.gmra.mrb[0].mxu0 %v3127
      %v3315 = vpop.f32.mrb[0].mxu0
      %v3316 = vadd.f32 0.0, %v3315
      %v3317 = vpop.f32.mrb[0].mxu0
      %3318 = vmatprep.mubr.f32.mxu0 0.0
      %3319 = vmatmul.mubr.f32.gmra.mrb[0].mxu0 %v3130
      %v3320 = vpop.f32.mrb[0].mxu0
      %v3321 = vadd.f32 0.0, %v3320
      %v3322 = vpop.f32.mrb[0].mxu0
      %3323 = vmatprep.mubr.f32.mxu0 0.0
      %3324 = vmatmul.mubr.f32.gmra.mrb[0].mxu0 %v3133
      %v3325 = vpop.f32.mrb[0].mxu0
      %v3326 = vadd.f32 0.0, %v3325
      %v3327 = vpop.f32.mrb[0].mxu0
      %3328 = vmatprep.mubr.f32.mxu0 0.0
      %3329 = vmatmul.mubr.f32.gmra.mrb[0].mxu0 %v3136
      %v3330 = vpop.f32.mrb[0].mxu0
      %v3331 = vadd.f32 0.0, %v3330
      %v3332 = vpop.f32.mrb[0].mxu0
      %3333 = vmatprep.mubr.f32.mxu0 0.0
      %3334 = vmatmul.mubr.f32.gmra.mrb[0].mxu0 %v3139
      %v3335 = vpop.f32.mrb[0].mxu0
      %v3336 = vadd.f32 0.0, %v3335
      %v3337 = vpop.f32.mrb[0].mxu0
      %3338 = vmatprep.mubr.f32.mxu0 0.0
      %3339 = vmatmul.mubr.f32.gmra.mrb[0].mxu0 %v3142
      %v3340 = vpop.f32.mrb[0].mxu0
      %v3341 = vadd.f32 0.0, %v3340
      %v3342 = vpop.f32.mrb[0].mxu0
      %3343 = vmatprep.mubr.f32.mxu0 0.0
      %3344 = vmatmul.mubr.f32.gmra.mrb[0].mxu0 %v3145
      %v3345 = vpop.f32.mrb[0].mxu0
      %v3346 = vadd.f32 0.0, %v3345
      %v3347 = vpop.f32.mrb[0].mxu0
      %3348 = vmatprep.mubr.f32.mxu0 0.0
      %3349 = vmatmul.mubr.f32.gmra.mrb[0].mxu0 %v3148
      %v3350 = vpop.f32.mrb[0].mxu0
      %v3351 = vadd.f32 0.0, %v3350
      %v3352 = vpop.f32.mrb[0].mxu0
      %3353 = vmatprep.mubr.f32.mxu0 0.0
      %3354 = vmatmul.mubr.f32.gmra.mrb[0].mxu0 %v3151
      %v3355 = vpop.f32.mrb[0].mxu0
      %v3356 = vadd.f32 0.0, %v3355
      %v3357 = vpop.f32.mrb[0].mxu0
      %3358 = vmatprep.mubr.f32.mxu0 0.0
      %3359 = vmatmul.mubr.f32.gmra.mrb[0].mxu0 %v3154
      %v3360 = vpop.f32.mrb[0].mxu0
      %v3361 = vadd.f32 0.0, %v3360
      %v3362 = vpop.f32.mrb[0].mxu0
      %3363 = vmatprep.mubr.f32.mxu0 0.0
      %3364 = vmatmul.mubr.f32.gmra.mrb[0].mxu0 %v3157
      %v3365 = vpop.f32.mrb[0].mxu0
      %v3366 = vadd.f32 0.0, %v3365
      %v3367 = vpop.f32.mrb[0].mxu0
      %3368 = vmatprep.mubr.f32.mxu0 0.0
      %3369 = vmatmul.mubr.f32.gmra.mrb[0].mxu0 %v3160
      %v3370 = vpop.f32.mrb[0].mxu0
      %v3371 = vadd.f32 0.0, %v3370
      %v3372 = vpop.f32.mrb[0].mxu0
      %3373 = vmatprep.mubr.f32.mxu0 0.0
      %3374 = vmatmul.mubr.f32.gmra.mrb[0].mxu0 %v3163
      %v3375 = vpop.f32.mrb[0].mxu0
      %v3376 = vadd.f32 0.0, %v3375
      %v3377 = vpop.f32.mrb[0].mxu0
      %3378 = vmatprep.mubr.f32.mxu0 0.0
      %3379 = vmatmul.mubr.f32.gmra.mrb[0].mxu0 %v3166
      %v3380 = vpop.f32.mrb[0].mxu0
      %v3381 = vadd.f32 0.0, %v3380
      %v3382 = vpop.f32.mrb[0].mxu0
      %3383 = vmatprep.mubr.f32.mxu0 0.0
      %3384 = vmatmul.mubr.f32.gmra.mrb[0].mxu0 %v3169
      %v3385 = vpop.f32.mrb[0].mxu0
      %v3386 = vadd.f32 0.0, %v3385
      %v3387 = vpop.f32.mrb[0].mxu0
      %3388 = vmatprep.mubr.f32.mxu0 0.0
      %3389 = vmatmul.mubr.f32.gmra.mrb[0].mxu0 %v3172
      %v3390 = vpop.f32.mrb[0].mxu0
      %v3391 = vadd.f32 0.0, %v3390
      %v3392 = vpop.f32.mrb[0].mxu0
      %3393 = vmatprep.mubr.f32.mxu0 0.0
      %3394 = vmatmul.mubr.f32.gmra.mrb[0].mxu0 %v3175
      %v3395 = vpop.f32.mrb[0].mxu0
      %v3396 = vadd.f32 0.0, %v3395
      %v3397 = vpop.f32.mrb[0].mxu0
      %3398 = vmatprep.mubr.f32.mxu0 0.0
      %3399 = vmatmul.mubr.f32.gmra.mrb[0].mxu0 %v3178
      %v3400 = vpop.f32.mrb[0].mxu0
      %v3401 = vadd.f32 0.0, %v3400
      %v3402 = vpop.f32.mrb[0].mxu0
      %3403 = vmatprep.mubr.f32.mxu0 0.0
      %3404 = vmatmul.mubr.f32.gmra.mrb[0].mxu0 %v3181
      %v3405 = vpop.f32.mrb[0].mxu0
      %v3406 = vadd.f32 0.0, %v3405
      %v3407 = vpop.f32.mrb[0].mxu0
      %3408 = vmatprep.mubr.f32.mxu0 0.0
      %3409 = vmatmul.mubr.f32.gmra.mrb[0].mxu0 %v3184
      %v3410 = vpop.f32.mrb[0].mxu0
      %v3411 = vadd.f32 0.0, %v3410
      %v3412 = vpop.f32.mrb[0].mxu0
      %3413 = vdwg.mxu0
      %v3414 = vadd.f32 %v3024, %v3256
      %v3415 = vadd.f32 %v3025, %v3261
      %v3416 = vadd.f32 %v3026, %v3266
      %v3417 = vadd.f32 %v3027, %v3271
      %v3418 = vadd.f32 %v3028, %v3276
      %v3419 = vadd.f32 %v3029, %v3281
      %v3420 = vadd.f32 %v3030, %v3286
      %v3421 = vadd.f32 %v3031, %v3291
      %v3422 = vadd.f32 %v3032, %v3296
      %v3423 = vadd.f32 %v3033, %v3301
      %v3424 = vadd.f32 %v3034, %v3306
      %v3425 = vadd.f32 %v3035, %v3311
      %v3426 = vadd.f32 %v3036, %v3316
      %v3427 = vadd.f32 %v3037, %v3321
      %v3428 = vadd.f32 %v3038, %v3326
      %v3429 = vadd.f32 %v3039, %v3331
      %v3430 = vadd.f32 %v3040, %v3336
      %v3431 = vadd.f32 %v3041, %v3341
      %v3432 = vadd.f32 %v3042, %v3346
      %v3433 = vadd.f32 %v3043, %v3351
      %v3434 = vadd.f32 %v3044, %v3356
      %v3435 = vadd.f32 %v3045, %v3361
      %v3436 = vadd.f32 %v3046, %v3366
      %v3437 = vadd.f32 %v3047, %v3371
      %v3438 = vadd.f32 %v3048, %v3376
      %v3439 = vadd.f32 %v3049, %v3381
      %v3440 = vadd.f32 %v3050, %v3386
      %v3441 = vadd.f32 %v3051, %v3391
      %v3442 = vadd.f32 %v3052, %v3396
      %v3443 = vadd.f32 %v3053, %v3401
      %v3444 = vadd.f32 %v3054, %v3406
      %v3445 = vadd.f32 %v3055, %v3411
      %v3446 = vld [vmem:[%s2665 + $0x2] sm:$0xff]
      %v3447 = vld [vmem:[%s2665 + $0xa] sm:$0xff]
      %v3448 = vld [vmem:[%s2665 + $0x1a] sm:$0xff]
      %v3449 = vld [vmem:[%s2665 + $0x22] sm:$0xff]
      %v3450 = vld [vmem:[%s2665 + $0x32] sm:$0xff]
      %v3451 = vld [vmem:[%s2665 + $0x3a] sm:$0xff]
      %v3452 = vld [vmem:[%s2665 + $0x4a] sm:$0xff]
      %v3453 = vld [vmem:[%s2665 + $0x52] sm:$0xff]
      %v3454 = vld [vmem:[%s2665 + $0x62] sm:$0xff]
      %v3455 = vld [vmem:[%s2665 + $0x6a] sm:$0xff]
      %v3456 = vld [vmem:[%s2665 + $0x7a] sm:$0xff]
      %v3457 = vld [vmem:[%s2665 + $0x82] sm:$0xff]
      %v3458 = vld [vmem:[%s2665 + $0x92] sm:$0xff]
      %v3459 = vld [vmem:[%s2665 + $0x9a] sm:$0xff]
      %v3460 = vld [vmem:[%s2665 + $0xaa] sm:$0xff]
      %v3461 = vld [vmem:[%s2665 + $0xb2] sm:$0xff]
      %v3462 = vld [vmem:[%s2665 + $0xc2] sm:$0xff]
      %v3463 = vld [vmem:[%s2665 + $0xca] sm:$0xff]
      %v3464 = vld [vmem:[%s2665 + $0xda] sm:$0xff]
      %v3465 = vld [vmem:[%s2665 + $0xe2] sm:$0xff]
      %v3466 = vld [vmem:[%s2665 + $0xf2] sm:$0xff]
      %v3467 = vld [vmem:[%s2665 + $0xfa] sm:$0xff]
      %v3468 = vld [vmem:[%s2665 + $0x10a] sm:$0xff]
      %v3469 = vld [vmem:[%s2665 + $0x112] sm:$0xff]
      %v3470 = vld [vmem:[%s2665 + $0x122] sm:$0xff]
      %v3471 = vld [vmem:[%s2665 + $0x12a] sm:$0xff]
      %v3472 = vld [vmem:[%s2665 + $0x13a] sm:$0xff]
      %v3473 = vld [vmem:[%s2665 + $0x142] sm:$0xff]
      %v3474 = vld [vmem:[%s2665 + $0x152] sm:$0xff]
      %v3475 = vld [vmem:[%s2665 + $0x15a] sm:$0xff]
      %v3476 = vld [vmem:[%s2665 + $0x16a] sm:$0xff]
      %v3477 = vld [vmem:[%s2665 + $0x172] sm:$0xff]
      %s3478 = scalar_lea.vmem %s1, 32
      %v3479 = vld [vmem:[%s3478] sm:$0xf]
      %v3481 = vsel %vm226, %v3446, 0
      %v3484 = vsel %vm226, %v3447, 0
      %v3487 = vsel %vm226, %v3448, 0
      %v3490 = vsel %vm226, %v3449, 0
      %v3493 = vsel %vm226, %v3450, 0
      %v3496 = vsel %vm226, %v3451, 0
      %v3499 = vsel %vm226, %v3452, 0
      %v3502 = vsel %vm226, %v3453, 0
      %v3505 = vsel %vm226, %v3454, 0
      %v3508 = vsel %vm226, %v3455, 0
      %v3511 = vsel %vm226, %v3456, 0
      %v3514 = vsel %vm226, %v3457, 0
      %v3517 = vsel %vm226, %v3458, 0
      %v3520 = vsel %vm226, %v3459, 0
      %v3523 = vsel %vm226, %v3460, 0
      %v3526 = vsel %vm226, %v3461, 0
      %v3529 = vsel %vm226, %v3462, 0
      %v3532 = vsel %vm226, %v3463, 0
      %v3535 = vsel %vm226, %v3464, 0
      %v3538 = vsel %vm226, %v3465, 0
      %v3541 = vsel %vm226, %v3466, 0
      %v3544 = vsel %vm226, %v3467, 0
      %v3547 = vsel %vm226, %v3468, 0
      %v3550 = vsel %vm226, %v3469, 0
      %v3553 = vsel %vm226, %v3470, 0
      %v3556 = vsel %vm226, %v3471, 0
      %v3559 = vsel %vm226, %v3472, 0
      %v3562 = vsel %vm226, %v3473, 0
      %v3565 = vsel %vm226, %v3474, 0
      %v3568 = vsel %vm226, %v3475, 0
      %v3571 = vsel %vm226, %v3476, 0
      %v3574 = vsel %vm226, %v3477, 0
      %v3577 = vsel %vm552, %v3479, 0
      %3579 = vmatprep.subr.mxu0 0.0
      %3580 = vmatpush1.msra.mxu0 %v3577
      %3581 = vmatprep.subr.mxu0 0.0
      %3582 = vmatpush1.msra.mxu0 0.0
      %3583 = vmatprep.subr.mxu0 0.0
      %3584 = vmatpush1.msra.mxu0 0.0
      %3585 = vmatprep.subr.mxu0 0.0
      %3586 = vmatpush1.msra.mxu0 0.0
      %3587 = vmatprep.subr.mxu0 0.0
      %3588 = vmatpush1.msra.mxu0 0.0
      %3589 = vmatprep.subr.mxu0 0.0
      %3590 = vmatpush1.msra.mxu0 0.0
      %3591 = vmatprep.subr.mxu0 0.0
      %3592 = vmatpush1.msra.mxu0 0.0
      %3593 = vmatprep.subr.mxu0 0.0
      %3594 = vmatpush1.msra.mxu0 0.0
      %3595 = vmatprep.subr.mxu0 0.0
      %3596 = vmatpush1.msra.mxu0 0.0
      %3597 = vmatprep.subr.mxu0 0.0
      %3598 = vmatpush1.msra.mxu0 0.0
      %3599 = vmatprep.subr.mxu0 0.0
      %3600 = vmatpush1.msra.mxu0 0.0
      %3601 = vmatprep.subr.mxu0 0.0
      %3602 = vmatpush1.msra.mxu0 0.0
      %3603 = vmatprep.subr.mxu0 0.0
      %3604 = vmatpush1.msra.mxu0 0.0
      %3605 = vmatprep.subr.mxu0 0.0
      %3606 = vmatpush1.msra.mxu0 0.0
      %3607 = vmatprep.subr.mxu0 0.0
      %3608 = vmatpush1.msra.mxu0 0.0
      %3609 = vmatprep.subr.mxu0 0.0
      %3610 = vmatpush1.msra.mxu0 0.0
      %3611 = vmatprep.subr.mxu0 0.0
      %3612 = vmatpush1.msra.mxu0 0.0
      %3613 = vmatprep.subr.mxu0 0.0
      %3614 = vmatpush1.msra.mxu0 0.0
      %3615 = vmatprep.subr.mxu0 0.0
      %3616 = vmatpush1.msra.mxu0 0.0
      %3617 = vmatprep.subr.mxu0 0.0
      %3618 = vmatpush1.msra.mxu0 0.0
      %3619 = vmatprep.subr.mxu0 0.0
      %3620 = vmatpush1.msra.mxu0 0.0
      %3621 = vmatprep.subr.mxu0 0.0
      %3622 = vmatpush1.msra.mxu0 0.0
      %3623 = vmatprep.subr.mxu0 0.0
      %3624 = vmatpush1.msra.mxu0 0.0
      %3625 = vmatprep.subr.mxu0 0.0
      %3626 = vmatpush1.msra.mxu0 0.0
      %3627 = vmatprep.subr.mxu0 0.0
      %3628 = vmatpush1.msra.mxu0 0.0
      %3629 = vmatprep.subr.mxu0 0.0
      %3630 = vmatpush1.msra.mxu0 0.0
      %3631 = vmatprep.subr.mxu0 0.0
      %3632 = vmatpush1.msra.mxu0 0.0
      %3633 = vmatprep.subr.mxu0 0.0
      %3634 = vmatpush1.msra.mxu0 0.0
      %3635 = vmatprep.subr.mxu0 0.0
      %3636 = vmatpush1.msra.mxu0 0.0
      %3637 = vmatprep.subr.mxu0 0.0
      %3638 = vmatpush1.msra.mxu0 0.0
      %3639 = vmatprep.subr.mxu0 0.0
      %3640 = vmatpush1.msra.mxu0 0.0
      %3641 = vmatprep.subr.mxu0 0.0
      %3642 = vmatpush1.msra.mxu0 0.0
      %3643 = vmatprep.mubr.f32.mxu0 0.0
      %3644 = vmatmul.mubr.f32.gmra.mrb[0].mxu0 %v3481
      %v3645 = vpop.f32.mrb[0].mxu0
      %v3646 = vadd.f32 0.0, %v3645
      %v3647 = vpop.f32.mrb[0].mxu0
      %3648 = vmatprep.mubr.f32.mxu0 0.0
      %3649 = vmatmul.mubr.f32.gmra.mrb[0].mxu0 %v3484
      %v3650 = vpop.f32.mrb[0].mxu0
      %v3651 = vadd.f32 0.0, %v3650
      %v3652 = vpop.f32.mrb[0].mxu0
      %3653 = vmatprep.mubr.f32.mxu0 0.0
      %3654 = vmatmul.mubr.f32.gmra.mrb[0].mxu0 %v3487
      %v3655 = vpop.f32.mrb[0].mxu0
      %v3656 = vadd.f32 0.0, %v3655
      %v3657 = vpop.f32.mrb[0].mxu0
      %3658 = vmatprep.mubr.f32.mxu0 0.0
      %3659 = vmatmul.mubr.f32.gmra.mrb[0].mxu0 %v3490
      %v3660 = vpop.f32.mrb[0].mxu0
      %v3661 = vadd.f32 0.0, %v3660
      %v3662 = vpop.f32.mrb[0].mxu0
      %3663 = vmatprep.mubr.f32.mxu0 0.0
      %3664 = vmatmul.mubr.f32.gmra.mrb[0].mxu0 %v3493
      %v3665 = vpop.f32.mrb[0].mxu0
      %v3666 = vadd.f32 0.0, %v3665
      %v3667 = vpop.f32.mrb[0].mxu0
      %3668 = vmatprep.mubr.f32.mxu0 0.0
      %3669 = vmatmul.mubr.f32.gmra.mrb[0].mxu0 %v3496
      %v3670 = vpop.f32.mrb[0].mxu0
      %v3671 = vadd.f32 0.0, %v3670
      %v3672 = vpop.f32.mrb[0].mxu0
      %3673 = vmatprep.mubr.f32.mxu0 0.0
      %3674 = vmatmul.mubr.f32.gmra.mrb[0].mxu0 %v3499
      %v3675 = vpop.f32.mrb[0].mxu0
      %v3676 = vadd.f32 0.0, %v3675
      %v3677 = vpop.f32.mrb[0].mxu0
      %3678 = vmatprep.mubr.f32.mxu0 0.0
      %3679 = vmatmul.mubr.f32.gmra.mrb[0].mxu0 %v3502
      %v3680 = vpop.f32.mrb[0].mxu0
      %v3681 = vadd.f32 0.0, %v3680
      %v3682 = vpop.f32.mrb[0].mxu0
      %3683 = vmatprep.mubr.f32.mxu0 0.0
      %3684 = vmatmul.mubr.f32.gmra.mrb[0].mxu0 %v3505
      %v3685 = vpop.f32.mrb[0].mxu0
      %v3686 = vadd.f32 0.0, %v3685
      %v3687 = vpop.f32.mrb[0].mxu0
      %3688 = vmatprep.mubr.f32.mxu0 0.0
      %3689 = vmatmul.mubr.f32.gmra.mrb[0].mxu0 %v3508
      %v3690 = vpop.f32.mrb[0].mxu0
      %v3691 = vadd.f32 0.0, %v3690
      %v3692 = vpop.f32.mrb[0].mxu0
      %3693 = vmatprep.mubr.f32.mxu0 0.0
      %3694 = vmatmul.mubr.f32.gmra.mrb[0].mxu0 %v3511
      %v3695 = vpop.f32.mrb[0].mxu0
      %v3696 = vadd.f32 0.0, %v3695
      %v3697 = vpop.f32.mrb[0].mxu0
      %3698 = vmatprep.mubr.f32.mxu0 0.0
      %3699 = vmatmul.mubr.f32.gmra.mrb[0].mxu0 %v3514
      %v3700 = vpop.f32.mrb[0].mxu0
      %v3701 = vadd.f32 0.0, %v3700
      %v3702 = vpop.f32.mrb[0].mxu0
      %3703 = vmatprep.mubr.f32.mxu0 0.0
      %3704 = vmatmul.mubr.f32.gmra.mrb[0].mxu0 %v3517
      %v3705 = vpop.f32.mrb[0].mxu0
      %v3706 = vadd.f32 0.0, %v3705
      %v3707 = vpop.f32.mrb[0].mxu0
      %3708 = vmatprep.mubr.f32.mxu0 0.0
      %3709 = vmatmul.mubr.f32.gmra.mrb[0].mxu0 %v3520
      %v3710 = vpop.f32.mrb[0].mxu0
      %v3711 = vadd.f32 0.0, %v3710
      %v3712 = vpop.f32.mrb[0].mxu0
      %3713 = vmatprep.mubr.f32.mxu0 0.0
      %3714 = vmatmul.mubr.f32.gmra.mrb[0].mxu0 %v3523
      %v3715 = vpop.f32.mrb[0].mxu0
      %v3716 = vadd.f32 0.0, %v3715
      %v3717 = vpop.f32.mrb[0].mxu0
      %3718 = vmatprep.mubr.f32.mxu0 0.0
      %3719 = vmatmul.mubr.f32.gmra.mrb[0].mxu0 %v3526
      %v3720 = vpop.f32.mrb[0].mxu0
      %v3721 = vadd.f32 0.0, %v3720
      %v3722 = vpop.f32.mrb[0].mxu0
      %3723 = vmatprep.mubr.f32.mxu0 0.0
      %3724 = vmatmul.mubr.f32.gmra.mrb[0].mxu0 %v3529
      %v3725 = vpop.f32.mrb[0].mxu0
      %v3726 = vadd.f32 0.0, %v3725
      %v3727 = vpop.f32.mrb[0].mxu0
      %3728 = vmatprep.mubr.f32.mxu0 0.0
      %3729 = vmatmul.mubr.f32.gmra.mrb[0].mxu0 %v3532
      %v3730 = vpop.f32.mrb[0].mxu0
      %v3731 = vadd.f32 0.0, %v3730
      %v3732 = vpop.f32.mrb[0].mxu0
      %3733 = vmatprep.mubr.f32.mxu0 0.0
      %3734 = vmatmul.mubr.f32.gmra.mrb[0].mxu0 %v3535
      %v3735 = vpop.f32.mrb[0].mxu0
      %v3736 = vadd.f32 0.0, %v3735
      %v3737 = vpop.f32.mrb[0].mxu0
      %3738 = vmatprep.mubr.f32.mxu0 0.0
      %3739 = vmatmul.mubr.f32.gmra.mrb[0].mxu0 %v3538
      %v3740 = vpop.f32.mrb[0].mxu0
      %v3741 = vadd.f32 0.0, %v3740
      %v3742 = vpop.f32.mrb[0].mxu0
      %3743 = vmatprep.mubr.f32.mxu0 0.0
      %3744 = vmatmul.mubr.f32.gmra.mrb[0].mxu0 %v3541
      %v3745 = vpop.f32.mrb[0].mxu0
      %v3746 = vadd.f32 0.0, %v3745
      %v3747 = vpop.f32.mrb[0].mxu0
      %3748 = vmatprep.mubr.f32.mxu0 0.0
      %3749 = vmatmul.mubr.f32.gmra.mrb[0].mxu0 %v3544
      %v3750 = vpop.f32.mrb[0].mxu0
      %v3751 = vadd.f32 0.0, %v3750
      %v3752 = vpop.f32.mrb[0].mxu0
      %3753 = vmatprep.mubr.f32.mxu0 0.0
      %3754 = vmatmul.mubr.f32.gmra.mrb[0].mxu0 %v3547
      %v3755 = vpop.f32.mrb[0].mxu0
      %v3756 = vadd.f32 0.0, %v3755
      %v3757 = vpop.f32.mrb[0].mxu0
      %3758 = vmatprep.mubr.f32.mxu0 0.0
      %3759 = vmatmul.mubr.f32.gmra.mrb[0].mxu0 %v3550
      %v3760 = vpop.f32.mrb[0].mxu0
      %v3761 = vadd.f32 0.0, %v3760
      %v3762 = vpop.f32.mrb[0].mxu0
      %3763 = vmatprep.mubr.f32.mxu0 0.0
      %3764 = vmatmul.mubr.f32.gmra.mrb[0].mxu0 %v3553
      %v3765 = vpop.f32.mrb[0].mxu0
      %v3766 = vadd.f32 0.0, %v3765
      %v3767 = vpop.f32.mrb[0].mxu0
      %3768 = vmatprep.mubr.f32.mxu0 0.0
      %3769 = vmatmul.mubr.f32.gmra.mrb[0].mxu0 %v3556
      %v3770 = vpop.f32.mrb[0].mxu0
      %v3771 = vadd.f32 0.0, %v3770
      %v3772 = vpop.f32.mrb[0].mxu0
      %3773 = vmatprep.mubr.f32.mxu0 0.0
      %3774 = vmatmul.mubr.f32.gmra.mrb[0].mxu0 %v3559
      %v3775 = vpop.f32.mrb[0].mxu0
      %v3776 = vadd.f32 0.0, %v3775
      %v3777 = vpop.f32.mrb[0].mxu0
      %3778 = vmatprep.mubr.f32.mxu0 0.0
      %3779 = vmatmul.mubr.f32.gmra.mrb[0].mxu0 %v3562
      %v3780 = vpop.f32.mrb[0].mxu0
      %v3781 = vadd.f32 0.0, %v3780
      %v3782 = vpop.f32.mrb[0].mxu0
      %3783 = vmatprep.mubr.f32.mxu0 0.0
      %3784 = vmatmul.mubr.f32.gmra.mrb[0].mxu0 %v3565
      %v3785 = vpop.f32.mrb[0].mxu0
      %v3786 = vadd.f32 0.0, %v3785
      %v3787 = vpop.f32.mrb[0].mxu0
      %3788 = vmatprep.mubr.f32.mxu0 0.0
      %3789 = vmatmul.mubr.f32.gmra.mrb[0].mxu0 %v3568
      %v3790 = vpop.f32.mrb[0].mxu0
      %v3791 = vadd.f32 0.0, %v3790
      %v3792 = vpop.f32.mrb[0].mxu0
      %3793 = vmatprep.mubr.f32.mxu0 0.0
      %3794 = vmatmul.mubr.f32.gmra.mrb[0].mxu0 %v3571
      %v3795 = vpop.f32.mrb[0].mxu0
      %v3796 = vadd.f32 0.0, %v3795
      %v3797 = vpop.f32.mrb[0].mxu0
      %3798 = vmatprep.mubr.f32.mxu0 0.0
      %3799 = vmatmul.mubr.f32.gmra.mrb[0].mxu0 %v3574
      %v3800 = vpop.f32.mrb[0].mxu0
      %v3801 = vadd.f32 0.0, %v3800
      %v3802 = vpop.f32.mrb[0].mxu0
      %3803 = vdwg.mxu0
      %v3804 = vadd.f32 %v3414, %v3646
      %v3805 = vadd.f32 %v3415, %v3651
      %v3806 = vadd.f32 %v3416, %v3656
      %v3807 = vadd.f32 %v3417, %v3661
      %v3808 = vadd.f32 %v3418, %v3666
      %v3809 = vadd.f32 %v3419, %v3671
      %v3810 = vadd.f32 %v3420, %v3676
      %v3811 = vadd.f32 %v3421, %v3681
      %v3812 = vadd.f32 %v3422, %v3686
      %v3813 = vadd.f32 %v3423, %v3691
      %v3814 = vadd.f32 %v3424, %v3696
      %v3815 = vadd.f32 %v3425, %v3701
      %v3816 = vadd.f32 %v3426, %v3706
      %v3817 = vadd.f32 %v3427, %v3711
      %v3818 = vadd.f32 %v3428, %v3716
      %v3819 = vadd.f32 %v3429, %v3721
      %v3820 = vadd.f32 %v3430, %v3726
      %v3821 = vadd.f32 %v3431, %v3731
      %v3822 = vadd.f32 %v3432, %v3736
      %v3823 = vadd.f32 %v3433, %v3741
      %v3824 = vadd.f32 %v3434, %v3746
      %v3825 = vadd.f32 %v3435, %v3751
      %v3826 = vadd.f32 %v3436, %v3756
      %v3827 = vadd.f32 %v3437, %v3761
      %v3828 = vadd.f32 %v3438, %v3766
      %v3829 = vadd.f32 %v3439, %v3771
      %v3830 = vadd.f32 %v3440, %v3776
      %v3831 = vadd.f32 %v3441, %v3781
      %v3832 = vadd.f32 %v3442, %v3786
      %v3833 = vadd.f32 %v3443, %v3791
      %v3834 = vadd.f32 %v3444, %v3796
      %v3835 = vadd.f32 %v3445, %v3801
      %v3836 = vld [vmem:[%s2] sm:$0x1]
      %v3838 = vlaneseq
      %v3839 = vshrl.u32 %v3838, 7
      %v3840 = vsub.s32 0, %v3839
      %v3841 = vrot.slane %v3836, %v3840
      %v3843 = vadd.f32 %v3804, %v3841
      %v3844 = vadd.f32 %v3805, %v3841
      %v3845 = vadd.f32 %v3806, %v3841
      %v3846 = vadd.f32 %v3807, %v3841
      %v3847 = vadd.f32 %v3808, %v3841
      %v3848 = vadd.f32 %v3809, %v3841
      %v3849 = vadd.f32 %v3810, %v3841
      %v3850 = vadd.f32 %v3811, %v3841
      %v3851 = vadd.f32 %v3812, %v3841
      %v3852 = vadd.f32 %v3813, %v3841
      %v3853 = vadd.f32 %v3814, %v3841
      %v3854 = vadd.f32 %v3815, %v3841
      %v3855 = vadd.f32 %v3816, %v3841
      %v3856 = vadd.f32 %v3817, %v3841
      %v3857 = vadd.f32 %v3818, %v3841
      %v3858 = vadd.f32 %v3819, %v3841
      %v3859 = vadd.f32 %v3820, %v3841
      %v3860 = vadd.f32 %v3821, %v3841
      %v3861 = vadd.f32 %v3822, %v3841
      %v3862 = vadd.f32 %v3823, %v3841
      %v3863 = vadd.f32 %v3824, %v3841
      %v3864 = vadd.f32 %v3825, %v3841
      %v3865 = vadd.f32 %v3826, %v3841
      %v3866 = vadd.f32 %v3827, %v3841
      %v3867 = vadd.f32 %v3828, %v3841
      %v3868 = vadd.f32 %v3829, %v3841
      %v3869 = vadd.f32 %v3830, %v3841
      %v3870 = vadd.f32 %v3831, %v3841
      %v3871 = vadd.f32 %v3832, %v3841
      %v3872 = vadd.f32 %v3833, %v3841
      %v3873 = vadd.f32 %v3834, %v3841
      %v3874 = vadd.f32 %v3835, %v3841
      %vm3875 = vcmp.ge.f32.partialorder %v3843, 0.0
      %vm3876 = vcmp.ge.f32.partialorder %v3844, 0.0
      %vm3877 = vcmp.ge.f32.partialorder %v3845, 0.0
      %vm3878 = vcmp.ge.f32.partialorder %v3846, 0.0
      %vm3879 = vcmp.ge.f32.partialorder %v3847, 0.0
      %vm3880 = vcmp.ge.f32.partialorder %v3848, 0.0
      %vm3881 = vcmp.ge.f32.partialorder %v3849, 0.0
      %vm3882 = vcmp.ge.f32.partialorder %v3850, 0.0
      %vm3883 = vcmp.ge.f32.partialorder %v3851, 0.0
      %vm3884 = vcmp.ge.f32.partialorder %v3852, 0.0
      %vm3885 = vcmp.ge.f32.partialorder %v3853, 0.0
      %vm3886 = vcmp.ge.f32.partialorder %v3854, 0.0
      %vm3887 = vcmp.ge.f32.partialorder %v3855, 0.0
      %vm3888 = vcmp.ge.f32.partialorder %v3856, 0.0
      %vm3889 = vcmp.ge.f32.partialorder %v3857, 0.0
      %vm3890 = vcmp.ge.f32.partialorder %v3858, 0.0
      %vm3891 = vcmp.ge.f32.partialorder %v3859, 0.0
      %vm3892 = vcmp.ge.f32.partialorder %v3860, 0.0
      %vm3893 = vcmp.ge.f32.partialorder %v3861, 0.0
      %vm3894 = vcmp.ge.f32.partialorder %v3862, 0.0
      %vm3895 = vcmp.ge.f32.partialorder %v3863, 0.0
      %vm3896 = vcmp.ge.f32.partialorder %v3864, 0.0
      %vm3897 = vcmp.ge.f32.partialorder %v3865, 0.0
      %vm3898 = vcmp.ge.f32.partialorder %v3866, 0.0
      %vm3899 = vcmp.ge.f32.partialorder %v3867, 0.0
      %vm3900 = vcmp.ge.f32.partialorder %v3868, 0.0
      %vm3901 = vcmp.ge.f32.partialorder %v3869, 0.0
      %vm3902 = vcmp.ge.f32.partialorder %v3870, 0.0
      %vm3903 = vcmp.ge.f32.partialorder %v3871, 0.0
      %vm3904 = vcmp.ge.f32.partialorder %v3872, 0.0
      %vm3905 = vcmp.ge.f32.partialorder %v3873, 0.0
      %vm3906 = vcmp.ge.f32.partialorder %v3874, 0.0
      %v3907 = vmul.f32 %v3843, 0.2
      %v3908 = vmul.f32 %v3844, 0.2
      %v3909 = vmul.f32 %v3845, 0.2
      %v3910 = vmul.f32 %v3846, 0.2
      %v3911 = vmul.f32 %v3847, 0.2
      %v3912 = vmul.f32 %v3848, 0.2
      %v3913 = vmul.f32 %v3849, 0.2
      %v3914 = vmul.f32 %v3850, 0.2
      %v3915 = vmul.f32 %v3851, 0.2
      %v3916 = vmul.f32 %v3852, 0.2
      %v3917 = vmul.f32 %v3853, 0.2
      %v3918 = vmul.f32 %v3854, 0.2
      %v3919 = vmul.f32 %v3855, 0.2
      %v3920 = vmul.f32 %v3856, 0.2
      %v3921 = vmul.f32 %v3857, 0.2
      %v3922 = vmul.f32 %v3858, 0.2
      %v3923 = vmul.f32 %v3859, 0.2
      %v3924 = vmul.f32 %v3860, 0.2
      %v3925 = vmul.f32 %v3861, 0.2
      %v3926 = vmul.f32 %v3862, 0.2
      %v3927 = vmul.f32 %v3863, 0.2
      %v3928 = vmul.f32 %v3864, 0.2
      %v3929 = vmul.f32 %v3865, 0.2
      %v3930 = vmul.f32 %v3866, 0.2
      %v3931 = vmul.f32 %v3867, 0.2
      %v3932 = vmul.f32 %v3868, 0.2
      %v3933 = vmul.f32 %v3869, 0.2
      %v3934 = vmul.f32 %v3870, 0.2
      %v3935 = vmul.f32 %v3871, 0.2
      %v3936 = vmul.f32 %v3872, 0.2
      %v3937 = vmul.f32 %v3873, 0.2
      %v3938 = vmul.f32 %v3874, 0.2
      %v3939 = vsel %vm3875, %v3843, %v3907
      %v3940 = vsel %vm3876, %v3844, %v3908
      %v3941 = vsel %vm3877, %v3845, %v3909
      %v3942 = vsel %vm3878, %v3846, %v3910
      %v3943 = vsel %vm3879, %v3847, %v3911
      %v3944 = vsel %vm3880, %v3848, %v3912
      %v3945 = vsel %vm3881, %v3849, %v3913
      %v3946 = vsel %vm3882, %v3850, %v3914
      %v3947 = vsel %vm3883, %v3851, %v3915
      %v3948 = vsel %vm3884, %v3852, %v3916
      %v3949 = vsel %vm3885, %v3853, %v3917
      %v3950 = vsel %vm3886, %v3854, %v3918
      %v3951 = vsel %vm3887, %v3855, %v3919
      %v3952 = vsel %vm3888, %v3856, %v3920
      %v3953 = vsel %vm3889, %v3857, %v3921
      %v3954 = vsel %vm3890, %v3858, %v3922
      %v3955 = vsel %vm3891, %v3859, %v3923
      %v3956 = vsel %vm3892, %v3860, %v3924
      %v3957 = vsel %vm3893, %v3861, %v3925
      %v3958 = vsel %vm3894, %v3862, %v3926
      %v3959 = vsel %vm3895, %v3863, %v3927
      %v3960 = vsel %vm3896, %v3864, %v3928
      %v3961 = vsel %vm3897, %v3865, %v3929
      %v3962 = vsel %vm3898, %v3866, %v3930
      %v3963 = vsel %vm3899, %v3867, %v3931
      %v3964 = vsel %vm3900, %v3868, %v3932
      %v3965 = vsel %vm3901, %v3869, %v3933
      %v3966 = vsel %vm3902, %v3870, %v3934
      %v3967 = vsel %vm3903, %v3871, %v3935
      %v3968 = vsel %vm3904, %v3872, %v3936
      %v3969 = vsel %vm3905, %v3873, %v3937
      %v3970 = vsel %vm3906, %v3874, %v3938
      %s3971 = scalar_lea.vmem [#allocation3], 24
      %3972 = vst [vmem:[%s3971 + $0x1] sm:$0xff] %v3939
      %3973 = vst [vmem:[%s3971 + $0x9] sm:$0xff] %v3940
      %3974 = vst [vmem:[%s3971 + $0x19] sm:$0xff] %v3941
      %3975 = vst [vmem:[%s3971 + $0x21] sm:$0xff] %v3942
      %3976 = vst [vmem:[%s3971 + $0x31] sm:$0xff] %v3943
      %3977 = vst [vmem:[%s3971 + $0x39] sm:$0xff] %v3944
      %3978 = vst [vmem:[%s3971 + $0x49] sm:$0xff] %v3945
      %3979 = vst [vmem:[%s3971 + $0x51] sm:$0xff] %v3946
      %3980 = vst [vmem:[%s3971 + $0x61] sm:$0xff] %v3947
      %3981 = vst [vmem:[%s3971 + $0x69] sm:$0xff] %v3948
      %3982 = vst [vmem:[%s3971 + $0x79] sm:$0xff] %v3949
      %3983 = vst [vmem:[%s3971 + $0x81] sm:$0xff] %v3950
      %3984 = vst [vmem:[%s3971 + $0x91] sm:$0xff] %v3951
      %3985 = vst [vmem:[%s3971 + $0x99] sm:$0xff] %v3952
      %3986 = vst [vmem:[%s3971 + $0xa9] sm:$0xff] %v3953
      %3987 = vst [vmem:[%s3971 + $0xb1] sm:$0xff] %v3954
      %3988 = vst [vmem:[%s3971 + $0xc1] sm:$0xff] %v3955
      %3989 = vst [vmem:[%s3971 + $0xc9] sm:$0xff] %v3956
      %3990 = vst [vmem:[%s3971 + $0xd9] sm:$0xff] %v3957
      %3991 = vst [vmem:[%s3971 + $0xe1] sm:$0xff] %v3958
      %3992 = vst [vmem:[%s3971 + $0xf1] sm:$0xff] %v3959
      %3993 = vst [vmem:[%s3971 + $0xf9] sm:$0xff] %v3960
      %3994 = vst [vmem:[%s3971 + $0x109] sm:$0xff] %v3961
      %3995 = vst [vmem:[%s3971 + $0x111] sm:$0xff] %v3962
      %3996 = vst [vmem:[%s3971 + $0x121] sm:$0xff] %v3963
      %3997 = vst [vmem:[%s3971 + $0x129] sm:$0xff] %v3964
      %3998 = vst [vmem:[%s3971 + $0x139] sm:$0xff] %v3965
      %3999 = vst [vmem:[%s3971 + $0x141] sm:$0xff] %v3966
      %4000 = vst [vmem:[%s3971 + $0x151] sm:$0xff] %v3967
      %4001 = vst [vmem:[%s3971 + $0x159] sm:$0xff] %v3968
      %4002 = vst [vmem:[%s3971 + $0x169] sm:$0xff] %v3969
      %4003 = vst [vmem:[%s3971 + $0x171] sm:$0xff] %v3970
      %v4004 = vld [vmem:[#allocation3] sm:$0xff]
      %v4005 = vld [vmem:[#allocation3 + $0x8] sm:$0xff]
      %v4006 = vld [vmem:[#allocation3 + $0x18] sm:$0xff]
      %v4007 = vld [vmem:[#allocation3 + $0x20] sm:$0xff]
      %v4008 = vld [vmem:[#allocation3 + $0x30] sm:$0xff]
      %v4009 = vld [vmem:[#allocation3 + $0x38] sm:$0xff]
      %v4010 = vld [vmem:[#allocation3 + $0x48] sm:$0xff]
      %v4011 = vld [vmem:[#allocation3 + $0x50] sm:$0xff]
      %v4012 = vld [vmem:[#allocation3 + $0x60] sm:$0xff]
      %v4013 = vld [vmem:[#allocation3 + $0x68] sm:$0xff]
      %v4014 = vld [vmem:[#allocation3 + $0x78] sm:$0xff]
      %v4015 = vld [vmem:[#allocation3 + $0x80] sm:$0xff]
      %v4016 = vld [vmem:[#allocation3 + $0x90] sm:$0xff]
      %v4017 = vld [vmem:[#allocation3 + $0x98] sm:$0xff]
      %v4018 = vld [vmem:[#allocation3 + $0xa8] sm:$0xff]
      %v4019 = vld [vmem:[#allocation3 + $0xb0] sm:$0xff]
      %v4020 = vld [vmem:[#allocation3 + $0xc0] sm:$0xff]
      %v4021 = vld [vmem:[#allocation3 + $0xc8] sm:$0xff]
      %v4022 = vld [vmem:[#allocation3 + $0xd8] sm:$0xff]
      %v4023 = vld [vmem:[#allocation3 + $0xe0] sm:$0xff]
      %v4024 = vld [vmem:[#allocation3 + $0xf0] sm:$0xff]
      %v4025 = vld [vmem:[#allocation3 + $0xf8] sm:$0xff]
      %v4026 = vld [vmem:[#allocation3 + $0x108] sm:$0xff]
      %v4027 = vld [vmem:[#allocation3 + $0x110] sm:$0xff]
      %v4028 = vld [vmem:[#allocation3 + $0x120] sm:$0xff]
      %v4029 = vld [vmem:[#allocation3 + $0x128] sm:$0xff]
      %v4030 = vld [vmem:[#allocation3 + $0x138] sm:$0xff]
      %v4031 = vld [vmem:[#allocation3 + $0x140] sm:$0xff]
      %v4032 = vld [vmem:[#allocation3 + $0x150] sm:$0xff]
      %v4033 = vld [vmem:[#allocation3 + $0x158] sm:$0xff]
      %v4034 = vld [vmem:[#allocation3 + $0x168] sm:$0xff]
      %v4035 = vld [vmem:[#allocation3 + $0x170] sm:$0xff]
      %v4036 = vpack.c.bf16 %v4005, %v4004
      %v4037 = vpack.c.bf16 %v4007, %v4006
      %v4038 = vpack.c.bf16 %v4009, %v4008
      %v4039 = vpack.c.bf16 %v4011, %v4010
      %v4040 = vpack.c.bf16 %v4013, %v4012
      %v4041 = vpack.c.bf16 %v4015, %v4014
      %v4042 = vpack.c.bf16 %v4017, %v4016
      %v4043 = vpack.c.bf16 %v4019, %v4018
      %v4044 = vpack.c.bf16 %v4021, %v4020
      %v4045 = vpack.c.bf16 %v4023, %v4022
      %v4046 = vpack.c.bf16 %v4025, %v4024
      %v4047 = vpack.c.bf16 %v4027, %v4026
      %v4048 = vpack.c.bf16 %v4029, %v4028
      %v4049 = vpack.c.bf16 %v4031, %v4030
      %v4050 = vpack.c.bf16 %v4033, %v4032
      %v4051 = vpack.c.bf16 %v4035, %v4034
      %v4052 = vld [vmem:[%s3] sm:$0xf]
      %v4053 = vld [vmem:[%s3 + $0x4] sm:$0xf]
      %v4054 = vld [vmem:[%s3 + $0x8] sm:$0xf]
      %v4055 = vld [vmem:[%s3 + $0xc] sm:$0xf]
      %v4056 = vld [vmem:[%s3 + $0x10] sm:$0xf]
      %v4057 = vld [vmem:[%s3 + $0x14] sm:$0xf]
      %v4058 = vld [vmem:[%s3 + $0x18] sm:$0xf]
      %v4059 = vld [vmem:[%s3 + $0x1c] sm:$0xf]
      %v4060 = vld [vmem:[%s3 + $0x20] sm:$0xf]
      %v4061 = vld [vmem:[%s3 + $0x24] sm:$0xf]
      %v4062 = vld [vmem:[%s3 + $0x28] sm:$0xf]
      %v4063 = vld [vmem:[%s3 + $0x2c] sm:$0xf]
      %v4064 = vld [vmem:[%s3 + $0x30] sm:$0xf]
      %v4065 = vld [vmem:[%s3 + $0x34] sm:$0xf]
      %v4066 = vld [vmem:[%s3 + $0x38] sm:$0xf]
      %v4067 = vld [vmem:[%s3 + $0x3c] sm:$0xf]
      %v4068 = vld [vmem:[#allocation3 + $0x1] sm:$0xff]
      %v4069 = vld [vmem:[#allocation3 + $0x9] sm:$0xff]
      %v4070 = vld [vmem:[#allocation3 + $0x19] sm:$0xff]
      %v4071 = vld [vmem:[#allocation3 + $0x21] sm:$0xff]
      %v4072 = vld [vmem:[#allocation3 + $0x31] sm:$0xff]
      %v4073 = vld [vmem:[#allocation3 + $0x39] sm:$0xff]
      %v4074 = vld [vmem:[#allocation3 + $0x49] sm:$0xff]
      %v4075 = vld [vmem:[#allocation3 + $0x51] sm:$0xff]
      %v4076 = vld [vmem:[#allocation3 + $0x61] sm:$0xff]
      %v4077 = vld [vmem:[#allocation3 + $0x69] sm:$0xff]
      %v4078 = vld [vmem:[#allocation3 + $0x79] sm:$0xff]
      %v4079 = vld [vmem:[#allocation3 + $0x81] sm:$0xff]
      %v4080 = vld [vmem:[#allocation3 + $0x91] sm:$0xff]
      %v4081 = vld [vmem:[#allocation3 + $0x99] sm:$0xff]
      %v4082 = vld [vmem:[#allocation3 + $0xa9] sm:$0xff]
      %v4083 = vld [vmem:[#allocation3 + $0xb1] sm:$0xff]
      %v4084 = vld [vmem:[#allocation3 + $0xc1] sm:$0xff]
      %v4085 = vld [vmem:[#allocation3 + $0xc9] sm:$0xff]
      %v4086 = vld [vmem:[#allocation3 + $0xd9] sm:$0xff]
      %v4087 = vld [vmem:[#allocation3 + $0xe1] sm:$0xff]
      %v4088 = vld [vmem:[#allocation3 + $0xf1] sm:$0xff]
      %v4089 = vld [vmem:[#allocation3 + $0xf9] sm:$0xff]
      %v4090 = vld [vmem:[#allocation3 + $0x109] sm:$0xff]
      %v4091 = vld [vmem:[#allocation3 + $0x111] sm:$0xff]
      %v4092 = vld [vmem:[#allocation3 + $0x121] sm:$0xff]
      %v4093 = vld [vmem:[#allocation3 + $0x129] sm:$0xff]
      %v4094 = vld [vmem:[#allocation3 + $0x139] sm:$0xff]
      %v4095 = vld [vmem:[#allocation3 + $0x141] sm:$0xff]
      %v4096 = vld [vmem:[#allocation3 + $0x151] sm:$0xff]
      %v4097 = vld [vmem:[#allocation3 + $0x159] sm:$0xff]
      %v4098 = vld [vmem:[#allocation3 + $0x169] sm:$0xff]
      %v4099 = vld [vmem:[#allocation3 + $0x171] sm:$0xff]
      %v4100 = vpack.c.bf16 %v4069, %v4068
      %v4101 = vpack.c.bf16 %v4071, %v4070
      %v4102 = vpack.c.bf16 %v4073, %v4072
      %v4103 = vpack.c.bf16 %v4075, %v4074
      %v4104 = vpack.c.bf16 %v4077, %v4076
      %v4105 = vpack.c.bf16 %v4079, %v4078
      %v4106 = vpack.c.bf16 %v4081, %v4080
      %v4107 = vpack.c.bf16 %v4083, %v4082
      %v4108 = vpack.c.bf16 %v4085, %v4084
      %v4109 = vpack.c.bf16 %v4087, %v4086
      %v4110 = vpack.c.bf16 %v4089, %v4088
      %v4111 = vpack.c.bf16 %v4091, %v4090
      %v4112 = vpack.c.bf16 %v4093, %v4092
      %v4113 = vpack.c.bf16 %v4095, %v4094
      %v4114 = vpack.c.bf16 %v4097, %v4096
      %v4115 = vpack.c.bf16 %v4099, %v4098
      %s4116 = scalar_lea.vmem %s3, 64
      %v4117 = vld [vmem:[%s4116] sm:$0xf]
      %v4118 = vld [vmem:[%s4116 + $0x4] sm:$0xf]
      %v4119 = vld [vmem:[%s4116 + $0x8] sm:$0xf]
      %v4120 = vld [vmem:[%s4116 + $0xc] sm:$0xf]
      %v4121 = vld [vmem:[%s4116 + $0x10] sm:$0xf]
      %v4122 = vld [vmem:[%s4116 + $0x14] sm:$0xf]
      %v4123 = vld [vmem:[%s4116 + $0x18] sm:$0xf]
      %v4124 = vld [vmem:[%s4116 + $0x1c] sm:$0xf]
      %v4125 = vld [vmem:[%s4116 + $0x20] sm:$0xf]
      %v4126 = vld [vmem:[%s4116 + $0x24] sm:$0xf]
      %v4127 = vld [vmem:[%s4116 + $0x28] sm:$0xf]
      %v4128 = vld [vmem:[%s4116 + $0x2c] sm:$0xf]
      %v4129 = vld [vmem:[%s4116 + $0x30] sm:$0xf]
      %v4130 = vld [vmem:[%s4116 + $0x34] sm:$0xf]
      %v4131 = vld [vmem:[%s4116 + $0x38] sm:$0xf]
      %v4132 = vld [vmem:[%s4116 + $0x3c] sm:$0xf]
      %v4149 = vunpack.c.l.b16 %v4117
      %v4150 = vunpack.c.l.b16 %v4118
      %v4151 = vunpack.c.l.b16 %v4119
      %v4152 = vunpack.c.l.b16 %v4120
      %v4153 = vunpack.c.l.b16 %v4121
      %v4154 = vunpack.c.l.b16 %v4122
      %v4155 = vunpack.c.l.b16 %v4123
      %v4156 = vunpack.c.l.b16 %v4124
      %v4157 = vunpack.c.l.b16 %v4125
      %v4158 = vunpack.c.l.b16 %v4126
      %v4159 = vunpack.c.l.b16 %v4127
      %v4160 = vunpack.c.l.b16 %v4128
      %v4161 = vunpack.c.l.b16 %v4129
      %v4162 = vunpack.c.l.b16 %v4130
      %v4163 = vunpack.c.l.b16 %v4131
      %v4164 = vunpack.c.l.b16 %v4132
      %v4165 = vpack.c.b16 %v4150, %v4149
      %v4166 = vpack.c.b16 %v4152, %v4151
      %v4167 = vpack.c.b16 %v4154, %v4153
      %v4168 = vpack.c.b16 %v4156, %v4155
      %v4169 = vpack.c.b16 %v4158, %v4157
      %v4170 = vpack.c.b16 %v4160, %v4159
      %v4171 = vpack.c.b16 %v4162, %v4161
      %v4172 = vpack.c.b16 %v4164, %v4163
      %4181 = vmatprep.subr.bf16.mxu0 0
      %4182 = vmatpush1.bf16.msra.mxu0 %v4165
      %4183 = vmatprep.subr.bf16.mxu0 0
      %4184 = vmatpush1.bf16.msra.mxu0 %v4166
      %4185 = vmatprep.subr.bf16.mxu0 0
      %4186 = vmatpush1.bf16.msra.mxu0 %v4167
      %4187 = vmatprep.subr.bf16.mxu0 0
      %4188 = vmatpush1.bf16.msra.mxu0 %v4168
      %4189 = vmatprep.subr.bf16.mxu0 0
      %4190 = vmatpush1.bf16.msra.mxu0 %v4169
      %4191 = vmatprep.subr.bf16.mxu0 0
      %4192 = vmatpush1.bf16.msra.mxu0 %v4170
      %4193 = vmatprep.subr.bf16.mxu0 0
      %4194 = vmatpush1.bf16.msra.mxu0 %v4171
      %4195 = vmatprep.subr.bf16.mxu0 0
      %4196 = vmatpush1.bf16.msra.mxu0 %v4172
      %4197 = vmatprep.subr.bf16.mxu0 0
      %4198 = vmatpush1.bf16.msra.mxu0 0
      %4199 = vmatprep.subr.bf16.mxu0 0
      %4200 = vmatpush1.bf16.msra.mxu0 0
      %4201 = vmatprep.subr.bf16.mxu0 0
      %4202 = vmatpush1.bf16.msra.mxu0 0
      %4203 = vmatprep.subr.bf16.mxu0 0
      %4204 = vmatpush1.bf16.msra.mxu0 0
      %4205 = vmatprep.subr.bf16.mxu0 0
      %4206 = vmatpush1.bf16.msra.mxu0 0
      %4207 = vmatprep.subr.bf16.mxu0 0
      %4208 = vmatpush1.bf16.msra.mxu0 0
      %4209 = vmatprep.subr.bf16.mxu0 0
      %4210 = vmatpush1.bf16.msra.mxu0 0
      %4211 = vmatprep.subr.bf16.mxu0 0
      %4212 = vmatpush1.bf16.msra.mxu0 0
      %4213 = vmatprep.mubr.bf16.mxu0 0
      %4214 = vmatmul.mubr.bf16.gmra.mrb[0].mxu0 %v4100
      %v4215 = vpop.f32.mrb[0].mxu0
      %v4216 = vadd.f32 0.0, %v4215
      %v4217 = vpop.f32.mrb[0].mxu0
      %v4218 = vpop.f32.mrb[0].mxu0
      %v4219 = vadd.f32 0.0, %v4218
      %v4220 = vpop.f32.mrb[0].mxu0
      %4221 = vmatprep.mubr.bf16.mxu0 0
      %4222 = vmatmul.mubr.bf16.gmra.mrb[0].mxu0 %v4101
      %v4223 = vpop.f32.mrb[0].mxu0
      %v4224 = vadd.f32 0.0, %v4223
      %v4225 = vpop.f32.mrb[0].mxu0
      %v4226 = vpop.f32.mrb[0].mxu0
      %v4227 = vadd.f32 0.0, %v4226
      %v4228 = vpop.f32.mrb[0].mxu0
      %4229 = vmatprep.mubr.bf16.mxu0 0
      %4230 = vmatmul.mubr.bf16.gmra.mrb[0].mxu0 %v4102
      %v4231 = vpop.f32.mrb[0].mxu0
      %v4232 = vadd.f32 0.0, %v4231
      %v4233 = vpop.f32.mrb[0].mxu0
      %v4234 = vpop.f32.mrb[0].mxu0
      %v4235 = vadd.f32 0.0, %v4234
      %v4236 = vpop.f32.mrb[0].mxu0
      %4237 = vmatprep.mubr.bf16.mxu0 0
      %4238 = vmatmul.mubr.bf16.gmra.mrb[0].mxu0 %v4103
      %v4239 = vpop.f32.mrb[0].mxu0
      %v4240 = vadd.f32 0.0, %v4239
      %v4241 = vpop.f32.mrb[0].mxu0
      %v4242 = vpop.f32.mrb[0].mxu0
      %v4243 = vadd.f32 0.0, %v4242
      %v4244 = vpop.f32.mrb[0].mxu0
      %4245 = vmatprep.mubr.bf16.mxu0 0
      %4246 = vmatmul.mubr.bf16.gmra.mrb[0].mxu0 %v4104
      %v4247 = vpop.f32.mrb[0].mxu0
      %v4248 = vadd.f32 0.0, %v4247
      %v4249 = vpop.f32.mrb[0].mxu0
      %v4250 = vpop.f32.mrb[0].mxu0
      %v4251 = vadd.f32 0.0, %v4250
      %v4252 = vpop.f32.mrb[0].mxu0
      %4253 = vmatprep.mubr.bf16.mxu0 0
      %4254 = vmatmul.mubr.bf16.gmra.mrb[0].mxu0 %v4105
      %v4255 = vpop.f32.mrb[0].mxu0
      %v4256 = vadd.f32 0.0, %v4255
      %v4257 = vpop.f32.mrb[0].mxu0
      %v4258 = vpop.f32.mrb[0].mxu0
      %v4259 = vadd.f32 0.0, %v4258
      %v4260 = vpop.f32.mrb[0].mxu0
      %4261 = vmatprep.mubr.bf16.mxu0 0
      %4262 = vmatmul.mubr.bf16.gmra.mrb[0].mxu0 %v4106
      %v4263 = vpop.f32.mrb[0].mxu0
      %v4264 = vadd.f32 0.0, %v4263
      %v4265 = vpop.f32.mrb[0].mxu0
      %v4266 = vpop.f32.mrb[0].mxu0
      %v4267 = vadd.f32 0.0, %v4266
      %v4268 = vpop.f32.mrb[0].mxu0
      %4269 = vmatprep.mubr.bf16.mxu0 0
      %4270 = vmatmul.mubr.bf16.gmra.mrb[0].mxu0 %v4107
      %v4271 = vpop.f32.mrb[0].mxu0
      %v4272 = vadd.f32 0.0, %v4271
      %v4273 = vpop.f32.mrb[0].mxu0
      %v4274 = vpop.f32.mrb[0].mxu0
      %v4275 = vadd.f32 0.0, %v4274
      %v4276 = vpop.f32.mrb[0].mxu0
      %4277 = vmatprep.mubr.bf16.mxu0 0
      %4278 = vmatmul.mubr.bf16.gmra.mrb[0].mxu0 %v4108
      %v4279 = vpop.f32.mrb[0].mxu0
      %v4280 = vadd.f32 0.0, %v4279
      %v4281 = vpop.f32.mrb[0].mxu0
      %v4282 = vpop.f32.mrb[0].mxu0
      %v4283 = vadd.f32 0.0, %v4282
      %v4284 = vpop.f32.mrb[0].mxu0
      %4285 = vmatprep.mubr.bf16.mxu0 0
      %4286 = vmatmul.mubr.bf16.gmra.mrb[0].mxu0 %v4109
      %v4287 = vpop.f32.mrb[0].mxu0
      %v4288 = vadd.f32 0.0, %v4287
      %v4289 = vpop.f32.mrb[0].mxu0
      %v4290 = vpop.f32.mrb[0].mxu0
      %v4291 = vadd.f32 0.0, %v4290
      %v4292 = vpop.f32.mrb[0].mxu0
      %4293 = vmatprep.mubr.bf16.mxu0 0
      %4294 = vmatmul.mubr.bf16.gmra.mrb[0].mxu0 %v4110
      %v4295 = vpop.f32.mrb[0].mxu0
      %v4296 = vadd.f32 0.0, %v4295
      %v4297 = vpop.f32.mrb[0].mxu0
      %v4298 = vpop.f32.mrb[0].mxu0
      %v4299 = vadd.f32 0.0, %v4298
      %v4300 = vpop.f32.mrb[0].mxu0
      %4301 = vmatprep.mubr.bf16.mxu0 0
      %4302 = vmatmul.mubr.bf16.gmra.mrb[0].mxu0 %v4111
      %v4303 = vpop.f32.mrb[0].mxu0
      %v4304 = vadd.f32 0.0, %v4303
      %v4305 = vpop.f32.mrb[0].mxu0
      %v4306 = vpop.f32.mrb[0].mxu0
      %v4307 = vadd.f32 0.0, %v4306
      %v4308 = vpop.f32.mrb[0].mxu0
      %4309 = vmatprep.mubr.bf16.mxu0 0
      %4310 = vmatmul.mubr.bf16.gmra.mrb[0].mxu0 %v4112
      %v4311 = vpop.f32.mrb[0].mxu0
      %v4312 = vadd.f32 0.0, %v4311
      %v4313 = vpop.f32.mrb[0].mxu0
      %v4314 = vpop.f32.mrb[0].mxu0
      %v4315 = vadd.f32 0.0, %v4314
      %v4316 = vpop.f32.mrb[0].mxu0
      %4317 = vmatprep.mubr.bf16.mxu0 0
      %4318 = vmatmul.mubr.bf16.gmra.mrb[0].mxu0 %v4113
      %v4319 = vpop.f32.mrb[0].mxu0
      %v4320 = vadd.f32 0.0, %v4319
      %v4321 = vpop.f32.mrb[0].mxu0
      %v4322 = vpop.f32.mrb[0].mxu0
      %v4323 = vadd.f32 0.0, %v4322
      %v4324 = vpop.f32.mrb[0].mxu0
      %4325 = vmatprep.mubr.bf16.mxu0 0
      %4326 = vmatmul.mubr.bf16.gmra.mrb[0].mxu0 %v4114
      %v4327 = vpop.f32.mrb[0].mxu0
      %v4328 = vadd.f32 0.0, %v4327
      %v4329 = vpop.f32.mrb[0].mxu0
      %v4330 = vpop.f32.mrb[0].mxu0
      %v4331 = vadd.f32 0.0, %v4330
      %v4332 = vpop.f32.mrb[0].mxu0
      %4333 = vmatprep.mubr.bf16.mxu0 0
      %4334 = vmatmul.mubr.bf16.gmra.mrb[0].mxu0 %v4115
      %v4335 = vpop.f32.mrb[0].mxu0
      %v4336 = vadd.f32 0.0, %v4335
      %v4337 = vpop.f32.mrb[0].mxu0
      %v4338 = vpop.f32.mrb[0].mxu0
      %v4339 = vadd.f32 0.0, %v4338
      %v4340 = vpop.f32.mrb[0].mxu0
      %4341 = vdwg.mxu0
      %v4358 = vunpack.c.l.b16 %v4052
      %v4359 = vunpack.c.l.b16 %v4053
      %v4360 = vunpack.c.l.b16 %v4054
      %v4361 = vunpack.c.l.b16 %v4055
      %v4362 = vunpack.c.l.b16 %v4056
      %v4363 = vunpack.c.l.b16 %v4057
      %v4364 = vunpack.c.l.b16 %v4058
      %v4365 = vunpack.c.l.b16 %v4059
      %v4366 = vunpack.c.l.b16 %v4060
      %v4367 = vunpack.c.l.b16 %v4061
      %v4368 = vunpack.c.l.b16 %v4062
      %v4369 = vunpack.c.l.b16 %v4063
      %v4370 = vunpack.c.l.b16 %v4064
      %v4371 = vunpack.c.l.b16 %v4065
      %v4372 = vunpack.c.l.b16 %v4066
      %v4373 = vunpack.c.l.b16 %v4067
      %v4374 = vpack.c.b16 %v4359, %v4358
      %v4375 = vpack.c.b16 %v4361, %v4360
      %v4376 = vpack.c.b16 %v4363, %v4362
      %v4377 = vpack.c.b16 %v4365, %v4364
      %v4378 = vpack.c.b16 %v4367, %v4366
      %v4379 = vpack.c.b16 %v4369, %v4368
      %v4380 = vpack.c.b16 %v4371, %v4370
      %v4381 = vpack.c.b16 %v4373, %v4372
      %4390 = vmatprep.subr.bf16.mxu0 0
      %4391 = vmatpush1.bf16.msra.mxu0 %v4374
      %4392 = vmatprep.subr.bf16.mxu0 0
      %4393 = vmatpush1.bf16.msra.mxu0 %v4375
      %4394 = vmatprep.subr.bf16.mxu0 0
      %4395 = vmatpush1.bf16.msra.mxu0 %v4376
      %4396 = vmatprep.subr.bf16.mxu0 0
      %4397 = vmatpush1.bf16.msra.mxu0 %v4377
      %4398 = vmatprep.subr.bf16.mxu0 0
      %4399 = vmatpush1.bf16.msra.mxu0 %v4378
      %4400 = vmatprep.subr.bf16.mxu0 0
      %4401 = vmatpush1.bf16.msra.mxu0 %v4379
      %4402 = vmatprep.subr.bf16.mxu0 0
      %4403 = vmatpush1.bf16.msra.mxu0 %v4380
      %4404 = vmatprep.subr.bf16.mxu0 0
      %4405 = vmatpush1.bf16.msra.mxu0 %v4381
      %4406 = vmatprep.subr.bf16.mxu0 0
      %4407 = vmatpush1.bf16.msra.mxu0 0
      %4408 = vmatprep.subr.bf16.mxu0 0
      %4409 = vmatpush1.bf16.msra.mxu0 0
      %4410 = vmatprep.subr.bf16.mxu0 0
      %4411 = vmatpush1.bf16.msra.mxu0 0
      %4412 = vmatprep.subr.bf16.mxu0 0
      %4413 = vmatpush1.bf16.msra.mxu0 0
      %4414 = vmatprep.subr.bf16.mxu0 0
      %4415 = vmatpush1.bf16.msra.mxu0 0
      %4416 = vmatprep.subr.bf16.mxu0 0
      %4417 = vmatpush1.bf16.msra.mxu0 0
      %4418 = vmatprep.subr.bf16.mxu0 0
      %4419 = vmatpush1.bf16.msra.mxu0 0
      %4420 = vmatprep.subr.bf16.mxu0 0
      %4421 = vmatpush1.bf16.msra.mxu0 0
      %4422 = vmatprep.mubr.bf16.mxu0 0
      %4423 = vmatmul.mubr.bf16.gmra.mrb[0].mxu0 %v4036
      %v4424 = vpop.f32.mrb[0].mxu0
      %v4425 = vadd.f32 %v4216, %v4424
      %v4426 = vpop.f32.mrb[0].mxu0
      %v4427 = vpop.f32.mrb[0].mxu0
      %v4428 = vadd.f32 %v4219, %v4427
      %v4429 = vpop.f32.mrb[0].mxu0
      %4430 = vmatprep.mubr.bf16.mxu0 0
      %4431 = vmatmul.mubr.bf16.gmra.mrb[0].mxu0 %v4037
      %v4432 = vpop.f32.mrb[0].mxu0
      %v4433 = vadd.f32 %v4224, %v4432
      %v4434 = vpop.f32.mrb[0].mxu0
      %v4435 = vpop.f32.mrb[0].mxu0
      %v4436 = vadd.f32 %v4227, %v4435
      %v4437 = vpop.f32.mrb[0].mxu0
      %4438 = vmatprep.mubr.bf16.mxu0 0
      %4439 = vmatmul.mubr.bf16.gmra.mrb[0].mxu0 %v4038
      %v4440 = vpop.f32.mrb[0].mxu0
      %v4441 = vadd.f32 %v4232, %v4440
      %v4442 = vpop.f32.mrb[0].mxu0
      %v4443 = vpop.f32.mrb[0].mxu0
      %v4444 = vadd.f32 %v4235, %v4443
      %v4445 = vpop.f32.mrb[0].mxu0
      %4446 = vmatprep.mubr.bf16.mxu0 0
      %4447 = vmatmul.mubr.bf16.gmra.mrb[0].mxu0 %v4039
      %v4448 = vpop.f32.mrb[0].mxu0
      %v4449 = vadd.f32 %v4240, %v4448
      %v4450 = vpop.f32.mrb[0].mxu0
      %v4451 = vpop.f32.mrb[0].mxu0
      %v4452 = vadd.f32 %v4243, %v4451
      %v4453 = vpop.f32.mrb[0].mxu0
      %4454 = vmatprep.mubr.bf16.mxu0 0
      %4455 = vmatmul.mubr.bf16.gmra.mrb[0].mxu0 %v4040
      %v4456 = vpop.f32.mrb[0].mxu0
      %v4457 = vadd.f32 %v4248, %v4456
      %v4458 = vpop.f32.mrb[0].mxu0
      %v4459 = vpop.f32.mrb[0].mxu0
      %v4460 = vadd.f32 %v4251, %v4459
      %v4461 = vpop.f32.mrb[0].mxu0
      %4462 = vmatprep.mubr.bf16.mxu0 0
      %4463 = vmatmul.mubr.bf16.gmra.mrb[0].mxu0 %v4041
      %v4464 = vpop.f32.mrb[0].mxu0
      %v4465 = vadd.f32 %v4256, %v4464
      %v4466 = vpop.f32.mrb[0].mxu0
      %v4467 = vpop.f32.mrb[0].mxu0
      %v4468 = vadd.f32 %v4259, %v4467
      %v4469 = vpop.f32.mrb[0].mxu0
      %4470 = vmatprep.mubr.bf16.mxu0 0
      %4471 = vmatmul.mubr.bf16.gmra.mrb[0].mxu0 %v4042
      %v4472 = vpop.f32.mrb[0].mxu0
      %v4473 = vadd.f32 %v4264, %v4472
      %v4474 = vpop.f32.mrb[0].mxu0
      %v4475 = vpop.f32.mrb[0].mxu0
      %v4476 = vadd.f32 %v4267, %v4475
      %v4477 = vpop.f32.mrb[0].mxu0
      %4478 = vmatprep.mubr.bf16.mxu0 0
      %4479 = vmatmul.mubr.bf16.gmra.mrb[0].mxu0 %v4043
      %v4480 = vpop.f32.mrb[0].mxu0
      %v4481 = vadd.f32 %v4272, %v4480
      %v4482 = vpop.f32.mrb[0].mxu0
      %v4483 = vpop.f32.mrb[0].mxu0
      %v4484 = vadd.f32 %v4275, %v4483
      %v4485 = vpop.f32.mrb[0].mxu0
      %4486 = vmatprep.mubr.bf16.mxu0 0
      %4487 = vmatmul.mubr.bf16.gmra.mrb[0].mxu0 %v4044
      %v4488 = vpop.f32.mrb[0].mxu0
      %v4489 = vadd.f32 %v4280, %v4488
      %v4490 = vpop.f32.mrb[0].mxu0
      %v4491 = vpop.f32.mrb[0].mxu0
      %v4492 = vadd.f32 %v4283, %v4491
      %v4493 = vpop.f32.mrb[0].mxu0
      %4494 = vmatprep.mubr.bf16.mxu0 0
      %4495 = vmatmul.mubr.bf16.gmra.mrb[0].mxu0 %v4045
      %v4496 = vpop.f32.mrb[0].mxu0
      %v4497 = vadd.f32 %v4288, %v4496
      %v4498 = vpop.f32.mrb[0].mxu0
      %v4499 = vpop.f32.mrb[0].mxu0
      %v4500 = vadd.f32 %v4291, %v4499
      %v4501 = vpop.f32.mrb[0].mxu0
      %4502 = vmatprep.mubr.bf16.mxu0 0
      %4503 = vmatmul.mubr.bf16.gmra.mrb[0].mxu0 %v4046
      %v4504 = vpop.f32.mrb[0].mxu0
      %v4505 = vadd.f32 %v4296, %v4504
      %v4506 = vpop.f32.mrb[0].mxu0
      %v4507 = vpop.f32.mrb[0].mxu0
      %v4508 = vadd.f32 %v4299, %v4507
      %v4509 = vpop.f32.mrb[0].mxu0
      %4510 = vmatprep.mubr.bf16.mxu0 0
      %4511 = vmatmul.mubr.bf16.gmra.mrb[0].mxu0 %v4047
      %v4512 = vpop.f32.mrb[0].mxu0
      %v4513 = vadd.f32 %v4304, %v4512
      %v4514 = vpop.f32.mrb[0].mxu0
      %v4515 = vpop.f32.mrb[0].mxu0
      %v4516 = vadd.f32 %v4307, %v4515
      %v4517 = vpop.f32.mrb[0].mxu0
      %4518 = vmatprep.mubr.bf16.mxu0 0
      %4519 = vmatmul.mubr.bf16.gmra.mrb[0].mxu0 %v4048
      %v4520 = vpop.f32.mrb[0].mxu0
      %v4521 = vadd.f32 %v4312, %v4520
      %v4522 = vpop.f32.mrb[0].mxu0
      %v4523 = vpop.f32.mrb[0].mxu0
      %v4524 = vadd.f32 %v4315, %v4523
      %v4525 = vpop.f32.mrb[0].mxu0
      %4526 = vmatprep.mubr.bf16.mxu0 0
      %4527 = vmatmul.mubr.bf16.gmra.mrb[0].mxu0 %v4049
      %v4528 = vpop.f32.mrb[0].mxu0
      %v4529 = vadd.f32 %v4320, %v4528
      %v4530 = vpop.f32.mrb[0].mxu0
      %v4531 = vpop.f32.mrb[0].mxu0
      %v4532 = vadd.f32 %v4323, %v4531
      %v4533 = vpop.f32.mrb[0].mxu0
      %4534 = vmatprep.mubr.bf16.mxu0 0
      %4535 = vmatmul.mubr.bf16.gmra.mrb[0].mxu0 %v4050
      %v4536 = vpop.f32.mrb[0].mxu0
      %v4537 = vadd.f32 %v4328, %v4536
      %v4538 = vpop.f32.mrb[0].mxu0
      %v4539 = vpop.f32.mrb[0].mxu0
      %v4540 = vadd.f32 %v4331, %v4539
      %v4541 = vpop.f32.mrb[0].mxu0
      %4542 = vmatprep.mubr.bf16.mxu0 0
      %4543 = vmatmul.mubr.bf16.gmra.mrb[0].mxu0 %v4051
      %v4544 = vpop.f32.mrb[0].mxu0
      %v4545 = vadd.f32 %v4336, %v4544
      %v4546 = vpop.f32.mrb[0].mxu0
      %v4547 = vpop.f32.mrb[0].mxu0
      %v4548 = vadd.f32 %v4339, %v4547
      %v4549 = vpop.f32.mrb[0].mxu0
      %4550 = vdwg.mxu0
      %v4551 = vld [vmem:[#allocation3 + $0x2] sm:$0xff]
      %v4552 = vld [vmem:[#allocation3 + $0xa] sm:$0xff]
      %v4553 = vld [vmem:[#allocation3 + $0x1a] sm:$0xff]
      %v4554 = vld [vmem:[#allocation3 + $0x22] sm:$0xff]
      %v4555 = vld [vmem:[#allocation3 + $0x32] sm:$0xff]
      %v4556 = vld [vmem:[#allocation3 + $0x3a] sm:$0xff]
      %v4557 = vld [vmem:[#allocation3 + $0x4a] sm:$0xff]
      %v4558 = vld [vmem:[#allocation3 + $0x52] sm:$0xff]
      %v4559 = vld [vmem:[#allocation3 + $0x62] sm:$0xff]
      %v4560 = vld [vmem:[#allocation3 + $0x6a] sm:$0xff]
      %v4561 = vld [vmem:[#allocation3 + $0x7a] sm:$0xff]
      %v4562 = vld [vmem:[#allocation3 + $0x82] sm:$0xff]
      %v4563 = vld [vmem:[#allocation3 + $0x92] sm:$0xff]
      %v4564 = vld [vmem:[#allocation3 + $0x9a] sm:$0xff]
      %v4565 = vld [vmem:[#allocation3 + $0xaa] sm:$0xff]
      %v4566 = vld [vmem:[#allocation3 + $0xb2] sm:$0xff]
      %v4567 = vld [vmem:[#allocation3 + $0xc2] sm:$0xff]
      %v4568 = vld [vmem:[#allocation3 + $0xca] sm:$0xff]
      %v4569 = vld [vmem:[#allocation3 + $0xda] sm:$0xff]
      %v4570 = vld [vmem:[#allocation3 + $0xe2] sm:$0xff]
      %v4571 = vld [vmem:[#allocation3 + $0xf2] sm:$0xff]
      %v4572 = vld [vmem:[#allocation3 + $0xfa] sm:$0xff]
      %v4573 = vld [vmem:[#allocation3 + $0x10a] sm:$0xff]
      %v4574 = vld [vmem:[#allocation3 + $0x112] sm:$0xff]
      %v4575 = vld [vmem:[#allocation3 + $0x122] sm:$0xff]
      %v4576 = vld [vmem:[#allocation3 + $0x12a] sm:$0xff]
      %v4577 = vld [vmem:[#allocation3 + $0x13a] sm:$0xff]
      %v4578 = vld [vmem:[#allocation3 + $0x142] sm:$0xff]
      %v4579 = vld [vmem:[#allocation3 + $0x152] sm:$0xff]
      %v4580 = vld [vmem:[#allocation3 + $0x15a] sm:$0xff]
      %v4581 = vld [vmem:[#allocation3 + $0x16a] sm:$0xff]
      %v4582 = vld [vmem:[#allocation3 + $0x172] sm:$0xff]
      %v4583 = vpack.c.bf16 %v4552, %v4551
      %v4584 = vpack.c.bf16 %v4554, %v4553
      %v4585 = vpack.c.bf16 %v4556, %v4555
      %v4586 = vpack.c.bf16 %v4558, %v4557
      %v4587 = vpack.c.bf16 %v4560, %v4559
      %v4588 = vpack.c.bf16 %v4562, %v4561
      %v4589 = vpack.c.bf16 %v4564, %v4563
      %v4590 = vpack.c.bf16 %v4566, %v4565
      %v4591 = vpack.c.bf16 %v4568, %v4567
      %v4592 = vpack.c.bf16 %v4570, %v4569
      %v4593 = vpack.c.bf16 %v4572, %v4571
      %v4594 = vpack.c.bf16 %v4574, %v4573
      %v4595 = vpack.c.bf16 %v4576, %v4575
      %v4596 = vpack.c.bf16 %v4578, %v4577
      %v4597 = vpack.c.bf16 %v4580, %v4579
      %v4598 = vpack.c.bf16 %v4582, %v4581
      %s4599 = scalar_lea.vmem %s3, 128
      %v4600 = vld [vmem:[%s4599] sm:$0xf]
      %v4601 = vld [vmem:[%s4599 + $0x4] sm:$0xf]
      %v4602 = vld [vmem:[%s4599 + $0x8] sm:$0xf]
      %v4603 = vld [vmem:[%s4599 + $0xc] sm:$0xf]
      %v4604 = vld [vmem:[%s4599 + $0x10] sm:$0xf]
      %v4605 = vld [vmem:[%s4599 + $0x14] sm:$0xf]
      %v4606 = vld [vmem:[%s4599 + $0x18] sm:$0xf]
      %v4607 = vld [vmem:[%s4599 + $0x1c] sm:$0xf]
      %v4608 = vld [vmem:[%s4599 + $0x20] sm:$0xf]
      %v4609 = vld [vmem:[%s4599 + $0x24] sm:$0xf]
      %v4610 = vld [vmem:[%s4599 + $0x28] sm:$0xf]
      %v4611 = vld [vmem:[%s4599 + $0x2c] sm:$0xf]
      %v4612 = vld [vmem:[%s4599 + $0x30] sm:$0xf]
      %v4613 = vld [vmem:[%s4599 + $0x34] sm:$0xf]
      %v4614 = vld [vmem:[%s4599 + $0x38] sm:$0xf]
      %v4615 = vld [vmem:[%s4599 + $0x3c] sm:$0xf]
      %v4632 = vunpack.c.l.b16 %v4600
      %v4633 = vunpack.c.l.b16 %v4601
      %v4634 = vunpack.c.l.b16 %v4602
      %v4635 = vunpack.c.l.b16 %v4603
      %v4636 = vunpack.c.l.b16 %v4604
      %v4637 = vunpack.c.l.b16 %v4605
      %v4638 = vunpack.c.l.b16 %v4606
      %v4639 = vunpack.c.l.b16 %v4607
      %v4640 = vunpack.c.l.b16 %v4608
      %v4641 = vunpack.c.l.b16 %v4609
      %v4642 = vunpack.c.l.b16 %v4610
      %v4643 = vunpack.c.l.b16 %v4611
      %v4644 = vunpack.c.l.b16 %v4612
      %v4645 = vunpack.c.l.b16 %v4613
      %v4646 = vunpack.c.l.b16 %v4614
      %v4647 = vunpack.c.l.b16 %v4615
      %v4648 = vpack.c.b16 %v4633, %v4632
      %v4649 = vpack.c.b16 %v4635, %v4634
      %v4650 = vpack.c.b16 %v4637, %v4636
      %v4651 = vpack.c.b16 %v4639, %v4638
      %v4652 = vpack.c.b16 %v4641, %v4640
      %v4653 = vpack.c.b16 %v4643, %v4642
      %v4654 = vpack.c.b16 %v4645, %v4644
      %v4655 = vpack.c.b16 %v4647, %v4646
      %4664 = vmatprep.subr.bf16.mxu0 0
      %4665 = vmatpush1.bf16.msra.mxu0 %v4648
      %4666 = vmatprep.subr.bf16.mxu0 0
      %4667 = vmatpush1.bf16.msra.mxu0 %v4649
      %4668 = vmatprep.subr.bf16.mxu0 0
      %4669 = vmatpush1.bf16.msra.mxu0 %v4650
      %4670 = vmatprep.subr.bf16.mxu0 0
      %4671 = vmatpush1.bf16.msra.mxu0 %v4651
      %4672 = vmatprep.subr.bf16.mxu0 0
      %4673 = vmatpush1.bf16.msra.mxu0 %v4652
      %4674 = vmatprep.subr.bf16.mxu0 0
      %4675 = vmatpush1.bf16.msra.mxu0 %v4653
      %4676 = vmatprep.subr.bf16.mxu0 0
      %4677 = vmatpush1.bf16.msra.mxu0 %v4654
      %4678 = vmatprep.subr.bf16.mxu0 0
      %4679 = vmatpush1.bf16.msra.mxu0 %v4655
      %4680 = vmatprep.subr.bf16.mxu0 0
      %4681 = vmatpush1.bf16.msra.mxu0 0
      %4682 = vmatprep.subr.bf16.mxu0 0
      %4683 = vmatpush1.bf16.msra.mxu0 0
      %4684 = vmatprep.subr.bf16.mxu0 0
      %4685 = vmatpush1.bf16.msra.mxu0 0
      %4686 = vmatprep.subr.bf16.mxu0 0
      %4687 = vmatpush1.bf16.msra.mxu0 0
      %4688 = vmatprep.subr.bf16.mxu0 0
      %4689 = vmatpush1.bf16.msra.mxu0 0
      %4690 = vmatprep.subr.bf16.mxu0 0
      %4691 = vmatpush1.bf16.msra.mxu0 0
      %4692 = vmatprep.subr.bf16.mxu0 0
      %4693 = vmatpush1.bf16.msra.mxu0 0
      %4694 = vmatprep.subr.bf16.mxu0 0
      %4695 = vmatpush1.bf16.msra.mxu0 0
      %4696 = vmatprep.mubr.bf16.mxu0 0
      %4697 = vmatmul.mubr.bf16.gmra.mrb[0].mxu0 %v4583
      %v4698 = vpop.f32.mrb[0].mxu0
      %v4699 = vadd.f32 0.0, %v4698
      %v4700 = vpop.f32.mrb[0].mxu0
      %v4701 = vpop.f32.mrb[0].mxu0
      %v4702 = vadd.f32 0.0, %v4701
      %v4703 = vpop.f32.mrb[0].mxu0
      %4704 = vmatprep.mubr.bf16.mxu0 0
      %4705 = vmatmul.mubr.bf16.gmra.mrb[0].mxu0 %v4584
      %v4706 = vpop.f32.mrb[0].mxu0
      %v4707 = vadd.f32 0.0, %v4706
      %v4708 = vpop.f32.mrb[0].mxu0
      %v4709 = vpop.f32.mrb[0].mxu0
      %v4710 = vadd.f32 0.0, %v4709
      %v4711 = vpop.f32.mrb[0].mxu0
      %4712 = vmatprep.mubr.bf16.mxu0 0
      %4713 = vmatmul.mubr.bf16.gmra.mrb[0].mxu0 %v4585
      %v4714 = vpop.f32.mrb[0].mxu0
      %v4715 = vadd.f32 0.0, %v4714
      %v4716 = vpop.f32.mrb[0].mxu0
      %v4717 = vpop.f32.mrb[0].mxu0
      %v4718 = vadd.f32 0.0, %v4717
      %v4719 = vpop.f32.mrb[0].mxu0
      %4720 = vmatprep.mubr.bf16.mxu0 0
      %4721 = vmatmul.mubr.bf16.gmra.mrb[0].mxu0 %v4586
      %v4722 = vpop.f32.mrb[0].mxu0
      %v4723 = vadd.f32 0.0, %v4722
      %v4724 = vpop.f32.mrb[0].mxu0
      %v4725 = vpop.f32.mrb[0].mxu0
      %v4726 = vadd.f32 0.0, %v4725
      %v4727 = vpop.f32.mrb[0].mxu0
      %4728 = vmatprep.mubr.bf16.mxu0 0
      %4729 = vmatmul.mubr.bf16.gmra.mrb[0].mxu0 %v4587
      %v4730 = vpop.f32.mrb[0].mxu0
      %v4731 = vadd.f32 0.0, %v4730
      %v4732 = vpop.f32.mrb[0].mxu0
      %v4733 = vpop.f32.mrb[0].mxu0
      %v4734 = vadd.f32 0.0, %v4733
      %v4735 = vpop.f32.mrb[0].mxu0
      %4736 = vmatprep.mubr.bf16.mxu0 0
      %4737 = vmatmul.mubr.bf16.gmra.mrb[0].mxu0 %v4588
      %v4738 = vpop.f32.mrb[0].mxu0
      %v4739 = vadd.f32 0.0, %v4738
      %v4740 = vpop.f32.mrb[0].mxu0
      %v4741 = vpop.f32.mrb[0].mxu0
      %v4742 = vadd.f32 0.0, %v4741
      %v4743 = vpop.f32.mrb[0].mxu0
      %4744 = vmatprep.mubr.bf16.mxu0 0
      %4745 = vmatmul.mubr.bf16.gmra.mrb[0].mxu0 %v4589
      %v4746 = vpop.f32.mrb[0].mxu0
      %v4747 = vadd.f32 0.0, %v4746
      %v4748 = vpop.f32.mrb[0].mxu0
      %v4749 = vpop.f32.mrb[0].mxu0
      %v4750 = vadd.f32 0.0, %v4749
      %v4751 = vpop.f32.mrb[0].mxu0
      %4752 = vmatprep.mubr.bf16.mxu0 0
      %4753 = vmatmul.mubr.bf16.gmra.mrb[0].mxu0 %v4590
      %v4754 = vpop.f32.mrb[0].mxu0
      %v4755 = vadd.f32 0.0, %v4754
      %v4756 = vpop.f32.mrb[0].mxu0
      %v4757 = vpop.f32.mrb[0].mxu0
      %v4758 = vadd.f32 0.0, %v4757
      %v4759 = vpop.f32.mrb[0].mxu0
      %4760 = vmatprep.mubr.bf16.mxu0 0
      %4761 = vmatmul.mubr.bf16.gmra.mrb[0].mxu0 %v4591
      %v4762 = vpop.f32.mrb[0].mxu0
      %v4763 = vadd.f32 0.0, %v4762
      %v4764 = vpop.f32.mrb[0].mxu0
      %v4765 = vpop.f32.mrb[0].mxu0
      %v4766 = vadd.f32 0.0, %v4765
      %v4767 = vpop.f32.mrb[0].mxu0
      %4768 = vmatprep.mubr.bf16.mxu0 0
      %4769 = vmatmul.mubr.bf16.gmra.mrb[0].mxu0 %v4592
      %v4770 = vpop.f32.mrb[0].mxu0
      %v4771 = vadd.f32 0.0, %v4770
      %v4772 = vpop.f32.mrb[0].mxu0
      %v4773 = vpop.f32.mrb[0].mxu0
      %v4774 = vadd.f32 0.0, %v4773
      %v4775 = vpop.f32.mrb[0].mxu0
      %4776 = vmatprep.mubr.bf16.mxu0 0
      %4777 = vmatmul.mubr.bf16.gmra.mrb[0].mxu0 %v4593
      %v4778 = vpop.f32.mrb[0].mxu0
      %v4779 = vadd.f32 0.0, %v4778
      %v4780 = vpop.f32.mrb[0].mxu0
      %v4781 = vpop.f32.mrb[0].mxu0
      %v4782 = vadd.f32 0.0, %v4781
      %v4783 = vpop.f32.mrb[0].mxu0
      %4784 = vmatprep.mubr.bf16.mxu0 0
      %4785 = vmatmul.mubr.bf16.gmra.mrb[0].mxu0 %v4594
      %v4786 = vpop.f32.mrb[0].mxu0
      %v4787 = vadd.f32 0.0, %v4786
      %v4788 = vpop.f32.mrb[0].mxu0
      %v4789 = vpop.f32.mrb[0].mxu0
      %v4790 = vadd.f32 0.0, %v4789
      %v4791 = vpop.f32.mrb[0].mxu0
      %4792 = vmatprep.mubr.bf16.mxu0 0
      %4793 = vmatmul.mubr.bf16.gmra.mrb[0].mxu0 %v4595
      %v4794 = vpop.f32.mrb[0].mxu0
      %v4795 = vadd.f32 0.0, %v4794
      %v4796 = vpop.f32.mrb[0].mxu0
      %v4797 = vpop.f32.mrb[0].mxu0
      %v4798 = vadd.f32 0.0, %v4797
      %v4799 = vpop.f32.mrb[0].mxu0
      %4800 = vmatprep.mubr.bf16.mxu0 0
      %4801 = vmatmul.mubr.bf16.gmra.mrb[0].mxu0 %v4596
      %v4802 = vpop.f32.mrb[0].mxu0
      %v4803 = vadd.f32 0.0, %v4802
      %v4804 = vpop.f32.mrb[0].mxu0
      %v4805 = vpop.f32.mrb[0].mxu0
      %v4806 = vadd.f32 0.0, %v4805
      %v4807 = vpop.f32.mrb[0].mxu0
      %4808 = vmatprep.mubr.bf16.mxu0 0
      %4809 = vmatmul.mubr.bf16.gmra.mrb[0].mxu0 %v4597
      %v4810 = vpop.f32.mrb[0].mxu0
      %v4811 = vadd.f32 0.0, %v4810
      %v4812 = vpop.f32.mrb[0].mxu0
      %v4813 = vpop.f32.mrb[0].mxu0
      %v4814 = vadd.f32 0.0, %v4813
      %v4815 = vpop.f32.mrb[0].mxu0
      %4816 = vmatprep.mubr.bf16.mxu0 0
      %4817 = vmatmul.mubr.bf16.gmra.mrb[0].mxu0 %v4598
      %v4818 = vpop.f32.mrb[0].mxu0
      %v4819 = vadd.f32 0.0, %v4818
      %v4820 = vpop.f32.mrb[0].mxu0
      %v4821 = vpop.f32.mrb[0].mxu0
      %v4822 = vadd.f32 0.0, %v4821
      %v4823 = vpop.f32.mrb[0].mxu0
      %4824 = vdwg.mxu0
      %v4825 = vadd.f32 %v4425, %v4699
      %v4826 = vadd.f32 %v4428, %v4702
      %v4827 = vadd.f32 %v4433, %v4707
      %v4828 = vadd.f32 %v4436, %v4710
      %v4829 = vadd.f32 %v4441, %v4715
      %v4830 = vadd.f32 %v4444, %v4718
      %v4831 = vadd.f32 %v4449, %v4723
      %v4832 = vadd.f32 %v4452, %v4726
      %v4833 = vadd.f32 %v4457, %v4731
      %v4834 = vadd.f32 %v4460, %v4734
      %v4835 = vadd.f32 %v4465, %v4739
      %v4836 = vadd.f32 %v4468, %v4742
      %v4837 = vadd.f32 %v4473, %v4747
      %v4838 = vadd.f32 %v4476, %v4750
      %v4839 = vadd.f32 %v4481, %v4755
      %v4840 = vadd.f32 %v4484, %v4758
      %v4841 = vadd.f32 %v4489, %v4763
      %v4842 = vadd.f32 %v4492, %v4766
      %v4843 = vadd.f32 %v4497, %v4771
      %v4844 = vadd.f32 %v4500, %v4774
      %v4845 = vadd.f32 %v4505, %v4779
      %v4846 = vadd.f32 %v4508, %v4782
      %v4847 = vadd.f32 %v4513, %v4787
      %v4848 = vadd.f32 %v4516, %v4790
      %v4849 = vadd.f32 %v4521, %v4795
      %v4850 = vadd.f32 %v4524, %v4798
      %v4851 = vadd.f32 %v4529, %v4803
      %v4852 = vadd.f32 %v4532, %v4806
      %v4853 = vadd.f32 %v4537, %v4811
      %v4854 = vadd.f32 %v4540, %v4814
      %v4855 = vadd.f32 %v4545, %v4819
      %v4856 = vadd.f32 %v4548, %v4822
      %v4857 = vld [vmem:[%s3971] sm:$0xff]
      %v4858 = vld [vmem:[%s3971 + $0x8] sm:$0xff]
      %v4859 = vld [vmem:[%s3971 + $0x18] sm:$0xff]
      %v4860 = vld [vmem:[%s3971 + $0x20] sm:$0xff]
      %v4861 = vld [vmem:[%s3971 + $0x30] sm:$0xff]
      %v4862 = vld [vmem:[%s3971 + $0x38] sm:$0xff]
      %v4863 = vld [vmem:[%s3971 + $0x48] sm:$0xff]
      %v4864 = vld [vmem:[%s3971 + $0x50] sm:$0xff]
      %v4865 = vld [vmem:[%s3971 + $0x60] sm:$0xff]
      %v4866 = vld [vmem:[%s3971 + $0x68] sm:$0xff]
      %v4867 = vld [vmem:[%s3971 + $0x78] sm:$0xff]
      %v4868 = vld [vmem:[%s3971 + $0x80] sm:$0xff]
      %v4869 = vld [vmem:[%s3971 + $0x90] sm:$0xff]
      %v4870 = vld [vmem:[%s3971 + $0x98] sm:$0xff]
      %v4871 = vld [vmem:[%s3971 + $0xa8] sm:$0xff]
      %v4872 = vld [vmem:[%s3971 + $0xb0] sm:$0xff]
      %v4873 = vld [vmem:[%s3971 + $0xc0] sm:$0xff]
      %v4874 = vld [vmem:[%s3971 + $0xc8] sm:$0xff]
      %v4875 = vld [vmem:[%s3971 + $0xd8] sm:$0xff]
      %v4876 = vld [vmem:[%s3971 + $0xe0] sm:$0xff]
      %v4877 = vld [vmem:[%s3971 + $0xf0] sm:$0xff]
      %v4878 = vld [vmem:[%s3971 + $0xf8] sm:$0xff]
      %v4879 = vld [vmem:[%s3971 + $0x108] sm:$0xff]
      %v4880 = vld [vmem:[%s3971 + $0x110] sm:$0xff]
      %v4881 = vld [vmem:[%s3971 + $0x120] sm:$0xff]
      %v4882 = vld [vmem:[%s3971 + $0x128] sm:$0xff]
      %v4883 = vld [vmem:[%s3971 + $0x138] sm:$0xff]
      %v4884 = vld [vmem:[%s3971 + $0x140] sm:$0xff]
      %v4885 = vld [vmem:[%s3971 + $0x150] sm:$0xff]
      %v4886 = vld [vmem:[%s3971 + $0x158] sm:$0xff]
      %v4887 = vld [vmem:[%s3971 + $0x168] sm:$0xff]
      %v4888 = vld [vmem:[%s3971 + $0x170] sm:$0xff]
      %v4889 = vpack.c.bf16 %v4858, %v4857
      %v4890 = vpack.c.bf16 %v4860, %v4859
      %v4891 = vpack.c.bf16 %v4862, %v4861
      %v4892 = vpack.c.bf16 %v4864, %v4863
      %v4893 = vpack.c.bf16 %v4866, %v4865
      %v4894 = vpack.c.bf16 %v4868, %v4867
      %v4895 = vpack.c.bf16 %v4870, %v4869
      %v4896 = vpack.c.bf16 %v4872, %v4871
      %v4897 = vpack.c.bf16 %v4874, %v4873
      %v4898 = vpack.c.bf16 %v4876, %v4875
      %v4899 = vpack.c.bf16 %v4878, %v4877
      %v4900 = vpack.c.bf16 %v4880, %v4879
      %v4901 = vpack.c.bf16 %v4882, %v4881
      %v4902 = vpack.c.bf16 %v4884, %v4883
      %v4903 = vpack.c.bf16 %v4886, %v4885
      %v4904 = vpack.c.bf16 %v4888, %v4887
      %s4905 = scalar_lea.vmem %s3, 192
      %v4906 = vld [vmem:[%s4905] sm:$0xf]
      %v4907 = vld [vmem:[%s4905 + $0x4] sm:$0xf]
      %v4908 = vld [vmem:[%s4905 + $0x8] sm:$0xf]
      %v4909 = vld [vmem:[%s4905 + $0xc] sm:$0xf]
      %v4910 = vld [vmem:[%s4905 + $0x10] sm:$0xf]
      %v4911 = vld [vmem:[%s4905 + $0x14] sm:$0xf]
      %v4912 = vld [vmem:[%s4905 + $0x18] sm:$0xf]
      %v4913 = vld [vmem:[%s4905 + $0x1c] sm:$0xf]
      %v4914 = vld [vmem:[%s4905 + $0x20] sm:$0xf]
      %v4915 = vld [vmem:[%s4905 + $0x24] sm:$0xf]
      %v4916 = vld [vmem:[%s4905 + $0x28] sm:$0xf]
      %v4917 = vld [vmem:[%s4905 + $0x2c] sm:$0xf]
      %v4918 = vld [vmem:[%s4905 + $0x30] sm:$0xf]
      %v4919 = vld [vmem:[%s4905 + $0x34] sm:$0xf]
      %v4920 = vld [vmem:[%s4905 + $0x38] sm:$0xf]
      %v4921 = vld [vmem:[%s4905 + $0x3c] sm:$0xf]
      %v4938 = vunpack.c.l.b16 %v4906
      %v4939 = vunpack.c.l.b16 %v4907
      %v4940 = vunpack.c.l.b16 %v4908
      %v4941 = vunpack.c.l.b16 %v4909
      %v4942 = vunpack.c.l.b16 %v4910
      %v4943 = vunpack.c.l.b16 %v4911
      %v4944 = vunpack.c.l.b16 %v4912
      %v4945 = vunpack.c.l.b16 %v4913
      %v4946 = vunpack.c.l.b16 %v4914
      %v4947 = vunpack.c.l.b16 %v4915
      %v4948 = vunpack.c.l.b16 %v4916
      %v4949 = vunpack.c.l.b16 %v4917
      %v4950 = vunpack.c.l.b16 %v4918
      %v4951 = vunpack.c.l.b16 %v4919
      %v4952 = vunpack.c.l.b16 %v4920
      %v4953 = vunpack.c.l.b16 %v4921
      %v4954 = vpack.c.b16 %v4939, %v4938
      %v4955 = vpack.c.b16 %v4941, %v4940
      %v4956 = vpack.c.b16 %v4943, %v4942
      %v4957 = vpack.c.b16 %v4945, %v4944
      %v4958 = vpack.c.b16 %v4947, %v4946
      %v4959 = vpack.c.b16 %v4949, %v4948
      %v4960 = vpack.c.b16 %v4951, %v4950
      %v4961 = vpack.c.b16 %v4953, %v4952
      %4970 = vmatprep.subr.bf16.mxu0 0
      %4971 = vmatpush1.bf16.msra.mxu0 %v4954
      %4972 = vmatprep.subr.bf16.mxu0 0
      %4973 = vmatpush1.bf16.msra.mxu0 %v4955
      %4974 = vmatprep.subr.bf16.mxu0 0
      %4975 = vmatpush1.bf16.msra.mxu0 %v4956
      %4976 = vmatprep.subr.bf16.mxu0 0
      %4977 = vmatpush1.bf16.msra.mxu0 %v4957
      %4978 = vmatprep.subr.bf16.mxu0 0
      %4979 = vmatpush1.bf16.msra.mxu0 %v4958
      %4980 = vmatprep.subr.bf16.mxu0 0
      %4981 = vmatpush1.bf16.msra.mxu0 %v4959
      %4982 = vmatprep.subr.bf16.mxu0 0
      %4983 = vmatpush1.bf16.msra.mxu0 %v4960
      %4984 = vmatprep.subr.bf16.mxu0 0
      %4985 = vmatpush1.bf16.msra.mxu0 %v4961
      %4986 = vmatprep.subr.bf16.mxu0 0
      %4987 = vmatpush1.bf16.msra.mxu0 0
      %4988 = vmatprep.subr.bf16.mxu0 0
      %4989 = vmatpush1.bf16.msra.mxu0 0
      %4990 = vmatprep.subr.bf16.mxu0 0
      %4991 = vmatpush1.bf16.msra.mxu0 0
      %4992 = vmatprep.subr.bf16.mxu0 0
      %4993 = vmatpush1.bf16.msra.mxu0 0
      %4994 = vmatprep.subr.bf16.mxu0 0
      %4995 = vmatpush1.bf16.msra.mxu0 0
      %4996 = vmatprep.subr.bf16.mxu0 0
      %4997 = vmatpush1.bf16.msra.mxu0 0
      %4998 = vmatprep.subr.bf16.mxu0 0
      %4999 = vmatpush1.bf16.msra.mxu0 0
      %5000 = vmatprep.subr.bf16.mxu0 0
      %5001 = vmatpush1.bf16.msra.mxu0 0
      %5002 = vmatprep.mubr.bf16.mxu0 0
      %5003 = vmatmul.mubr.bf16.gmra.mrb[0].mxu0 %v4889
      %v5004 = vpop.f32.mrb[0].mxu0
      %v5005 = vadd.f32 0.0, %v5004
      %v5006 = vpop.f32.mrb[0].mxu0
      %v5007 = vpop.f32.mrb[0].mxu0
      %v5008 = vadd.f32 0.0, %v5007
      %v5009 = vpop.f32.mrb[0].mxu0
      %5010 = vmatprep.mubr.bf16.mxu0 0
      %5011 = vmatmul.mubr.bf16.gmra.mrb[0].mxu0 %v4890
      %v5012 = vpop.f32.mrb[0].mxu0
      %v5013 = vadd.f32 0.0, %v5012
      %v5014 = vpop.f32.mrb[0].mxu0
      %v5015 = vpop.f32.mrb[0].mxu0
      %v5016 = vadd.f32 0.0, %v5015
      %v5017 = vpop.f32.mrb[0].mxu0
      %5018 = vmatprep.mubr.bf16.mxu0 0
      %5019 = vmatmul.mubr.bf16.gmra.mrb[0].mxu0 %v4891
      %v5020 = vpop.f32.mrb[0].mxu0
      %v5021 = vadd.f32 0.0, %v5020
      %v5022 = vpop.f32.mrb[0].mxu0
      %v5023 = vpop.f32.mrb[0].mxu0
      %v5024 = vadd.f32 0.0, %v5023
      %v5025 = vpop.f32.mrb[0].mxu0
      %5026 = vmatprep.mubr.bf16.mxu0 0
      %5027 = vmatmul.mubr.bf16.gmra.mrb[0].mxu0 %v4892
      %v5028 = vpop.f32.mrb[0].mxu0
      %v5029 = vadd.f32 0.0, %v5028
      %v5030 = vpop.f32.mrb[0].mxu0
      %v5031 = vpop.f32.mrb[0].mxu0
      %v5032 = vadd.f32 0.0, %v5031
      %v5033 = vpop.f32.mrb[0].mxu0
      %5034 = vmatprep.mubr.bf16.mxu0 0
      %5035 = vmatmul.mubr.bf16.gmra.mrb[0].mxu0 %v4893
      %v5036 = vpop.f32.mrb[0].mxu0
      %v5037 = vadd.f32 0.0, %v5036
      %v5038 = vpop.f32.mrb[0].mxu0
      %v5039 = vpop.f32.mrb[0].mxu0
      %v5040 = vadd.f32 0.0, %v5039
      %v5041 = vpop.f32.mrb[0].mxu0
      %5042 = vmatprep.mubr.bf16.mxu0 0
      %5043 = vmatmul.mubr.bf16.gmra.mrb[0].mxu0 %v4894
      %v5044 = vpop.f32.mrb[0].mxu0
      %v5045 = vadd.f32 0.0, %v5044
      %v5046 = vpop.f32.mrb[0].mxu0
      %v5047 = vpop.f32.mrb[0].mxu0
      %v5048 = vadd.f32 0.0, %v5047
      %v5049 = vpop.f32.mrb[0].mxu0
      %5050 = vmatprep.mubr.bf16.mxu0 0
      %5051 = vmatmul.mubr.bf16.gmra.mrb[0].mxu0 %v4895
      %v5052 = vpop.f32.mrb[0].mxu0
      %v5053 = vadd.f32 0.0, %v5052
      %v5054 = vpop.f32.mrb[0].mxu0
      %v5055 = vpop.f32.mrb[0].mxu0
      %v5056 = vadd.f32 0.0, %v5055
      %v5057 = vpop.f32.mrb[0].mxu0
      %5058 = vmatprep.mubr.bf16.mxu0 0
      %5059 = vmatmul.mubr.bf16.gmra.mrb[0].mxu0 %v4896
      %v5060 = vpop.f32.mrb[0].mxu0
      %v5061 = vadd.f32 0.0, %v5060
      %v5062 = vpop.f32.mrb[0].mxu0
      %v5063 = vpop.f32.mrb[0].mxu0
      %v5064 = vadd.f32 0.0, %v5063
      %v5065 = vpop.f32.mrb[0].mxu0
      %5066 = vmatprep.mubr.bf16.mxu0 0
      %5067 = vmatmul.mubr.bf16.gmra.mrb[0].mxu0 %v4897
      %v5068 = vpop.f32.mrb[0].mxu0
      %v5069 = vadd.f32 0.0, %v5068
      %v5070 = vpop.f32.mrb[0].mxu0
      %v5071 = vpop.f32.mrb[0].mxu0
      %v5072 = vadd.f32 0.0, %v5071
      %v5073 = vpop.f32.mrb[0].mxu0
      %5074 = vmatprep.mubr.bf16.mxu0 0
      %5075 = vmatmul.mubr.bf16.gmra.mrb[0].mxu0 %v4898
      %v5076 = vpop.f32.mrb[0].mxu0
      %v5077 = vadd.f32 0.0, %v5076
      %v5078 = vpop.f32.mrb[0].mxu0
      %v5079 = vpop.f32.mrb[0].mxu0
      %v5080 = vadd.f32 0.0, %v5079
      %v5081 = vpop.f32.mrb[0].mxu0
      %5082 = vmatprep.mubr.bf16.mxu0 0
      %5083 = vmatmul.mubr.bf16.gmra.mrb[0].mxu0 %v4899
      %v5084 = vpop.f32.mrb[0].mxu0
      %v5085 = vadd.f32 0.0, %v5084
      %v5086 = vpop.f32.mrb[0].mxu0
      %v5087 = vpop.f32.mrb[0].mxu0
      %v5088 = vadd.f32 0.0, %v5087
      %v5089 = vpop.f32.mrb[0].mxu0
      %5090 = vmatprep.mubr.bf16.mxu0 0
      %5091 = vmatmul.mubr.bf16.gmra.mrb[0].mxu0 %v4900
      %v5092 = vpop.f32.mrb[0].mxu0
      %v5093 = vadd.f32 0.0, %v5092
      %v5094 = vpop.f32.mrb[0].mxu0
      %v5095 = vpop.f32.mrb[0].mxu0
      %v5096 = vadd.f32 0.0, %v5095
      %v5097 = vpop.f32.mrb[0].mxu0
      %5098 = vmatprep.mubr.bf16.mxu0 0
      %5099 = vmatmul.mubr.bf16.gmra.mrb[0].mxu0 %v4901
      %v5100 = vpop.f32.mrb[0].mxu0
      %v5101 = vadd.f32 0.0, %v5100
      %v5102 = vpop.f32.mrb[0].mxu0
      %v5103 = vpop.f32.mrb[0].mxu0
      %v5104 = vadd.f32 0.0, %v5103
      %v5105 = vpop.f32.mrb[0].mxu0
      %5106 = vmatprep.mubr.bf16.mxu0 0
      %5107 = vmatmul.mubr.bf16.gmra.mrb[0].mxu0 %v4902
      %v5108 = vpop.f32.mrb[0].mxu0
      %v5109 = vadd.f32 0.0, %v5108
      %v5110 = vpop.f32.mrb[0].mxu0
      %v5111 = vpop.f32.mrb[0].mxu0
      %v5112 = vadd.f32 0.0, %v5111
      %v5113 = vpop.f32.mrb[0].mxu0
      %5114 = vmatprep.mubr.bf16.mxu0 0
      %5115 = vmatmul.mubr.bf16.gmra.mrb[0].mxu0 %v4903
      %v5116 = vpop.f32.mrb[0].mxu0
      %v5117 = vadd.f32 0.0, %v5116
      %v5118 = vpop.f32.mrb[0].mxu0
      %v5119 = vpop.f32.mrb[0].mxu0
      %v5120 = vadd.f32 0.0, %v5119
      %v5121 = vpop.f32.mrb[0].mxu0
      %5122 = vmatprep.mubr.bf16.mxu0 0
      %5123 = vmatmul.mubr.bf16.gmra.mrb[0].mxu0 %v4904
      %v5124 = vpop.f32.mrb[0].mxu0
      %v5125 = vadd.f32 0.0, %v5124
      %v5126 = vpop.f32.mrb[0].mxu0
      %v5127 = vpop.f32.mrb[0].mxu0
      %v5128 = vadd.f32 0.0, %v5127
      %v5129 = vpop.f32.mrb[0].mxu0
      %5130 = vdwg.mxu0
      %v5131 = vadd.f32 %v4825, %v5005
      %v5132 = vadd.f32 %v4826, %v5008
      %v5133 = vadd.f32 %v4827, %v5013
      %v5134 = vadd.f32 %v4828, %v5016
      %v5135 = vadd.f32 %v4829, %v5021
      %v5136 = vadd.f32 %v4830, %v5024
      %v5137 = vadd.f32 %v4831, %v5029
      %v5138 = vadd.f32 %v4832, %v5032
      %v5139 = vadd.f32 %v4833, %v5037
      %v5140 = vadd.f32 %v4834, %v5040
      %v5141 = vadd.f32 %v4835, %v5045
      %v5142 = vadd.f32 %v4836, %v5048
      %v5143 = vadd.f32 %v4837, %v5053
      %v5144 = vadd.f32 %v4838, %v5056
      %v5145 = vadd.f32 %v4839, %v5061
      %v5146 = vadd.f32 %v4840, %v5064
      %v5147 = vadd.f32 %v4841, %v5069
      %v5148 = vadd.f32 %v4842, %v5072
      %v5149 = vadd.f32 %v4843, %v5077
      %v5150 = vadd.f32 %v4844, %v5080
      %v5151 = vadd.f32 %v4845, %v5085
      %v5152 = vadd.f32 %v4846, %v5088
      %v5153 = vadd.f32 %v4847, %v5093
      %v5154 = vadd.f32 %v4848, %v5096
      %v5155 = vadd.f32 %v4849, %v5101
      %v5156 = vadd.f32 %v4850, %v5104
      %v5157 = vadd.f32 %v4851, %v5109
      %v5158 = vadd.f32 %v4852, %v5112
      %v5159 = vadd.f32 %v4853, %v5117
      %v5160 = vadd.f32 %v4854, %v5120
      %v5161 = vadd.f32 %v4855, %v5125
      %v5162 = vadd.f32 %v4856, %v5128
      %v5163 = vld [vmem:[%s3971 + $0x1] sm:$0xff]
      %v5164 = vld [vmem:[%s3971 + $0x9] sm:$0xff]
      %v5165 = vld [vmem:[%s3971 + $0x19] sm:$0xff]
      %v5166 = vld [vmem:[%s3971 + $0x21] sm:$0xff]
      %v5167 = vld [vmem:[%s3971 + $0x31] sm:$0xff]
      %v5168 = vld [vmem:[%s3971 + $0x39] sm:$0xff]
      %v5169 = vld [vmem:[%s3971 + $0x49] sm:$0xff]
      %v5170 = vld [vmem:[%s3971 + $0x51] sm:$0xff]
      %v5171 = vld [vmem:[%s3971 + $0x61] sm:$0xff]
      %v5172 = vld [vmem:[%s3971 + $0x69] sm:$0xff]
      %v5173 = vld [vmem:[%s3971 + $0x79] sm:$0xff]
      %v5174 = vld [vmem:[%s3971 + $0x81] sm:$0xff]
      %v5175 = vld [vmem:[%s3971 + $0x91] sm:$0xff]
      %v5176 = vld [vmem:[%s3971 + $0x99] sm:$0xff]
      %v5177 = vld [vmem:[%s3971 + $0xa9] sm:$0xff]
      %v5178 = vld [vmem:[%s3971 + $0xb1] sm:$0xff]
      %v5179 = vld [vmem:[%s3971 + $0xc1] sm:$0xff]
      %v5180 = vld [vmem:[%s3971 + $0xc9] sm:$0xff]
      %v5181 = vld [vmem:[%s3971 + $0xd9] sm:$0xff]
      %v5182 = vld [vmem:[%s3971 + $0xe1] sm:$0xff]
      %v5183 = vld [vmem:[%s3971 + $0xf1] sm:$0xff]
      %v5184 = vld [vmem:[%s3971 + $0xf9] sm:$0xff]
      %v5185 = vld [vmem:[%s3971 + $0x109] sm:$0xff]
      %v5186 = vld [vmem:[%s3971 + $0x111] sm:$0xff]
      %v5187 = vld [vmem:[%s3971 + $0x121] sm:$0xff]
      %v5188 = vld [vmem:[%s3971 + $0x129] sm:$0xff]
      %v5189 = vld [vmem:[%s3971 + $0x139] sm:$0xff]
      %v5190 = vld [vmem:[%s3971 + $0x141] sm:$0xff]
      %v5191 = vld [vmem:[%s3971 + $0x151] sm:$0xff]
      %v5192 = vld [vmem:[%s3971 + $0x159] sm:$0xff]
      %v5193 = vld [vmem:[%s3971 + $0x169] sm:$0xff]
      %v5194 = vld [vmem:[%s3971 + $0x171] sm:$0xff]
      %v5195 = vpack.c.bf16 %v5164, %v5163
      %v5196 = vpack.c.bf16 %v5166, %v5165
      %v5197 = vpack.c.bf16 %v5168, %v5167
      %v5198 = vpack.c.bf16 %v5170, %v5169
      %v5199 = vpack.c.bf16 %v5172, %v5171
      %v5200 = vpack.c.bf16 %v5174, %v5173
      %v5201 = vpack.c.bf16 %v5176, %v5175
      %v5202 = vpack.c.bf16 %v5178, %v5177
      %v5203 = vpack.c.bf16 %v5180, %v5179
      %v5204 = vpack.c.bf16 %v5182, %v5181
      %v5205 = vpack.c.bf16 %v5184, %v5183
      %v5206 = vpack.c.bf16 %v5186, %v5185
      %v5207 = vpack.c.bf16 %v5188, %v5187
      %v5208 = vpack.c.bf16 %v5190, %v5189
      %v5209 = vpack.c.bf16 %v5192, %v5191
      %v5210 = vpack.c.bf16 %v5194, %v5193
      %s5211 = scalar_lea.vmem %s3, 256
      %v5212 = vld [vmem:[%s5211] sm:$0xf]
      %v5213 = vld [vmem:[%s5211 + $0x4] sm:$0xf]
      %v5214 = vld [vmem:[%s5211 + $0x8] sm:$0xf]
      %v5215 = vld [vmem:[%s5211 + $0xc] sm:$0xf]
      %v5216 = vld [vmem:[%s5211 + $0x10] sm:$0xf]
      %v5217 = vld [vmem:[%s5211 + $0x14] sm:$0xf]
      %v5218 = vld [vmem:[%s5211 + $0x18] sm:$0xf]
      %v5219 = vld [vmem:[%s5211 + $0x1c] sm:$0xf]
      %v5220 = vld [vmem:[%s5211 + $0x20] sm:$0xf]
      %v5221 = vld [vmem:[%s5211 + $0x24] sm:$0xf]
      %v5222 = vld [vmem:[%s5211 + $0x28] sm:$0xf]
      %v5223 = vld [vmem:[%s5211 + $0x2c] sm:$0xf]
      %v5224 = vld [vmem:[%s5211 + $0x30] sm:$0xf]
      %v5225 = vld [vmem:[%s5211 + $0x34] sm:$0xf]
      %v5226 = vld [vmem:[%s5211 + $0x38] sm:$0xf]
      %v5227 = vld [vmem:[%s5211 + $0x3c] sm:$0xf]
      %v5244 = vunpack.c.l.b16 %v5212
      %v5245 = vunpack.c.l.b16 %v5213
      %v5246 = vunpack.c.l.b16 %v5214
      %v5247 = vunpack.c.l.b16 %v5215
      %v5248 = vunpack.c.l.b16 %v5216
      %v5249 = vunpack.c.l.b16 %v5217
      %v5250 = vunpack.c.l.b16 %v5218
      %v5251 = vunpack.c.l.b16 %v5219
      %v5252 = vunpack.c.l.b16 %v5220
      %v5253 = vunpack.c.l.b16 %v5221
      %v5254 = vunpack.c.l.b16 %v5222
      %v5255 = vunpack.c.l.b16 %v5223
      %v5256 = vunpack.c.l.b16 %v5224
      %v5257 = vunpack.c.l.b16 %v5225
      %v5258 = vunpack.c.l.b16 %v5226
      %v5259 = vunpack.c.l.b16 %v5227
      %v5260 = vpack.c.b16 %v5245, %v5244
      %v5261 = vpack.c.b16 %v5247, %v5246
      %v5262 = vpack.c.b16 %v5249, %v5248
      %v5263 = vpack.c.b16 %v5251, %v5250
      %v5264 = vpack.c.b16 %v5253, %v5252
      %v5265 = vpack.c.b16 %v5255, %v5254
      %v5266 = vpack.c.b16 %v5257, %v5256
      %v5267 = vpack.c.b16 %v5259, %v5258
      %5276 = vmatprep.subr.bf16.mxu0 0
      %5277 = vmatpush1.bf16.msra.mxu0 %v5260
      %5278 = vmatprep.subr.bf16.mxu0 0
      %5279 = vmatpush1.bf16.msra.mxu0 %v5261
      %5280 = vmatprep.subr.bf16.mxu0 0
      %5281 = vmatpush1.bf16.msra.mxu0 %v5262
      %5282 = vmatprep.subr.bf16.mxu0 0
      %5283 = vmatpush1.bf16.msra.mxu0 %v5263
      %5284 = vmatprep.subr.bf16.mxu0 0
      %5285 = vmatpush1.bf16.msra.mxu0 %v5264
      %5286 = vmatprep.subr.bf16.mxu0 0
      %5287 = vmatpush1.bf16.msra.mxu0 %v5265
      %5288 = vmatprep.subr.bf16.mxu0 0
      %5289 = vmatpush1.bf16.msra.mxu0 %v5266
      %5290 = vmatprep.subr.bf16.mxu0 0
      %5291 = vmatpush1.bf16.msra.mxu0 %v5267
      %5292 = vmatprep.subr.bf16.mxu0 0
      %5293 = vmatpush1.bf16.msra.mxu0 0
      %5294 = vmatprep.subr.bf16.mxu0 0
      %5295 = vmatpush1.bf16.msra.mxu0 0
      %5296 = vmatprep.subr.bf16.mxu0 0
      %5297 = vmatpush1.bf16.msra.mxu0 0
      %5298 = vmatprep.subr.bf16.mxu0 0
      %5299 = vmatpush1.bf16.msra.mxu0 0
      %5300 = vmatprep.subr.bf16.mxu0 0
      %5301 = vmatpush1.bf16.msra.mxu0 0
      %5302 = vmatprep.subr.bf16.mxu0 0
      %5303 = vmatpush1.bf16.msra.mxu0 0
      %5304 = vmatprep.subr.bf16.mxu0 0
      %5305 = vmatpush1.bf16.msra.mxu0 0
      %5306 = vmatprep.subr.bf16.mxu0 0
      %5307 = vmatpush1.bf16.msra.mxu0 0
      %5308 = vmatprep.mubr.bf16.mxu0 0
      %5309 = vmatmul.mubr.bf16.gmra.mrb[0].mxu0 %v5195
      %v5310 = vpop.f32.mrb[0].mxu0
      %v5311 = vadd.f32 0.0, %v5310
      %v5312 = vpop.f32.mrb[0].mxu0
      %v5313 = vpop.f32.mrb[0].mxu0
      %v5314 = vadd.f32 0.0, %v5313
      %v5315 = vpop.f32.mrb[0].mxu0
      %5316 = vmatprep.mubr.bf16.mxu0 0
      %5317 = vmatmul.mubr.bf16.gmra.mrb[0].mxu0 %v5196
      %v5318 = vpop.f32.mrb[0].mxu0
      %v5319 = vadd.f32 0.0, %v5318
      %v5320 = vpop.f32.mrb[0].mxu0
      %v5321 = vpop.f32.mrb[0].mxu0
      %v5322 = vadd.f32 0.0, %v5321
      %v5323 = vpop.f32.mrb[0].mxu0
      %5324 = vmatprep.mubr.bf16.mxu0 0
      %5325 = vmatmul.mubr.bf16.gmra.mrb[0].mxu0 %v5197
      %v5326 = vpop.f32.mrb[0].mxu0
      %v5327 = vadd.f32 0.0, %v5326
      %v5328 = vpop.f32.mrb[0].mxu0
      %v5329 = vpop.f32.mrb[0].mxu0
      %v5330 = vadd.f32 0.0, %v5329
      %v5331 = vpop.f32.mrb[0].mxu0
      %5332 = vmatprep.mubr.bf16.mxu0 0
      %5333 = vmatmul.mubr.bf16.gmra.mrb[0].mxu0 %v5198
      %v5334 = vpop.f32.mrb[0].mxu0
      %v5335 = vadd.f32 0.0, %v5334
      %v5336 = vpop.f32.mrb[0].mxu0
      %v5337 = vpop.f32.mrb[0].mxu0
      %v5338 = vadd.f32 0.0, %v5337
      %v5339 = vpop.f32.mrb[0].mxu0
      %5340 = vmatprep.mubr.bf16.mxu0 0
      %5341 = vmatmul.mubr.bf16.gmra.mrb[0].mxu0 %v5199
      %v5342 = vpop.f32.mrb[0].mxu0
      %v5343 = vadd.f32 0.0, %v5342
      %v5344 = vpop.f32.mrb[0].mxu0
      %v5345 = vpop.f32.mrb[0].mxu0
      %v5346 = vadd.f32 0.0, %v5345
      %v5347 = vpop.f32.mrb[0].mxu0
      %5348 = vmatprep.mubr.bf16.mxu0 0
      %5349 = vmatmul.mubr.bf16.gmra.mrb[0].mxu0 %v5200
      %v5350 = vpop.f32.mrb[0].mxu0
      %v5351 = vadd.f32 0.0, %v5350
      %v5352 = vpop.f32.mrb[0].mxu0
      %v5353 = vpop.f32.mrb[0].mxu0
      %v5354 = vadd.f32 0.0, %v5353
      %v5355 = vpop.f32.mrb[0].mxu0
      %5356 = vmatprep.mubr.bf16.mxu0 0
      %5357 = vmatmul.mubr.bf16.gmra.mrb[0].mxu0 %v5201
      %v5358 = vpop.f32.mrb[0].mxu0
      %v5359 = vadd.f32 0.0, %v5358
      %v5360 = vpop.f32.mrb[0].mxu0
      %v5361 = vpop.f32.mrb[0].mxu0
      %v5362 = vadd.f32 0.0, %v5361
      %v5363 = vpop.f32.mrb[0].mxu0
      %5364 = vmatprep.mubr.bf16.mxu0 0
      %5365 = vmatmul.mubr.bf16.gmra.mrb[0].mxu0 %v5202
      %v5366 = vpop.f32.mrb[0].mxu0
      %v5367 = vadd.f32 0.0, %v5366
      %v5368 = vpop.f32.mrb[0].mxu0
      %v5369 = vpop.f32.mrb[0].mxu0
      %v5370 = vadd.f32 0.0, %v5369
      %v5371 = vpop.f32.mrb[0].mxu0
      %5372 = vmatprep.mubr.bf16.mxu0 0
      %5373 = vmatmul.mubr.bf16.gmra.mrb[0].mxu0 %v5203
      %v5374 = vpop.f32.mrb[0].mxu0
      %v5375 = vadd.f32 0.0, %v5374
      %v5376 = vpop.f32.mrb[0].mxu0
      %v5377 = vpop.f32.mrb[0].mxu0
      %v5378 = vadd.f32 0.0, %v5377
      %v5379 = vpop.f32.mrb[0].mxu0
      %5380 = vmatprep.mubr.bf16.mxu0 0
      %5381 = vmatmul.mubr.bf16.gmra.mrb[0].mxu0 %v5204
      %v5382 = vpop.f32.mrb[0].mxu0
      %v5383 = vadd.f32 0.0, %v5382
      %v5384 = vpop.f32.mrb[0].mxu0
      %v5385 = vpop.f32.mrb[0].mxu0
      %v5386 = vadd.f32 0.0, %v5385
      %v5387 = vpop.f32.mrb[0].mxu0
      %5388 = vmatprep.mubr.bf16.mxu0 0
      %5389 = vmatmul.mubr.bf16.gmra.mrb[0].mxu0 %v5205
      %v5390 = vpop.f32.mrb[0].mxu0
      %v5391 = vadd.f32 0.0, %v5390
      %v5392 = vpop.f32.mrb[0].mxu0
      %v5393 = vpop.f32.mrb[0].mxu0
      %v5394 = vadd.f32 0.0, %v5393
      %v5395 = vpop.f32.mrb[0].mxu0
      %5396 = vmatprep.mubr.bf16.mxu0 0
      %5397 = vmatmul.mubr.bf16.gmra.mrb[0].mxu0 %v5206
      %v5398 = vpop.f32.mrb[0].mxu0
      %v5399 = vadd.f32 0.0, %v5398
      %v5400 = vpop.f32.mrb[0].mxu0
      %v5401 = vpop.f32.mrb[0].mxu0
      %v5402 = vadd.f32 0.0, %v5401
      %v5403 = vpop.f32.mrb[0].mxu0
      %5404 = vmatprep.mubr.bf16.mxu0 0
      %5405 = vmatmul.mubr.bf16.gmra.mrb[0].mxu0 %v5207
      %v5406 = vpop.f32.mrb[0].mxu0
      %v5407 = vadd.f32 0.0, %v5406
      %v5408 = vpop.f32.mrb[0].mxu0
      %v5409 = vpop.f32.mrb[0].mxu0
      %v5410 = vadd.f32 0.0, %v5409
      %v5411 = vpop.f32.mrb[0].mxu0
      %5412 = vmatprep.mubr.bf16.mxu0 0
      %5413 = vmatmul.mubr.bf16.gmra.mrb[0].mxu0 %v5208
      %v5414 = vpop.f32.mrb[0].mxu0
      %v5415 = vadd.f32 0.0, %v5414
      %v5416 = vpop.f32.mrb[0].mxu0
      %v5417 = vpop.f32.mrb[0].mxu0
      %v5418 = vadd.f32 0.0, %v5417
      %v5419 = vpop.f32.mrb[0].mxu0
      %5420 = vmatprep.mubr.bf16.mxu0 0
      %5421 = vmatmul.mubr.bf16.gmra.mrb[0].mxu0 %v5209
      %v5422 = vpop.f32.mrb[0].mxu0
      %v5423 = vadd.f32 0.0, %v5422
      %v5424 = vpop.f32.mrb[0].mxu0
      %v5425 = vpop.f32.mrb[0].mxu0
      %v5426 = vadd.f32 0.0, %v5425
      %v5427 = vpop.f32.mrb[0].mxu0
      %5428 = vmatprep.mubr.bf16.mxu0 0
      %5429 = vmatmul.mubr.bf16.gmra.mrb[0].mxu0 %v5210
      %v5430 = vpop.f32.mrb[0].mxu0
      %v5431 = vadd.f32 0.0, %v5430
      %v5432 = vpop.f32.mrb[0].mxu0
      %v5433 = vpop.f32.mrb[0].mxu0
      %v5434 = vadd.f32 0.0, %v5433
      %v5435 = vpop.f32.mrb[0].mxu0
      %5436 = vdwg.mxu0
      %v5437 = vadd.f32 %v5131, %v5311
      %v5438 = vadd.f32 %v5132, %v5314
      %v5439 = vadd.f32 %v5133, %v5319
      %v5440 = vadd.f32 %v5134, %v5322
      %v5441 = vadd.f32 %v5135, %v5327
      %v5442 = vadd.f32 %v5136, %v5330
      %v5443 = vadd.f32 %v5137, %v5335
      %v5444 = vadd.f32 %v5138, %v5338
      %v5445 = vadd.f32 %v5139, %v5343
      %v5446 = vadd.f32 %v5140, %v5346
      %v5447 = vadd.f32 %v5141, %v5351
      %v5448 = vadd.f32 %v5142, %v5354
      %v5449 = vadd.f32 %v5143, %v5359
      %v5450 = vadd.f32 %v5144, %v5362
      %v5451 = vadd.f32 %v5145, %v5367
      %v5452 = vadd.f32 %v5146, %v5370
      %v5453 = vadd.f32 %v5147, %v5375
      %v5454 = vadd.f32 %v5148, %v5378
      %v5455 = vadd.f32 %v5149, %v5383
      %v5456 = vadd.f32 %v5150, %v5386
      %v5457 = vadd.f32 %v5151, %v5391
      %v5458 = vadd.f32 %v5152, %v5394
      %v5459 = vadd.f32 %v5153, %v5399
      %v5460 = vadd.f32 %v5154, %v5402
      %v5461 = vadd.f32 %v5155, %v5407
      %v5462 = vadd.f32 %v5156, %v5410
      %v5463 = vadd.f32 %v5157, %v5415
      %v5464 = vadd.f32 %v5158, %v5418
      %v5465 = vadd.f32 %v5159, %v5423
      %v5466 = vadd.f32 %v5160, %v5426
      %v5467 = vadd.f32 %v5161, %v5431
      %v5468 = vadd.f32 %v5162, %v5434
      %v5469 = vld [vmem:[%s3971 + $0x2] sm:$0xff]
      %v5470 = vld [vmem:[%s3971 + $0xa] sm:$0xff]
      %v5471 = vld [vmem:[%s3971 + $0x1a] sm:$0xff]
      %v5472 = vld [vmem:[%s3971 + $0x22] sm:$0xff]
      %v5473 = vld [vmem:[%s3971 + $0x32] sm:$0xff]
      %v5474 = vld [vmem:[%s3971 + $0x3a] sm:$0xff]
      %v5475 = vld [vmem:[%s3971 + $0x4a] sm:$0xff]
      %v5476 = vld [vmem:[%s3971 + $0x52] sm:$0xff]
      %v5477 = vld [vmem:[%s3971 + $0x62] sm:$0xff]
      %v5478 = vld [vmem:[%s3971 + $0x6a] sm:$0xff]
      %v5479 = vld [vmem:[%s3971 + $0x7a] sm:$0xff]
      %v5480 = vld [vmem:[%s3971 + $0x82] sm:$0xff]
      %v5481 = vld [vmem:[%s3971 + $0x92] sm:$0xff]
      %v5482 = vld [vmem:[%s3971 + $0x9a] sm:$0xff]
      %v5483 = vld [vmem:[%s3971 + $0xaa] sm:$0xff]
      %v5484 = vld [vmem:[%s3971 + $0xb2] sm:$0xff]
      %v5485 = vld [vmem:[%s3971 + $0xc2] sm:$0xff]
      %v5486 = vld [vmem:[%s3971 + $0xca] sm:$0xff]
      %v5487 = vld [vmem:[%s3971 + $0xda] sm:$0xff]
      %v5488 = vld [vmem:[%s3971 + $0xe2] sm:$0xff]
      %v5489 = vld [vmem:[%s3971 + $0xf2] sm:$0xff]
      %v5490 = vld [vmem:[%s3971 + $0xfa] sm:$0xff]
      %v5491 = vld [vmem:[%s3971 + $0x10a] sm:$0xff]
      %v5492 = vld [vmem:[%s3971 + $0x112] sm:$0xff]
      %v5493 = vld [vmem:[%s3971 + $0x122] sm:$0xff]
      %v5494 = vld [vmem:[%s3971 + $0x12a] sm:$0xff]
      %v5495 = vld [vmem:[%s3971 + $0x13a] sm:$0xff]
      %v5496 = vld [vmem:[%s3971 + $0x142] sm:$0xff]
      %v5497 = vld [vmem:[%s3971 + $0x152] sm:$0xff]
      %v5498 = vld [vmem:[%s3971 + $0x15a] sm:$0xff]
      %v5499 = vld [vmem:[%s3971 + $0x16a] sm:$0xff]
      %v5500 = vld [vmem:[%s3971 + $0x172] sm:$0xff]
      %v5501 = vpack.c.bf16 %v5470, %v5469
      %v5502 = vpack.c.bf16 %v5472, %v5471
      %v5503 = vpack.c.bf16 %v5474, %v5473
      %v5504 = vpack.c.bf16 %v5476, %v5475
      %v5505 = vpack.c.bf16 %v5478, %v5477
      %v5506 = vpack.c.bf16 %v5480, %v5479
      %v5507 = vpack.c.bf16 %v5482, %v5481
      %v5508 = vpack.c.bf16 %v5484, %v5483
      %v5509 = vpack.c.bf16 %v5486, %v5485
      %v5510 = vpack.c.bf16 %v5488, %v5487
      %v5511 = vpack.c.bf16 %v5490, %v5489
      %v5512 = vpack.c.bf16 %v5492, %v5491
      %v5513 = vpack.c.bf16 %v5494, %v5493
      %v5514 = vpack.c.bf16 %v5496, %v5495
      %v5515 = vpack.c.bf16 %v5498, %v5497
      %v5516 = vpack.c.bf16 %v5500, %v5499
      %s5517 = scalar_lea.vmem %s3, 320
      %v5518 = vld [vmem:[%s5517] sm:$0xf]
      %v5519 = vld [vmem:[%s5517 + $0x4] sm:$0xf]
      %v5520 = vld [vmem:[%s5517 + $0x8] sm:$0xf]
      %v5521 = vld [vmem:[%s5517 + $0xc] sm:$0xf]
      %v5522 = vld [vmem:[%s5517 + $0x10] sm:$0xf]
      %v5523 = vld [vmem:[%s5517 + $0x14] sm:$0xf]
      %v5524 = vld [vmem:[%s5517 + $0x18] sm:$0xf]
      %v5525 = vld [vmem:[%s5517 + $0x1c] sm:$0xf]
      %v5526 = vld [vmem:[%s5517 + $0x20] sm:$0xf]
      %v5527 = vld [vmem:[%s5517 + $0x24] sm:$0xf]
      %v5528 = vld [vmem:[%s5517 + $0x28] sm:$0xf]
      %v5529 = vld [vmem:[%s5517 + $0x2c] sm:$0xf]
      %v5530 = vld [vmem:[%s5517 + $0x30] sm:$0xf]
      %v5531 = vld [vmem:[%s5517 + $0x34] sm:$0xf]
      %v5532 = vld [vmem:[%s5517 + $0x38] sm:$0xf]
      %v5533 = vld [vmem:[%s5517 + $0x3c] sm:$0xf]
      %v5550 = vunpack.c.l.b16 %v5518
      %v5551 = vunpack.c.l.b16 %v5519
      %v5552 = vunpack.c.l.b16 %v5520
      %v5553 = vunpack.c.l.b16 %v5521
      %v5554 = vunpack.c.l.b16 %v5522
      %v5555 = vunpack.c.l.b16 %v5523
      %v5556 = vunpack.c.l.b16 %v5524
      %v5557 = vunpack.c.l.b16 %v5525
      %v5558 = vunpack.c.l.b16 %v5526
      %v5559 = vunpack.c.l.b16 %v5527
      %v5560 = vunpack.c.l.b16 %v5528
      %v5561 = vunpack.c.l.b16 %v5529
      %v5562 = vunpack.c.l.b16 %v5530
      %v5563 = vunpack.c.l.b16 %v5531
      %v5564 = vunpack.c.l.b16 %v5532
      %v5565 = vunpack.c.l.b16 %v5533
      %v5566 = vpack.c.b16 %v5551, %v5550
      %v5567 = vpack.c.b16 %v5553, %v5552
      %v5568 = vpack.c.b16 %v5555, %v5554
      %v5569 = vpack.c.b16 %v5557, %v5556
      %v5570 = vpack.c.b16 %v5559, %v5558
      %v5571 = vpack.c.b16 %v5561, %v5560
      %v5572 = vpack.c.b16 %v5563, %v5562
      %v5573 = vpack.c.b16 %v5565, %v5564
      %5582 = vmatprep.subr.bf16.mxu0 0
      %5583 = vmatpush1.bf16.msra.mxu0 %v5566
      %5584 = vmatprep.subr.bf16.mxu0 0
      %5585 = vmatpush1.bf16.msra.mxu0 %v5567
      %5586 = vmatprep.subr.bf16.mxu0 0
      %5587 = vmatpush1.bf16.msra.mxu0 %v5568
      %5588 = vmatprep.subr.bf16.mxu0 0
      %5589 = vmatpush1.bf16.msra.mxu0 %v5569
      %5590 = vmatprep.subr.bf16.mxu0 0
      %5591 = vmatpush1.bf16.msra.mxu0 %v5570
      %5592 = vmatprep.subr.bf16.mxu0 0
      %5593 = vmatpush1.bf16.msra.mxu0 %v5571
      %5594 = vmatprep.subr.bf16.mxu0 0
      %5595 = vmatpush1.bf16.msra.mxu0 %v5572
      %5596 = vmatprep.subr.bf16.mxu0 0
      %5597 = vmatpush1.bf16.msra.mxu0 %v5573
      %5598 = vmatprep.subr.bf16.mxu0 0
      %5599 = vmatpush1.bf16.msra.mxu0 0
      %5600 = vmatprep.subr.bf16.mxu0 0
      %5601 = vmatpush1.bf16.msra.mxu0 0
      %5602 = vmatprep.subr.bf16.mxu0 0
      %5603 = vmatpush1.bf16.msra.mxu0 0
      %5604 = vmatprep.subr.bf16.mxu0 0
      %5605 = vmatpush1.bf16.msra.mxu0 0
      %5606 = vmatprep.subr.bf16.mxu0 0
      %5607 = vmatpush1.bf16.msra.mxu0 0
      %5608 = vmatprep.subr.bf16.mxu0 0
      %5609 = vmatpush1.bf16.msra.mxu0 0
      %5610 = vmatprep.subr.bf16.mxu0 0
      %5611 = vmatpush1.bf16.msra.mxu0 0
      %5612 = vmatprep.subr.bf16.mxu0 0
      %5613 = vmatpush1.bf16.msra.mxu0 0
      %5614 = vmatprep.mubr.bf16.mxu0 0
      %5615 = vmatmul.mubr.bf16.gmra.mrb[0].mxu0 %v5501
      %v5616 = vpop.f32.mrb[0].mxu0
      %v5617 = vadd.f32 0.0, %v5616
      %v5618 = vpop.f32.mrb[0].mxu0
      %v5619 = vpop.f32.mrb[0].mxu0
      %v5620 = vadd.f32 0.0, %v5619
      %v5621 = vpop.f32.mrb[0].mxu0
      %5622 = vmatprep.mubr.bf16.mxu0 0
      %5623 = vmatmul.mubr.bf16.gmra.mrb[0].mxu0 %v5502
      %v5624 = vpop.f32.mrb[0].mxu0
      %v5625 = vadd.f32 0.0, %v5624
      %v5626 = vpop.f32.mrb[0].mxu0
      %v5627 = vpop.f32.mrb[0].mxu0
      %v5628 = vadd.f32 0.0, %v5627
      %v5629 = vpop.f32.mrb[0].mxu0
      %5630 = vmatprep.mubr.bf16.mxu0 0
      %5631 = vmatmul.mubr.bf16.gmra.mrb[0].mxu0 %v5503
      %v5632 = vpop.f32.mrb[0].mxu0
      %v5633 = vadd.f32 0.0, %v5632
      %v5634 = vpop.f32.mrb[0].mxu0
      %v5635 = vpop.f32.mrb[0].mxu0
      %v5636 = vadd.f32 0.0, %v5635
      %v5637 = vpop.f32.mrb[0].mxu0
      %5638 = vmatprep.mubr.bf16.mxu0 0
      %5639 = vmatmul.mubr.bf16.gmra.mrb[0].mxu0 %v5504
      %v5640 = vpop.f32.mrb[0].mxu0
      %v5641 = vadd.f32 0.0, %v5640
      %v5642 = vpop.f32.mrb[0].mxu0
      %v5643 = vpop.f32.mrb[0].mxu0
      %v5644 = vadd.f32 0.0, %v5643
      %v5645 = vpop.f32.mrb[0].mxu0
      %5646 = vmatprep.mubr.bf16.mxu0 0
      %5647 = vmatmul.mubr.bf16.gmra.mrb[0].mxu0 %v5505
      %v5648 = vpop.f32.mrb[0].mxu0
      %v5649 = vadd.f32 0.0, %v5648
      %v5650 = vpop.f32.mrb[0].mxu0
      %v5651 = vpop.f32.mrb[0].mxu0
      %v5652 = vadd.f32 0.0, %v5651
      %v5653 = vpop.f32.mrb[0].mxu0
      %5654 = vmatprep.mubr.bf16.mxu0 0
      %5655 = vmatmul.mubr.bf16.gmra.mrb[0].mxu0 %v5506
      %v5656 = vpop.f32.mrb[0].mxu0
      %v5657 = vadd.f32 0.0, %v5656
      %v5658 = vpop.f32.mrb[0].mxu0
      %v5659 = vpop.f32.mrb[0].mxu0
      %v5660 = vadd.f32 0.0, %v5659
      %v5661 = vpop.f32.mrb[0].mxu0
      %5662 = vmatprep.mubr.bf16.mxu0 0
      %5663 = vmatmul.mubr.bf16.gmra.mrb[0].mxu0 %v5507
      %v5664 = vpop.f32.mrb[0].mxu0
      %v5665 = vadd.f32 0.0, %v5664
      %v5666 = vpop.f32.mrb[0].mxu0
      %v5667 = vpop.f32.mrb[0].mxu0
      %v5668 = vadd.f32 0.0, %v5667
      %v5669 = vpop.f32.mrb[0].mxu0
      %5670 = vmatprep.mubr.bf16.mxu0 0
      %5671 = vmatmul.mubr.bf16.gmra.mrb[0].mxu0 %v5508
      %v5672 = vpop.f32.mrb[0].mxu0
      %v5673 = vadd.f32 0.0, %v5672
      %v5674 = vpop.f32.mrb[0].mxu0
      %v5675 = vpop.f32.mrb[0].mxu0
      %v5676 = vadd.f32 0.0, %v5675
      %v5677 = vpop.f32.mrb[0].mxu0
      %5678 = vmatprep.mubr.bf16.mxu0 0
      %5679 = vmatmul.mubr.bf16.gmra.mrb[0].mxu0 %v5509
      %v5680 = vpop.f32.mrb[0].mxu0
      %v5681 = vadd.f32 0.0, %v5680
      %v5682 = vpop.f32.mrb[0].mxu0
      %v5683 = vpop.f32.mrb[0].mxu0
      %v5684 = vadd.f32 0.0, %v5683
      %v5685 = vpop.f32.mrb[0].mxu0
      %5686 = vmatprep.mubr.bf16.mxu0 0
      %5687 = vmatmul.mubr.bf16.gmra.mrb[0].mxu0 %v5510
      %v5688 = vpop.f32.mrb[0].mxu0
      %v5689 = vadd.f32 0.0, %v5688
      %v5690 = vpop.f32.mrb[0].mxu0
      %v5691 = vpop.f32.mrb[0].mxu0
      %v5692 = vadd.f32 0.0, %v5691
      %v5693 = vpop.f32.mrb[0].mxu0
      %5694 = vmatprep.mubr.bf16.mxu0 0
      %5695 = vmatmul.mubr.bf16.gmra.mrb[0].mxu0 %v5511
      %v5696 = vpop.f32.mrb[0].mxu0
      %v5697 = vadd.f32 0.0, %v5696
      %v5698 = vpop.f32.mrb[0].mxu0
      %v5699 = vpop.f32.mrb[0].mxu0
      %v5700 = vadd.f32 0.0, %v5699
      %v5701 = vpop.f32.mrb[0].mxu0
      %5702 = vmatprep.mubr.bf16.mxu0 0
      %5703 = vmatmul.mubr.bf16.gmra.mrb[0].mxu0 %v5512
      %v5704 = vpop.f32.mrb[0].mxu0
      %v5705 = vadd.f32 0.0, %v5704
      %v5706 = vpop.f32.mrb[0].mxu0
      %v5707 = vpop.f32.mrb[0].mxu0
      %v5708 = vadd.f32 0.0, %v5707
      %v5709 = vpop.f32.mrb[0].mxu0
      %5710 = vmatprep.mubr.bf16.mxu0 0
      %5711 = vmatmul.mubr.bf16.gmra.mrb[0].mxu0 %v5513
      %v5712 = vpop.f32.mrb[0].mxu0
      %v5713 = vadd.f32 0.0, %v5712
      %v5714 = vpop.f32.mrb[0].mxu0
      %v5715 = vpop.f32.mrb[0].mxu0
      %v5716 = vadd.f32 0.0, %v5715
      %v5717 = vpop.f32.mrb[0].mxu0
      %5718 = vmatprep.mubr.bf16.mxu0 0
      %5719 = vmatmul.mubr.bf16.gmra.mrb[0].mxu0 %v5514
      %v5720 = vpop.f32.mrb[0].mxu0
      %v5721 = vadd.f32 0.0, %v5720
      %v5722 = vpop.f32.mrb[0].mxu0
      %v5723 = vpop.f32.mrb[0].mxu0
      %v5724 = vadd.f32 0.0, %v5723
      %v5725 = vpop.f32.mrb[0].mxu0
      %5726 = vmatprep.mubr.bf16.mxu0 0
      %5727 = vmatmul.mubr.bf16.gmra.mrb[0].mxu0 %v5515
      %v5728 = vpop.f32.mrb[0].mxu0
      %v5729 = vadd.f32 0.0, %v5728
      %v5730 = vpop.f32.mrb[0].mxu0
      %v5731 = vpop.f32.mrb[0].mxu0
      %v5732 = vadd.f32 0.0, %v5731
      %v5733 = vpop.f32.mrb[0].mxu0
      %5734 = vmatprep.mubr.bf16.mxu0 0
      %5735 = vmatmul.mubr.bf16.gmra.mrb[0].mxu0 %v5516
      %v5736 = vpop.f32.mrb[0].mxu0
      %v5737 = vadd.f32 0.0, %v5736
      %v5738 = vpop.f32.mrb[0].mxu0
      %v5739 = vpop.f32.mrb[0].mxu0
      %v5740 = vadd.f32 0.0, %v5739
      %v5741 = vpop.f32.mrb[0].mxu0
      %5742 = vdwg.mxu0
      %v5743 = vadd.f32 %v5437, %v5617
      %v5744 = vadd.f32 %v5438, %v5620
      %v5745 = vadd.f32 %v5439, %v5625
      %v5746 = vadd.f32 %v5440, %v5628
      %v5747 = vadd.f32 %v5441, %v5633
      %v5748 = vadd.f32 %v5442, %v5636
      %v5749 = vadd.f32 %v5443, %v5641
      %v5750 = vadd.f32 %v5444, %v5644
      %v5751 = vadd.f32 %v5445, %v5649
      %v5752 = vadd.f32 %v5446, %v5652
      %v5753 = vadd.f32 %v5447, %v5657
      %v5754 = vadd.f32 %v5448, %v5660
      %v5755 = vadd.f32 %v5449, %v5665
      %v5756 = vadd.f32 %v5450, %v5668
      %v5757 = vadd.f32 %v5451, %v5673
      %v5758 = vadd.f32 %v5452, %v5676
      %v5759 = vadd.f32 %v5453, %v5681
      %v5760 = vadd.f32 %v5454, %v5684
      %v5761 = vadd.f32 %v5455, %v5689
      %v5762 = vadd.f32 %v5456, %v5692
      %v5763 = vadd.f32 %v5457, %v5697
      %v5764 = vadd.f32 %v5458, %v5700
      %v5765 = vadd.f32 %v5459, %v5705
      %v5766 = vadd.f32 %v5460, %v5708
      %v5767 = vadd.f32 %v5461, %v5713
      %v5768 = vadd.f32 %v5462, %v5716
      %v5769 = vadd.f32 %v5463, %v5721
      %v5770 = vadd.f32 %v5464, %v5724
      %v5771 = vadd.f32 %v5465, %v5729
      %v5772 = vadd.f32 %v5466, %v5732
      %v5773 = vadd.f32 %v5467, %v5737
      %v5774 = vadd.f32 %v5468, %v5740
      %s5775 = scalar_lea.vmem [#allocation3], 48
      %v5776 = vld [vmem:[%s5775] sm:$0xff]
      %v5777 = vld [vmem:[%s5775 + $0x8] sm:$0xff]
      %v5778 = vld [vmem:[%s5775 + $0x18] sm:$0xff]
      %v5779 = vld [vmem:[%s5775 + $0x20] sm:$0xff]
      %v5780 = vld [vmem:[%s5775 + $0x30] sm:$0xff]
      %v5781 = vld [vmem:[%s5775 + $0x38] sm:$0xff]
      %v5782 = vld [vmem:[%s5775 + $0x48] sm:$0xff]
      %v5783 = vld [vmem:[%s5775 + $0x50] sm:$0xff]
      %v5784 = vld [vmem:[%s5775 + $0x60] sm:$0xff]
      %v5785 = vld [vmem:[%s5775 + $0x68] sm:$0xff]
      %v5786 = vld [vmem:[%s5775 + $0x78] sm:$0xff]
      %v5787 = vld [vmem:[%s5775 + $0x80] sm:$0xff]
      %v5788 = vld [vmem:[%s5775 + $0x90] sm:$0xff]
      %v5789 = vld [vmem:[%s5775 + $0x98] sm:$0xff]
      %v5790 = vld [vmem:[%s5775 + $0xa8] sm:$0xff]
      %v5791 = vld [vmem:[%s5775 + $0xb0] sm:$0xff]
      %v5792 = vld [vmem:[%s5775 + $0xc0] sm:$0xff]
      %v5793 = vld [vmem:[%s5775 + $0xc8] sm:$0xff]
      %v5794 = vld [vmem:[%s5775 + $0xd8] sm:$0xff]
      %v5795 = vld [vmem:[%s5775 + $0xe0] sm:$0xff]
      %v5796 = vld [vmem:[%s5775 + $0xf0] sm:$0xff]
      %v5797 = vld [vmem:[%s5775 + $0xf8] sm:$0xff]
      %v5798 = vld [vmem:[%s5775 + $0x108] sm:$0xff]
      %v5799 = vld [vmem:[%s5775 + $0x110] sm:$0xff]
      %v5800 = vld [vmem:[%s5775 + $0x120] sm:$0xff]
      %v5801 = vld [vmem:[%s5775 + $0x128] sm:$0xff]
      %v5802 = vld [vmem:[%s5775 + $0x138] sm:$0xff]
      %v5803 = vld [vmem:[%s5775 + $0x140] sm:$0xff]
      %v5804 = vld [vmem:[%s5775 + $0x150] sm:$0xff]
      %v5805 = vld [vmem:[%s5775 + $0x158] sm:$0xff]
      %v5806 = vld [vmem:[%s5775 + $0x168] sm:$0xff]
      %v5807 = vld [vmem:[%s5775 + $0x170] sm:$0xff]
      %v5808 = vpack.c.bf16 %v5777, %v5776
      %v5809 = vpack.c.bf16 %v5779, %v5778
      %v5810 = vpack.c.bf16 %v5781, %v5780
      %v5811 = vpack.c.bf16 %v5783, %v5782
      %v5812 = vpack.c.bf16 %v5785, %v5784
      %v5813 = vpack.c.bf16 %v5787, %v5786
      %v5814 = vpack.c.bf16 %v5789, %v5788
      %v5815 = vpack.c.bf16 %v5791, %v5790
      %v5816 = vpack.c.bf16 %v5793, %v5792
      %v5817 = vpack.c.bf16 %v5795, %v5794
      %v5818 = vpack.c.bf16 %v5797, %v5796
      %v5819 = vpack.c.bf16 %v5799, %v5798
      %v5820 = vpack.c.bf16 %v5801, %v5800
      %v5821 = vpack.c.bf16 %v5803, %v5802
      %v5822 = vpack.c.bf16 %v5805, %v5804
      %v5823 = vpack.c.bf16 %v5807, %v5806
      %s5824 = scalar_lea.vmem %s3, 384
      %v5825 = vld [vmem:[%s5824] sm:$0xf]
      %v5826 = vld [vmem:[%s5824 + $0x4] sm:$0xf]
      %v5827 = vld [vmem:[%s5824 + $0x8] sm:$0xf]
      %v5828 = vld [vmem:[%s5824 + $0xc] sm:$0xf]
      %v5829 = vld [vmem:[%s5824 + $0x10] sm:$0xf]
      %v5830 = vld [vmem:[%s5824 + $0x14] sm:$0xf]
      %v5831 = vld [vmem:[%s5824 + $0x18] sm:$0xf]
      %v5832 = vld [vmem:[%s5824 + $0x1c] sm:$0xf]
      %v5833 = vld [vmem:[%s5824 + $0x20] sm:$0xf]
      %v5834 = vld [vmem:[%s5824 + $0x24] sm:$0xf]
      %v5835 = vld [vmem:[%s5824 + $0x28] sm:$0xf]
      %v5836 = vld [vmem:[%s5824 + $0x2c] sm:$0xf]
      %v5837 = vld [vmem:[%s5824 + $0x30] sm:$0xf]
      %v5838 = vld [vmem:[%s5824 + $0x34] sm:$0xf]
      %v5839 = vld [vmem:[%s5824 + $0x38] sm:$0xf]
      %v5840 = vld [vmem:[%s5824 + $0x3c] sm:$0xf]
      %v5857 = vunpack.c.l.b16 %v5825
      %v5858 = vunpack.c.l.b16 %v5826
      %v5859 = vunpack.c.l.b16 %v5827
      %v5860 = vunpack.c.l.b16 %v5828
      %v5861 = vunpack.c.l.b16 %v5829
      %v5862 = vunpack.c.l.b16 %v5830
      %v5863 = vunpack.c.l.b16 %v5831
      %v5864 = vunpack.c.l.b16 %v5832
      %v5865 = vunpack.c.l.b16 %v5833
      %v5866 = vunpack.c.l.b16 %v5834
      %v5867 = vunpack.c.l.b16 %v5835
      %v5868 = vunpack.c.l.b16 %v5836
      %v5869 = vunpack.c.l.b16 %v5837
      %v5870 = vunpack.c.l.b16 %v5838
      %v5871 = vunpack.c.l.b16 %v5839
      %v5872 = vunpack.c.l.b16 %v5840
      %v5873 = vpack.c.b16 %v5858, %v5857
      %v5874 = vpack.c.b16 %v5860, %v5859
      %v5875 = vpack.c.b16 %v5862, %v5861
      %v5876 = vpack.c.b16 %v5864, %v5863
      %v5877 = vpack.c.b16 %v5866, %v5865
      %v5878 = vpack.c.b16 %v5868, %v5867
      %v5879 = vpack.c.b16 %v5870, %v5869
      %v5880 = vpack.c.b16 %v5872, %v5871
      %5889 = vmatprep.subr.bf16.mxu0 0
      %5890 = vmatpush1.bf16.msra.mxu0 %v5873
      %5891 = vmatprep.subr.bf16.mxu0 0
      %5892 = vmatpush1.bf16.msra.mxu0 %v5874
      %5893 = vmatprep.subr.bf16.mxu0 0
      %5894 = vmatpush1.bf16.msra.mxu0 %v5875
      %5895 = vmatprep.subr.bf16.mxu0 0
      %5896 = vmatpush1.bf16.msra.mxu0 %v5876
      %5897 = vmatprep.subr.bf16.mxu0 0
      %5898 = vmatpush1.bf16.msra.mxu0 %v5877
      %5899 = vmatprep.subr.bf16.mxu0 0
      %5900 = vmatpush1.bf16.msra.mxu0 %v5878
      %5901 = vmatprep.subr.bf16.mxu0 0
      %5902 = vmatpush1.bf16.msra.mxu0 %v5879
      %5903 = vmatprep.subr.bf16.mxu0 0
      %5904 = vmatpush1.bf16.msra.mxu0 %v5880
      %5905 = vmatprep.subr.bf16.mxu0 0
      %5906 = vmatpush1.bf16.msra.mxu0 0
      %5907 = vmatprep.subr.bf16.mxu0 0
      %5908 = vmatpush1.bf16.msra.mxu0 0
      %5909 = vmatprep.subr.bf16.mxu0 0
      %5910 = vmatpush1.bf16.msra.mxu0 0
      %5911 = vmatprep.subr.bf16.mxu0 0
      %5912 = vmatpush1.bf16.msra.mxu0 0
      %5913 = vmatprep.subr.bf16.mxu0 0
      %5914 = vmatpush1.bf16.msra.mxu0 0
      %5915 = vmatprep.subr.bf16.mxu0 0
      %5916 = vmatpush1.bf16.msra.mxu0 0
      %5917 = vmatprep.subr.bf16.mxu0 0
      %5918 = vmatpush1.bf16.msra.mxu0 0
      %5919 = vmatprep.subr.bf16.mxu0 0
      %5920 = vmatpush1.bf16.msra.mxu0 0
      %5921 = vmatprep.mubr.bf16.mxu0 0
      %5922 = vmatmul.mubr.bf16.gmra.mrb[0].mxu0 %v5808
      %v5923 = vpop.f32.mrb[0].mxu0
      %v5924 = vadd.f32 0.0, %v5923
      %v5925 = vpop.f32.mrb[0].mxu0
      %v5926 = vpop.f32.mrb[0].mxu0
      %v5927 = vadd.f32 0.0, %v5926
      %v5928 = vpop.f32.mrb[0].mxu0
      %5929 = vmatprep.mubr.bf16.mxu0 0
      %5930 = vmatmul.mubr.bf16.gmra.mrb[0].mxu0 %v5809
      %v5931 = vpop.f32.mrb[0].mxu0
      %v5932 = vadd.f32 0.0, %v5931
      %v5933 = vpop.f32.mrb[0].mxu0
      %v5934 = vpop.f32.mrb[0].mxu0
      %v5935 = vadd.f32 0.0, %v5934
      %v5936 = vpop.f32.mrb[0].mxu0
      %5937 = vmatprep.mubr.bf16.mxu0 0
      %5938 = vmatmul.mubr.bf16.gmra.mrb[0].mxu0 %v5810
      %v5939 = vpop.f32.mrb[0].mxu0
      %v5940 = vadd.f32 0.0, %v5939
      %v5941 = vpop.f32.mrb[0].mxu0
      %v5942 = vpop.f32.mrb[0].mxu0
      %v5943 = vadd.f32 0.0, %v5942
      %v5944 = vpop.f32.mrb[0].mxu0
      %5945 = vmatprep.mubr.bf16.mxu0 0
      %5946 = vmatmul.mubr.bf16.gmra.mrb[0].mxu0 %v5811
      %v5947 = vpop.f32.mrb[0].mxu0
      %v5948 = vadd.f32 0.0, %v5947
      %v5949 = vpop.f32.mrb[0].mxu0
      %v5950 = vpop.f32.mrb[0].mxu0
      %v5951 = vadd.f32 0.0, %v5950
      %v5952 = vpop.f32.mrb[0].mxu0
      %5953 = vmatprep.mubr.bf16.mxu0 0
      %5954 = vmatmul.mubr.bf16.gmra.mrb[0].mxu0 %v5812
      %v5955 = vpop.f32.mrb[0].mxu0
      %v5956 = vadd.f32 0.0, %v5955
      %v5957 = vpop.f32.mrb[0].mxu0
      %v5958 = vpop.f32.mrb[0].mxu0
      %v5959 = vadd.f32 0.0, %v5958
      %v5960 = vpop.f32.mrb[0].mxu0
      %5961 = vmatprep.mubr.bf16.mxu0 0
      %5962 = vmatmul.mubr.bf16.gmra.mrb[0].mxu0 %v5813
      %v5963 = vpop.f32.mrb[0].mxu0
      %v5964 = vadd.f32 0.0, %v5963
      %v5965 = vpop.f32.mrb[0].mxu0
      %v5966 = vpop.f32.mrb[0].mxu0
      %v5967 = vadd.f32 0.0, %v5966
      %v5968 = vpop.f32.mrb[0].mxu0
      %5969 = vmatprep.mubr.bf16.mxu0 0
      %5970 = vmatmul.mubr.bf16.gmra.mrb[0].mxu0 %v5814
      %v5971 = vpop.f32.mrb[0].mxu0
      %v5972 = vadd.f32 0.0, %v5971
      %v5973 = vpop.f32.mrb[0].mxu0
      %v5974 = vpop.f32.mrb[0].mxu0
      %v5975 = vadd.f32 0.0, %v5974
      %v5976 = vpop.f32.mrb[0].mxu0
      %5977 = vmatprep.mubr.bf16.mxu0 0
      %5978 = vmatmul.mubr.bf16.gmra.mrb[0].mxu0 %v5815
      %v5979 = vpop.f32.mrb[0].mxu0
      %v5980 = vadd.f32 0.0, %v5979
      %v5981 = vpop.f32.mrb[0].mxu0
      %v5982 = vpop.f32.mrb[0].mxu0
      %v5983 = vadd.f32 0.0, %v5982
      %v5984 = vpop.f32.mrb[0].mxu0
      %5985 = vmatprep.mubr.bf16.mxu0 0
      %5986 = vmatmul.mubr.bf16.gmra.mrb[0].mxu0 %v5816
      %v5987 = vpop.f32.mrb[0].mxu0
      %v5988 = vadd.f32 0.0, %v5987
      %v5989 = vpop.f32.mrb[0].mxu0
      %v5990 = vpop.f32.mrb[0].mxu0
      %v5991 = vadd.f32 0.0, %v5990
      %v5992 = vpop.f32.mrb[0].mxu0
      %5993 = vmatprep.mubr.bf16.mxu0 0
      %5994 = vmatmul.mubr.bf16.gmra.mrb[0].mxu0 %v5817
      %v5995 = vpop.f32.mrb[0].mxu0
      %v5996 = vadd.f32 0.0, %v5995
      %v5997 = vpop.f32.mrb[0].mxu0
      %v5998 = vpop.f32.mrb[0].mxu0
      %v5999 = vadd.f32 0.0, %v5998
      %v6000 = vpop.f32.mrb[0].mxu0
      %6001 = vmatprep.mubr.bf16.mxu0 0
      %6002 = vmatmul.mubr.bf16.gmra.mrb[0].mxu0 %v5818
      %v6003 = vpop.f32.mrb[0].mxu0
      %v6004 = vadd.f32 0.0, %v6003
      %v6005 = vpop.f32.mrb[0].mxu0
      %v6006 = vpop.f32.mrb[0].mxu0
      %v6007 = vadd.f32 0.0, %v6006
      %v6008 = vpop.f32.mrb[0].mxu0
      %6009 = vmatprep.mubr.bf16.mxu0 0
      %6010 = vmatmul.mubr.bf16.gmra.mrb[0].mxu0 %v5819
      %v6011 = vpop.f32.mrb[0].mxu0
      %v6012 = vadd.f32 0.0, %v6011
      %v6013 = vpop.f32.mrb[0].mxu0
      %v6014 = vpop.f32.mrb[0].mxu0
      %v6015 = vadd.f32 0.0, %v6014
      %v6016 = vpop.f32.mrb[0].mxu0
      %6017 = vmatprep.mubr.bf16.mxu0 0
      %6018 = vmatmul.mubr.bf16.gmra.mrb[0].mxu0 %v5820
      %v6019 = vpop.f32.mrb[0].mxu0
      %v6020 = vadd.f32 0.0, %v6019
      %v6021 = vpop.f32.mrb[0].mxu0
      %v6022 = vpop.f32.mrb[0].mxu0
      %v6023 = vadd.f32 0.0, %v6022
      %v6024 = vpop.f32.mrb[0].mxu0
      %6025 = vmatprep.mubr.bf16.mxu0 0
      %6026 = vmatmul.mubr.bf16.gmra.mrb[0].mxu0 %v5821
      %v6027 = vpop.f32.mrb[0].mxu0
      %v6028 = vadd.f32 0.0, %v6027
      %v6029 = vpop.f32.mrb[0].mxu0
      %v6030 = vpop.f32.mrb[0].mxu0
      %v6031 = vadd.f32 0.0, %v6030
      %v6032 = vpop.f32.mrb[0].mxu0
      %6033 = vmatprep.mubr.bf16.mxu0 0
      %6034 = vmatmul.mubr.bf16.gmra.mrb[0].mxu0 %v5822
      %v6035 = vpop.f32.mrb[0].mxu0
      %v6036 = vadd.f32 0.0, %v6035
      %v6037 = vpop.f32.mrb[0].mxu0
      %v6038 = vpop.f32.mrb[0].mxu0
      %v6039 = vadd.f32 0.0, %v6038
      %v6040 = vpop.f32.mrb[0].mxu0
      %6041 = vmatprep.mubr.bf16.mxu0 0
      %6042 = vmatmul.mubr.bf16.gmra.mrb[0].mxu0 %v5823
      %v6043 = vpop.f32.mrb[0].mxu0
      %v6044 = vadd.f32 0.0, %v6043
      %v6045 = vpop.f32.mrb[0].mxu0
      %v6046 = vpop.f32.mrb[0].mxu0
      %v6047 = vadd.f32 0.0, %v6046
      %v6048 = vpop.f32.mrb[0].mxu0
      %6049 = vdwg.mxu0
      %v6050 = vadd.f32 %v5743, %v5924
      %v6051 = vadd.f32 %v5744, %v5927
      %v6052 = vadd.f32 %v5745, %v5932
      %v6053 = vadd.f32 %v5746, %v5935
      %v6054 = vadd.f32 %v5747, %v5940
      %v6055 = vadd.f32 %v5748, %v5943
      %v6056 = vadd.f32 %v5749, %v5948
      %v6057 = vadd.f32 %v5750, %v5951
      %v6058 = vadd.f32 %v5751, %v5956
      %v6059 = vadd.f32 %v5752, %v5959
      %v6060 = vadd.f32 %v5753, %v5964
      %v6061 = vadd.f32 %v5754, %v5967
      %v6062 = vadd.f32 %v5755, %v5972
      %v6063 = vadd.f32 %v5756, %v5975
      %v6064 = vadd.f32 %v5757, %v5980
      %v6065 = vadd.f32 %v5758, %v5983
      %v6066 = vadd.f32 %v5759, %v5988
      %v6067 = vadd.f32 %v5760, %v5991
      %v6068 = vadd.f32 %v5761, %v5996
      %v6069 = vadd.f32 %v5762, %v5999
      %v6070 = vadd.f32 %v5763, %v6004
      %v6071 = vadd.f32 %v5764, %v6007
      %v6072 = vadd.f32 %v5765, %v6012
      %v6073 = vadd.f32 %v5766, %v6015
      %v6074 = vadd.f32 %v5767, %v6020
      %v6075 = vadd.f32 %v5768, %v6023
      %v6076 = vadd.f32 %v5769, %v6028
      %v6077 = vadd.f32 %v5770, %v6031
      %v6078 = vadd.f32 %v5771, %v6036
      %v6079 = vadd.f32 %v5772, %v6039
      %v6080 = vadd.f32 %v5773, %v6044
      %v6081 = vadd.f32 %v5774, %v6047
      %v6082 = vld [vmem:[%s5775 + $0x1] sm:$0xff]
      %v6083 = vld [vmem:[%s5775 + $0x9] sm:$0xff]
      %v6084 = vld [vmem:[%s5775 + $0x19] sm:$0xff]
      %v6085 = vld [vmem:[%s5775 + $0x21] sm:$0xff]
      %v6086 = vld [vmem:[%s5775 + $0x31] sm:$0xff]
      %v6087 = vld [vmem:[%s5775 + $0x39] sm:$0xff]
      %v6088 = vld [vmem:[%s5775 + $0x49] sm:$0xff]
      %v6089 = vld [vmem:[%s5775 + $0x51] sm:$0xff]
      %v6090 = vld [vmem:[%s5775 + $0x61] sm:$0xff]
      %v6091 = vld [vmem:[%s5775 + $0x69] sm:$0xff]
      %v6092 = vld [vmem:[%s5775 + $0x79] sm:$0xff]
      %v6093 = vld [vmem:[%s5775 + $0x81] sm:$0xff]
      %v6094 = vld [vmem:[%s5775 + $0x91] sm:$0xff]
      %v6095 = vld [vmem:[%s5775 + $0x99] sm:$0xff]
      %v6096 = vld [vmem:[%s5775 + $0xa9] sm:$0xff]
      %v6097 = vld [vmem:[%s5775 + $0xb1] sm:$0xff]
      %v6098 = vld [vmem:[%s5775 + $0xc1] sm:$0xff]
      %v6099 = vld [vmem:[%s5775 + $0xc9] sm:$0xff]
      %v6100 = vld [vmem:[%s5775 + $0xd9] sm:$0xff]
      %v6101 = vld [vmem:[%s5775 + $0xe1] sm:$0xff]
      %v6102 = vld [vmem:[%s5775 + $0xf1] sm:$0xff]
      %v6103 = vld [vmem:[%s5775 + $0xf9] sm:$0xff]
      %v6104 = vld [vmem:[%s5775 + $0x109] sm:$0xff]
      %v6105 = vld [vmem:[%s5775 + $0x111] sm:$0xff]
      %v6106 = vld [vmem:[%s5775 + $0x121] sm:$0xff]
      %v6107 = vld [vmem:[%s5775 + $0x129] sm:$0xff]
      %v6108 = vld [vmem:[%s5775 + $0x139] sm:$0xff]
      %v6109 = vld [vmem:[%s5775 + $0x141] sm:$0xff]
      %v6110 = vld [vmem:[%s5775 + $0x151] sm:$0xff]
      %v6111 = vld [vmem:[%s5775 + $0x159] sm:$0xff]
      %v6112 = vld [vmem:[%s5775 + $0x169] sm:$0xff]
      %v6113 = vld [vmem:[%s5775 + $0x171] sm:$0xff]
      %v6114 = vpack.c.bf16 %v6083, %v6082
      %v6115 = vpack.c.bf16 %v6085, %v6084
      %v6116 = vpack.c.bf16 %v6087, %v6086
      %v6117 = vpack.c.bf16 %v6089, %v6088
      %v6118 = vpack.c.bf16 %v6091, %v6090
      %v6119 = vpack.c.bf16 %v6093, %v6092
      %v6120 = vpack.c.bf16 %v6095, %v6094
      %v6121 = vpack.c.bf16 %v6097, %v6096
      %v6122 = vpack.c.bf16 %v6099, %v6098
      %v6123 = vpack.c.bf16 %v6101, %v6100
      %v6124 = vpack.c.bf16 %v6103, %v6102
      %v6125 = vpack.c.bf16 %v6105, %v6104
      %v6126 = vpack.c.bf16 %v6107, %v6106
      %v6127 = vpack.c.bf16 %v6109, %v6108
      %v6128 = vpack.c.bf16 %v6111, %v6110
      %v6129 = vpack.c.bf16 %v6113, %v6112
      %s6130 = scalar_lea.vmem %s3, 448
      %v6131 = vld [vmem:[%s6130] sm:$0xf]
      %v6132 = vld [vmem:[%s6130 + $0x4] sm:$0xf]
      %v6133 = vld [vmem:[%s6130 + $0x8] sm:$0xf]
      %v6134 = vld [vmem:[%s6130 + $0xc] sm:$0xf]
      %v6135 = vld [vmem:[%s6130 + $0x10] sm:$0xf]
      %v6136 = vld [vmem:[%s6130 + $0x14] sm:$0xf]
      %v6137 = vld [vmem:[%s6130 + $0x18] sm:$0xf]
      %v6138 = vld [vmem:[%s6130 + $0x1c] sm:$0xf]
      %v6139 = vld [vmem:[%s6130 + $0x20] sm:$0xf]
      %v6140 = vld [vmem:[%s6130 + $0x24] sm:$0xf]
      %v6141 = vld [vmem:[%s6130 + $0x28] sm:$0xf]
      %v6142 = vld [vmem:[%s6130 + $0x2c] sm:$0xf]
      %v6143 = vld [vmem:[%s6130 + $0x30] sm:$0xf]
      %v6144 = vld [vmem:[%s6130 + $0x34] sm:$0xf]
      %v6145 = vld [vmem:[%s6130 + $0x38] sm:$0xf]
      %v6146 = vld [vmem:[%s6130 + $0x3c] sm:$0xf]
      %v6163 = vunpack.c.l.b16 %v6131
      %v6164 = vunpack.c.l.b16 %v6132
      %v6165 = vunpack.c.l.b16 %v6133
      %v6166 = vunpack.c.l.b16 %v6134
      %v6167 = vunpack.c.l.b16 %v6135
      %v6168 = vunpack.c.l.b16 %v6136
      %v6169 = vunpack.c.l.b16 %v6137
      %v6170 = vunpack.c.l.b16 %v6138
      %v6171 = vunpack.c.l.b16 %v6139
      %v6172 = vunpack.c.l.b16 %v6140
      %v6173 = vunpack.c.l.b16 %v6141
      %v6174 = vunpack.c.l.b16 %v6142
      %v6175 = vunpack.c.l.b16 %v6143
      %v6176 = vunpack.c.l.b16 %v6144
      %v6177 = vunpack.c.l.b16 %v6145
      %v6178 = vunpack.c.l.b16 %v6146
      %v6179 = vpack.c.b16 %v6164, %v6163
      %v6180 = vpack.c.b16 %v6166, %v6165
      %v6181 = vpack.c.b16 %v6168, %v6167
      %v6182 = vpack.c.b16 %v6170, %v6169
      %v6183 = vpack.c.b16 %v6172, %v6171
      %v6184 = vpack.c.b16 %v6174, %v6173
      %v6185 = vpack.c.b16 %v6176, %v6175
      %v6186 = vpack.c.b16 %v6178, %v6177
      %6195 = vmatprep.subr.bf16.mxu0 0
      %6196 = vmatpush1.bf16.msra.mxu0 %v6179
      %6197 = vmatprep.subr.bf16.mxu0 0
      %6198 = vmatpush1.bf16.msra.mxu0 %v6180
      %6199 = vmatprep.subr.bf16.mxu0 0
      %6200 = vmatpush1.bf16.msra.mxu0 %v6181
      %6201 = vmatprep.subr.bf16.mxu0 0
      %6202 = vmatpush1.bf16.msra.mxu0 %v6182
      %6203 = vmatprep.subr.bf16.mxu0 0
      %6204 = vmatpush1.bf16.msra.mxu0 %v6183
      %6205 = vmatprep.subr.bf16.mxu0 0
      %6206 = vmatpush1.bf16.msra.mxu0 %v6184
      %6207 = vmatprep.subr.bf16.mxu0 0
      %6208 = vmatpush1.bf16.msra.mxu0 %v6185
      %6209 = vmatprep.subr.bf16.mxu0 0
      %6210 = vmatpush1.bf16.msra.mxu0 %v6186
      %6211 = vmatprep.subr.bf16.mxu0 0
      %6212 = vmatpush1.bf16.msra.mxu0 0
      %6213 = vmatprep.subr.bf16.mxu0 0
      %6214 = vmatpush1.bf16.msra.mxu0 0
      %6215 = vmatprep.subr.bf16.mxu0 0
      %6216 = vmatpush1.bf16.msra.mxu0 0
      %6217 = vmatprep.subr.bf16.mxu0 0
      %6218 = vmatpush1.bf16.msra.mxu0 0
      %6219 = vmatprep.subr.bf16.mxu0 0
      %6220 = vmatpush1.bf16.msra.mxu0 0
      %6221 = vmatprep.subr.bf16.mxu0 0
      %6222 = vmatpush1.bf16.msra.mxu0 0
      %6223 = vmatprep.subr.bf16.mxu0 0
      %6224 = vmatpush1.bf16.msra.mxu0 0
      %6225 = vmatprep.subr.bf16.mxu0 0
      %6226 = vmatpush1.bf16.msra.mxu0 0
      %6227 = vmatprep.mubr.bf16.mxu0 0
      %6228 = vmatmul.mubr.bf16.gmra.mrb[0].mxu0 %v6114
      %v6229 = vpop.f32.mrb[0].mxu0
      %v6230 = vadd.f32 0.0, %v6229
      %v6231 = vpop.f32.mrb[0].mxu0
      %v6232 = vpop.f32.mrb[0].mxu0
      %v6233 = vadd.f32 0.0, %v6232
      %v6234 = vpop.f32.mrb[0].mxu0
      %6235 = vmatprep.mubr.bf16.mxu0 0
      %6236 = vmatmul.mubr.bf16.gmra.mrb[0].mxu0 %v6115
      %v6237 = vpop.f32.mrb[0].mxu0
      %v6238 = vadd.f32 0.0, %v6237
      %v6239 = vpop.f32.mrb[0].mxu0
      %v6240 = vpop.f32.mrb[0].mxu0
      %v6241 = vadd.f32 0.0, %v6240
      %v6242 = vpop.f32.mrb[0].mxu0
      %6243 = vmatprep.mubr.bf16.mxu0 0
      %6244 = vmatmul.mubr.bf16.gmra.mrb[0].mxu0 %v6116
      %v6245 = vpop.f32.mrb[0].mxu0
      %v6246 = vadd.f32 0.0, %v6245
      %v6247 = vpop.f32.mrb[0].mxu0
      %v6248 = vpop.f32.mrb[0].mxu0
      %v6249 = vadd.f32 0.0, %v6248
      %v6250 = vpop.f32.mrb[0].mxu0
      %6251 = vmatprep.mubr.bf16.mxu0 0
      %6252 = vmatmul.mubr.bf16.gmra.mrb[0].mxu0 %v6117
      %v6253 = vpop.f32.mrb[0].mxu0
      %v6254 = vadd.f32 0.0, %v6253
      %v6255 = vpop.f32.mrb[0].mxu0
      %v6256 = vpop.f32.mrb[0].mxu0
      %v6257 = vadd.f32 0.0, %v6256
      %v6258 = vpop.f32.mrb[0].mxu0
      %6259 = vmatprep.mubr.bf16.mxu0 0
      %6260 = vmatmul.mubr.bf16.gmra.mrb[0].mxu0 %v6118
      %v6261 = vpop.f32.mrb[0].mxu0
      %v6262 = vadd.f32 0.0, %v6261
      %v6263 = vpop.f32.mrb[0].mxu0
      %v6264 = vpop.f32.mrb[0].mxu0
      %v6265 = vadd.f32 0.0, %v6264
      %v6266 = vpop.f32.mrb[0].mxu0
      %6267 = vmatprep.mubr.bf16.mxu0 0
      %6268 = vmatmul.mubr.bf16.gmra.mrb[0].mxu0 %v6119
      %v6269 = vpop.f32.mrb[0].mxu0
      %v6270 = vadd.f32 0.0, %v6269
      %v6271 = vpop.f32.mrb[0].mxu0
      %v6272 = vpop.f32.mrb[0].mxu0
      %v6273 = vadd.f32 0.0, %v6272
      %v6274 = vpop.f32.mrb[0].mxu0
      %6275 = vmatprep.mubr.bf16.mxu0 0
      %6276 = vmatmul.mubr.bf16.gmra.mrb[0].mxu0 %v6120
      %v6277 = vpop.f32.mrb[0].mxu0
      %v6278 = vadd.f32 0.0, %v6277
      %v6279 = vpop.f32.mrb[0].mxu0
      %v6280 = vpop.f32.mrb[0].mxu0
      %v6281 = vadd.f32 0.0, %v6280
      %v6282 = vpop.f32.mrb[0].mxu0
      %6283 = vmatprep.mubr.bf16.mxu0 0
      %6284 = vmatmul.mubr.bf16.gmra.mrb[0].mxu0 %v6121
      %v6285 = vpop.f32.mrb[0].mxu0
      %v6286 = vadd.f32 0.0, %v6285
      %v6287 = vpop.f32.mrb[0].mxu0
      %v6288 = vpop.f32.mrb[0].mxu0
      %v6289 = vadd.f32 0.0, %v6288
      %v6290 = vpop.f32.mrb[0].mxu0
      %6291 = vmatprep.mubr.bf16.mxu0 0
      %6292 = vmatmul.mubr.bf16.gmra.mrb[0].mxu0 %v6122
      %v6293 = vpop.f32.mrb[0].mxu0
      %v6294 = vadd.f32 0.0, %v6293
      %v6295 = vpop.f32.mrb[0].mxu0
      %v6296 = vpop.f32.mrb[0].mxu0
      %v6297 = vadd.f32 0.0, %v6296
      %v6298 = vpop.f32.mrb[0].mxu0
      %6299 = vmatprep.mubr.bf16.mxu0 0
      %6300 = vmatmul.mubr.bf16.gmra.mrb[0].mxu0 %v6123
      %v6301 = vpop.f32.mrb[0].mxu0
      %v6302 = vadd.f32 0.0, %v6301
      %v6303 = vpop.f32.mrb[0].mxu0
      %v6304 = vpop.f32.mrb[0].mxu0
      %v6305 = vadd.f32 0.0, %v6304
      %v6306 = vpop.f32.mrb[0].mxu0
      %6307 = vmatprep.mubr.bf16.mxu0 0
      %6308 = vmatmul.mubr.bf16.gmra.mrb[0].mxu0 %v6124
      %v6309 = vpop.f32.mrb[0].mxu0
      %v6310 = vadd.f32 0.0, %v6309
      %v6311 = vpop.f32.mrb[0].mxu0
      %v6312 = vpop.f32.mrb[0].mxu0
      %v6313 = vadd.f32 0.0, %v6312
      %v6314 = vpop.f32.mrb[0].mxu0
      %6315 = vmatprep.mubr.bf16.mxu0 0
      %6316 = vmatmul.mubr.bf16.gmra.mrb[0].mxu0 %v6125
      %v6317 = vpop.f32.mrb[0].mxu0
      %v6318 = vadd.f32 0.0, %v6317
      %v6319 = vpop.f32.mrb[0].mxu0
      %v6320 = vpop.f32.mrb[0].mxu0
      %v6321 = vadd.f32 0.0, %v6320
      %v6322 = vpop.f32.mrb[0].mxu0
      %6323 = vmatprep.mubr.bf16.mxu0 0
      %6324 = vmatmul.mubr.bf16.gmra.mrb[0].mxu0 %v6126
      %v6325 = vpop.f32.mrb[0].mxu0
      %v6326 = vadd.f32 0.0, %v6325
      %v6327 = vpop.f32.mrb[0].mxu0
      %v6328 = vpop.f32.mrb[0].mxu0
      %v6329 = vadd.f32 0.0, %v6328
      %v6330 = vpop.f32.mrb[0].mxu0
      %6331 = vmatprep.mubr.bf16.mxu0 0
      %6332 = vmatmul.mubr.bf16.gmra.mrb[0].mxu0 %v6127
      %v6333 = vpop.f32.mrb[0].mxu0
      %v6334 = vadd.f32 0.0, %v6333
      %v6335 = vpop.f32.mrb[0].mxu0
      %v6336 = vpop.f32.mrb[0].mxu0
      %v6337 = vadd.f32 0.0, %v6336
      %v6338 = vpop.f32.mrb[0].mxu0
      %6339 = vmatprep.mubr.bf16.mxu0 0
      %6340 = vmatmul.mubr.bf16.gmra.mrb[0].mxu0 %v6128
      %v6341 = vpop.f32.mrb[0].mxu0
      %v6342 = vadd.f32 0.0, %v6341
      %v6343 = vpop.f32.mrb[0].mxu0
      %v6344 = vpop.f32.mrb[0].mxu0
      %v6345 = vadd.f32 0.0, %v6344
      %v6346 = vpop.f32.mrb[0].mxu0
      %6347 = vmatprep.mubr.bf16.mxu0 0
      %6348 = vmatmul.mubr.bf16.gmra.mrb[0].mxu0 %v6129
      %v6349 = vpop.f32.mrb[0].mxu0
      %v6350 = vadd.f32 0.0, %v6349
      %v6351 = vpop.f32.mrb[0].mxu0
      %v6352 = vpop.f32.mrb[0].mxu0
      %v6353 = vadd.f32 0.0, %v6352
      %v6354 = vpop.f32.mrb[0].mxu0
      %6355 = vdwg.mxu0
      %v6356 = vadd.f32 %v6050, %v6230
      %v6357 = vadd.f32 %v6051, %v6233
      %v6358 = vadd.f32 %v6052, %v6238
      %v6359 = vadd.f32 %v6053, %v6241
      %v6360 = vadd.f32 %v6054, %v6246
      %v6361 = vadd.f32 %v6055, %v6249
      %v6362 = vadd.f32 %v6056, %v6254
      %v6363 = vadd.f32 %v6057, %v6257
      %v6364 = vadd.f32 %v6058, %v6262
      %v6365 = vadd.f32 %v6059, %v6265
      %v6366 = vadd.f32 %v6060, %v6270
      %v6367 = vadd.f32 %v6061, %v6273
      %v6368 = vadd.f32 %v6062, %v6278
      %v6369 = vadd.f32 %v6063, %v6281
      %v6370 = vadd.f32 %v6064, %v6286
      %v6371 = vadd.f32 %v6065, %v6289
      %v6372 = vadd.f32 %v6066, %v6294
      %v6373 = vadd.f32 %v6067, %v6297
      %v6374 = vadd.f32 %v6068, %v6302
      %v6375 = vadd.f32 %v6069, %v6305
      %v6376 = vadd.f32 %v6070, %v6310
      %v6377 = vadd.f32 %v6071, %v6313
      %v6378 = vadd.f32 %v6072, %v6318
      %v6379 = vadd.f32 %v6073, %v6321
      %v6380 = vadd.f32 %v6074, %v6326
      %v6381 = vadd.f32 %v6075, %v6329
      %v6382 = vadd.f32 %v6076, %v6334
      %v6383 = vadd.f32 %v6077, %v6337
      %v6384 = vadd.f32 %v6078, %v6342
      %v6385 = vadd.f32 %v6079, %v6345
      %v6386 = vadd.f32 %v6080, %v6350
      %v6387 = vadd.f32 %v6081, %v6353
      %v6388 = vld [vmem:[%s5775 + $0x2] sm:$0xff]
      %v6389 = vld [vmem:[%s5775 + $0xa] sm:$0xff]
      %v6390 = vld [vmem:[%s5775 + $0x1a] sm:$0xff]
      %v6391 = vld [vmem:[%s5775 + $0x22] sm:$0xff]
      %v6392 = vld [vmem:[%s5775 + $0x32] sm:$0xff]
      %v6393 = vld [vmem:[%s5775 + $0x3a] sm:$0xff]
      %v6394 = vld [vmem:[%s5775 + $0x4a] sm:$0xff]
      %v6395 = vld [vmem:[%s5775 + $0x52] sm:$0xff]
      %v6396 = vld [vmem:[%s5775 + $0x62] sm:$0xff]
      %v6397 = vld [vmem:[%s5775 + $0x6a] sm:$0xff]
      %v6398 = vld [vmem:[%s5775 + $0x7a] sm:$0xff]
      %v6399 = vld [vmem:[%s5775 + $0x82] sm:$0xff]
      %v6400 = vld [vmem:[%s5775 + $0x92] sm:$0xff]
      %v6401 = vld [vmem:[%s5775 + $0x9a] sm:$0xff]
      %v6402 = vld [vmem:[%s5775 + $0xaa] sm:$0xff]
      %v6403 = vld [vmem:[%s5775 + $0xb2] sm:$0xff]
      %v6404 = vld [vmem:[%s5775 + $0xc2] sm:$0xff]
      %v6405 = vld [vmem:[%s5775 + $0xca] sm:$0xff]
      %v6406 = vld [vmem:[%s5775 + $0xda] sm:$0xff]
      %v6407 = vld [vmem:[%s5775 + $0xe2] sm:$0xff]
      %v6408 = vld [vmem:[%s5775 + $0xf2] sm:$0xff]
      %v6409 = vld [vmem:[%s5775 + $0xfa] sm:$0xff]
      %v6410 = vld [vmem:[%s5775 + $0x10a] sm:$0xff]
      %v6411 = vld [vmem:[%s5775 + $0x112] sm:$0xff]
      %v6412 = vld [vmem:[%s5775 + $0x122] sm:$0xff]
      %v6413 = vld [vmem:[%s5775 + $0x12a] sm:$0xff]
      %v6414 = vld [vmem:[%s5775 + $0x13a] sm:$0xff]
      %v6415 = vld [vmem:[%s5775 + $0x142] sm:$0xff]
      %v6416 = vld [vmem:[%s5775 + $0x152] sm:$0xff]
      %v6417 = vld [vmem:[%s5775 + $0x15a] sm:$0xff]
      %v6418 = vld [vmem:[%s5775 + $0x16a] sm:$0xff]
      %v6419 = vld [vmem:[%s5775 + $0x172] sm:$0xff]
      %v6420 = vpack.c.bf16 %v6389, %v6388
      %v6421 = vpack.c.bf16 %v6391, %v6390
      %v6422 = vpack.c.bf16 %v6393, %v6392
      %v6423 = vpack.c.bf16 %v6395, %v6394
      %v6424 = vpack.c.bf16 %v6397, %v6396
      %v6425 = vpack.c.bf16 %v6399, %v6398
      %v6426 = vpack.c.bf16 %v6401, %v6400
      %v6427 = vpack.c.bf16 %v6403, %v6402
      %v6428 = vpack.c.bf16 %v6405, %v6404
      %v6429 = vpack.c.bf16 %v6407, %v6406
      %v6430 = vpack.c.bf16 %v6409, %v6408
      %v6431 = vpack.c.bf16 %v6411, %v6410
      %v6432 = vpack.c.bf16 %v6413, %v6412
      %v6433 = vpack.c.bf16 %v6415, %v6414
      %v6434 = vpack.c.bf16 %v6417, %v6416
      %v6435 = vpack.c.bf16 %v6419, %v6418
      %s6436 = scalar_lea.vmem %s3, 512
      %v6437 = vld [vmem:[%s6436] sm:$0xf]
      %v6438 = vld [vmem:[%s6436 + $0x4] sm:$0xf]
      %v6439 = vld [vmem:[%s6436 + $0x8] sm:$0xf]
      %v6440 = vld [vmem:[%s6436 + $0xc] sm:$0xf]
      %v6441 = vld [vmem:[%s6436 + $0x10] sm:$0xf]
      %v6442 = vld [vmem:[%s6436 + $0x14] sm:$0xf]
      %v6443 = vld [vmem:[%s6436 + $0x18] sm:$0xf]
      %v6444 = vld [vmem:[%s6436 + $0x1c] sm:$0xf]
      %v6445 = vld [vmem:[%s6436 + $0x20] sm:$0xf]
      %v6446 = vld [vmem:[%s6436 + $0x24] sm:$0xf]
      %v6447 = vld [vmem:[%s6436 + $0x28] sm:$0xf]
      %v6448 = vld [vmem:[%s6436 + $0x2c] sm:$0xf]
      %v6449 = vld [vmem:[%s6436 + $0x30] sm:$0xf]
      %v6450 = vld [vmem:[%s6436 + $0x34] sm:$0xf]
      %v6451 = vld [vmem:[%s6436 + $0x38] sm:$0xf]
      %v6452 = vld [vmem:[%s6436 + $0x3c] sm:$0xf]
      %v6469 = vunpack.c.l.b16 %v6437
      %v6470 = vunpack.c.l.b16 %v6438
      %v6471 = vunpack.c.l.b16 %v6439
      %v6472 = vunpack.c.l.b16 %v6440
      %v6473 = vunpack.c.l.b16 %v6441
      %v6474 = vunpack.c.l.b16 %v6442
      %v6475 = vunpack.c.l.b16 %v6443
      %v6476 = vunpack.c.l.b16 %v6444
      %v6477 = vunpack.c.l.b16 %v6445
      %v6478 = vunpack.c.l.b16 %v6446
      %v6479 = vunpack.c.l.b16 %v6447
      %v6480 = vunpack.c.l.b16 %v6448
      %v6481 = vunpack.c.l.b16 %v6449
      %v6482 = vunpack.c.l.b16 %v6450
      %v6483 = vunpack.c.l.b16 %v6451
      %v6484 = vunpack.c.l.b16 %v6452
      %v6485 = vpack.c.b16 %v6470, %v6469
      %v6486 = vpack.c.b16 %v6472, %v6471
      %v6487 = vpack.c.b16 %v6474, %v6473
      %v6488 = vpack.c.b16 %v6476, %v6475
      %v6489 = vpack.c.b16 %v6478, %v6477
      %v6490 = vpack.c.b16 %v6480, %v6479
      %v6491 = vpack.c.b16 %v6482, %v6481
      %v6492 = vpack.c.b16 %v6484, %v6483
      %6501 = vmatprep.subr.bf16.mxu0 0
      %6502 = vmatpush1.bf16.msra.mxu0 %v6485
      %6503 = vmatprep.subr.bf16.mxu0 0
      %6504 = vmatpush1.bf16.msra.mxu0 %v6486
      %6505 = vmatprep.subr.bf16.mxu0 0
      %6506 = vmatpush1.bf16.msra.mxu0 %v6487
      %6507 = vmatprep.subr.bf16.mxu0 0
      %6508 = vmatpush1.bf16.msra.mxu0 %v6488
      %6509 = vmatprep.subr.bf16.mxu0 0
      %6510 = vmatpush1.bf16.msra.mxu0 %v6489
      %6511 = vmatprep.subr.bf16.mxu0 0
      %6512 = vmatpush1.bf16.msra.mxu0 %v6490
      %6513 = vmatprep.subr.bf16.mxu0 0
      %6514 = vmatpush1.bf16.msra.mxu0 %v6491
      %6515 = vmatprep.subr.bf16.mxu0 0
      %6516 = vmatpush1.bf16.msra.mxu0 %v6492
      %6517 = vmatprep.subr.bf16.mxu0 0
      %6518 = vmatpush1.bf16.msra.mxu0 0
      %6519 = vmatprep.subr.bf16.mxu0 0
      %6520 = vmatpush1.bf16.msra.mxu0 0
      %6521 = vmatprep.subr.bf16.mxu0 0
      %6522 = vmatpush1.bf16.msra.mxu0 0
      %6523 = vmatprep.subr.bf16.mxu0 0
      %6524 = vmatpush1.bf16.msra.mxu0 0
      %6525 = vmatprep.subr.bf16.mxu0 0
      %6526 = vmatpush1.bf16.msra.mxu0 0
      %6527 = vmatprep.subr.bf16.mxu0 0
      %6528 = vmatpush1.bf16.msra.mxu0 0
      %6529 = vmatprep.subr.bf16.mxu0 0
      %6530 = vmatpush1.bf16.msra.mxu0 0
      %6531 = vmatprep.subr.bf16.mxu0 0
      %6532 = vmatpush1.bf16.msra.mxu0 0
      %6533 = vmatprep.mubr.bf16.mxu0 0
      %6534 = vmatmul.mubr.bf16.gmra.mrb[0].mxu0 %v6420
      %v6535 = vpop.f32.mrb[0].mxu0
      %v6536 = vadd.f32 0.0, %v6535
      %v6537 = vpop.f32.mrb[0].mxu0
      %v6538 = vpop.f32.mrb[0].mxu0
      %v6539 = vadd.f32 0.0, %v6538
      %v6540 = vpop.f32.mrb[0].mxu0
      %6541 = vmatprep.mubr.bf16.mxu0 0
      %6542 = vmatmul.mubr.bf16.gmra.mrb[0].mxu0 %v6421
      %v6543 = vpop.f32.mrb[0].mxu0
      %v6544 = vadd.f32 0.0, %v6543
      %v6545 = vpop.f32.mrb[0].mxu0
      %v6546 = vpop.f32.mrb[0].mxu0
      %v6547 = vadd.f32 0.0, %v6546
      %v6548 = vpop.f32.mrb[0].mxu0
      %6549 = vmatprep.mubr.bf16.mxu0 0
      %6550 = vmatmul.mubr.bf16.gmra.mrb[0].mxu0 %v6422
      %v6551 = vpop.f32.mrb[0].mxu0
      %v6552 = vadd.f32 0.0, %v6551
      %v6553 = vpop.f32.mrb[0].mxu0
      %v6554 = vpop.f32.mrb[0].mxu0
      %v6555 = vadd.f32 0.0, %v6554
      %v6556 = vpop.f32.mrb[0].mxu0
      %6557 = vmatprep.mubr.bf16.mxu0 0
      %6558 = vmatmul.mubr.bf16.gmra.mrb[0].mxu0 %v6423
      %v6559 = vpop.f32.mrb[0].mxu0
      %v6560 = vadd.f32 0.0, %v6559
      %v6561 = vpop.f32.mrb[0].mxu0
      %v6562 = vpop.f32.mrb[0].mxu0
      %v6563 = vadd.f32 0.0, %v6562
      %v6564 = vpop.f32.mrb[0].mxu0
      %6565 = vmatprep.mubr.bf16.mxu0 0
      %6566 = vmatmul.mubr.bf16.gmra.mrb[0].mxu0 %v6424
      %v6567 = vpop.f32.mrb[0].mxu0
      %v6568 = vadd.f32 0.0, %v6567
      %v6569 = vpop.f32.mrb[0].mxu0
      %v6570 = vpop.f32.mrb[0].mxu0
      %v6571 = vadd.f32 0.0, %v6570
      %v6572 = vpop.f32.mrb[0].mxu0
      %6573 = vmatprep.mubr.bf16.mxu0 0
      %6574 = vmatmul.mubr.bf16.gmra.mrb[0].mxu0 %v6425
      %v6575 = vpop.f32.mrb[0].mxu0
      %v6576 = vadd.f32 0.0, %v6575
      %v6577 = vpop.f32.mrb[0].mxu0
      %v6578 = vpop.f32.mrb[0].mxu0
      %v6579 = vadd.f32 0.0, %v6578
      %v6580 = vpop.f32.mrb[0].mxu0
      %6581 = vmatprep.mubr.bf16.mxu0 0
      %6582 = vmatmul.mubr.bf16.gmra.mrb[0].mxu0 %v6426
      %v6583 = vpop.f32.mrb[0].mxu0
      %v6584 = vadd.f32 0.0, %v6583
      %v6585 = vpop.f32.mrb[0].mxu0
      %v6586 = vpop.f32.mrb[0].mxu0
      %v6587 = vadd.f32 0.0, %v6586
      %v6588 = vpop.f32.mrb[0].mxu0
      %6589 = vmatprep.mubr.bf16.mxu0 0
      %6590 = vmatmul.mubr.bf16.gmra.mrb[0].mxu0 %v6427
      %v6591 = vpop.f32.mrb[0].mxu0
      %v6592 = vadd.f32 0.0, %v6591
      %v6593 = vpop.f32.mrb[0].mxu0
      %v6594 = vpop.f32.mrb[0].mxu0
      %v6595 = vadd.f32 0.0, %v6594
      %v6596 = vpop.f32.mrb[0].mxu0
      %6597 = vmatprep.mubr.bf16.mxu0 0
      %6598 = vmatmul.mubr.bf16.gmra.mrb[0].mxu0 %v6428
      %v6599 = vpop.f32.mrb[0].mxu0
      %v6600 = vadd.f32 0.0, %v6599
      %v6601 = vpop.f32.mrb[0].mxu0
      %v6602 = vpop.f32.mrb[0].mxu0
      %v6603 = vadd.f32 0.0, %v6602
      %v6604 = vpop.f32.mrb[0].mxu0
      %6605 = vmatprep.mubr.bf16.mxu0 0
      %6606 = vmatmul.mubr.bf16.gmra.mrb[0].mxu0 %v6429
      %v6607 = vpop.f32.mrb[0].mxu0
      %v6608 = vadd.f32 0.0, %v6607
      %v6609 = vpop.f32.mrb[0].mxu0
      %v6610 = vpop.f32.mrb[0].mxu0
      %v6611 = vadd.f32 0.0, %v6610
      %v6612 = vpop.f32.mrb[0].mxu0
      %6613 = vmatprep.mubr.bf16.mxu0 0
      %6614 = vmatmul.mubr.bf16.gmra.mrb[0].mxu0 %v6430
      %v6615 = vpop.f32.mrb[0].mxu0
      %v6616 = vadd.f32 0.0, %v6615
      %v6617 = vpop.f32.mrb[0].mxu0
      %v6618 = vpop.f32.mrb[0].mxu0
      %v6619 = vadd.f32 0.0, %v6618
      %v6620 = vpop.f32.mrb[0].mxu0
      %6621 = vmatprep.mubr.bf16.mxu0 0
      %6622 = vmatmul.mubr.bf16.gmra.mrb[0].mxu0 %v6431
      %v6623 = vpop.f32.mrb[0].mxu0
      %v6624 = vadd.f32 0.0, %v6623
      %v6625 = vpop.f32.mrb[0].mxu0
      %v6626 = vpop.f32.mrb[0].mxu0
      %v6627 = vadd.f32 0.0, %v6626
      %v6628 = vpop.f32.mrb[0].mxu0
      %6629 = vmatprep.mubr.bf16.mxu0 0
      %6630 = vmatmul.mubr.bf16.gmra.mrb[0].mxu0 %v6432
      %v6631 = vpop.f32.mrb[0].mxu0
      %v6632 = vadd.f32 0.0, %v6631
      %v6633 = vpop.f32.mrb[0].mxu0
      %v6634 = vpop.f32.mrb[0].mxu0
      %v6635 = vadd.f32 0.0, %v6634
      %v6636 = vpop.f32.mrb[0].mxu0
      %6637 = vmatprep.mubr.bf16.mxu0 0
      %6638 = vmatmul.mubr.bf16.gmra.mrb[0].mxu0 %v6433
      %v6639 = vpop.f32.mrb[0].mxu0
      %v6640 = vadd.f32 0.0, %v6639
      %v6641 = vpop.f32.mrb[0].mxu0
      %v6642 = vpop.f32.mrb[0].mxu0
      %v6643 = vadd.f32 0.0, %v6642
      %v6644 = vpop.f32.mrb[0].mxu0
      %6645 = vmatprep.mubr.bf16.mxu0 0
      %6646 = vmatmul.mubr.bf16.gmra.mrb[0].mxu0 %v6434
      %v6647 = vpop.f32.mrb[0].mxu0
      %v6648 = vadd.f32 0.0, %v6647
      %v6649 = vpop.f32.mrb[0].mxu0
      %v6650 = vpop.f32.mrb[0].mxu0
      %v6651 = vadd.f32 0.0, %v6650
      %v6652 = vpop.f32.mrb[0].mxu0
      %6653 = vmatprep.mubr.bf16.mxu0 0
      %6654 = vmatmul.mubr.bf16.gmra.mrb[0].mxu0 %v6435
      %v6655 = vpop.f32.mrb[0].mxu0
      %v6656 = vadd.f32 0.0, %v6655
      %v6657 = vpop.f32.mrb[0].mxu0
      %v6658 = vpop.f32.mrb[0].mxu0
      %v6659 = vadd.f32 0.0, %v6658
      %v6660 = vpop.f32.mrb[0].mxu0
      %6661 = vdwg.mxu0
      %v6662 = vadd.f32 %v6356, %v6536
      %v6663 = vadd.f32 %v6357, %v6539
      %v6664 = vadd.f32 %v6358, %v6544
      %v6665 = vadd.f32 %v6359, %v6547
      %v6666 = vadd.f32 %v6360, %v6552
      %v6667 = vadd.f32 %v6361, %v6555
      %v6668 = vadd.f32 %v6362, %v6560
      %v6669 = vadd.f32 %v6363, %v6563
      %v6670 = vadd.f32 %v6364, %v6568
      %v6671 = vadd.f32 %v6365, %v6571
      %v6672 = vadd.f32 %v6366, %v6576
      %v6673 = vadd.f32 %v6367, %v6579
      %v6674 = vadd.f32 %v6368, %v6584
      %v6675 = vadd.f32 %v6369, %v6587
      %v6676 = vadd.f32 %v6370, %v6592
      %v6677 = vadd.f32 %v6371, %v6595
      %v6678 = vadd.f32 %v6372, %v6600
      %v6679 = vadd.f32 %v6373, %v6603
      %v6680 = vadd.f32 %v6374, %v6608
      %v6681 = vadd.f32 %v6375, %v6611
      %v6682 = vadd.f32 %v6376, %v6616
      %v6683 = vadd.f32 %v6377, %v6619
      %v6684 = vadd.f32 %v6378, %v6624
      %v6685 = vadd.f32 %v6379, %v6627
      %v6686 = vadd.f32 %v6380, %v6632
      %v6687 = vadd.f32 %v6381, %v6635
      %v6688 = vadd.f32 %v6382, %v6640
      %v6689 = vadd.f32 %v6383, %v6643
      %v6690 = vadd.f32 %v6384, %v6648
      %v6691 = vadd.f32 %v6385, %v6651
      %v6692 = vadd.f32 %v6386, %v6656
      %v6693 = vadd.f32 %v6387, %v6659
      %v6694 = vld [vmem:[%s4] sm:$0x1]
      %v6696 = vlaneseq
      %v6697 = vshrl.u32 %v6696, 7
      %v6698 = vsub.s32 0, %v6697
      %v6699 = vrot.slane %v6694, %v6698
      %v6701 = vadd.f32 %v6662, %v6699
      %v6702 = vadd.f32 %v6663, %v6699
      %v6703 = vadd.f32 %v6664, %v6699
      %v6704 = vadd.f32 %v6665, %v6699
      %v6705 = vadd.f32 %v6666, %v6699
      %v6706 = vadd.f32 %v6667, %v6699
      %v6707 = vadd.f32 %v6668, %v6699
      %v6708 = vadd.f32 %v6669, %v6699
      %v6709 = vadd.f32 %v6670, %v6699
      %v6710 = vadd.f32 %v6671, %v6699
      %v6711 = vadd.f32 %v6672, %v6699
      %v6712 = vadd.f32 %v6673, %v6699
      %v6713 = vadd.f32 %v6674, %v6699
      %v6714 = vadd.f32 %v6675, %v6699
      %v6715 = vadd.f32 %v6676, %v6699
      %v6716 = vadd.f32 %v6677, %v6699
      %v6717 = vadd.f32 %v6678, %v6699
      %v6718 = vadd.f32 %v6679, %v6699
      %v6719 = vadd.f32 %v6680, %v6699
      %v6720 = vadd.f32 %v6681, %v6699
      %v6721 = vadd.f32 %v6682, %v6699
      %v6722 = vadd.f32 %v6683, %v6699
      %v6723 = vadd.f32 %v6684, %v6699
      %v6724 = vadd.f32 %v6685, %v6699
      %v6725 = vadd.f32 %v6686, %v6699
      %v6726 = vadd.f32 %v6687, %v6699
      %v6727 = vadd.f32 %v6688, %v6699
      %v6728 = vadd.f32 %v6689, %v6699
      %v6729 = vadd.f32 %v6690, %v6699
      %v6730 = vadd.f32 %v6691, %v6699
      %v6731 = vadd.f32 %v6692, %v6699
      %v6732 = vadd.f32 %v6693, %v6699
      %vm6733 = vcmp.ge.f32.partialorder %v6701, 0.0
      %vm6734 = vcmp.ge.f32.partialorder %v6702, 0.0
      %vm6735 = vcmp.ge.f32.partialorder %v6703, 0.0
      %vm6736 = vcmp.ge.f32.partialorder %v6704, 0.0
      %vm6737 = vcmp.ge.f32.partialorder %v6705, 0.0
      %vm6738 = vcmp.ge.f32.partialorder %v6706, 0.0
      %vm6739 = vcmp.ge.f32.partialorder %v6707, 0.0
      %vm6740 = vcmp.ge.f32.partialorder %v6708, 0.0
      %vm6741 = vcmp.ge.f32.partialorder %v6709, 0.0
      %vm6742 = vcmp.ge.f32.partialorder %v6710, 0.0
      %vm6743 = vcmp.ge.f32.partialorder %v6711, 0.0
      %vm6744 = vcmp.ge.f32.partialorder %v6712, 0.0
      %vm6745 = vcmp.ge.f32.partialorder %v6713, 0.0
      %vm6746 = vcmp.ge.f32.partialorder %v6714, 0.0
      %vm6747 = vcmp.ge.f32.partialorder %v6715, 0.0
      %vm6748 = vcmp.ge.f32.partialorder %v6716, 0.0
      %vm6749 = vcmp.ge.f32.partialorder %v6717, 0.0
      %vm6750 = vcmp.ge.f32.partialorder %v6718, 0.0
      %vm6751 = vcmp.ge.f32.partialorder %v6719, 0.0
      %vm6752 = vcmp.ge.f32.partialorder %v6720, 0.0
      %vm6753 = vcmp.ge.f32.partialorder %v6721, 0.0
      %vm6754 = vcmp.ge.f32.partialorder %v6722, 0.0
      %vm6755 = vcmp.ge.f32.partialorder %v6723, 0.0
      %vm6756 = vcmp.ge.f32.partialorder %v6724, 0.0
      %vm6757 = vcmp.ge.f32.partialorder %v6725, 0.0
      %vm6758 = vcmp.ge.f32.partialorder %v6726, 0.0
      %vm6759 = vcmp.ge.f32.partialorder %v6727, 0.0
      %vm6760 = vcmp.ge.f32.partialorder %v6728, 0.0
      %vm6761 = vcmp.ge.f32.partialorder %v6729, 0.0
      %vm6762 = vcmp.ge.f32.partialorder %v6730, 0.0
      %vm6763 = vcmp.ge.f32.partialorder %v6731, 0.0
      %vm6764 = vcmp.ge.f32.partialorder %v6732, 0.0
      %v6765 = vmul.f32 %v6701, 0.2
      %v6766 = vmul.f32 %v6702, 0.2
      %v6767 = vmul.f32 %v6703, 0.2
      %v6768 = vmul.f32 %v6704, 0.2
      %v6769 = vmul.f32 %v6705, 0.2
      %v6770 = vmul.f32 %v6706, 0.2
      %v6771 = vmul.f32 %v6707, 0.2
      %v6772 = vmul.f32 %v6708, 0.2
      %v6773 = vmul.f32 %v6709, 0.2
      %v6774 = vmul.f32 %v6710, 0.2
      %v6775 = vmul.f32 %v6711, 0.2
      %v6776 = vmul.f32 %v6712, 0.2
      %v6777 = vmul.f32 %v6713, 0.2
      %v6778 = vmul.f32 %v6714, 0.2
      %v6779 = vmul.f32 %v6715, 0.2
      %v6780 = vmul.f32 %v6716, 0.2
      %v6781 = vmul.f32 %v6717, 0.2
      %v6782 = vmul.f32 %v6718, 0.2
      %v6783 = vmul.f32 %v6719, 0.2
      %v6784 = vmul.f32 %v6720, 0.2
      %v6785 = vmul.f32 %v6721, 0.2
      %v6786 = vmul.f32 %v6722, 0.2
      %v6787 = vmul.f32 %v6723, 0.2
      %v6788 = vmul.f32 %v6724, 0.2
      %v6789 = vmul.f32 %v6725, 0.2
      %v6790 = vmul.f32 %v6726, 0.2
      %v6791 = vmul.f32 %v6727, 0.2
      %v6792 = vmul.f32 %v6728, 0.2
      %v6793 = vmul.f32 %v6729, 0.2
      %v6794 = vmul.f32 %v6730, 0.2
      %v6795 = vmul.f32 %v6731, 0.2
      %v6796 = vmul.f32 %v6732, 0.2
      %v6797 = vsel %vm6733, %v6701, %v6765
      %v6798 = vsel %vm6734, %v6702, %v6766
      %v6799 = vsel %vm6735, %v6703, %v6767
      %v6800 = vsel %vm6736, %v6704, %v6768
      %v6801 = vsel %vm6737, %v6705, %v6769
      %v6802 = vsel %vm6738, %v6706, %v6770
      %v6803 = vsel %vm6739, %v6707, %v6771
      %v6804 = vsel %vm6740, %v6708, %v6772
      %v6805 = vsel %vm6741, %v6709, %v6773
      %v6806 = vsel %vm6742, %v6710, %v6774
      %v6807 = vsel %vm6743, %v6711, %v6775
      %v6808 = vsel %vm6744, %v6712, %v6776
      %v6809 = vsel %vm6745, %v6713, %v6777
      %v6810 = vsel %vm6746, %v6714, %v6778
      %v6811 = vsel %vm6747, %v6715, %v6779
      %v6812 = vsel %vm6748, %v6716, %v6780
      %v6813 = vsel %vm6749, %v6717, %v6781
      %v6814 = vsel %vm6750, %v6718, %v6782
      %v6815 = vsel %vm6751, %v6719, %v6783
      %v6816 = vsel %vm6752, %v6720, %v6784
      %v6817 = vsel %vm6753, %v6721, %v6785
      %v6818 = vsel %vm6754, %v6722, %v6786
      %v6819 = vsel %vm6755, %v6723, %v6787
      %v6820 = vsel %vm6756, %v6724, %v6788
      %v6821 = vsel %vm6757, %v6725, %v6789
      %v6822 = vsel %vm6758, %v6726, %v6790
      %v6823 = vsel %vm6759, %v6727, %v6791
      %v6824 = vsel %vm6760, %v6728, %v6792
      %v6825 = vsel %vm6761, %v6729, %v6793
      %v6826 = vsel %vm6762, %v6730, %v6794
      %v6827 = vsel %vm6763, %v6731, %v6795
      %v6828 = vsel %vm6764, %v6732, %v6796
      %vm6829 = vcmask 64512
      %6830 = vst.msk [vmem:[%s224] sm:$0xff] %vm6829, %v6797
      %6831 = vst.msk [vmem:[%s224 + $0x8] sm:$0xff] %vm6829, %v6798
      %6832 = vst.msk [vmem:[%s224 + $0x10] sm:$0xff] %vm6829, %v6799
      %6833 = vst.msk [vmem:[%s224 + $0x18] sm:$0xff] %vm6829, %v6800
      %6834 = vst.msk [vmem:[%s224 + $0x20] sm:$0xff] %vm6829, %v6801
      %6835 = vst.msk [vmem:[%s224 + $0x28] sm:$0xff] %vm6829, %v6802
      %6836 = vst.msk [vmem:[%s224 + $0x30] sm:$0xff] %vm6829, %v6803
      %6837 = vst.msk [vmem:[%s224 + $0x38] sm:$0xff] %vm6829, %v6804
      %6838 = vst.msk [vmem:[%s224 + $0x40] sm:$0xff] %vm6829, %v6805
      %6839 = vst.msk [vmem:[%s224 + $0x48] sm:$0xff] %vm6829, %v6806
      %6840 = vst.msk [vmem:[%s224 + $0x50] sm:$0xff] %vm6829, %v6807
      %6841 = vst.msk [vmem:[%s224 + $0x58] sm:$0xff] %vm6829, %v6808
      %6842 = vst.msk [vmem:[%s224 + $0x60] sm:$0xff] %vm6829, %v6809
      %6843 = vst.msk [vmem:[%s224 + $0x68] sm:$0xff] %vm6829, %v6810
      %6844 = vst.msk [vmem:[%s224 + $0x70] sm:$0xff] %vm6829, %v6811
      %6845 = vst.msk [vmem:[%s224 + $0x78] sm:$0xff] %vm6829, %v6812
      %6846 = vst.msk [vmem:[%s224 + $0x80] sm:$0xff] %vm6829, %v6813
      %6847 = vst.msk [vmem:[%s224 + $0x88] sm:$0xff] %vm6829, %v6814
      %6848 = vst.msk [vmem:[%s224 + $0x90] sm:$0xff] %vm6829, %v6815
      %6849 = vst.msk [vmem:[%s224 + $0x98] sm:$0xff] %vm6829, %v6816
      %6850 = vst.msk [vmem:[%s224 + $0xa0] sm:$0xff] %vm6829, %v6817
      %6851 = vst.msk [vmem:[%s224 + $0xa8] sm:$0xff] %vm6829, %v6818
      %6852 = vst.msk [vmem:[%s224 + $0xb0] sm:$0xff] %vm6829, %v6819
      %6853 = vst.msk [vmem:[%s224 + $0xb8] sm:$0xff] %vm6829, %v6820
      %6854 = vst.msk [vmem:[%s224 + $0xc0] sm:$0xff] %vm6829, %v6821
      %6855 = vst.msk [vmem:[%s224 + $0xc8] sm:$0xff] %vm6829, %v6822
      %6856 = vst.msk [vmem:[%s224 + $0xd0] sm:$0xff] %vm6829, %v6823
      %6857 = vst.msk [vmem:[%s224 + $0xd8] sm:$0xff] %vm6829, %v6824
      %6858 = vst.msk [vmem:[%s224 + $0xe0] sm:$0xff] %vm6829, %v6825
      %6859 = vst.msk [vmem:[%s224 + $0xe8] sm:$0xff] %vm6829, %v6826
      %6860 = vst.msk [vmem:[%s224 + $0xf0] sm:$0xff] %vm6829, %v6827
      %6861 = vst.msk [vmem:[%s224 + $0xf8] sm:$0xff] %vm6829, %v6828
      %p6862 = scmp.lt.s32.totalorder %s16, 1
      %s6863 = scalar_select %p6862, %s16, 1
      %s6864 = smul.addr %s6863, 32
      %s6865 = smul.addr %s6864, 8
      %s6866 = scalar_lea.vmem %s5, %s6865
      // Predicated region
      $region41: #{tpu_custom_call.1} parent=39 // pred_check
        %p6867 = pneg %p144
      $region42: #{tpu_custom_call.1} parent=39 // pred_check_branch
        %6869 = sbr.rel (%p6867) target = $region44
      $region43: #{tpu_custom_call.1} parent=39 // pred_region
        _
      $region44: #{tpu_custom_call.1} parent=39 // pred_fallthru
        _
    $region40: #{tpu_custom_call.1} parent=5 // pred_fallthru
      _
    %p6870 = scmp.le.s32.totalorder 2, %s11
    // Predicated region
    $region45: #{tpu_custom_call.1} parent=5 // pred_check
      %p6871 = pneg %p6870
    $region46: #{tpu_custom_call.1} parent=5 // pred_check_branch
      %6873 = sbr.rel (%p6871) target = $region48
    $region47: #{tpu_custom_call.1} parent=5 // pred_region
      %s6874 = ssub.s32 %s11, 2
      // Predicated region
      $region49: #{tpu_custom_call.1} parent=47 // pred_check
        %p6875 = pneg %p150
      $region50: #{tpu_custom_call.1} parent=47 // pred_check_branch
        %6877 = sbr.rel (%p6875) target = $region52
      $region51: #{tpu_custom_call.1} parent=47 // pred_region
        %p6878 = scmp.lt.s32.totalorder %s17, 1
        %s6879 = scalar_select %p6878, %s17, 1
        %s6880 = smul.addr %s6879, 32
        %s6881 = smul.addr %s6880, 8
        %s6882 = scalar_lea.vmem %s5, %s6881
      $region52: #{tpu_custom_call.1} parent=47 // pred_fallthru
        _
    $region48: #{tpu_custom_call.1} parent=5 // pred_fallthru
      _
  $region6: #{tpu_custom_call.1} parent=0 // loop_footer
    %s15 = sadd.s32 1, %s11
  $region7: #{tpu_custom_call.1} parent=0 // loop_footer_branch
    %10 = sbr.rel target = $region3
  $region8: #{tpu_custom_call.1} parent=0 // loop_exit
    _

</llo_original>
